<compile_context>
chip_gen: v6e
topology: v6e:2x2x1
jax: 0.10.0
libtpu: 0.0.40
codegen_flags: <defaults>
</compile_context>

<pallas_src>
import functools

import numpy as np
import jax
import jax.numpy as jnp
from jax.experimental import pallas as pl
from jax.experimental.pallas import tpu as pltpu


_VMEM_LIMIT = 32 * 1024 * 1024      # fits v7x (64 MiB physical) and v5e/v6e
_GELU_C = 0.7978845608028654        # sqrt(2/pi)


def _cparams(ngrid):
    return pltpu.CompilerParams(
        dimension_semantics=("parallel",) * ngrid,
        vmem_limit_bytes=_VMEM_LIMIT)


def _row_block(M):
    """Row tile: keep >=2 grid steps when possible (v7x 2-TC), cap at 1024."""
    if M > 1024:
        for tm in (1024, 512, 256, 128, 64, 32, 16, 8):
            if M % tm == 0:
                return tm
        return M
    if M >= 16 and M % 2 == 0 and (M // 2) % 8 == 0:
        return M // 2
    return M


def _col_block(N):
    """Output-column tile (bounds VMEM for the big MLP weights)."""
    if N <= 512:
        return N
    for tn in (512, 384, 256, 128):
        if N % tn == 0:
            return tn
    return N


def _pick_wb(n_total, n_img, shift, limit=8):
    """Windows per attention grid step: must divide n_total (and n_img when the
    block is shifted so the mask index_map stays valid) and leave >=2 steps."""
    best = 1
    for c in range(1, min(n_total, limit) + 1):
        if n_total % c:
            continue
        if shift > 0 and n_img % c:
            continue
        if n_total // c < 2:
            continue
        best = c
    return best


# ----------------------------- Pallas kernels -----------------------------

def _gelu_tanh(y):
    # tanh-approximate GELU runs on the EUP slot (overlaps MXU/VPU).
    return 0.5 * y * (1.0 + jnp.tanh(_GELU_C * (y + 0.044715 * y * y * y)))


def _linear_kernel(x_ref, w_ref, b_ref, o_ref, *, activation):
    y = jnp.dot(x_ref[...].astype(jnp.bfloat16), w_ref[...],
                preferred_element_type=jnp.float32)
    y = y + b_ref[...]
    if activation == "gelu":
        y = _gelu_tanh(y)
    o_ref[...] = y.astype(o_ref.dtype)


def _ln_linear_kernel(x_ref, g_ref, bt_ref, w_ref, b_ref, o_ref,
                      *, eps, activation):
    x = x_ref[...].astype(jnp.float32)
    mu = jnp.mean(x, axis=-1, keepdims=True)
    var = jnp.mean(jnp.square(x - mu), axis=-1, keepdims=True)
    xn = (x - mu) * jax.lax.rsqrt(var + eps)
    xn = xn * g_ref[...] + bt_ref[...]
    y = jnp.dot(xn.astype(jnp.bfloat16), w_ref[...],
                preferred_element_type=jnp.float32)
    y = y + b_ref[...]
    if activation == "gelu":
        y = _gelu_tanh(y)
    o_ref[...] = y.astype(o_ref.dtype)


def _linear_res_kernel(x_ref, w_ref, b_ref, r_ref, o_ref):
    y = jnp.dot(x_ref[...].astype(jnp.bfloat16), w_ref[...],
                preferred_element_type=jnp.float32)
    y = y + b_ref[...] + r_ref[...].astype(jnp.float32)
    o_ref[...] = y.astype(o_ref.dtype)


def _layernorm_kernel(x_ref, g_ref, b_ref, o_ref, *, eps):
    x = x_ref[...].astype(jnp.float32)
    mu = jnp.mean(x, axis=-1, keepdims=True)
    var = jnp.mean(jnp.square(x - mu), axis=-1, keepdims=True)
    xn = (x - mu) * jax.lax.rsqrt(var + eps)
    o_ref[...] = (xn * g_ref[...] + b_ref[...]).astype(o_ref.dtype)


def _window_attn_kernel(qkv_ref, rb_ref, *rest, scale, nh, dh, dim, has_mask):
    # qkv_ref: (wb, T, 3*dim) bf16 (lane-dense).  Heads are split in VMEM with
    # static lane slices; no (nW, nH, T, Dh) tensor ever reaches HBM.
    if has_mask:
        m_ref, o_ref = rest
        mask = m_ref[...]                      # (wb, T, T) f32
    else:
        (o_ref,) = rest
        mask = None
    for h in range(nh):
        q = qkv_ref[:, :, pl.ds(h * dh, dh)]                # (wb, T, dh) bf16
        k = qkv_ref[:, :, pl.ds(dim + h * dh, dh)]
        v = qkv_ref[:, :, pl.ds(2 * dim + h * dh, dh)]
        s = jnp.einsum("bqd,bkd->bqk", q, k,
                       preferred_element_type=jnp.float32) * scale
        s = s + rb_ref[h][None]                              # (T,T) rel bias
        if has_mask:
            s = s + mask
        s = s - jnp.max(s, axis=-1, keepdims=True)
        p = jnp.exp(s)
        p = p * pl.reciprocal(jnp.sum(p, axis=-1, keepdims=True), approx=True)
        o = jnp.einsum("bqk,bkd->bqd", p.astype(jnp.bfloat16), v,
                       preferred_element_type=jnp.float32)
        o_ref[:, :, pl.ds(h * dh, dh)] = o.astype(o_ref.dtype)


# ----------------------------- kernel wrappers -----------------------------

def linear(x, w, b, activation="none", out_dtype=jnp.bfloat16):
    M, K = x.shape
    N = w.shape[1]
    TM, TN = _row_block(M), _col_block(N)
    return pl.pallas_call(
        functools.partial(_linear_kernel, activation=activation),
        out_shape=jax.ShapeDtypeStruct((M, N), out_dtype),
        grid=(M // TM, N // TN),
        in_specs=[pl.BlockSpec((TM, K), lambda i, j: (i, 0)),
                  pl.BlockSpec((K, TN), lambda i, j: (0, j)),
                  pl.BlockSpec((1, TN), lambda i, j: (0, j))],
        out_specs=pl.BlockSpec((TM, TN), lambda i, j: (i, j)),
        compiler_params=_cparams(2),
    )(x, w, b.reshape(1, N))


def ln_linear(x, g, bt, w, b, activation="none", eps=1e-5,
              out_dtype=jnp.bfloat16):
    """LayerNorm(x) @ w + b (optionally GELU) fused in one kernel."""
    M, K = x.shape
    N = w.shape[1]
    TM, TN = _row_block(M), _col_block(N)
    return pl.pallas_call(
        functools.partial(_ln_linear_kernel, eps=eps, activation=activation),
        out_shape=jax.ShapeDtypeStruct((M, N), out_dtype),
        grid=(M // TM, N // TN),
        in_specs=[pl.BlockSpec((TM, K), lambda i, j: (i, 0)),
                  pl.BlockSpec((1, K), lambda i, j: (0, 0)),
                  pl.BlockSpec((1, K), lambda i, j: (0, 0)),
                  pl.BlockSpec((K, TN), lambda i, j: (0, j)),
                  pl.BlockSpec((1, TN), lambda i, j: (0, j))],
        out_specs=pl.BlockSpec((TM, TN), lambda i, j: (i, j)),
        compiler_params=_cparams(2),
    )(x, g.reshape(1, K), bt.reshape(1, K), w, b.reshape(1, N))


def linear_residual(x, w, b, res, out_dtype=jnp.bfloat16):
    """x @ w + b + res fused (residual add in the matmul epilogue)."""
    M, K = x.shape
    N = w.shape[1]
    TM, TN = _row_block(M), _col_block(N)
    return pl.pallas_call(
        _linear_res_kernel,
        out_shape=jax.ShapeDtypeStruct((M, N), out_dtype),
        grid=(M // TM, N // TN),
        in_specs=[pl.BlockSpec((TM, K), lambda i, j: (i, 0)),
                  pl.BlockSpec((K, TN), lambda i, j: (0, j)),
                  pl.BlockSpec((1, TN), lambda i, j: (0, j)),
                  pl.BlockSpec((TM, TN), lambda i, j: (i, j))],
        out_specs=pl.BlockSpec((TM, TN), lambda i, j: (i, j)),
        compiler_params=_cparams(2),
    )(x, w, b.reshape(1, N), res)


def layernorm(x, gamma, beta, eps=1e-5, out_dtype=jnp.bfloat16):
    M, C = x.shape
    TM = _row_block(M)
    return pl.pallas_call(
        functools.partial(_layernorm_kernel, eps=eps),
        out_shape=jax.ShapeDtypeStruct((M, C), out_dtype),
        grid=(M // TM,),
        in_specs=[pl.BlockSpec((TM, C), lambda i: (i, 0)),
                  pl.BlockSpec((1, C), lambda i: (0, 0)),
                  pl.BlockSpec((1, C), lambda i: (0, 0))],
        out_specs=pl.BlockSpec((TM, C), lambda i: (i, 0)),
        compiler_params=_cparams(1),
    )(x, gamma.reshape(1, C), beta.reshape(1, C))


def window_attention(qkv, rel_bias, mask, scale, wb, num_heads):
    """qkv: (nW, T, 3*dim) bf16; rel_bias: (nH, T, T); mask: None|(nW_img, T, T).
    Returns (nW, T, dim) bf16 (lane-dense head-merged layout)."""
    nW, T, three_dim = qkv.shape
    dim = three_dim // 3
    dh = dim // num_heads
    qkv_spec = pl.BlockSpec((wb, T, three_dim), lambda g: (g, 0, 0))
    rb_spec = pl.BlockSpec(rel_bias.shape, lambda g: (0, 0, 0))
    out_spec = pl.BlockSpec((wb, T, dim), lambda g: (g, 0, 0))
    has_mask = mask is not None
    if has_mask:
        nmb = mask.shape[0] // wb
        if nmb == 1:
            m_spec = pl.BlockSpec((wb, T, T), lambda g: (0, 0, 0))
        else:
            m_spec = pl.BlockSpec((wb, T, T), lambda g, _n=nmb: (g % _n, 0, 0))
        in_specs = [qkv_spec, rb_spec, m_spec]
        args = (qkv, rel_bias, mask)
    else:
        in_specs = [qkv_spec, rb_spec]
        args = (qkv, rel_bias)
    return pl.pallas_call(
        functools.partial(_window_attn_kernel, scale=scale, nh=num_heads,
                          dh=dh, dim=dim, has_mask=has_mask),
        out_shape=jax.ShapeDtypeStruct((nW, T, dim), jnp.bfloat16),
        grid=(nW // wb,),
        in_specs=in_specs,
        out_specs=out_spec,
        compiler_params=_cparams(1),
    )(*args)


# ----------------------------- Swin plumbing ------------------------------

def window_partition(x, window):
    B, H, W, C = x.shape
    x = x.reshape(B, H // window, window, W // window, window, C)
    return x.transpose(0, 1, 3, 2, 4, 5).reshape(-1, window * window, C)


def window_reverse(windows, window, H, W):
    B = windows.shape[0] // ((H // window) * (W // window))
    x = windows.reshape(B, H // window, W // window, window, window, -1)
    return x.transpose(0, 1, 3, 2, 4, 5).reshape(B, H, W, -1)


def relative_position_index(window):
    coords = np.stack(np.meshgrid(np.arange(window), np.arange(window),
                                  indexing="ij"))
    flat = coords.reshape(2, -1)
    rel = (flat[:, :, None] - flat[:, None, :]).transpose(1, 2, 0).copy()
    rel[:, :, 0] += window - 1
    rel[:, :, 1] += window - 1
    rel[:, :, 0] *= 2 * window - 1
    return rel.sum(-1)                      # (T, T) int


def shifted_window_mask(H, W, window, shift):
    img = np.zeros((1, H, W, 1), dtype=np.float32)
    slices = (slice(0, -window), slice(-window, -shift), slice(-shift, None))
    cnt = 0
    for hs in slices:
        for ws in slices:
            img[:, hs, ws, :] = cnt
            cnt += 1
    mw = img.reshape(1, H // window, window, W // window, window, 1)
    mw = mw.transpose(0, 1, 3, 2, 4, 5).reshape(-1, window * window)
    diff = mw[:, None, :] - mw[:, :, None]
    return np.where(diff != 0, -100.0, 0.0).astype(np.float32)  # (nW_img, T, T)


def swin_block(h, blk, B, res, dim, num_heads, window, shift):
    Hc, Wc = res
    T = window * window
    Dh = dim // num_heads
    nW_img = (Hc // window) * (Wc // window)
    nWtot = B * nW_img

    shortcut = h                                        # (B*Hc*Wc, dim) bf16

    # Window partition (and cyclic shift) is pure data movement; LN is per
    # token so it commutes -> fuse LN1 into the QKV matmul afterwards.
    x = h.reshape(B, Hc, Wc, dim)
    if shift > 0:
        x = jnp.roll(x, shift=(-shift, -shift), axis=(1, 2))
    windows = window_partition(x, window)               # (nWtot, T, dim)
    wflat = windows.reshape(nWtot * T, dim)

    # Lane-dense (rows, 3*dim) QKV slab; head split happens inside attention.
    qkv = ln_linear(wflat, blk["ln1_g"], blk["ln1_b"],
                    blk["qkv_w"], blk["qkv_b"])          # (nWtot*T, 3*dim) bf16
    qkv = qkv.reshape(nWtot, T, 3 * dim)                 # free reshape

    wb = _pick_wb(nWtot, nW_img, shift)
    mask = blk["attn_mask"] if shift > 0 else None
    if shift > 0:
        assert nW_img % wb == 0 and mask.shape[0] == nW_img, (nW_img, wb)
    attn = window_attention(qkv, blk["rel_bias"], mask,
                            Dh ** -0.5, wb, num_heads)   # (nWtot, T, dim) bf16

    # proj is per-token -> reverse/un-shift first, then fuse proj + residual.
    xw = window_reverse(attn, window, Hc, Wc)
    if shift > 0:
        xw = jnp.roll(xw, shift=(shift, shift), axis=(1, 2))
    xflat = xw.reshape(B * Hc * Wc, dim)
    h = linear_residual(xflat, blk["proj_w"], blk["proj_b"], shortcut)

    # MLP: LN2+FC1(+tanh GELU) fused, FC2+residual fused.
    y = ln_linear(h, blk["ln2_g"], blk["ln2_b"],
                  blk["fc1_w"], blk["fc1_b"], activation="gelu")
    h = linear_residual(y, blk["fc2_w"], blk["fc2_b"], h)
    return h


def patch_merging(h, prm, B, res, dim):
    Hc, Wc = res
    x = h.reshape(B, Hc, Wc, dim)
    x0 = x[:, 0::2, 0::2, :]
    x1 = x[:, 1::2, 0::2, :]
    x2 = x[:, 0::2, 1::2, :]
    x3 = x[:, 1::2, 1::2, :]
    x = jnp.concatenate([x0, x1, x2, x3], axis=-1)       # (B, H/2, W/2, 4*dim)
    new_res = (Hc // 2, Wc // 2)
    x = x.reshape(B * new_res[0] * new_res[1], 4 * dim)
    # fused LN + reduction matmul (no bias in Swin patch merging)
    x = ln_linear(x, prm["ln_g"], prm["ln_b"], prm["red_w"],
                  jnp.zeros((2 * dim,), jnp.float32))
    return x, new_res, 2 * dim


def swin_forward(params, x, cfg):
    B, C_in, H, W = x.shape
    p = cfg["patch_size"]
    win_cfg = cfg["window_size"]
    Hp, Wp = H // p, W // p

    # patch embedding: stride-p conv == per-patch flatten + matmul
    patches = x.reshape(B, C_in, Hp, p, Wp, p).transpose(0, 2, 4, 1, 3, 5)
    patches = patches.reshape(B * Hp * Wp, C_in * p * p)
    pe = params["patch_embed"]
    kpad = pe["w"].shape[0]
    if kpad > patches.shape[1]:          # zero-pad K to a lane-dense multiple
        patches = jnp.pad(patches, ((0, 0), (0, kpad - patches.shape[1])))
    h = linear(patches, pe["w"], pe["b"])
    h = layernorm(h, pe["ln_g"], pe["ln_b"])

    dim = cfg["embed_dim"]
    res = (Hp, Wp)
    for si, stage in enumerate(params["stages"]):
        nh = cfg["num_heads"][si]
        for bi, blk in enumerate(stage["blocks"]):
            win = min(win_cfg, min(res))
            shift = 0 if (bi % 2 == 0 or min(res) <= win_cfg) else win_cfg // 2
            h = swin_block(h, blk, B, res, dim, nh, win, shift)
        if stage["downsample"] is not None:
            h, res, dim = patch_merging(h, stage["downsample"], B, res, dim)

    h = layernorm(h, params["ln_g"], params["ln_b"], out_dtype=jnp.float32)
    last_hidden = h.reshape(B, res[0] * res[1], dim)
    pooled = jnp.mean(last_hidden, axis=1)   # HF pooler: AdaptiveAvgPool1d(1)
    return last_hidden, pooled


# ----------------------------- parameter init -----------------------------

def init_swin_params(key, cfg):
    std = 0.02
    kit = iter(jax.random.split(key, 256))

    def rnd(shape, dtype=jnp.float32):
        return (std * jax.random.normal(next(kit), shape)).astype(dtype)

    def ln(c):
        return jnp.ones((c,), jnp.float32), jnp.zeros((c,), jnp.float32)

    p, C, E = cfg["patch_size"], cfg["num_channels"], cfg["embed_dim"]
    Wcfg, mlp = cfg["window_size"], cfg["mlp_ratio"]
    img = cfg["image_size"]

    g, b = ln(E)
    kdim = C * p * p
    kpad = ((kdim + 127) // 128) * 128    # lane-dense patch-embed contraction
    pe_w = jnp.zeros((kpad, E), jnp.bfloat16).at[:kdim].set(
        rnd((kdim, E), jnp.bfloat16))
    params = {
        "patch_embed": dict(w=pe_w, b=jnp.zeros((E,), jnp.float32),
                            ln_g=g, ln_b=b)
    }
    stages = []
    dim = E
    res = (img // p, img // p)
    for si, (depth, nh) in enumerate(zip(cfg["depths"], cfg["num_heads"])):
        blocks = []
        for bi in range(depth):
            win = min(Wcfg, min(res))
            shift = 0 if (bi % 2 == 0 or min(res) <= Wcfg) else Wcfg // 2
            T = win * win
            g1, b1 = ln(dim)
            g2, b2 = ln(dim)
            # precompute relative-position bias gather/permute once at init
            table = rnd(((2 * win - 1) ** 2, nh))
            ridx = jnp.asarray(relative_position_index(win).reshape(-1))
            rel_bias = table[ridx].reshape(T, T, nh).transpose(2, 0, 1)
            mask = (jnp.asarray(shifted_window_mask(res[0], res[1], win, shift))
                    if shift > 0 else None)
            blocks.append(dict(
                ln1_g=g1, ln1_b=b1,
                qkv_w=rnd((dim, 3 * dim), jnp.bfloat16),
                qkv_b=jnp.zeros((3 * dim,), jnp.float32),
                rel_bias=jnp.asarray(rel_bias, jnp.float32),
                attn_mask=mask,
                proj_w=rnd((dim, dim), jnp.bfloat16),
                proj_b=jnp.zeros((dim,), jnp.float32),
                ln2_g=g2, ln2_b=b2,
                fc1_w=rnd((dim, mlp * dim), jnp.bfloat16),
                fc1_b=jnp.zeros((mlp * dim,), jnp.float32),
                fc2_w=rnd((mlp * dim, dim), jnp.bfloat16),
                fc2_b=jnp.zeros((dim,), jnp.float32),
            ))
        stage = dict(blocks=blocks)
        if si < len(cfg["depths"]) - 1:
            gm, bm = ln(4 * dim)
            stage["downsample"] = dict(ln_g=gm, ln_b=bm,
                                       red_w=rnd((4 * dim, 2 * dim),
                                                 jnp.bfloat16))
            dim *= 2
            res = (res[0] // 2, res[1] // 2)
        else:
            stage["downsample"] = None
        stages.append(stage)
    params["stages"] = stages
    gf, bf = ln(dim)
    params["ln_g"], params["ln_b"] = gf, bf
    return params


# ----------------------------------- main ----------------------------------

if __name__ == "__main__":
    # Scaled-down Swin config (the real checkpoint uses 384px / embed_dim 128 /
    # depths (2,2,18,2); same structure, smaller sizes for this synthetic test).
    cfg = dict(image_size=32, patch_size=4, num_channels=3, embed_dim=32,
               depths=(2, 2), num_heads=(2, 4), window_size=4, mlp_ratio=4)

    key = jax.random.PRNGKey(0)
    pkey, xkey = jax.random.split(key)
    params = init_swin_params(pkey, cfg)
    x = jax.random.normal(xkey, (2, cfg["num_channels"],
                                 cfg["image_size"], cfg["image_size"]),
                          dtype=jnp.float32)

    fwd = jax.jit(lambda prm, inp: swin_forward(prm, inp, cfg))
    last_hidden, pooled = fwd(params, x)
    jax.block_until_ready((last_hidden, pooled))

    assert last_hidden.shape == (2, 16, 64), last_hidden.shape
    assert pooled.shape == (2, 64), pooled.shape
    assert bool(jnp.isfinite(last_hidden).all()) and bool(jnp.isfinite(pooled).all())
    print("KERNEL_OK")
</pallas_src>

<mosaic_0001>
module attributes {stable_mosaic.version = 11 : i64} {
  func.func @_layernorm_kernel(%arg0: i32, %arg1: memref<64x32xbf16, #tpu.memory_space<vmem>>, %arg2: memref<1x32xf32, #tpu.memory_space<vmem>>, %arg3: memref<1x32xf32, #tpu.memory_space<vmem>>, %arg4: memref<64x32xbf16, #tpu.memory_space<vmem>>) attributes {dimension_semantics = [#tpu.dimension_semantics<parallel>], iteration_bounds = array<i64: 2>, scalar_prefetch = 0 : i64, scratch_operands = 0 : i64, tpu.core_type = #tpu.core_type<tc>, window_params = [{transform_indices = @transform_0, window_bounds = array<i64: 64, 32>}, {pipeline_mode = #tpu.pipeline_mode<synchronous>, transform_indices = @transform_1, window_bounds = array<i64: 1, 32>}, {pipeline_mode = #tpu.pipeline_mode<synchronous>, transform_indices = @transform_2, window_bounds = array<i64: 1, 32>}, {transform_indices = @transform_3, window_bounds = array<i64: 64, 32>}]} {
    %c0 = arith.constant 0 : index
    %c0_0 = arith.constant 0 : index
    %0 = vector.load %arg1[%c0, %c0_0] : memref<64x32xbf16, #tpu.memory_space<vmem>>, vector<64x32xbf16>
    %1 = arith.extf %0 : vector<64x32xbf16> to vector<64x32xf32>
    %cst = arith.constant dense<0.000000e+00> : vector<64xf32>
    %2 = vector.multi_reduction <add>, %1, %cst [1] : vector<64x32xf32> to vector<64xf32>
    %3 = vector.shape_cast %2 : vector<64xf32> to vector<64x1xf32>
    %cst_1 = arith.constant 3.200000e+01 : f32
    %4 = vector.broadcast %cst_1 : f32 to vector<64x1xf32>
    %5 = arith.divf %3, %4 : vector<64x1xf32>
    %6 = vector.broadcast %5 : vector<64x1xf32> to vector<64x32xf32>
    %7 = arith.subf %1, %6 : vector<64x32xf32>
    %8 = arith.mulf %7, %7 : vector<64x32xf32>
    %cst_2 = arith.constant dense<0.000000e+00> : vector<64xf32>
    %9 = vector.multi_reduction <add>, %8, %cst_2 [1] : vector<64x32xf32> to vector<64xf32>
    %10 = vector.shape_cast %9 : vector<64xf32> to vector<64x1xf32>
    %cst_3 = arith.constant 3.200000e+01 : f32
    %11 = vector.broadcast %cst_3 : f32 to vector<64x1xf32>
    %12 = arith.divf %10, %11 : vector<64x1xf32>
    %13 = vector.broadcast %5 : vector<64x1xf32> to vector<64x32xf32>
    %14 = arith.subf %1, %13 : vector<64x32xf32>
    %cst_4 = arith.constant 9.99999974E-6 : f32
    %15 = vector.broadcast %cst_4 : f32 to vector<64x1xf32>
    %16 = arith.addf %12, %15 : vector<64x1xf32>
    %17 = math.rsqrt %16 : vector<64x1xf32>
    %18 = vector.broadcast %17 : vector<64x1xf32> to vector<64x32xf32>
    %19 = arith.mulf %14, %18 : vector<64x32xf32>
    %c0_5 = arith.constant 0 : index
    %c0_6 = arith.constant 0 : index
    %20 = vector.load %arg2[%c0_5, %c0_6] : memref<1x32xf32, #tpu.memory_space<vmem>>, vector<1x32xf32>
    %21 = vector.broadcast %20 : vector<1x32xf32> to vector<64x32xf32>
    %22 = arith.mulf %19, %21 : vector<64x32xf32>
    %c0_7 = arith.constant 0 : index
    %c0_8 = arith.constant 0 : index
    %23 = vector.load %arg3[%c0_7, %c0_8] : memref<1x32xf32, #tpu.memory_space<vmem>>, vector<1x32xf32>
    %24 = vector.broadcast %23 : vector<1x32xf32> to vector<64x32xf32>
    %25 = arith.addf %22, %24 : vector<64x32xf32>
    %26 = arith.truncf %25 : vector<64x32xf32> to vector<64x32xbf16>
    %c0_9 = arith.constant 0 : index
    %c0_10 = arith.constant 0 : index
    %27 = vector.load %arg4[%c0_9, %c0_10] : memref<64x32xbf16, #tpu.memory_space<vmem>>, vector<64x32xbf16>
    tpu.vector_store %arg4[%c0_9, %c0_10], %26 {strides = array<i32>} : memref<64x32xbf16, #tpu.memory_space<vmem>>, vector<64x32xbf16>,
    return
  }
  func.func @transform_0(%arg0: i32) -> (i32, i32) {
    %c0_i32 = arith.constant 0 : i32
    %c0_i32_0 = arith.constant 0 : i32
    return %arg0, %c0_i32 : i32, i32
  }
  func.func @transform_1(%arg0: i32) -> (i32, i32) {
    %c0_i32 = arith.constant 0 : i32
    %c0_i32_0 = arith.constant 0 : i32
    %c0_i32_1 = arith.constant 0 : i32
    return %c0_i32, %c0_i32_0 : i32, i32
  }
  func.func @transform_2(%arg0: i32) -> (i32, i32) {
    %c0_i32 = arith.constant 0 : i32
    %c0_i32_0 = arith.constant 0 : i32
    %c0_i32_1 = arith.constant 0 : i32
    return %c0_i32, %c0_i32_0 : i32, i32
  }
  func.func @transform_3(%arg0: i32) -> (i32, i32) {
    %c0_i32 = arith.constant 0 : i32
    %c0_i32_0 = arith.constant 0 : i32
    return %arg0, %c0_i32 : i32, i32
  }
}

module attributes {stable_mosaic.version = 11 : i64} {
  func.func @_linear_kernel(%arg0: i32, %arg1: i32, %arg2: memref<64x128xf32, #tpu.memory_space<vmem>>, %arg3: memref<128x32xbf16, #tpu.memory_space<vmem>>, %arg4: memref<1x32xf32, #tpu.memory_space<vmem>>, %arg5: memref<64x32xbf16, #tpu.memory_space<vmem>>) attributes {dimension_semantics = [#tpu.dimension_semantics<parallel>, #tpu.dimension_semantics<parallel>], iteration_bounds = array<i64: 2, 1>, scalar_prefetch = 0 : i64, scratch_operands = 0 : i64, tpu.core_type = #tpu.core_type<tc>, window_params = [{transform_indices = @transform_0, window_bounds = array<i64: 64, 128>}, {transform_indices = @transform_1, window_bounds = array<i64: 128, 32>}, {transform_indices = @transform_2, window_bounds = array<i64: 1, 32>}, {transform_indices = @transform_3, window_bounds = array<i64: 64, 32>}]} {
    %c0 = arith.constant 0 : index
    %c0_0 = arith.constant 0 : index
    %0 = vector.load %arg2[%c0, %c0_0] : memref<64x128xf32, #tpu.memory_space<vmem>>, vector<64x128xf32>
    %1 = arith.truncf %0 : vector<64x128xf32> to vector<64x128xbf16>
    %c0_1 = arith.constant 0 : index
    %c0_2 = arith.constant 0 : index
    %2 = vector.load %arg3[%c0_1, %c0_2] : memref<128x32xbf16, #tpu.memory_space<vmem>>, vector<128x32xbf16>
    %cst = arith.constant dense<0.000000e+00> : vector<64x32xf32>
    %3 = tpu.matmul %1, %2, %cst {dimension_numbers = #tpu.dot_dimension_numbers<[1], [0], [0], [1], [0, 0, 1, 1], [], []>} : vector<64x128xbf16>, vector<128x32xbf16>, vector<64x32xf32> -> vector<64x32xf32>
    %c0_3 = arith.constant 0 : index
    %c0_4 = arith.constant 0 : index
    %4 = vector.load %arg4[%c0_3, %c0_4] : memref<1x32xf32, #tpu.memory_space<vmem>>, vector<1x32xf32>
    %5 = vector.broadcast %4 : vector<1x32xf32> to vector<64x32xf32>
    %6 = arith.addf %3, %5 : vector<64x32xf32>
    %7 = arith.truncf %6 : vector<64x32xf32> to vector<64x32xbf16>
    %c0_5 = arith.constant 0 : index
    %c0_6 = arith.constant 0 : index
    %8 = vector.load %arg5[%c0_5, %c0_6] : memref<64x32xbf16, #tpu.memory_space<vmem>>, vector<64x32xbf16>
    tpu.vector_store %arg5[%c0_5, %c0_6], %7 {strides = array<i32>} : memref<64x32xbf16, #tpu.memory_space<vmem>>, vector<64x32xbf16>,
    return
  }
  func.func @transform_0(%arg0: i32, %arg1: i32) -> (i32, i32) {
    %c0_i32 = arith.constant 0 : i32
    %c0_i32_0 = arith.constant 0 : i32
    return %arg0, %c0_i32 : i32, i32
  }
  func.func @transform_1(%arg0: i32, %arg1: i32) -> (i32, i32) {
    %c0_i32 = arith.constant 0 : i32
    %c0_i32_0 = arith.constant 0 : i32
    return %c0_i32, %arg1 : i32, i32
  }
  func.func @transform_2(%arg0: i32, %arg1: i32) -> (i32, i32) {
    %c0_i32 = arith.constant 0 : i32
    %c0_i32_0 = arith.constant 0 : i32
    return %c0_i32, %arg1 : i32, i32
  }
  func.func @transform_3(%arg0: i32, %arg1: i32) -> (i32, i32) {
    %c0_i32 = arith.constant 0 : i32
    return %arg0, %arg1 : i32, i32
  }
}

module attributes {stable_mosaic.version = 11 : i64} {
  func.func @_ln_linear_kernel(%arg0: i32, %arg1: i32, %arg2: memref<64x32xbf16, #tpu.memory_space<vmem>>, %arg3: memref<1x32xf32, #tpu.memory_space<vmem>>, %arg4: memref<1x32xf32, #tpu.memory_space<vmem>>, %arg5: memref<32x96xbf16, #tpu.memory_space<vmem>>, %arg6: memref<1x96xf32, #tpu.memory_space<vmem>>, %arg7: memref<64x96xbf16, #tpu.memory_space<vmem>>) attributes {dimension_semantics = [#tpu.dimension_semantics<parallel>, #tpu.dimension_semantics<parallel>], iteration_bounds = array<i64: 2, 1>, scalar_prefetch = 0 : i64, scratch_operands = 0 : i64, tpu.core_type = #tpu.core_type<tc>, window_params = [{transform_indices = @transform_0, window_bounds = array<i64: 64, 32>}, {pipeline_mode = #tpu.pipeline_mode<synchronous>, transform_indices = @transform_1, window_bounds = array<i64: 1, 32>}, {pipeline_mode = #tpu.pipeline_mode<synchronous>, transform_indices = @transform_2, window_bounds = array<i64: 1, 32>}, {transform_indices = @transform_3, window_bounds = array<i64: 32, 96>}, {transform_indices = @transform_4, window_bounds = array<i64: 1, 96>}, {transform_indices = @transform_5, window_bounds = array<i64: 64, 96>}]} {
    %c0 = arith.constant 0 : index
    %c0_0 = arith.constant 0 : index
    %0 = vector.load %arg2[%c0, %c0_0] : memref<64x32xbf16, #tpu.memory_space<vmem>>, vector<64x32xbf16>
    %1 = arith.extf %0 : vector<64x32xbf16> to vector<64x32xf32>
    %cst = arith.constant dense<0.000000e+00> : vector<64xf32>
    %2 = vector.multi_reduction <add>, %1, %cst [1] : vector<64x32xf32> to vector<64xf32>
    %3 = vector.shape_cast %2 : vector<64xf32> to vector<64x1xf32>
    %cst_1 = arith.constant 3.200000e+01 : f32
    %4 = vector.broadcast %cst_1 : f32 to vector<64x1xf32>
    %5 = arith.divf %3, %4 : vector<64x1xf32>
    %6 = vector.broadcast %5 : vector<64x1xf32> to vector<64x32xf32>
    %7 = arith.subf %1, %6 : vector<64x32xf32>
    %8 = arith.mulf %7, %7 : vector<64x32xf32>
    %cst_2 = arith.constant dense<0.000000e+00> : vector<64xf32>
    %9 = vector.multi_reduction <add>, %8, %cst_2 [1] : vector<64x32xf32> to vector<64xf32>
    %10 = vector.shape_cast %9 : vector<64xf32> to vector<64x1xf32>
    %cst_3 = arith.constant 3.200000e+01 : f32
    %11 = vector.broadcast %cst_3 : f32 to vector<64x1xf32>
    %12 = arith.divf %10, %11 : vector<64x1xf32>
    %13 = vector.broadcast %5 : vector<64x1xf32> to vector<64x32xf32>
    %14 = arith.subf %1, %13 : vector<64x32xf32>
    %cst_4 = arith.constant 9.99999974E-6 : f32
    %15 = vector.broadcast %cst_4 : f32 to vector<64x1xf32>
    %16 = arith.addf %12, %15 : vector<64x1xf32>
    %17 = math.rsqrt %16 : vector<64x1xf32>
    %18 = vector.broadcast %17 : vector<64x1xf32> to vector<64x32xf32>
    %19 = arith.mulf %14, %18 : vector<64x32xf32>
    %c0_5 = arith.constant 0 : index
    %c0_6 = arith.constant 0 : index
    %20 = vector.load %arg3[%c0_5, %c0_6] : memref<1x32xf32, #tpu.memory_space<vmem>>, vector<1x32xf32>
    %21 = vector.broadcast %20 : vector<1x32xf32> to vector<64x32xf32>
    %22 = arith.mulf %19, %21 : vector<64x32xf32>
    %c0_7 = arith.constant 0 : index
    %c0_8 = arith.constant 0 : index
    %23 = vector.load %arg4[%c0_7, %c0_8] : memref<1x32xf32, #tpu.memory_space<vmem>>, vector<1x32xf32>
    %24 = vector.broadcast %23 : vector<1x32xf32> to vector<64x32xf32>
    %25 = arith.addf %22, %24 : vector<64x32xf32>
    %26 = arith.truncf %25 : vector<64x32xf32> to vector<64x32xbf16>
    %c0_9 = arith.constant 0 : index
    %c0_10 = arith.constant 0 : index
    %27 = vector.load %arg5[%c0_9, %c0_10] : memref<32x96xbf16, #tpu.memory_space<vmem>>, vector<32x96xbf16>
    %cst_11 = arith.constant dense<0.000000e+00> : vector<64x96xf32>
    %28 = tpu.matmul %26, %27, %cst_11 {dimension_numbers = #tpu.dot_dimension_numbers<[1], [0], [0], [1], [0, 0, 1, 1], [], []>} : vector<64x32xbf16>, vector<32x96xbf16>, vector<64x96xf32> -> vector<64x96xf32>
    %c0_12 = arith.constant 0 : index
    %c0_13 = arith.constant 0 : index
    %29 = vector.load %arg6[%c0_12, %c0_13] : memref<1x96xf32, #tpu.memory_space<vmem>>, vector<1x96xf32>
    %30 = vector.broadcast %29 : vector<1x96xf32> to vector<64x96xf32>
    %31 = arith.addf %28, %30 : vector<64x96xf32>
    %32 = arith.truncf %31 : vector<64x96xf32> to vector<64x96xbf16>
    %c0_14 = arith.constant 0 : index
    %c0_15 = arith.constant 0 : index
    %33 = vector.load %arg7[%c0_14, %c0_15] : memref<64x96xbf16, #tpu.memory_space<vmem>>, vector<64x96xbf16>
    tpu.vector_store %arg7[%c0_14, %c0_15], %32 {strides = array<i32>} : memref<64x96xbf16, #tpu.memory_space<vmem>>, vector<64x96xbf16>,
    return
  }
  func.func @transform_0(%arg0: i32, %arg1: i32) -> (i32, i32) {
    %c0_i32 = arith.constant 0 : i32
    %c0_i32_0 = arith.constant 0 : i32
    return %arg0, %c0_i32 : i32, i32
  }
  func.func @transform_1(%arg0: i32, %arg1: i32) -> (i32, i32) {
    %c0_i32 = arith.constant 0 : i32
    %c0_i32_0 = arith.constant 0 : i32
    %c0_i32_1 = arith.constant 0 : i32
    return %c0_i32, %c0_i32_0 : i32, i32
  }
  func.func @transform_2(%arg0: i32, %arg1: i32) -> (i32, i32) {
    %c0_i32 = arith.constant 0 : i32
    %c0_i32_0 = arith.constant 0 : i32
    %c0_i32_1 = arith.constant 0 : i32
    return %c0_i32, %c0_i32_0 : i32, i32
  }
  func.func @transform_3(%arg0: i32, %arg1: i32) -> (i32, i32) {
    %c0_i32 = arith.constant 0 : i32
    %c0_i32_0 = arith.constant 0 : i32
    return %c0_i32, %arg1 : i32, i32
  }
  func.func @transform_4(%arg0: i32, %arg1: i32) -> (i32, i32) {
    %c0_i32 = arith.constant 0 : i32
    %c0_i32_0 = arith.constant 0 : i32
    return %c0_i32, %arg1 : i32, i32
  }
  func.func @transform_5(%arg0: i32, %arg1: i32) -> (i32, i32) {
    %c0_i32 = arith.constant 0 : i32
    return %arg0, %arg1 : i32, i32
  }
}

module attributes {stable_mosaic.version = 11 : i64} {
  func.func @_window_attn_kernel(%arg0: i32, %arg1: memref<4x16x96xbf16, #tpu.memory_space<vmem>>, %arg2: memref<2x16x16xf32, #tpu.memory_space<vmem>>, %arg3: memref<4x16x32xbf16, #tpu.memory_space<vmem>>) attributes {dimension_semantics = [#tpu.dimension_semantics<parallel>], iteration_bounds = array<i64: 2>, scalar_prefetch = 0 : i64, scratch_operands = 0 : i64, tpu.core_type = #tpu.core_type<tc>, window_params = [{transform_indices = @transform_0, window_bounds = array<i64: 4, 16, 96>}, {pipeline_mode = #tpu.pipeline_mode<synchronous>, transform_indices = @transform_1, window_bounds = array<i64: 2, 16, 16>}, {transform_indices = @transform_2, window_bounds = array<i64: 4, 16, 32>}]} {
    %c0 = arith.constant 0 : index
    %c0_0 = arith.constant 0 : index
    %c0_1 = arith.constant 0 : index
    %0 = vector.load %arg1[%c0, %c0_0, %c0_1] : memref<4x16x96xbf16, #tpu.memory_space<vmem>>, vector<4x16x16xbf16>
    %c0_2 = arith.constant 0 : index
    %c0_3 = arith.constant 0 : index
    %c32 = arith.constant 32 : index
    %1 = vector.load %arg1[%c0_2, %c0_3, %c32] : memref<4x16x96xbf16, #tpu.memory_space<vmem>>, vector<4x16x16xbf16>
    %c0_4 = arith.constant 0 : index
    %c0_5 = arith.constant 0 : index
    %c64 = arith.constant 64 : index
    %2 = vector.load %arg1[%c0_4, %c0_5, %c64] : memref<4x16x96xbf16, #tpu.memory_space<vmem>>, vector<4x16x16xbf16>
    "tpu.trace_start"() <{level = 10 : i32, message = "bqd,bkd->bqk"}> : () -> ()
    %cst = arith.constant dense<0.000000e+00> : vector<4x16x16xf32>
    %3 = tpu.matmul %0, %1, %cst {dimension_numbers = #tpu.dot_dimension_numbers<[2], [2], [1], [1], [0, 0, 0, 1, 1, 1], [0], [0]>} : vector<4x16x16xbf16>, vector<4x16x16xbf16>, vector<4x16x16xf32> -> vector<4x16x16xf32>
    "tpu.trace_stop"() : () -> ()
    %cst_6 = arith.constant 2.500000e-01 : f32
    %4 = vector.broadcast %cst_6 : f32 to vector<4x16x16xf32>
    %5 = arith.mulf %3, %4 : vector<4x16x16xf32>
    %c0_7 = arith.constant 0 : index
    %c0_8 = arith.constant 0 : index
    %c0_9 = arith.constant 0 : index
    %6 = vector.load %arg2[%c0_7, %c0_8, %c0_9] : memref<2x16x16xf32, #tpu.memory_space<vmem>>, vector<1x16x16xf32>
    %7 = vector.shape_cast %6 : vector<1x16x16xf32> to vector<16x16xf32>
    %8 = vector.shape_cast %7 : vector<16x16xf32> to vector<1x16x16xf32>
    %9 = vector.broadcast %8 : vector<1x16x16xf32> to vector<4x16x16xf32>
    %10 = arith.addf %5, %9 : vector<4x16x16xf32>
    %cst_10 = arith.constant dense<0xFF800000> : vector<4x16xf32>
    %11 = vector.multi_reduction <maximumf>, %10, %cst_10 [2] : vector<4x16x16xf32> to vector<4x16xf32>
    %12 = vector.shape_cast %11 : vector<4x16xf32> to vector<4x16x1xf32>
    %13 = vector.broadcast %12 : vector<4x16x1xf32> to vector<4x16x16xf32>
    %14 = arith.subf %10, %13 : vector<4x16x16xf32>
    %15 = math.exp %14 : vector<4x16x16xf32>
    %cst_11 = arith.constant dense<0.000000e+00> : vector<4x16xf32>
    %16 = vector.multi_reduction <add>, %15, %cst_11 [2] : vector<4x16x16xf32> to vector<4x16xf32>
    %17 = vector.shape_cast %16 : vector<4x16xf32> to vector<4x16x1xf32>
    %18 = tpu.reciprocal %17 {approx = true} : vector<4x16x1xf32> -> vector<4x16x1xf32>
    %19 = vector.broadcast %18 : vector<4x16x1xf32> to vector<4x16x16xf32>
    %20 = arith.mulf %15, %19 : vector<4x16x16xf32>
    %21 = arith.truncf %20 : vector<4x16x16xf32> to vector<4x16x16xbf16>
    "tpu.trace_start"() <{level = 10 : i32, message = "bqk,bkd->bqd"}> : () -> ()
    %cst_12 = arith.constant dense<0.000000e+00> : vector<4x16x16xf32>
    %22 = tpu.matmul %21, %2, %cst_12 {dimension_numbers = #tpu.dot_dimension_numbers<[2], [1], [1], [2], [0, 0, 0, 1, 1, 2], [0], [0]>} : vector<4x16x16xbf16>, vector<4x16x16xbf16>, vector<4x16x16xf32> -> vector<4x16x16xf32>
    "tpu.trace_stop"() : () -> ()
    %23 = arith.truncf %22 : vector<4x16x16xf32> to vector<4x16x16xbf16>
    %c0_13 = arith.constant 0 : index
    %c0_14 = arith.constant 0 : index
    %c0_15 = arith.constant 0 : index
    %24 = vector.load %arg3[%c0_13, %c0_14, %c0_15] : memref<4x16x32xbf16, #tpu.memory_space<vmem>>, vector<4x16x16xbf16>
    tpu.vector_store %arg3[%c0_13, %c0_14, %c0_15], %23 {strides = array<i32>} : memref<4x16x32xbf16, #tpu.memory_space<vmem>>, vector<4x16x16xbf16>,
    %c0_16 = arith.constant 0 : index
    %c0_17 = arith.constant 0 : index
    %c16 = arith.constant 16 : index
    %25 = vector.load %arg1[%c0_16, %c0_17, %c16] : memref<4x16x96xbf16, #tpu.memory_space<vmem>>, vector<4x16x16xbf16>
    %c0_18 = arith.constant 0 : index
    %c0_19 = arith.constant 0 : index
    %c48 = arith.constant 48 : index
    %26 = vector.load %arg1[%c0_18, %c0_19, %c48] : memref<4x16x96xbf16, #tpu.memory_space<vmem>>, vector<4x16x16xbf16>
    %c0_20 = arith.constant 0 : index
    %c0_21 = arith.constant 0 : index
    %c80 = arith.constant 80 : index
    %27 = vector.load %arg1[%c0_20, %c0_21, %c80] : memref<4x16x96xbf16, #tpu.memory_space<vmem>>, vector<4x16x16xbf16>
    "tpu.trace_start"() <{level = 10 : i32, message = "bqd,bkd->bqk"}> : () -> ()
    %cst_22 = arith.constant dense<0.000000e+00> : vector<4x16x16xf32>
    %28 = tpu.matmul %25, %26, %cst_22 {dimension_numbers = #tpu.dot_dimension_numbers<[2], [2], [1], [1], [0, 0, 0, 1, 1, 1], [0], [0]>} : vector<4x16x16xbf16>, vector<4x16x16xbf16>, vector<4x16x16xf32> -> vector<4x16x16xf32>
    "tpu.trace_stop"() : () -> ()
    %cst_23 = arith.constant 2.500000e-01 : f32
    %29 = vector.broadcast %cst_23 : f32 to vector<4x16x16xf32>
    %30 = arith.mulf %28, %29 : vector<4x16x16xf32>
    %c1 = arith.constant 1 : index
    %c0_24 = arith.constant 0 : index
    %c0_25 = arith.constant 0 : index
    %31 = vector.load %arg2[%c1, %c0_24, %c0_25] : memref<2x16x16xf32, #tpu.memory_space<vmem>>, vector<1x16x16xf32>
    %32 = vector.shape_cast %31 : vector<1x16x16xf32> to vector<16x16xf32>
    %33 = vector.shape_cast %32 : vector<16x16xf32> to vector<1x16x16xf32>
    %34 = vector.broadcast %33 : vector<1x16x16xf32> to vector<4x16x16xf32>
    %35 = arith.addf %30, %34 : vector<4x16x16xf32>
    %cst_26 = arith.constant dense<0xFF800000> : vector<4x16xf32>
    %36 = vector.multi_reduction <maximumf>, %35, %cst_26 [2] : vector<4x16x16xf32> to vector<4x16xf32>
    %37 = vector.shape_cast %36 : vector<4x16xf32> to vector<4x16x1xf32>
    %38 = vector.broadcast %37 : vector<4x16x1xf32> to vector<4x16x16xf32>
    %39 = arith.subf %35, %38 : vector<4x16x16xf32>
    %40 = math.exp %39 : vector<4x16x16xf32>
    %cst_27 = arith.constant dense<0.000000e+00> : vector<4x16xf32>
    %41 = vector.multi_reduction <add>, %40, %cst_27 [2] : vector<4x16x16xf32> to vector<4x16xf32>
    %42 = vector.shape_cast %41 : vector<4x16xf32> to vector<4x16x1xf32>
    %43 = tpu.reciprocal %42 {approx = true} : vector<4x16x1xf32> -> vector<4x16x1xf32>
    %44 = vector.broadcast %43 : vector<4x16x1xf32> to vector<4x16x16xf32>
    %45 = arith.mulf %40, %44 : vector<4x16x16xf32>
    %46 = arith.truncf %45 : vector<4x16x16xf32> to vector<4x16x16xbf16>
    "tpu.trace_start"() <{level = 10 : i32, message = "bqk,bkd->bqd"}> : () -> ()
    %cst_28 = arith.constant dense<0.000000e+00> : vector<4x16x16xf32>
    %47 = tpu.matmul %46, %27, %cst_28 {dimension_numbers = #tpu.dot_dimension_numbers<[2], [1], [1], [2], [0, 0, 0, 1, 1, 2], [0], [0]>} : vector<4x16x16xbf16>, vector<4x16x16xbf16>, vector<4x16x16xf32> -> vector<4x16x16xf32>
    "tpu.trace_stop"() : () -> ()
    %48 = arith.truncf %47 : vector<4x16x16xf32> to vector<4x16x16xbf16>
    %c0_29 = arith.constant 0 : index
    %c0_30 = arith.constant 0 : index
    %c16_31 = arith.constant 16 : index
    %49 = vector.load %arg3[%c0_29, %c0_30, %c16_31] : memref<4x16x32xbf16, #tpu.memory_space<vmem>>, vector<4x16x16xbf16>
    tpu.vector_store %arg3[%c0_29, %c0_30, %c16_31], %48 {strides = array<i32>} : memref<4x16x32xbf16, #tpu.memory_space<vmem>>, vector<4x16x16xbf16>,
    return
  }
  func.func @transform_0(%arg0: i32) -> (i32, i32, i32) {
    %c0_i32 = arith.constant 0 : i32
    %c0_i32_0 = arith.constant 0 : i32
    %c0_i32_1 = arith.constant 0 : i32
    return %arg0, %c0_i32, %c0_i32_0 : i32, i32, i32
  }
  func.func @transform_1(%arg0: i32) -> (i32, i32, i32) {
    %c0_i32 = arith.constant 0 : i32
    %c0_i32_0 = arith.constant 0 : i32
    %c0_i32_1 = arith.constant 0 : i32
    %c0_i32_2 = arith.constant 0 : i32
    return %c0_i32, %c0_i32_0, %c0_i32_1 : i32, i32, i32
  }
  func.func @transform_2(%arg0: i32) -> (i32, i32, i32) {
    %c0_i32 = arith.constant 0 : i32
    %c0_i32_0 = arith.constant 0 : i32
    %c0_i32_1 = arith.constant 0 : i32
    return %arg0, %c0_i32, %c0_i32_0 : i32, i32, i32
  }
}

module attributes {stable_mosaic.version = 11 : i64} {
  func.func @_linear_res_kernel(%arg0: i32, %arg1: i32, %arg2: memref<64x32xbf16, #tpu.memory_space<vmem>>, %arg3: memref<32x32xbf16, #tpu.memory_space<vmem>>, %arg4: memref<1x32xf32, #tpu.memory_space<vmem>>, %arg5: memref<64x32xbf16, #tpu.memory_space<vmem>>, %arg6: memref<64x32xbf16, #tpu.memory_space<vmem>>) attributes {dimension_semantics = [#tpu.dimension_semantics<parallel>, #tpu.dimension_semantics<parallel>], iteration_bounds = array<i64: 2, 1>, scalar_prefetch = 0 : i64, scratch_operands = 0 : i64, tpu.core_type = #tpu.core_type<tc>, window_params = [{transform_indices = @transform_0, window_bounds = array<i64: 64, 32>}, {transform_indices = @transform_1, window_bounds = array<i64: 32, 32>}, {transform_indices = @transform_2, window_bounds = array<i64: 1, 32>}, {transform_indices = @transform_3, window_bounds = array<i64: 64, 32>}, {transform_indices = @transform_4, window_bounds = array<i64: 64, 32>}]} {
    %c0 = arith.constant 0 : index
    %c0_0 = arith.constant 0 : index
    %0 = vector.load %arg2[%c0, %c0_0] : memref<64x32xbf16, #tpu.memory_space<vmem>>, vector<64x32xbf16>
    %c0_1 = arith.constant 0 : index
    %c0_2 = arith.constant 0 : index
    %1 = vector.load %arg3[%c0_1, %c0_2] : memref<32x32xbf16, #tpu.memory_space<vmem>>, vector<32x32xbf16>
    %cst = arith.constant dense<0.000000e+00> : vector<64x32xf32>
    %2 = tpu.matmul %0, %1, %cst {dimension_numbers = #tpu.dot_dimension_numbers<[1], [0], [0], [1], [0, 0, 1, 1], [], []>} : vector<64x32xbf16>, vector<32x32xbf16>, vector<64x32xf32> -> vector<64x32xf32>
    %c0_3 = arith.constant 0 : index
    %c0_4 = arith.constant 0 : index
    %3 = vector.load %arg4[%c0_3, %c0_4] : memref<1x32xf32, #tpu.memory_space<vmem>>, vector<1x32xf32>
    %4 = vector.broadcast %3 : vector<1x32xf32> to vector<64x32xf32>
    %5 = arith.addf %2, %4 : vector<64x32xf32>
    %c0_5 = arith.constant 0 : index
    %c0_6 = arith.constant 0 : index
    %6 = vector.load %arg5[%c0_5, %c0_6] : memref<64x32xbf16, #tpu.memory_space<vmem>>, vector<64x32xbf16>
    %7 = arith.extf %6 : vector<64x32xbf16> to vector<64x32xf32>
    %8 = arith.addf %5, %7 : vector<64x32xf32>
    %9 = arith.truncf %8 : vector<64x32xf32> to vector<64x32xbf16>
    %c0_7 = arith.constant 0 : index
    %c0_8 = arith.constant 0 : index
    %10 = vector.load %arg6[%c0_7, %c0_8] : memref<64x32xbf16, #tpu.memory_space<vmem>>, vector<64x32xbf16>
    tpu.vector_store %arg6[%c0_7, %c0_8], %9 {strides = array<i32>} : memref<64x32xbf16, #tpu.memory_space<vmem>>, vector<64x32xbf16>,
    return
  }
  func.func @transform_0(%arg0: i32, %arg1: i32) -> (i32, i32) {
    %c0_i32 = arith.constant 0 : i32
    %c0_i32_0 = arith.constant 0 : i32
    return %arg0, %c0_i32 : i32, i32
  }
  func.func @transform_1(%arg0: i32, %arg1: i32) -> (i32, i32) {
    %c0_i32 = arith.constant 0 : i32
    %c0_i32_0 = arith.constant 0 : i32
    return %c0_i32, %arg1 : i32, i32
  }
  func.func @transform_2(%arg0: i32, %arg1: i32) -> (i32, i32) {
    %c0_i32 = arith.constant 0 : i32
    %c0_i32_0 = arith.constant 0 : i32
    return %c0_i32, %arg1 : i32, i32
  }
  func.func @transform_3(%arg0: i32, %arg1: i32) -> (i32, i32) {
    %c0_i32 = arith.constant 0 : i32
    return %arg0, %arg1 : i32, i32
  }
  func.func @transform_4(%arg0: i32, %arg1: i32) -> (i32, i32) {
    %c0_i32 = arith.constant 0 : i32
    return %arg0, %arg1 : i32, i32
  }
}

module attributes {stable_mosaic.version = 11 : i64} {
  func.func @_ln_linear_kernel(%arg0: i32, %arg1: i32, %arg2: memref<64x32xbf16, #tpu.memory_space<vmem>>, %arg3: memref<1x32xf32, #tpu.memory_space<vmem>>, %arg4: memref<1x32xf32, #tpu.memory_space<vmem>>, %arg5: memref<32x128xbf16, #tpu.memory_space<vmem>>, %arg6: memref<1x128xf32, #tpu.memory_space<vmem>>, %arg7: memref<64x128xbf16, #tpu.memory_space<vmem>>) attributes {dimension_semantics = [#tpu.dimension_semantics<parallel>, #tpu.dimension_semantics<parallel>], iteration_bounds = array<i64: 2, 1>, scalar_prefetch = 0 : i64, scratch_operands = 0 : i64, tpu.core_type = #tpu.core_type<tc>, window_params = [{transform_indices = @transform_0, window_bounds = array<i64: 64, 32>}, {pipeline_mode = #tpu.pipeline_mode<synchronous>, transform_indices = @transform_1, window_bounds = array<i64: 1, 32>}, {pipeline_mode = #tpu.pipeline_mode<synchronous>, transform_indices = @transform_2, window_bounds = array<i64: 1, 32>}, {transform_indices = @transform_3, window_bounds = array<i64: 32, 128>}, {transform_indices = @transform_4, window_bounds = array<i64: 1, 128>}, {transform_indices = @transform_5, window_bounds = array<i64: 64, 128>}]} {
    %c0 = arith.constant 0 : index
    %c0_0 = arith.constant 0 : index
    %0 = vector.load %arg2[%c0, %c0_0] : memref<64x32xbf16, #tpu.memory_space<vmem>>, vector<64x32xbf16>
    %1 = arith.extf %0 : vector<64x32xbf16> to vector<64x32xf32>
    %cst = arith.constant dense<0.000000e+00> : vector<64xf32>
    %2 = vector.multi_reduction <add>, %1, %cst [1] : vector<64x32xf32> to vector<64xf32>
    %3 = vector.shape_cast %2 : vector<64xf32> to vector<64x1xf32>
    %cst_1 = arith.constant 3.200000e+01 : f32
    %4 = vector.broadcast %cst_1 : f32 to vector<64x1xf32>
    %5 = arith.divf %3, %4 : vector<64x1xf32>
    %6 = vector.broadcast %5 : vector<64x1xf32> to vector<64x32xf32>
    %7 = arith.subf %1, %6 : vector<64x32xf32>
    %8 = arith.mulf %7, %7 : vector<64x32xf32>
    %cst_2 = arith.constant dense<0.000000e+00> : vector<64xf32>
    %9 = vector.multi_reduction <add>, %8, %cst_2 [1] : vector<64x32xf32> to vector<64xf32>
    %10 = vector.shape_cast %9 : vector<64xf32> to vector<64x1xf32>
    %cst_3 = arith.constant 3.200000e+01 : f32
    %11 = vector.broadcast %cst_3 : f32 to vector<64x1xf32>
    %12 = arith.divf %10, %11 : vector<64x1xf32>
    %13 = vector.broadcast %5 : vector<64x1xf32> to vector<64x32xf32>
    %14 = arith.subf %1, %13 : vector<64x32xf32>
    %cst_4 = arith.constant 9.99999974E-6 : f32
    %15 = vector.broadcast %cst_4 : f32 to vector<64x1xf32>
    %16 = arith.addf %12, %15 : vector<64x1xf32>
    %17 = math.rsqrt %16 : vector<64x1xf32>
    %18 = vector.broadcast %17 : vector<64x1xf32> to vector<64x32xf32>
    %19 = arith.mulf %14, %18 : vector<64x32xf32>
    %c0_5 = arith.constant 0 : index
    %c0_6 = arith.constant 0 : index
    %20 = vector.load %arg3[%c0_5, %c0_6] : memref<1x32xf32, #tpu.memory_space<vmem>>, vector<1x32xf32>
    %21 = vector.broadcast %20 : vector<1x32xf32> to vector<64x32xf32>
    %22 = arith.mulf %19, %21 : vector<64x32xf32>
    %c0_7 = arith.constant 0 : index
    %c0_8 = arith.constant 0 : index
    %23 = vector.load %arg4[%c0_7, %c0_8] : memref<1x32xf32, #tpu.memory_space<vmem>>, vector<1x32xf32>
    %24 = vector.broadcast %23 : vector<1x32xf32> to vector<64x32xf32>
    %25 = arith.addf %22, %24 : vector<64x32xf32>
    %26 = arith.truncf %25 : vector<64x32xf32> to vector<64x32xbf16>
    %c0_9 = arith.constant 0 : index
    %c0_10 = arith.constant 0 : index
    %27 = vector.load %arg5[%c0_9, %c0_10] : memref<32x128xbf16, #tpu.memory_space<vmem>>, vector<32x128xbf16>
    %cst_11 = arith.constant dense<0.000000e+00> : vector<64x128xf32>
    %28 = tpu.matmul %26, %27, %cst_11 {dimension_numbers = #tpu.dot_dimension_numbers<[1], [0], [0], [1], [0, 0, 1, 1], [], []>} : vector<64x32xbf16>, vector<32x128xbf16>, vector<64x128xf32> -> vector<64x128xf32>
    %c0_12 = arith.constant 0 : index
    %c0_13 = arith.constant 0 : index
    %29 = vector.load %arg6[%c0_12, %c0_13] : memref<1x128xf32, #tpu.memory_space<vmem>>, vector<1x128xf32>
    %30 = vector.broadcast %29 : vector<1x128xf32> to vector<64x128xf32>
    %31 = arith.addf %28, %30 : vector<64x128xf32>
    %cst_14 = arith.constant 5.000000e-01 : f32
    %32 = vector.broadcast %cst_14 : f32 to vector<64x128xf32>
    %33 = arith.mulf %32, %31 : vector<64x128xf32>
    %cst_15 = arith.constant 4.471500e-02 : f32
    %34 = vector.broadcast %cst_15 : f32 to vector<64x128xf32>
    %35 = arith.mulf %34, %31 : vector<64x128xf32>
    %36 = arith.mulf %35, %31 : vector<64x128xf32>
    %37 = arith.mulf %36, %31 : vector<64x128xf32>
    %38 = arith.addf %31, %37 : vector<64x128xf32>
    %cst_16 = arith.constant 0.797884583 : f32
    %39 = vector.broadcast %cst_16 : f32 to vector<64x128xf32>
    %40 = arith.mulf %39, %38 : vector<64x128xf32>
    %41 = math.tanh %40 : vector<64x128xf32>
    %cst_17 = arith.constant 1.000000e+00 : f32
    %42 = vector.broadcast %cst_17 : f32 to vector<64x128xf32>
    %43 = arith.addf %42, %41 : vector<64x128xf32>
    %44 = arith.mulf %33, %43 : vector<64x128xf32>
    %45 = arith.truncf %44 : vector<64x128xf32> to vector<64x128xbf16>
    %c0_18 = arith.constant 0 : index
    %c0_19 = arith.constant 0 : index
    %46 = vector.load %arg7[%c0_18, %c0_19] : memref<64x128xbf16, #tpu.memory_space<vmem>>, vector<64x128xbf16>
    tpu.vector_store %arg7[%c0_18, %c0_19], %45 {strides = array<i32>} : memref<64x128xbf16, #tpu.memory_space<vmem>>, vector<64x128xbf16>,
    return
  }
  func.func @transform_0(%arg0: i32, %arg1: i32) -> (i32, i32) {
    %c0_i32 = arith.constant 0 : i32
    %c0_i32_0 = arith.constant 0 : i32
    return %arg0, %c0_i32 : i32, i32
  }
  func.func @transform_1(%arg0: i32, %arg1: i32) -> (i32, i32) {
    %c0_i32 = arith.constant 0 : i32
    %c0_i32_0 = arith.constant 0 : i32
    %c0_i32_1 = arith.constant 0 : i32
    return %c0_i32, %c0_i32_0 : i32, i32
  }
  func.func @transform_2(%arg0: i32, %arg1: i32) -> (i32, i32) {
    %c0_i32 = arith.constant 0 : i32
    %c0_i32_0 = arith.constant 0 : i32
    %c0_i32_1 = arith.constant 0 : i32
    return %c0_i32, %c0_i32_0 : i32, i32
  }
  func.func @transform_3(%arg0: i32, %arg1: i32) -> (i32, i32) {
    %c0_i32 = arith.constant 0 : i32
    %c0_i32_0 = arith.constant 0 : i32
    return %c0_i32, %arg1 : i32, i32
  }
  func.func @transform_4(%arg0: i32, %arg1: i32) -> (i32, i32) {
    %c0_i32 = arith.constant 0 : i32
    %c0_i32_0 = arith.constant 0 : i32
    return %c0_i32, %arg1 : i32, i32
  }
  func.func @transform_5(%arg0: i32, %arg1: i32) -> (i32, i32) {
    %c0_i32 = arith.constant 0 : i32
    return %arg0, %arg1 : i32, i32
  }
}

module attributes {stable_mosaic.version = 11 : i64} {
  func.func @_linear_res_kernel(%arg0: i32, %arg1: i32, %arg2: memref<64x128xbf16, #tpu.memory_space<vmem>>, %arg3: memref<128x32xbf16, #tpu.memory_space<vmem>>, %arg4: memref<1x32xf32, #tpu.memory_space<vmem>>, %arg5: memref<64x32xbf16, #tpu.memory_space<vmem>>, %arg6: memref<64x32xbf16, #tpu.memory_space<vmem>>) attributes {dimension_semantics = [#tpu.dimension_semantics<parallel>, #tpu.dimension_semantics<parallel>], iteration_bounds = array<i64: 2, 1>, scalar_prefetch = 0 : i64, scratch_operands = 0 : i64, tpu.core_type = #tpu.core_type<tc>, window_params = [{transform_indices = @transform_0, window_bounds = array<i64: 64, 128>}, {transform_indices = @transform_1, window_bounds = array<i64: 128, 32>}, {transform_indices = @transform_2, window_bounds = array<i64: 1, 32>}, {transform_indices = @transform_3, window_bounds = array<i64: 64, 32>}, {transform_indices = @transform_4, window_bounds = array<i64: 64, 32>}]} {
    %c0 = arith.constant 0 : index
    %c0_0 = arith.constant 0 : index
    %0 = vector.load %arg2[%c0, %c0_0] : memref<64x128xbf16, #tpu.memory_space<vmem>>, vector<64x128xbf16>
    %c0_1 = arith.constant 0 : index
    %c0_2 = arith.constant 0 : index
    %1 = vector.load %arg3[%c0_1, %c0_2] : memref<128x32xbf16, #tpu.memory_space<vmem>>, vector<128x32xbf16>
    %cst = arith.constant dense<0.000000e+00> : vector<64x32xf32>
    %2 = tpu.matmul %0, %1, %cst {dimension_numbers = #tpu.dot_dimension_numbers<[1], [0], [0], [1], [0, 0, 1, 1], [], []>} : vector<64x128xbf16>, vector<128x32xbf16>, vector<64x32xf32> -> vector<64x32xf32>
    %c0_3 = arith.constant 0 : index
    %c0_4 = arith.constant 0 : index
    %3 = vector.load %arg4[%c0_3, %c0_4] : memref<1x32xf32, #tpu.memory_space<vmem>>, vector<1x32xf32>
    %4 = vector.broadcast %3 : vector<1x32xf32> to vector<64x32xf32>
    %5 = arith.addf %2, %4 : vector<64x32xf32>
    %c0_5 = arith.constant 0 : index
    %c0_6 = arith.constant 0 : index
    %6 = vector.load %arg5[%c0_5, %c0_6] : memref<64x32xbf16, #tpu.memory_space<vmem>>, vector<64x32xbf16>
    %7 = arith.extf %6 : vector<64x32xbf16> to vector<64x32xf32>
    %8 = arith.addf %5, %7 : vector<64x32xf32>
    %9 = arith.truncf %8 : vector<64x32xf32> to vector<64x32xbf16>
    %c0_7 = arith.constant 0 : index
    %c0_8 = arith.constant 0 : index
    %10 = vector.load %arg6[%c0_7, %c0_8] : memref<64x32xbf16, #tpu.memory_space<vmem>>, vector<64x32xbf16>
    tpu.vector_store %arg6[%c0_7, %c0_8], %9 {strides = array<i32>} : memref<64x32xbf16, #tpu.memory_space<vmem>>, vector<64x32xbf16>,
    return
  }
  func.func @transform_0(%arg0: i32, %arg1: i32) -> (i32, i32) {
    %c0_i32 = arith.constant 0 : i32
    %c0_i32_0 = arith.constant 0 : i32
    return %arg0, %c0_i32 : i32, i32
  }
  func.func @transform_1(%arg0: i32, %arg1: i32) -> (i32, i32) {
    %c0_i32 = arith.constant 0 : i32
    %c0_i32_0 = arith.constant 0 : i32
    return %c0_i32, %arg1 : i32, i32
  }
  func.func @transform_2(%arg0: i32, %arg1: i32) -> (i32, i32) {
    %c0_i32 = arith.constant 0 : i32
    %c0_i32_0 = arith.constant 0 : i32
    return %c0_i32, %arg1 : i32, i32
  }
  func.func @transform_3(%arg0: i32, %arg1: i32) -> (i32, i32) {
    %c0_i32 = arith.constant 0 : i32
    return %arg0, %arg1 : i32, i32
  }
  func.func @transform_4(%arg0: i32, %arg1: i32) -> (i32, i32) {
    %c0_i32 = arith.constant 0 : i32
    return %arg0, %arg1 : i32, i32
  }
}

module attributes {stable_mosaic.version = 11 : i64} {
  func.func @_window_attn_kernel(%arg0: i32, %arg1: memref<4x16x96xbf16, #tpu.memory_space<vmem>>, %arg2: memref<2x16x16xf32, #tpu.memory_space<vmem>>, %arg3: memref<4x16x16xf32, #tpu.memory_space<vmem>>, %arg4: memref<4x16x32xbf16, #tpu.memory_space<vmem>>) attributes {dimension_semantics = [#tpu.dimension_semantics<parallel>], iteration_bounds = array<i64: 2>, scalar_prefetch = 0 : i64, scratch_operands = 0 : i64, tpu.core_type = #tpu.core_type<tc>, window_params = [{transform_indices = @transform_0, window_bounds = array<i64: 4, 16, 96>}, {pipeline_mode = #tpu.pipeline_mode<synchronous>, transform_indices = @transform_1, window_bounds = array<i64: 2, 16, 16>}, {pipeline_mode = #tpu.pipeline_mode<synchronous>, transform_indices = @transform_2, window_bounds = array<i64: 4, 16, 16>}, {transform_indices = @transform_3, window_bounds = array<i64: 4, 16, 32>}]} {
    %c0 = arith.constant 0 : index
    %c0_0 = arith.constant 0 : index
    %c0_1 = arith.constant 0 : index
    %0 = vector.load %arg3[%c0, %c0_0, %c0_1] : memref<4x16x16xf32, #tpu.memory_space<vmem>>, vector<4x16x16xf32>
    %c0_2 = arith.constant 0 : index
    %c0_3 = arith.constant 0 : index
    %c0_4 = arith.constant 0 : index
    %1 = vector.load %arg1[%c0_2, %c0_3, %c0_4] : memref<4x16x96xbf16, #tpu.memory_space<vmem>>, vector<4x16x16xbf16>
    %c0_5 = arith.constant 0 : index
    %c0_6 = arith.constant 0 : index
    %c32 = arith.constant 32 : index
    %2 = vector.load %arg1[%c0_5, %c0_6, %c32] : memref<4x16x96xbf16, #tpu.memory_space<vmem>>, vector<4x16x16xbf16>
    %c0_7 = arith.constant 0 : index
    %c0_8 = arith.constant 0 : index
    %c64 = arith.constant 64 : index
    %3 = vector.load %arg1[%c0_7, %c0_8, %c64] : memref<4x16x96xbf16, #tpu.memory_space<vmem>>, vector<4x16x16xbf16>
    "tpu.trace_start"() <{level = 10 : i32, message = "bqd,bkd->bqk"}> : () -> ()
    %cst = arith.constant dense<0.000000e+00> : vector<4x16x16xf32>
    %4 = tpu.matmul %1, %2, %cst {dimension_numbers = #tpu.dot_dimension_numbers<[2], [2], [1], [1], [0, 0, 0, 1, 1, 1], [0], [0]>} : vector<4x16x16xbf16>, vector<4x16x16xbf16>, vector<4x16x16xf32> -> vector<4x16x16xf32>
    "tpu.trace_stop"() : () -> ()
    %cst_9 = arith.constant 2.500000e-01 : f32
    %5 = vector.broadcast %cst_9 : f32 to vector<4x16x16xf32>
    %6 = arith.mulf %4, %5 : vector<4x16x16xf32>
    %c0_10 = arith.constant 0 : index
    %c0_11 = arith.constant 0 : index
    %c0_12 = arith.constant 0 : index
    %7 = vector.load %arg2[%c0_10, %c0_11, %c0_12] : memref<2x16x16xf32, #tpu.memory_space<vmem>>, vector<1x16x16xf32>
    %8 = vector.shape_cast %7 : vector<1x16x16xf32> to vector<16x16xf32>
    %9 = vector.shape_cast %8 : vector<16x16xf32> to vector<1x16x16xf32>
    %10 = vector.broadcast %9 : vector<1x16x16xf32> to vector<4x16x16xf32>
    %11 = arith.addf %6, %10 : vector<4x16x16xf32>
    %12 = arith.addf %11, %0 : vector<4x16x16xf32>
    %cst_13 = arith.constant dense<0xFF800000> : vector<4x16xf32>
    %13 = vector.multi_reduction <maximumf>, %12, %cst_13 [2] : vector<4x16x16xf32> to vector<4x16xf32>
    %14 = vector.shape_cast %13 : vector<4x16xf32> to vector<4x16x1xf32>
    %15 = vector.broadcast %14 : vector<4x16x1xf32> to vector<4x16x16xf32>
    %16 = arith.subf %12, %15 : vector<4x16x16xf32>
    %17 = math.exp %16 : vector<4x16x16xf32>
    %cst_14 = arith.constant dense<0.000000e+00> : vector<4x16xf32>
    %18 = vector.multi_reduction <add>, %17, %cst_14 [2] : vector<4x16x16xf32> to vector<4x16xf32>
    %19 = vector.shape_cast %18 : vector<4x16xf32> to vector<4x16x1xf32>
    %20 = tpu.reciprocal %19 {approx = true} : vector<4x16x1xf32> -> vector<4x16x1xf32>
    %21 = vector.broadcast %20 : vector<4x16x1xf32> to vector<4x16x16xf32>
    %22 = arith.mulf %17, %21 : vector<4x16x16xf32>
    %23 = arith.truncf %22 : vector<4x16x16xf32> to vector<4x16x16xbf16>
    "tpu.trace_start"() <{level = 10 : i32, message = "bqk,bkd->bqd"}> : () -> ()
    %cst_15 = arith.constant dense<0.000000e+00> : vector<4x16x16xf32>
    %24 = tpu.matmul %23, %3, %cst_15 {dimension_numbers = #tpu.dot_dimension_numbers<[2], [1], [1], [2], [0, 0, 0, 1, 1, 2], [0], [0]>} : vector<4x16x16xbf16>, vector<4x16x16xbf16>, vector<4x16x16xf32> -> vector<4x16x16xf32>
    "tpu.trace_stop"() : () -> ()
    %25 = arith.truncf %24 : vector<4x16x16xf32> to vector<4x16x16xbf16>
    %c0_16 = arith.constant 0 : index
    %c0_17 = arith.constant 0 : index
    %c0_18 = arith.constant 0 : index
    %26 = vector.load %arg4[%c0_16, %c0_17, %c0_18] : memref<4x16x32xbf16, #tpu.memory_space<vmem>>, vector<4x16x16xbf16>
    tpu.vector_store %arg4[%c0_16, %c0_17, %c0_18], %25 {strides = array<i32>} : memref<4x16x32xbf16, #tpu.memory_space<vmem>>, vector<4x16x16xbf16>,
    %c0_19 = arith.constant 0 : index
    %c0_20 = arith.constant 0 : index
    %c16 = arith.constant 16 : index
    %27 = vector.load %arg1[%c0_19, %c0_20, %c16] : memref<4x16x96xbf16, #tpu.memory_space<vmem>>, vector<4x16x16xbf16>
    %c0_21 = arith.constant 0 : index
    %c0_22 = arith.constant 0 : index
    %c48 = arith.constant 48 : index
    %28 = vector.load %arg1[%c0_21, %c0_22, %c48] : memref<4x16x96xbf16, #tpu.memory_space<vmem>>, vector<4x16x16xbf16>
    %c0_23 = arith.constant 0 : index
    %c0_24 = arith.constant 0 : index
    %c80 = arith.constant 80 : index
    %29 = vector.load %arg1[%c0_23, %c0_24, %c80] : memref<4x16x96xbf16, #tpu.memory_space<vmem>>, vector<4x16x16xbf16>
    "tpu.trace_start"() <{level = 10 : i32, message = "bqd,bkd->bqk"}> : () -> ()
    %cst_25 = arith.constant dense<0.000000e+00> : vector<4x16x16xf32>
    %30 = tpu.matmul %27, %28, %cst_25 {dimension_numbers = #tpu.dot_dimension_numbers<[2], [2], [1], [1], [0, 0, 0, 1, 1, 1], [0], [0]>} : vector<4x16x16xbf16>, vector<4x16x16xbf16>, vector<4x16x16xf32> -> vector<4x16x16xf32>
    "tpu.trace_stop"() : () -> ()
    %cst_26 = arith.constant 2.500000e-01 : f32
    %31 = vector.broadcast %cst_26 : f32 to vector<4x16x16xf32>
    %32 = arith.mulf %30, %31 : vector<4x16x16xf32>
    %c1 = arith.constant 1 : index
    %c0_27 = arith.constant 0 : index
    %c0_28 = arith.constant 0 : index
    %33 = vector.load %arg2[%c1, %c0_27, %c0_28] : memref<2x16x16xf32, #tpu.memory_space<vmem>>, vector<1x16x16xf32>
    %34 = vector.shape_cast %33 : vector<1x16x16xf32> to vector<16x16xf32>
    %35 = vector.shape_cast %34 : vector<16x16xf32> to vector<1x16x16xf32>
    %36 = vector.broadcast %35 : vector<1x16x16xf32> to vector<4x16x16xf32>
    %37 = arith.addf %32, %36 : vector<4x16x16xf32>
    %38 = arith.addf %37, %0 : vector<4x16x16xf32>
    %cst_29 = arith.constant dense<0xFF800000> : vector<4x16xf32>
    %39 = vector.multi_reduction <maximumf>, %38, %cst_29 [2] : vector<4x16x16xf32> to vector<4x16xf32>
    %40 = vector.shape_cast %39 : vector<4x16xf32> to vector<4x16x1xf32>
    %41 = vector.broadcast %40 : vector<4x16x1xf32> to vector<4x16x16xf32>
    %42 = arith.subf %38, %41 : vector<4x16x16xf32>
    %43 = math.exp %42 : vector<4x16x16xf32>
    %cst_30 = arith.constant dense<0.000000e+00> : vector<4x16xf32>
    %44 = vector.multi_reduction <add>, %43, %cst_30 [2] : vector<4x16x16xf32> to vector<4x16xf32>
    %45 = vector.shape_cast %44 : vector<4x16xf32> to vector<4x16x1xf32>
    %46 = tpu.reciprocal %45 {approx = true} : vector<4x16x1xf32> -> vector<4x16x1xf32>
    %47 = vector.broadcast %46 : vector<4x16x1xf32> to vector<4x16x16xf32>
    %48 = arith.mulf %43, %47 : vector<4x16x16xf32>
    %49 = arith.truncf %48 : vector<4x16x16xf32> to vector<4x16x16xbf16>
    "tpu.trace_start"() <{level = 10 : i32, message = "bqk,bkd->bqd"}> : () -> ()
    %cst_31 = arith.constant dense<0.000000e+00> : vector<4x16x16xf32>
    %50 = tpu.matmul %49, %29, %cst_31 {dimension_numbers = #tpu.dot_dimension_numbers<[2], [1], [1], [2], [0, 0, 0, 1, 1, 2], [0], [0]>} : vector<4x16x16xbf16>, vector<4x16x16xbf16>, vector<4x16x16xf32> -> vector<4x16x16xf32>
    "tpu.trace_stop"() : () -> ()
    %51 = arith.truncf %50 : vector<4x16x16xf32> to vector<4x16x16xbf16>
    %c0_32 = arith.constant 0 : index
    %c0_33 = arith.constant 0 : index
    %c16_34 = arith.constant 16 : index
    %52 = vector.load %arg4[%c0_32, %c0_33, %c16_34] : memref<4x16x32xbf16, #tpu.memory_space<vmem>>, vector<4x16x16xbf16>
    tpu.vector_store %arg4[%c0_32, %c0_33, %c16_34], %51 {strides = array<i32>} : memref<4x16x32xbf16, #tpu.memory_space<vmem>>, vector<4x16x16xbf16>,
    return
  }
  func.func @transform_0(%arg0: i32) -> (i32, i32, i32) {
    %c0_i32 = arith.constant 0 : i32
    %c0_i32_0 = arith.constant 0 : i32
    %c0_i32_1 = arith.constant 0 : i32
    return %arg0, %c0_i32, %c0_i32_0 : i32, i32, i32
  }
  func.func @transform_1(%arg0: i32) -> (i32, i32, i32) {
    %c0_i32 = arith.constant 0 : i32
    %c0_i32_0 = arith.constant 0 : i32
    %c0_i32_1 = arith.constant 0 : i32
    %c0_i32_2 = arith.constant 0 : i32
    return %c0_i32, %c0_i32_0, %c0_i32_1 : i32, i32, i32
  }
  func.func @transform_2(%arg0: i32) -> (i32, i32, i32) {
    %c0_i32 = arith.constant 0 : i32
    %c0_i32_0 = arith.constant 0 : i32
    %c0_i32_1 = arith.constant 0 : i32
    %c0_i32_2 = arith.constant 0 : i32
    return %c0_i32, %c0_i32_0, %c0_i32_1 : i32, i32, i32
  }
  func.func @transform_3(%arg0: i32) -> (i32, i32, i32) {
    %c0_i32 = arith.constant 0 : i32
    %c0_i32_0 = arith.constant 0 : i32
    %c0_i32_1 = arith.constant 0 : i32
    return %arg0, %c0_i32, %c0_i32_0 : i32, i32, i32
  }
}

module attributes {stable_mosaic.version = 11 : i64} {
  func.func @_ln_linear_kernel(%arg0: i32, %arg1: i32, %arg2: memref<16x64xbf16, #tpu.memory_space<vmem>>, %arg3: memref<1x64xf32, #tpu.memory_space<vmem>>, %arg4: memref<1x64xf32, #tpu.memory_space<vmem>>, %arg5: memref<64x192xbf16, #tpu.memory_space<vmem>>, %arg6: memref<1x192xf32, #tpu.memory_space<vmem>>, %arg7: memref<16x192xbf16, #tpu.memory_space<vmem>>) attributes {dimension_semantics = [#tpu.dimension_semantics<parallel>, #tpu.dimension_semantics<parallel>], iteration_bounds = array<i64: 2, 1>, scalar_prefetch = 0 : i64, scratch_operands = 0 : i64, tpu.core_type = #tpu.core_type<tc>, window_params = [{transform_indices = @transform_0, window_bounds = array<i64: 16, 64>}, {pipeline_mode = #tpu.pipeline_mode<synchronous>, transform_indices = @transform_1, window_bounds = array<i64: 1, 64>}, {pipeline_mode = #tpu.pipeline_mode<synchronous>, transform_indices = @transform_2, window_bounds = array<i64: 1, 64>}, {transform_indices = @transform_3, window_bounds = array<i64: 64, 192>}, {transform_indices = @transform_4, window_bounds = array<i64: 1, 192>}, {transform_indices = @transform_5, window_bounds = array<i64: 16, 192>}]} {
    %c0 = arith.constant 0 : index
    %c0_0 = arith.constant 0 : index
    %0 = vector.load %arg2[%c0, %c0_0] : memref<16x64xbf16, #tpu.memory_space<vmem>>, vector<16x64xbf16>
    %1 = arith.extf %0 : vector<16x64xbf16> to vector<16x64xf32>
    %cst = arith.constant dense<0.000000e+00> : vector<16xf32>
    %2 = vector.multi_reduction <add>, %1, %cst [1] : vector<16x64xf32> to vector<16xf32>
    %3 = vector.shape_cast %2 : vector<16xf32> to vector<16x1xf32>
    %cst_1 = arith.constant 6.400000e+01 : f32
    %4 = vector.broadcast %cst_1 : f32 to vector<16x1xf32>
    %5 = arith.divf %3, %4 : vector<16x1xf32>
    %6 = vector.broadcast %5 : vector<16x1xf32> to vector<16x64xf32>
    %7 = arith.subf %1, %6 : vector<16x64xf32>
    %8 = arith.mulf %7, %7 : vector<16x64xf32>
    %cst_2 = arith.constant dense<0.000000e+00> : vector<16xf32>
    %9 = vector.multi_reduction <add>, %8, %cst_2 [1] : vector<16x64xf32> to vector<16xf32>
    %10 = vector.shape_cast %9 : vector<16xf32> to vector<16x1xf32>
    %cst_3 = arith.constant 6.400000e+01 : f32
    %11 = vector.broadcast %cst_3 : f32 to vector<16x1xf32>
    %12 = arith.divf %10, %11 : vector<16x1xf32>
    %13 = vector.broadcast %5 : vector<16x1xf32> to vector<16x64xf32>
    %14 = arith.subf %1, %13 : vector<16x64xf32>
    %cst_4 = arith.constant 9.99999974E-6 : f32
    %15 = vector.broadcast %cst_4 : f32 to vector<16x1xf32>
    %16 = arith.addf %12, %15 : vector<16x1xf32>
    %17 = math.rsqrt %16 : vector<16x1xf32>
    %18 = vector.broadcast %17 : vector<16x1xf32> to vector<16x64xf32>
    %19 = arith.mulf %14, %18 : vector<16x64xf32>
    %c0_5 = arith.constant 0 : index
    %c0_6 = arith.constant 0 : index
    %20 = vector.load %arg3[%c0_5, %c0_6] : memref<1x64xf32, #tpu.memory_space<vmem>>, vector<1x64xf32>
    %21 = vector.broadcast %20 : vector<1x64xf32> to vector<16x64xf32>
    %22 = arith.mulf %19, %21 : vector<16x64xf32>
    %c0_7 = arith.constant 0 : index
    %c0_8 = arith.constant 0 : index
    %23 = vector.load %arg4[%c0_7, %c0_8] : memref<1x64xf32, #tpu.memory_space<vmem>>, vector<1x64xf32>
    %24 = vector.broadcast %23 : vector<1x64xf32> to vector<16x64xf32>
    %25 = arith.addf %22, %24 : vector<16x64xf32>
    %26 = arith.truncf %25 : vector<16x64xf32> to vector<16x64xbf16>
    %c0_9 = arith.constant 0 : index
    %c0_10 = arith.constant 0 : index
    %27 = vector.load %arg5[%c0_9, %c0_10] : memref<64x192xbf16, #tpu.memory_space<vmem>>, vector<64x192xbf16>
    %cst_11 = arith.constant dense<0.000000e+00> : vector<16x192xf32>
    %28 = tpu.matmul %26, %27, %cst_11 {dimension_numbers = #tpu.dot_dimension_numbers<[1], [0], [0], [1], [0, 0, 1, 1], [], []>} : vector<16x64xbf16>, vector<64x192xbf16>, vector<16x192xf32> -> vector<16x192xf32>
    %c0_12 = arith.constant 0 : index
    %c0_13 = arith.constant 0 : index
    %29 = vector.load %arg6[%c0_12, %c0_13] : memref<1x192xf32, #tpu.memory_space<vmem>>, vector<1x192xf32>
    %30 = vector.broadcast %29 : vector<1x192xf32> to vector<16x192xf32>
    %31 = arith.addf %28, %30 : vector<16x192xf32>
    %32 = arith.truncf %31 : vector<16x192xf32> to vector<16x192xbf16>
    %c0_14 = arith.constant 0 : index
    %c0_15 = arith.constant 0 : index
    %33 = vector.load %arg7[%c0_14, %c0_15] : memref<16x192xbf16, #tpu.memory_space<vmem>>, vector<16x192xbf16>
    tpu.vector_store %arg7[%c0_14, %c0_15], %32 {strides = array<i32>} : memref<16x192xbf16, #tpu.memory_space<vmem>>, vector<16x192xbf16>,
    return
  }
  func.func @transform_0(%arg0: i32, %arg1: i32) -> (i32, i32) {
    %c0_i32 = arith.constant 0 : i32
    %c0_i32_0 = arith.constant 0 : i32
    return %arg0, %c0_i32 : i32, i32
  }
  func.func @transform_1(%arg0: i32, %arg1: i32) -> (i32, i32) {
    %c0_i32 = arith.constant 0 : i32
    %c0_i32_0 = arith.constant 0 : i32
    %c0_i32_1 = arith.constant 0 : i32
    return %c0_i32, %c0_i32_0 : i32, i32
  }
  func.func @transform_2(%arg0: i32, %arg1: i32) -> (i32, i32) {
    %c0_i32 = arith.constant 0 : i32
    %c0_i32_0 = arith.constant 0 : i32
    %c0_i32_1 = arith.constant 0 : i32
    return %c0_i32, %c0_i32_0 : i32, i32
  }
  func.func @transform_3(%arg0: i32, %arg1: i32) -> (i32, i32) {
    %c0_i32 = arith.constant 0 : i32
    %c0_i32_0 = arith.constant 0 : i32
    return %c0_i32, %arg1 : i32, i32
  }
  func.func @transform_4(%arg0: i32, %arg1: i32) -> (i32, i32) {
    %c0_i32 = arith.constant 0 : i32
    %c0_i32_0 = arith.constant 0 : i32
    return %c0_i32, %arg1 : i32, i32
  }
  func.func @transform_5(%arg0: i32, %arg1: i32) -> (i32, i32) {
    %c0_i32 = arith.constant 0 : i32
    return %arg0, %arg1 : i32, i32
  }
}

module attributes {stable_mosaic.version = 11 : i64} {
  func.func @_ln_linear_kernel(%arg0: i32, %arg1: i32, %arg2: memref<16x128xbf16, #tpu.memory_space<vmem>>, %arg3: memref<1x128xf32, #tpu.memory_space<vmem>>, %arg4: memref<1x128xf32, #tpu.memory_space<vmem>>, %arg5: memref<128x64xbf16, #tpu.memory_space<vmem>>, %arg6: memref<1x64xf32, #tpu.memory_space<vmem>>, %arg7: memref<16x64xbf16, #tpu.memory_space<vmem>>) attributes {dimension_semantics = [#tpu.dimension_semantics<parallel>, #tpu.dimension_semantics<parallel>], iteration_bounds = array<i64: 2, 1>, scalar_prefetch = 0 : i64, scratch_operands = 0 : i64, tpu.core_type = #tpu.core_type<tc>, window_params = [{transform_indices = @transform_0, window_bounds = array<i64: 16, 128>}, {pipeline_mode = #tpu.pipeline_mode<synchronous>, transform_indices = @transform_1, window_bounds = array<i64: 1, 128>}, {pipeline_mode = #tpu.pipeline_mode<synchronous>, transform_indices = @transform_2, window_bounds = array<i64: 1, 128>}, {transform_indices = @transform_3, window_bounds = array<i64: 128, 64>}, {transform_indices = @transform_4, window_bounds = array<i64: 1, 64>}, {transform_indices = @transform_5, window_bounds = array<i64: 16, 64>}]} {
    %c0 = arith.constant 0 : index
    %c0_0 = arith.constant 0 : index
    %0 = vector.load %arg2[%c0, %c0_0] : memref<16x128xbf16, #tpu.memory_space<vmem>>, vector<16x128xbf16>
    %1 = arith.extf %0 : vector<16x128xbf16> to vector<16x128xf32>
    %cst = arith.constant dense<0.000000e+00> : vector<16xf32>
    %2 = vector.multi_reduction <add>, %1, %cst [1] : vector<16x128xf32> to vector<16xf32>
    %3 = vector.shape_cast %2 : vector<16xf32> to vector<16x1xf32>
    %cst_1 = arith.constant 1.280000e+02 : f32
    %4 = vector.broadcast %cst_1 : f32 to vector<16x1xf32>
    %5 = arith.divf %3, %4 : vector<16x1xf32>
    %6 = vector.broadcast %5 : vector<16x1xf32> to vector<16x128xf32>
    %7 = arith.subf %1, %6 : vector<16x128xf32>
    %8 = arith.mulf %7, %7 : vector<16x128xf32>
    %cst_2 = arith.constant dense<0.000000e+00> : vector<16xf32>
    %9 = vector.multi_reduction <add>, %8, %cst_2 [1] : vector<16x128xf32> to vector<16xf32>
    %10 = vector.shape_cast %9 : vector<16xf32> to vector<16x1xf32>
    %cst_3 = arith.constant 1.280000e+02 : f32
    %11 = vector.broadcast %cst_3 : f32 to vector<16x1xf32>
    %12 = arith.divf %10, %11 : vector<16x1xf32>
    %13 = vector.broadcast %5 : vector<16x1xf32> to vector<16x128xf32>
    %14 = arith.subf %1, %13 : vector<16x128xf32>
    %cst_4 = arith.constant 9.99999974E-6 : f32
    %15 = vector.broadcast %cst_4 : f32 to vector<16x1xf32>
    %16 = arith.addf %12, %15 : vector<16x1xf32>
    %17 = math.rsqrt %16 : vector<16x1xf32>
    %18 = vector.broadcast %17 : vector<16x1xf32> to vector<16x128xf32>
    %19 = arith.mulf %14, %18 : vector<16x128xf32>
    %c0_5 = arith.constant 0 : index
    %c0_6 = arith.constant 0 : index
    %20 = vector.load %arg3[%c0_5, %c0_6] : memref<1x128xf32, #tpu.memory_space<vmem>>, vector<1x128xf32>
    %21 = vector.broadcast %20 : vector<1x128xf32> to vector<16x128xf32>
    %22 = arith.mulf %19, %21 : vector<16x128xf32>
    %c0_7 = arith.constant 0 : index
    %c0_8 = arith.constant 0 : index
    %23 = vector.load %arg4[%c0_7, %c0_8] : memref<1x128xf32, #tpu.memory_space<vmem>>, vector<1x128xf32>
    %24 = vector.broadcast %23 : vector<1x128xf32> to vector<16x128xf32>
    %25 = arith.addf %22, %24 : vector<16x128xf32>
    %26 = arith.truncf %25 : vector<16x128xf32> to vector<16x128xbf16>
    %c0_9 = arith.constant 0 : index
    %c0_10 = arith.constant 0 : index
    %27 = vector.load %arg5[%c0_9, %c0_10] : memref<128x64xbf16, #tpu.memory_space<vmem>>, vector<128x64xbf16>
    %cst_11 = arith.constant dense<0.000000e+00> : vector<16x64xf32>
    %28 = tpu.matmul %26, %27, %cst_11 {dimension_numbers = #tpu.dot_dimension_numbers<[1], [0], [0], [1], [0, 0, 1, 1], [], []>} : vector<16x128xbf16>, vector<128x64xbf16>, vector<16x64xf32> -> vector<16x64xf32>
    %c0_12 = arith.constant 0 : index
    %c0_13 = arith.constant 0 : index
    %29 = vector.load %arg6[%c0_12, %c0_13] : memref<1x64xf32, #tpu.memory_space<vmem>>, vector<1x64xf32>
    %30 = vector.broadcast %29 : vector<1x64xf32> to vector<16x64xf32>
    %31 = arith.addf %28, %30 : vector<16x64xf32>
    %32 = arith.truncf %31 : vector<16x64xf32> to vector<16x64xbf16>
    %c0_14 = arith.constant 0 : index
    %c0_15 = arith.constant 0 : index
    %33 = vector.load %arg7[%c0_14, %c0_15] : memref<16x64xbf16, #tpu.memory_space<vmem>>, vector<16x64xbf16>
    tpu.vector_store %arg7[%c0_14, %c0_15], %32 {strides = array<i32>} : memref<16x64xbf16, #tpu.memory_space<vmem>>, vector<16x64xbf16>,
    return
  }
  func.func @transform_0(%arg0: i32, %arg1: i32) -> (i32, i32) {
    %c0_i32 = arith.constant 0 : i32
    %c0_i32_0 = arith.constant 0 : i32
    return %arg0, %c0_i32 : i32, i32
  }
  func.func @transform_1(%arg0: i32, %arg1: i32) -> (i32, i32) {
    %c0_i32 = arith.constant 0 : i32
    %c0_i32_0 = arith.constant 0 : i32
    %c0_i32_1 = arith.constant 0 : i32
    return %c0_i32, %c0_i32_0 : i32, i32
  }
  func.func @transform_2(%arg0: i32, %arg1: i32) -> (i32, i32) {
    %c0_i32 = arith.constant 0 : i32
    %c0_i32_0 = arith.constant 0 : i32
    %c0_i32_1 = arith.constant 0 : i32
    return %c0_i32, %c0_i32_0 : i32, i32
  }
  func.func @transform_3(%arg0: i32, %arg1: i32) -> (i32, i32) {
    %c0_i32 = arith.constant 0 : i32
    %c0_i32_0 = arith.constant 0 : i32
    return %c0_i32, %arg1 : i32, i32
  }
  func.func @transform_4(%arg0: i32, %arg1: i32) -> (i32, i32) {
    %c0_i32 = arith.constant 0 : i32
    %c0_i32_0 = arith.constant 0 : i32
    return %c0_i32, %arg1 : i32, i32
  }
  func.func @transform_5(%arg0: i32, %arg1: i32) -> (i32, i32) {
    %c0_i32 = arith.constant 0 : i32
    return %arg0, %arg1 : i32, i32
  }
}

module attributes {stable_mosaic.version = 11 : i64} {
  func.func @_window_attn_kernel(%arg0: i32, %arg1: memref<1x16x192xbf16, #tpu.memory_space<vmem>>, %arg2: memref<4x16x16xf32, #tpu.memory_space<vmem>>, %arg3: memref<1x16x64xbf16, #tpu.memory_space<vmem>>) attributes {dimension_semantics = [#tpu.dimension_semantics<parallel>], iteration_bounds = array<i64: 2>, scalar_prefetch = 0 : i64, scratch_operands = 0 : i64, tpu.core_type = #tpu.core_type<tc>, window_params = [{transform_indices = @transform_0, window_bounds = array<i64: 1, 16, 192>}, {pipeline_mode = #tpu.pipeline_mode<synchronous>, transform_indices = @transform_1, window_bounds = array<i64: 4, 16, 16>}, {transform_indices = @transform_2, window_bounds = array<i64: 1, 16, 64>}]} {
    %c0 = arith.constant 0 : index
    %c0_0 = arith.constant 0 : index
    %c0_1 = arith.constant 0 : index
    %0 = vector.load %arg1[%c0, %c0_0, %c0_1] : memref<1x16x192xbf16, #tpu.memory_space<vmem>>, vector<1x16x16xbf16>
    %c0_2 = arith.constant 0 : index
    %c0_3 = arith.constant 0 : index
    %c64 = arith.constant 64 : index
    %1 = vector.load %arg1[%c0_2, %c0_3, %c64] : memref<1x16x192xbf16, #tpu.memory_space<vmem>>, vector<1x16x16xbf16>
    %c0_4 = arith.constant 0 : index
    %c0_5 = arith.constant 0 : index
    %c128 = arith.constant 128 : index
    %2 = vector.load %arg1[%c0_4, %c0_5, %c128] : memref<1x16x192xbf16, #tpu.memory_space<vmem>>, vector<1x16x16xbf16>
    "tpu.trace_start"() <{level = 10 : i32, message = "bqd,bkd->bqk"}> : () -> ()
    %cst = arith.constant dense<0.000000e+00> : vector<1x16x16xf32>
    %3 = tpu.matmul %0, %1, %cst {dimension_numbers = #tpu.dot_dimension_numbers<[2], [2], [1], [1], [0, 0, 0, 1, 1, 1], [0], [0]>} : vector<1x16x16xbf16>, vector<1x16x16xbf16>, vector<1x16x16xf32> -> vector<1x16x16xf32>
    "tpu.trace_stop"() : () -> ()
    %cst_6 = arith.constant 2.500000e-01 : f32
    %4 = vector.broadcast %cst_6 : f32 to vector<1x16x16xf32>
    %5 = arith.mulf %3, %4 : vector<1x16x16xf32>
    %c0_7 = arith.constant 0 : index
    %c0_8 = arith.constant 0 : index
    %c0_9 = arith.constant 0 : index
    %6 = vector.load %arg2[%c0_7, %c0_8, %c0_9] : memref<4x16x16xf32, #tpu.memory_space<vmem>>, vector<1x16x16xf32>
    %7 = vector.shape_cast %6 : vector<1x16x16xf32> to vector<16x16xf32>
    %8 = vector.shape_cast %7 : vector<16x16xf32> to vector<1x16x16xf32>
    %9 = arith.addf %5, %8 : vector<1x16x16xf32>
    %cst_10 = arith.constant dense<0xFF800000> : vector<1x16xf32>
    %10 = vector.multi_reduction <maximumf>, %9, %cst_10 [2] : vector<1x16x16xf32> to vector<1x16xf32>
    %11 = vector.shape_cast %10 : vector<1x16xf32> to vector<1x16x1xf32>
    %12 = vector.broadcast %11 : vector<1x16x1xf32> to vector<1x16x16xf32>
    %13 = arith.subf %9, %12 : vector<1x16x16xf32>
    %14 = math.exp %13 : vector<1x16x16xf32>
    %cst_11 = arith.constant dense<0.000000e+00> : vector<1x16xf32>
    %15 = vector.multi_reduction <add>, %14, %cst_11 [2] : vector<1x16x16xf32> to vector<1x16xf32>
    %16 = vector.shape_cast %15 : vector<1x16xf32> to vector<1x16x1xf32>
    %17 = tpu.reciprocal %16 {approx = true} : vector<1x16x1xf32> -> vector<1x16x1xf32>
    %18 = vector.broadcast %17 : vector<1x16x1xf32> to vector<1x16x16xf32>
    %19 = arith.mulf %14, %18 : vector<1x16x16xf32>
    %20 = arith.truncf %19 : vector<1x16x16xf32> to vector<1x16x16xbf16>
    "tpu.trace_start"() <{level = 10 : i32, message = "bqk,bkd->bqd"}> : () -> ()
    %cst_12 = arith.constant dense<0.000000e+00> : vector<1x16x16xf32>
    %21 = tpu.matmul %20, %2, %cst_12 {dimension_numbers = #tpu.dot_dimension_numbers<[2], [1], [1], [2], [0, 0, 0, 1, 1, 2], [0], [0]>} : vector<1x16x16xbf16>, vector<1x16x16xbf16>, vector<1x16x16xf32> -> vector<1x16x16xf32>
    "tpu.trace_stop"() : () -> ()
    %22 = arith.truncf %21 : vector<1x16x16xf32> to vector<1x16x16xbf16>
    %c0_13 = arith.constant 0 : index
    %c0_14 = arith.constant 0 : index
    %c0_15 = arith.constant 0 : index
    %23 = vector.load %arg3[%c0_13, %c0_14, %c0_15] : memref<1x16x64xbf16, #tpu.memory_space<vmem>>, vector<1x16x16xbf16>
    tpu.vector_store %arg3[%c0_13, %c0_14, %c0_15], %22 {strides = array<i32>} : memref<1x16x64xbf16, #tpu.memory_space<vmem>>, vector<1x16x16xbf16>,
    %c0_16 = arith.constant 0 : index
    %c0_17 = arith.constant 0 : index
    %c16 = arith.constant 16 : index
    %24 = vector.load %arg1[%c0_16, %c0_17, %c16] : memref<1x16x192xbf16, #tpu.memory_space<vmem>>, vector<1x16x16xbf16>
    %c0_18 = arith.constant 0 : index
    %c0_19 = arith.constant 0 : index
    %c80 = arith.constant 80 : index
    %25 = vector.load %arg1[%c0_18, %c0_19, %c80] : memref<1x16x192xbf16, #tpu.memory_space<vmem>>, vector<1x16x16xbf16>
    %c0_20 = arith.constant 0 : index
    %c0_21 = arith.constant 0 : index
    %c144 = arith.constant 144 : index
    %26 = vector.load %arg1[%c0_20, %c0_21, %c144] : memref<1x16x192xbf16, #tpu.memory_space<vmem>>, vector<1x16x16xbf16>
    "tpu.trace_start"() <{level = 10 : i32, message = "bqd,bkd->bqk"}> : () -> ()
    %cst_22 = arith.constant dense<0.000000e+00> : vector<1x16x16xf32>
    %27 = tpu.matmul %24, %25, %cst_22 {dimension_numbers = #tpu.dot_dimension_numbers<[2], [2], [1], [1], [0, 0, 0, 1, 1, 1], [0], [0]>} : vector<1x16x16xbf16>, vector<1x16x16xbf16>, vector<1x16x16xf32> -> vector<1x16x16xf32>
    "tpu.trace_stop"() : () -> ()
    %cst_23 = arith.constant 2.500000e-01 : f32
    %28 = vector.broadcast %cst_23 : f32 to vector<1x16x16xf32>
    %29 = arith.mulf %27, %28 : vector<1x16x16xf32>
    %c1 = arith.constant 1 : index
    %c0_24 = arith.constant 0 : index
    %c0_25 = arith.constant 0 : index
    %30 = vector.load %arg2[%c1, %c0_24, %c0_25] : memref<4x16x16xf32, #tpu.memory_space<vmem>>, vector<1x16x16xf32>
    %31 = vector.shape_cast %30 : vector<1x16x16xf32> to vector<16x16xf32>
    %32 = vector.shape_cast %31 : vector<16x16xf32> to vector<1x16x16xf32>
    %33 = arith.addf %29, %32 : vector<1x16x16xf32>
    %cst_26 = arith.constant dense<0xFF800000> : vector<1x16xf32>
    %34 = vector.multi_reduction <maximumf>, %33, %cst_26 [2] : vector<1x16x16xf32> to vector<1x16xf32>
    %35 = vector.shape_cast %34 : vector<1x16xf32> to vector<1x16x1xf32>
    %36 = vector.broadcast %35 : vector<1x16x1xf32> to vector<1x16x16xf32>
    %37 = arith.subf %33, %36 : vector<1x16x16xf32>
    %38 = math.exp %37 : vector<1x16x16xf32>
    %cst_27 = arith.constant dense<0.000000e+00> : vector<1x16xf32>
    %39 = vector.multi_reduction <add>, %38, %cst_27 [2] : vector<1x16x16xf32> to vector<1x16xf32>
    %40 = vector.shape_cast %39 : vector<1x16xf32> to vector<1x16x1xf32>
    %41 = tpu.reciprocal %40 {approx = true} : vector<1x16x1xf32> -> vector<1x16x1xf32>
    %42 = vector.broadcast %41 : vector<1x16x1xf32> to vector<1x16x16xf32>
    %43 = arith.mulf %38, %42 : vector<1x16x16xf32>
    %44 = arith.truncf %43 : vector<1x16x16xf32> to vector<1x16x16xbf16>
    "tpu.trace_start"() <{level = 10 : i32, message = "bqk,bkd->bqd"}> : () -> ()
    %cst_28 = arith.constant dense<0.000000e+00> : vector<1x16x16xf32>
    %45 = tpu.matmul %44, %26, %cst_28 {dimension_numbers = #tpu.dot_dimension_numbers<[2], [1], [1], [2], [0, 0, 0, 1, 1, 2], [0], [0]>} : vector<1x16x16xbf16>, vector<1x16x16xbf16>, vector<1x16x16xf32> -> vector<1x16x16xf32>
    "tpu.trace_stop"() : () -> ()
    %46 = arith.truncf %45 : vector<1x16x16xf32> to vector<1x16x16xbf16>
    %c0_29 = arith.constant 0 : index
    %c0_30 = arith.constant 0 : index
    %c16_31 = arith.constant 16 : index
    %47 = vector.load %arg3[%c0_29, %c0_30, %c16_31] : memref<1x16x64xbf16, #tpu.memory_space<vmem>>, vector<1x16x16xbf16>
    tpu.vector_store %arg3[%c0_29, %c0_30, %c16_31], %46 {strides = array<i32>} : memref<1x16x64xbf16, #tpu.memory_space<vmem>>, vector<1x16x16xbf16>,
    %c0_32 = arith.constant 0 : index
    %c0_33 = arith.constant 0 : index
    %c32 = arith.constant 32 : index
    %48 = vector.load %arg1[%c0_32, %c0_33, %c32] : memref<1x16x192xbf16, #tpu.memory_space<vmem>>, vector<1x16x16xbf16>
    %c0_34 = arith.constant 0 : index
    %c0_35 = arith.constant 0 : index
    %c96 = arith.constant 96 : index
    %49 = vector.load %arg1[%c0_34, %c0_35, %c96] : memref<1x16x192xbf16, #tpu.memory_space<vmem>>, vector<1x16x16xbf16>
    %c0_36 = arith.constant 0 : index
    %c0_37 = arith.constant 0 : index
    %c160 = arith.constant 160 : index
    %50 = vector.load %arg1[%c0_36, %c0_37, %c160] : memref<1x16x192xbf16, #tpu.memory_space<vmem>>, vector<1x16x16xbf16>
    "tpu.trace_start"() <{level = 10 : i32, message = "bqd,bkd->bqk"}> : () -> ()
    %cst_38 = arith.constant dense<0.000000e+00> : vector<1x16x16xf32>
    %51 = tpu.matmul %48, %49, %cst_38 {dimension_numbers = #tpu.dot_dimension_numbers<[2], [2], [1], [1], [0, 0, 0, 1, 1, 1], [0], [0]>} : vector<1x16x16xbf16>, vector<1x16x16xbf16>, vector<1x16x16xf32> -> vector<1x16x16xf32>
    "tpu.trace_stop"() : () -> ()
    %cst_39 = arith.constant 2.500000e-01 : f32
    %52 = vector.broadcast %cst_39 : f32 to vector<1x16x16xf32>
    %53 = arith.mulf %51, %52 : vector<1x16x16xf32>
    %c2 = arith.constant 2 : index
    %c0_40 = arith.constant 0 : index
    %c0_41 = arith.constant 0 : index
    %54 = vector.load %arg2[%c2, %c0_40, %c0_41] : memref<4x16x16xf32, #tpu.memory_space<vmem>>, vector<1x16x16xf32>
    %55 = vector.shape_cast %54 : vector<1x16x16xf32> to vector<16x16xf32>
    %56 = vector.shape_cast %55 : vector<16x16xf32> to vector<1x16x16xf32>
    %57 = arith.addf %53, %56 : vector<1x16x16xf32>
    %cst_42 = arith.constant dense<0xFF800000> : vector<1x16xf32>
    %58 = vector.multi_reduction <maximumf>, %57, %cst_42 [2] : vector<1x16x16xf32> to vector<1x16xf32>
    %59 = vector.shape_cast %58 : vector<1x16xf32> to vector<1x16x1xf32>
    %60 = vector.broadcast %59 : vector<1x16x1xf32> to vector<1x16x16xf32>
    %61 = arith.subf %57, %60 : vector<1x16x16xf32>
    %62 = math.exp %61 : vector<1x16x16xf32>
    %cst_43 = arith.constant dense<0.000000e+00> : vector<1x16xf32>
    %63 = vector.multi_reduction <add>, %62, %cst_43 [2] : vector<1x16x16xf32> to vector<1x16xf32>
    %64 = vector.shape_cast %63 : vector<1x16xf32> to vector<1x16x1xf32>
    %65 = tpu.reciprocal %64 {approx = true} : vector<1x16x1xf32> -> vector<1x16x1xf32>
    %66 = vector.broadcast %65 : vector<1x16x1xf32> to vector<1x16x16xf32>
    %67 = arith.mulf %62, %66 : vector<1x16x16xf32>
    %68 = arith.truncf %67 : vector<1x16x16xf32> to vector<1x16x16xbf16>
    "tpu.trace_start"() <{level = 10 : i32, message = "bqk,bkd->bqd"}> : () -> ()
    %cst_44 = arith.constant dense<0.000000e+00> : vector<1x16x16xf32>
    %69 = tpu.matmul %68, %50, %cst_44 {dimension_numbers = #tpu.dot_dimension_numbers<[2], [1], [1], [2], [0, 0, 0, 1, 1, 2], [0], [0]>} : vector<1x16x16xbf16>, vector<1x16x16xbf16>, vector<1x16x16xf32> -> vector<1x16x16xf32>
    "tpu.trace_stop"() : () -> ()
    %70 = arith.truncf %69 : vector<1x16x16xf32> to vector<1x16x16xbf16>
    %c0_45 = arith.constant 0 : index
    %c0_46 = arith.constant 0 : index
    %c32_47 = arith.constant 32 : index
    %71 = vector.load %arg3[%c0_45, %c0_46, %c32_47] : memref<1x16x64xbf16, #tpu.memory_space<vmem>>, vector<1x16x16xbf16>
    tpu.vector_store %arg3[%c0_45, %c0_46, %c32_47], %70 {strides = array<i32>} : memref<1x16x64xbf16, #tpu.memory_space<vmem>>, vector<1x16x16xbf16>,
    %c0_48 = arith.constant 0 : index
    %c0_49 = arith.constant 0 : index
    %c48 = arith.constant 48 : index
    %72 = vector.load %arg1[%c0_48, %c0_49, %c48] : memref<1x16x192xbf16, #tpu.memory_space<vmem>>, vector<1x16x16xbf16>
    %c0_50 = arith.constant 0 : index
    %c0_51 = arith.constant 0 : index
    %c112 = arith.constant 112 : index
    %73 = vector.load %arg1[%c0_50, %c0_51, %c112] : memref<1x16x192xbf16, #tpu.memory_space<vmem>>, vector<1x16x16xbf16>
    %c0_52 = arith.constant 0 : index
    %c0_53 = arith.constant 0 : index
    %c176 = arith.constant 176 : index
    %74 = vector.load %arg1[%c0_52, %c0_53, %c176] : memref<1x16x192xbf16, #tpu.memory_space<vmem>>, vector<1x16x16xbf16>
    "tpu.trace_start"() <{level = 10 : i32, message = "bqd,bkd->bqk"}> : () -> ()
    %cst_54 = arith.constant dense<0.000000e+00> : vector<1x16x16xf32>
    %75 = tpu.matmul %72, %73, %cst_54 {dimension_numbers = #tpu.dot_dimension_numbers<[2], [2], [1], [1], [0, 0, 0, 1, 1, 1], [0], [0]>} : vector<1x16x16xbf16>, vector<1x16x16xbf16>, vector<1x16x16xf32> -> vector<1x16x16xf32>
    "tpu.trace_stop"() : () -> ()
    %cst_55 = arith.constant 2.500000e-01 : f32
    %76 = vector.broadcast %cst_55 : f32 to vector<1x16x16xf32>
    %77 = arith.mulf %75, %76 : vector<1x16x16xf32>
    %c3 = arith.constant 3 : index
    %c0_56 = arith.constant 0 : index
    %c0_57 = arith.constant 0 : index
    %78 = vector.load %arg2[%c3, %c0_56, %c0_57] : memref<4x16x16xf32, #tpu.memory_space<vmem>>, vector<1x16x16xf32>
    %79 = vector.shape_cast %78 : vector<1x16x16xf32> to vector<16x16xf32>
    %80 = vector.shape_cast %79 : vector<16x16xf32> to vector<1x16x16xf32>
    %81 = arith.addf %77, %80 : vector<1x16x16xf32>
    %cst_58 = arith.constant dense<0xFF800000> : vector<1x16xf32>
    %82 = vector.multi_reduction <maximumf>, %81, %cst_58 [2] : vector<1x16x16xf32> to vector<1x16xf32>
    %83 = vector.shape_cast %82 : vector<1x16xf32> to vector<1x16x1xf32>
    %84 = vector.broadcast %83 : vector<1x16x1xf32> to vector<1x16x16xf32>
    %85 = arith.subf %81, %84 : vector<1x16x16xf32>
    %86 = math.exp %85 : vector<1x16x16xf32>
    %cst_59 = arith.constant dense<0.000000e+00> : vector<1x16xf32>
    %87 = vector.multi_reduction <add>, %86, %cst_59 [2] : vector<1x16x16xf32> to vector<1x16xf32>
    %88 = vector.shape_cast %87 : vector<1x16xf32> to vector<1x16x1xf32>
    %89 = tpu.reciprocal %88 {approx = true} : vector<1x16x1xf32> -> vector<1x16x1xf32>
    %90 = vector.broadcast %89 : vector<1x16x1xf32> to vector<1x16x16xf32>
    %91 = arith.mulf %86, %90 : vector<1x16x16xf32>
    %92 = arith.truncf %91 : vector<1x16x16xf32> to vector<1x16x16xbf16>
    "tpu.trace_start"() <{level = 10 : i32, message = "bqk,bkd->bqd"}> : () -> ()
    %cst_60 = arith.constant dense<0.000000e+00> : vector<1x16x16xf32>
    %93 = tpu.matmul %92, %74, %cst_60 {dimension_numbers = #tpu.dot_dimension_numbers<[2], [1], [1], [2], [0, 0, 0, 1, 1, 2], [0], [0]>} : vector<1x16x16xbf16>, vector<1x16x16xbf16>, vector<1x16x16xf32> -> vector<1x16x16xf32>
    "tpu.trace_stop"() : () -> ()
    %94 = arith.truncf %93 : vector<1x16x16xf32> to vector<1x16x16xbf16>
    %c0_61 = arith.constant 0 : index
    %c0_62 = arith.constant 0 : index
    %c48_63 = arith.constant 48 : index
    %95 = vector.load %arg3[%c0_61, %c0_62, %c48_63] : memref<1x16x64xbf16, #tpu.memory_space<vmem>>, vector<1x16x16xbf16>
    tpu.vector_store %arg3[%c0_61, %c0_62, %c48_63], %94 {strides = array<i32>} : memref<1x16x64xbf16, #tpu.memory_space<vmem>>, vector<1x16x16xbf16>,
    return
  }
  func.func @transform_0(%arg0: i32) -> (i32, i32, i32) {
    %c0_i32 = arith.constant 0 : i32
    %c0_i32_0 = arith.constant 0 : i32
    %c0_i32_1 = arith.constant 0 : i32
    return %arg0, %c0_i32, %c0_i32_0 : i32, i32, i32
  }
  func.func @transform_1(%arg0: i32) -> (i32, i32, i32) {
    %c0_i32 = arith.constant 0 : i32
    %c0_i32_0 = arith.constant 0 : i32
    %c0_i32_1 = arith.constant 0 : i32
    %c0_i32_2 = arith.constant 0 : i32
    return %c0_i32, %c0_i32_0, %c0_i32_1 : i32, i32, i32
  }
  func.func @transform_2(%arg0: i32) -> (i32, i32, i32) {
    %c0_i32 = arith.constant 0 : i32
    %c0_i32_0 = arith.constant 0 : i32
    %c0_i32_1 = arith.constant 0 : i32
    return %arg0, %c0_i32, %c0_i32_0 : i32, i32, i32
  }
}

module attributes {stable_mosaic.version = 11 : i64} {
  func.func @_linear_res_kernel(%arg0: i32, %arg1: i32, %arg2: memref<16x64xbf16, #tpu.memory_space<vmem>>, %arg3: memref<64x64xbf16, #tpu.memory_space<vmem>>, %arg4: memref<1x64xf32, #tpu.memory_space<vmem>>, %arg5: memref<16x64xbf16, #tpu.memory_space<vmem>>, %arg6: memref<16x64xbf16, #tpu.memory_space<vmem>>) attributes {dimension_semantics = [#tpu.dimension_semantics<parallel>, #tpu.dimension_semantics<parallel>], iteration_bounds = array<i64: 2, 1>, scalar_prefetch = 0 : i64, scratch_operands = 0 : i64, tpu.core_type = #tpu.core_type<tc>, window_params = [{transform_indices = @transform_0, window_bounds = array<i64: 16, 64>}, {transform_indices = @transform_1, window_bounds = array<i64: 64, 64>}, {transform_indices = @transform_2, window_bounds = array<i64: 1, 64>}, {transform_indices = @transform_3, window_bounds = array<i64: 16, 64>}, {transform_indices = @transform_4, window_bounds = array<i64: 16, 64>}]} {
    %c0 = arith.constant 0 : index
    %c0_0 = arith.constant 0 : index
    %0 = vector.load %arg2[%c0, %c0_0] : memref<16x64xbf16, #tpu.memory_space<vmem>>, vector<16x64xbf16>
    %c0_1 = arith.constant 0 : index
    %c0_2 = arith.constant 0 : index
    %1 = vector.load %arg3[%c0_1, %c0_2] : memref<64x64xbf16, #tpu.memory_space<vmem>>, vector<64x64xbf16>
    %cst = arith.constant dense<0.000000e+00> : vector<16x64xf32>
    %2 = tpu.matmul %0, %1, %cst {dimension_numbers = #tpu.dot_dimension_numbers<[1], [0], [0], [1], [0, 0, 1, 1], [], []>} : vector<16x64xbf16>, vector<64x64xbf16>, vector<16x64xf32> -> vector<16x64xf32>
    %c0_3 = arith.constant 0 : index
    %c0_4 = arith.constant 0 : index
    %3 = vector.load %arg4[%c0_3, %c0_4] : memref<1x64xf32, #tpu.memory_space<vmem>>, vector<1x64xf32>
    %4 = vector.broadcast %3 : vector<1x64xf32> to vector<16x64xf32>
    %5 = arith.addf %2, %4 : vector<16x64xf32>
    %c0_5 = arith.constant 0 : index
    %c0_6 = arith.constant 0 : index
    %6 = vector.load %arg5[%c0_5, %c0_6] : memref<16x64xbf16, #tpu.memory_space<vmem>>, vector<16x64xbf16>
    %7 = arith.extf %6 : vector<16x64xbf16> to vector<16x64xf32>
    %8 = arith.addf %5, %7 : vector<16x64xf32>
    %9 = arith.truncf %8 : vector<16x64xf32> to vector<16x64xbf16>
    %c0_7 = arith.constant 0 : index
    %c0_8 = arith.constant 0 : index
    %10 = vector.load %arg6[%c0_7, %c0_8] : memref<16x64xbf16, #tpu.memory_space<vmem>>, vector<16x64xbf16>
    tpu.vector_store %arg6[%c0_7, %c0_8], %9 {strides = array<i32>} : memref<16x64xbf16, #tpu.memory_space<vmem>>, vector<16x64xbf16>,
    return
  }
  func.func @transform_0(%arg0: i32, %arg1: i32) -> (i32, i32) {
    %c0_i32 = arith.constant 0 : i32
    %c0_i32_0 = arith.constant 0 : i32
    return %arg0, %c0_i32 : i32, i32
  }
  func.func @transform_1(%arg0: i32, %arg1: i32) -> (i32, i32) {
    %c0_i32 = arith.constant 0 : i32
    %c0_i32_0 = arith.constant 0 : i32
    return %c0_i32, %arg1 : i32, i32
  }
  func.func @transform_2(%arg0: i32, %arg1: i32) -> (i32, i32) {
    %c0_i32 = arith.constant 0 : i32
    %c0_i32_0 = arith.constant 0 : i32
    return %c0_i32, %arg1 : i32, i32
  }
  func.func @transform_3(%arg0: i32, %arg1: i32) -> (i32, i32) {
    %c0_i32 = arith.constant 0 : i32
    return %arg0, %arg1 : i32, i32
  }
  func.func @transform_4(%arg0: i32, %arg1: i32) -> (i32, i32) {
    %c0_i32 = arith.constant 0 : i32
    return %arg0, %arg1 : i32, i32
  }
}

module attributes {stable_mosaic.version = 11 : i64} {
  func.func @_ln_linear_kernel(%arg0: i32, %arg1: i32, %arg2: memref<16x64xbf16, #tpu.memory_space<vmem>>, %arg3: memref<1x64xf32, #tpu.memory_space<vmem>>, %arg4: memref<1x64xf32, #tpu.memory_space<vmem>>, %arg5: memref<64x256xbf16, #tpu.memory_space<vmem>>, %arg6: memref<1x256xf32, #tpu.memory_space<vmem>>, %arg7: memref<16x256xbf16, #tpu.memory_space<vmem>>) attributes {dimension_semantics = [#tpu.dimension_semantics<parallel>, #tpu.dimension_semantics<parallel>], iteration_bounds = array<i64: 2, 1>, scalar_prefetch = 0 : i64, scratch_operands = 0 : i64, tpu.core_type = #tpu.core_type<tc>, window_params = [{transform_indices = @transform_0, window_bounds = array<i64: 16, 64>}, {pipeline_mode = #tpu.pipeline_mode<synchronous>, transform_indices = @transform_1, window_bounds = array<i64: 1, 64>}, {pipeline_mode = #tpu.pipeline_mode<synchronous>, transform_indices = @transform_2, window_bounds = array<i64: 1, 64>}, {transform_indices = @transform_3, window_bounds = array<i64: 64, 256>}, {transform_indices = @transform_4, window_bounds = array<i64: 1, 256>}, {transform_indices = @transform_5, window_bounds = array<i64: 16, 256>}]} {
    %c0 = arith.constant 0 : index
    %c0_0 = arith.constant 0 : index
    %0 = vector.load %arg2[%c0, %c0_0] : memref<16x64xbf16, #tpu.memory_space<vmem>>, vector<16x64xbf16>
    %1 = arith.extf %0 : vector<16x64xbf16> to vector<16x64xf32>
    %cst = arith.constant dense<0.000000e+00> : vector<16xf32>
    %2 = vector.multi_reduction <add>, %1, %cst [1] : vector<16x64xf32> to vector<16xf32>
    %3 = vector.shape_cast %2 : vector<16xf32> to vector<16x1xf32>
    %cst_1 = arith.constant 6.400000e+01 : f32
    %4 = vector.broadcast %cst_1 : f32 to vector<16x1xf32>
    %5 = arith.divf %3, %4 : vector<16x1xf32>
    %6 = vector.broadcast %5 : vector<16x1xf32> to vector<16x64xf32>
    %7 = arith.subf %1, %6 : vector<16x64xf32>
    %8 = arith.mulf %7, %7 : vector<16x64xf32>
    %cst_2 = arith.constant dense<0.000000e+00> : vector<16xf32>
    %9 = vector.multi_reduction <add>, %8, %cst_2 [1] : vector<16x64xf32> to vector<16xf32>
    %10 = vector.shape_cast %9 : vector<16xf32> to vector<16x1xf32>
    %cst_3 = arith.constant 6.400000e+01 : f32
    %11 = vector.broadcast %cst_3 : f32 to vector<16x1xf32>
    %12 = arith.divf %10, %11 : vector<16x1xf32>
    %13 = vector.broadcast %5 : vector<16x1xf32> to vector<16x64xf32>
    %14 = arith.subf %1, %13 : vector<16x64xf32>
    %cst_4 = arith.constant 9.99999974E-6 : f32
    %15 = vector.broadcast %cst_4 : f32 to vector<16x1xf32>
    %16 = arith.addf %12, %15 : vector<16x1xf32>
    %17 = math.rsqrt %16 : vector<16x1xf32>
    %18 = vector.broadcast %17 : vector<16x1xf32> to vector<16x64xf32>
    %19 = arith.mulf %14, %18 : vector<16x64xf32>
    %c0_5 = arith.constant 0 : index
    %c0_6 = arith.constant 0 : index
    %20 = vector.load %arg3[%c0_5, %c0_6] : memref<1x64xf32, #tpu.memory_space<vmem>>, vector<1x64xf32>
    %21 = vector.broadcast %20 : vector<1x64xf32> to vector<16x64xf32>
    %22 = arith.mulf %19, %21 : vector<16x64xf32>
    %c0_7 = arith.constant 0 : index
    %c0_8 = arith.constant 0 : index
    %23 = vector.load %arg4[%c0_7, %c0_8] : memref<1x64xf32, #tpu.memory_space<vmem>>, vector<1x64xf32>
    %24 = vector.broadcast %23 : vector<1x64xf32> to vector<16x64xf32>
    %25 = arith.addf %22, %24 : vector<16x64xf32>
    %26 = arith.truncf %25 : vector<16x64xf32> to vector<16x64xbf16>
    %c0_9 = arith.constant 0 : index
    %c0_10 = arith.constant 0 : index
    %27 = vector.load %arg5[%c0_9, %c0_10] : memref<64x256xbf16, #tpu.memory_space<vmem>>, vector<64x256xbf16>
    %cst_11 = arith.constant dense<0.000000e+00> : vector<16x256xf32>
    %28 = tpu.matmul %26, %27, %cst_11 {dimension_numbers = #tpu.dot_dimension_numbers<[1], [0], [0], [1], [0, 0, 1, 1], [], []>} : vector<16x64xbf16>, vector<64x256xbf16>, vector<16x256xf32> -> vector<16x256xf32>
    %c0_12 = arith.constant 0 : index
    %c0_13 = arith.constant 0 : index
    %29 = vector.load %arg6[%c0_12, %c0_13] : memref<1x256xf32, #tpu.memory_space<vmem>>, vector<1x256xf32>
    %30 = vector.broadcast %29 : vector<1x256xf32> to vector<16x256xf32>
    %31 = arith.addf %28, %30 : vector<16x256xf32>
    %cst_14 = arith.constant 5.000000e-01 : f32
    %32 = vector.broadcast %cst_14 : f32 to vector<16x256xf32>
    %33 = arith.mulf %32, %31 : vector<16x256xf32>
    %cst_15 = arith.constant 4.471500e-02 : f32
    %34 = vector.broadcast %cst_15 : f32 to vector<16x256xf32>
    %35 = arith.mulf %34, %31 : vector<16x256xf32>
    %36 = arith.mulf %35, %31 : vector<16x256xf32>
    %37 = arith.mulf %36, %31 : vector<16x256xf32>
    %38 = arith.addf %31, %37 : vector<16x256xf32>
    %cst_16 = arith.constant 0.797884583 : f32
    %39 = vector.broadcast %cst_16 : f32 to vector<16x256xf32>
    %40 = arith.mulf %39, %38 : vector<16x256xf32>
    %41 = math.tanh %40 : vector<16x256xf32>
    %cst_17 = arith.constant 1.000000e+00 : f32
    %42 = vector.broadcast %cst_17 : f32 to vector<16x256xf32>
    %43 = arith.addf %42, %41 : vector<16x256xf32>
    %44 = arith.mulf %33, %43 : vector<16x256xf32>
    %45 = arith.truncf %44 : vector<16x256xf32> to vector<16x256xbf16>
    %c0_18 = arith.constant 0 : index
    %c0_19 = arith.constant 0 : index
    %46 = vector.load %arg7[%c0_18, %c0_19] : memref<16x256xbf16, #tpu.memory_space<vmem>>, vector<16x256xbf16>
    tpu.vector_store %arg7[%c0_18, %c0_19], %45 {strides = array<i32>} : memref<16x256xbf16, #tpu.memory_space<vmem>>, vector<16x256xbf16>,
    return
  }
  func.func @transform_0(%arg0: i32, %arg1: i32) -> (i32, i32) {
    %c0_i32 = arith.constant 0 : i32
    %c0_i32_0 = arith.constant 0 : i32
    return %arg0, %c0_i32 : i32, i32
  }
  func.func @transform_1(%arg0: i32, %arg1: i32) -> (i32, i32) {
    %c0_i32 = arith.constant 0 : i32
    %c0_i32_0 = arith.constant 0 : i32
    %c0_i32_1 = arith.constant 0 : i32
    return %c0_i32, %c0_i32_0 : i32, i32
  }
  func.func @transform_2(%arg0: i32, %arg1: i32) -> (i32, i32) {
    %c0_i32 = arith.constant 0 : i32
    %c0_i32_0 = arith.constant 0 : i32
    %c0_i32_1 = arith.constant 0 : i32
    return %c0_i32, %c0_i32_0 : i32, i32
  }
  func.func @transform_3(%arg0: i32, %arg1: i32) -> (i32, i32) {
    %c0_i32 = arith.constant 0 : i32
    %c0_i32_0 = arith.constant 0 : i32
    return %c0_i32, %arg1 : i32, i32
  }
  func.func @transform_4(%arg0: i32, %arg1: i32) -> (i32, i32) {
    %c0_i32 = arith.constant 0 : i32
    %c0_i32_0 = arith.constant 0 : i32
    return %c0_i32, %arg1 : i32, i32
  }
  func.func @transform_5(%arg0: i32, %arg1: i32) -> (i32, i32) {
    %c0_i32 = arith.constant 0 : i32
    return %arg0, %arg1 : i32, i32
  }
}

module attributes {stable_mosaic.version = 11 : i64} {
  func.func @_linear_res_kernel(%arg0: i32, %arg1: i32, %arg2: memref<16x256xbf16, #tpu.memory_space<vmem>>, %arg3: memref<256x64xbf16, #tpu.memory_space<vmem>>, %arg4: memref<1x64xf32, #tpu.memory_space<vmem>>, %arg5: memref<16x64xbf16, #tpu.memory_space<vmem>>, %arg6: memref<16x64xbf16, #tpu.memory_space<vmem>>) attributes {dimension_semantics = [#tpu.dimension_semantics<parallel>, #tpu.dimension_semantics<parallel>], iteration_bounds = array<i64: 2, 1>, scalar_prefetch = 0 : i64, scratch_operands = 0 : i64, tpu.core_type = #tpu.core_type<tc>, window_params = [{transform_indices = @transform_0, window_bounds = array<i64: 16, 256>}, {transform_indices = @transform_1, window_bounds = array<i64: 256, 64>}, {transform_indices = @transform_2, window_bounds = array<i64: 1, 64>}, {transform_indices = @transform_3, window_bounds = array<i64: 16, 64>}, {transform_indices = @transform_4, window_bounds = array<i64: 16, 64>}]} {
    %c0 = arith.constant 0 : index
    %c0_0 = arith.constant 0 : index
    %0 = vector.load %arg2[%c0, %c0_0] : memref<16x256xbf16, #tpu.memory_space<vmem>>, vector<16x256xbf16>
    %c0_1 = arith.constant 0 : index
    %c0_2 = arith.constant 0 : index
    %1 = vector.load %arg3[%c0_1, %c0_2] : memref<256x64xbf16, #tpu.memory_space<vmem>>, vector<256x64xbf16>
    %cst = arith.constant dense<0.000000e+00> : vector<16x64xf32>
    %2 = tpu.matmul %0, %1, %cst {dimension_numbers = #tpu.dot_dimension_numbers<[1], [0], [0], [1], [0, 0, 1, 1], [], []>} : vector<16x256xbf16>, vector<256x64xbf16>, vector<16x64xf32> -> vector<16x64xf32>
    %c0_3 = arith.constant 0 : index
    %c0_4 = arith.constant 0 : index
    %3 = vector.load %arg4[%c0_3, %c0_4] : memref<1x64xf32, #tpu.memory_space<vmem>>, vector<1x64xf32>
    %4 = vector.broadcast %3 : vector<1x64xf32> to vector<16x64xf32>
    %5 = arith.addf %2, %4 : vector<16x64xf32>
    %c0_5 = arith.constant 0 : index
    %c0_6 = arith.constant 0 : index
    %6 = vector.load %arg5[%c0_5, %c0_6] : memref<16x64xbf16, #tpu.memory_space<vmem>>, vector<16x64xbf16>
    %7 = arith.extf %6 : vector<16x64xbf16> to vector<16x64xf32>
    %8 = arith.addf %5, %7 : vector<16x64xf32>
    %9 = arith.truncf %8 : vector<16x64xf32> to vector<16x64xbf16>
    %c0_7 = arith.constant 0 : index
    %c0_8 = arith.constant 0 : index
    %10 = vector.load %arg6[%c0_7, %c0_8] : memref<16x64xbf16, #tpu.memory_space<vmem>>, vector<16x64xbf16>
    tpu.vector_store %arg6[%c0_7, %c0_8], %9 {strides = array<i32>} : memref<16x64xbf16, #tpu.memory_space<vmem>>, vector<16x64xbf16>,
    return
  }
  func.func @transform_0(%arg0: i32, %arg1: i32) -> (i32, i32) {
    %c0_i32 = arith.constant 0 : i32
    %c0_i32_0 = arith.constant 0 : i32
    return %arg0, %c0_i32 : i32, i32
  }
  func.func @transform_1(%arg0: i32, %arg1: i32) -> (i32, i32) {
    %c0_i32 = arith.constant 0 : i32
    %c0_i32_0 = arith.constant 0 : i32
    return %c0_i32, %arg1 : i32, i32
  }
  func.func @transform_2(%arg0: i32, %arg1: i32) -> (i32, i32) {
    %c0_i32 = arith.constant 0 : i32
    %c0_i32_0 = arith.constant 0 : i32
    return %c0_i32, %arg1 : i32, i32
  }
  func.func @transform_3(%arg0: i32, %arg1: i32) -> (i32, i32) {
    %c0_i32 = arith.constant 0 : i32
    return %arg0, %arg1 : i32, i32
  }
  func.func @transform_4(%arg0: i32, %arg1: i32) -> (i32, i32) {
    %c0_i32 = arith.constant 0 : i32
    return %arg0, %arg1 : i32, i32
  }
}

module attributes {stable_mosaic.version = 11 : i64} {
  func.func @_layernorm_kernel(%arg0: i32, %arg1: memref<16x64xbf16, #tpu.memory_space<vmem>>, %arg2: memref<1x64xf32, #tpu.memory_space<vmem>>, %arg3: memref<1x64xf32, #tpu.memory_space<vmem>>, %arg4: memref<16x64xf32, #tpu.memory_space<vmem>>) attributes {dimension_semantics = [#tpu.dimension_semantics<parallel>], iteration_bounds = array<i64: 2>, scalar_prefetch = 0 : i64, scratch_operands = 0 : i64, tpu.core_type = #tpu.core_type<tc>, window_params = [{transform_indices = @transform_0, window_bounds = array<i64: 16, 64>}, {pipeline_mode = #tpu.pipeline_mode<synchronous>, transform_indices = @transform_1, window_bounds = array<i64: 1, 64>}, {pipeline_mode = #tpu.pipeline_mode<synchronous>, transform_indices = @transform_2, window_bounds = array<i64: 1, 64>}, {transform_indices = @transform_3, window_bounds = array<i64: 16, 64>}]} {
    %c0 = arith.constant 0 : index
    %c0_0 = arith.constant 0 : index
    %0 = vector.load %arg1[%c0, %c0_0] : memref<16x64xbf16, #tpu.memory_space<vmem>>, vector<16x64xbf16>
    %1 = arith.extf %0 : vector<16x64xbf16> to vector<16x64xf32>
    %cst = arith.constant dense<0.000000e+00> : vector<16xf32>
    %2 = vector.multi_reduction <add>, %1, %cst [1] : vector<16x64xf32> to vector<16xf32>
    %3 = vector.shape_cast %2 : vector<16xf32> to vector<16x1xf32>
    %cst_1 = arith.constant 6.400000e+01 : f32
    %4 = vector.broadcast %cst_1 : f32 to vector<16x1xf32>
    %5 = arith.divf %3, %4 : vector<16x1xf32>
    %6 = vector.broadcast %5 : vector<16x1xf32> to vector<16x64xf32>
    %7 = arith.subf %1, %6 : vector<16x64xf32>
    %8 = arith.mulf %7, %7 : vector<16x64xf32>
    %cst_2 = arith.constant dense<0.000000e+00> : vector<16xf32>
    %9 = vector.multi_reduction <add>, %8, %cst_2 [1] : vector<16x64xf32> to vector<16xf32>
    %10 = vector.shape_cast %9 : vector<16xf32> to vector<16x1xf32>
    %cst_3 = arith.constant 6.400000e+01 : f32
    %11 = vector.broadcast %cst_3 : f32 to vector<16x1xf32>
    %12 = arith.divf %10, %11 : vector<16x1xf32>
    %13 = vector.broadcast %5 : vector<16x1xf32> to vector<16x64xf32>
    %14 = arith.subf %1, %13 : vector<16x64xf32>
    %cst_4 = arith.constant 9.99999974E-6 : f32
    %15 = vector.broadcast %cst_4 : f32 to vector<16x1xf32>
    %16 = arith.addf %12, %15 : vector<16x1xf32>
    %17 = math.rsqrt %16 : vector<16x1xf32>
    %18 = vector.broadcast %17 : vector<16x1xf32> to vector<16x64xf32>
    %19 = arith.mulf %14, %18 : vector<16x64xf32>
    %c0_5 = arith.constant 0 : index
    %c0_6 = arith.constant 0 : index
    %20 = vector.load %arg2[%c0_5, %c0_6] : memref<1x64xf32, #tpu.memory_space<vmem>>, vector<1x64xf32>
    %21 = vector.broadcast %20 : vector<1x64xf32> to vector<16x64xf32>
    %22 = arith.mulf %19, %21 : vector<16x64xf32>
    %c0_7 = arith.constant 0 : index
    %c0_8 = arith.constant 0 : index
    %23 = vector.load %arg3[%c0_7, %c0_8] : memref<1x64xf32, #tpu.memory_space<vmem>>, vector<1x64xf32>
    %24 = vector.broadcast %23 : vector<1x64xf32> to vector<16x64xf32>
    %25 = arith.addf %22, %24 : vector<16x64xf32>
    %c0_9 = arith.constant 0 : index
    %c0_10 = arith.constant 0 : index
    %26 = vector.load %arg4[%c0_9, %c0_10] : memref<16x64xf32, #tpu.memory_space<vmem>>, vector<16x64xf32>
    tpu.vector_store %arg4[%c0_9, %c0_10], %25 {strides = array<i32>} : memref<16x64xf32, #tpu.memory_space<vmem>>, vector<16x64xf32>,
    return
  }
  func.func @transform_0(%arg0: i32) -> (i32, i32) {
    %c0_i32 = arith.constant 0 : i32
    %c0_i32_0 = arith.constant 0 : i32
    return %arg0, %c0_i32 : i32, i32
  }
  func.func @transform_1(%arg0: i32) -> (i32, i32) {
    %c0_i32 = arith.constant 0 : i32
    %c0_i32_0 = arith.constant 0 : i32
    %c0_i32_1 = arith.constant 0 : i32
    return %c0_i32, %c0_i32_0 : i32, i32
  }
  func.func @transform_2(%arg0: i32) -> (i32, i32) {
    %c0_i32 = arith.constant 0 : i32
    %c0_i32_0 = arith.constant 0 : i32
    %c0_i32_1 = arith.constant 0 : i32
    return %c0_i32, %c0_i32_0 : i32, i32
  }
  func.func @transform_3(%arg0: i32) -> (i32, i32) {
    %c0_i32 = arith.constant 0 : i32
    %c0_i32_0 = arith.constant 0 : i32
    return %arg0, %c0_i32 : i32, i32
  }
}

</mosaic_0001>

<llo_original>
// kernel: _lambda_.24
$region0: #{_lambda_.24}
  #allocation0 [shape = 'u32[]', space=smem, size = 0x4, offset = 0x4, fixed_abs, tag = 'smem constant byte address 0x4 - core index']
  #allocation1 [shape = 'u32[144,128]{1,0:T(1,128)}', space=vmem, size = 0x12000, scoped, tag = 'internal scratch']
  %s0 = inlined_call_operand.vmem [shape: f32[128,128], index: 0, kind: input, shape index: {}]
  %s1 = inlined_call_operand.vmem [shape: bf16[128,32], index: 1, kind: input, shape index: {}]
  %s2 = inlined_call_operand.vmem [shape: f32[1,32], index: 2, kind: input, shape index: {}]
  %s3 = inlined_call_operand.vmem [shape: bf16[128,32], index: 3, kind: output, shape index: {}]
  %s4 = sld [smem:[#allocation0]]
  $region45: #{_lambda_.24} parent=0
    _
  %s6 = ssub.s32 1, %s4
  %s7 = scalar_select 0, %s6, %s4
  loop: start=0, step=1, limit=4
  $region2: #{_lambda_.24} parent=0 // loop_pre_header
    _
  $region3: #{_lambda_.24} parent=0 // loop_header
    %s9 = sphi 0, %s13
    %p10 = scmp.ge.s32.totalorder %s9, 4
    %s16 = sphi 0, %s28
    %s17 = sphi 0, %s24
    %s18 = sphi 0, %s16
    %s19 = sphi 0, %s17
    %s20 = sphi 0, %s18
    %s21 = sphi 0, %s19
    %s31 = sphi 0, %s33
    %s34 = sphi 0, %s31
    %s35 = sphi 0, %s34
    %s51 = sphi 0, %s35
    %s57 = sphi 0, %s59
    %s60 = sphi 0, %s57
    %s61 = sphi 0, %s60
    %s77 = sphi 0, %s61
    %s83 = sphi 0, %s85
    %s86 = sphi 0, %s83
    %s87 = sphi 0, %s86
    %s103 = sphi 0, %s87
    %s111 = sphi 0, %s113
    %s114 = sphi 0, %s111
    %s115 = sphi 0, %s114
    %s131 = sphi 0, %s115
  $region4: #{_lambda_.24} parent=0 // loop_header_branch
    %12 = sbr.rel (%p10) target = $region8
  $region5: #{_lambda_.24} parent=0 // loop_body
    %s14 = ssub.s32 %s9, 1
    %s15 = ssub.s32 %s9, 2
    %s22 = sadd.s32 1, %s17
    %p23 = scmp.ge.s32.totalorder %s22, 1
    %s24 = scalar_select %p23, 0, %s22
    %s25 = sadd.s32 1, %s16
    %s26 = scalar_select %p23, %s25, %s16
    %p27 = scmp.ge.s32.totalorder %s26, 2
    %s28 = scalar_select %p27, 0, %s26
    %s29 = ssub.s32 %s16, %s28
    %p30 = scmp.eq.s32.totalorder %s29, 0
    %s32 = sadd.s32 %s31, 1
    %s33 = scalar_select %p30, %s31, %s32
    %p36 = pneg %p30
    %p37 = scmp.eq.s32.totalorder %s9, 1
    %p38 = por %p36, %p37
    %p39 = scmp.ne.s32.totalorder %s31, %s34
    %p40 = scmp.eq.s32.totalorder %s9, 0
    %p41 = por %p39, %p40
    %p42 = scmp.ne.s32.totalorder %s31, %s34
    %p43 = scmp.eq.s32.totalorder %s14, 1
    %p44 = por %p42, %p43
    %p45 = scmp.ne.s32.totalorder %s34, %s35
    %p46 = scmp.eq.s32.totalorder %s14, 0
    %p47 = por %p45, %p46
    %p48 = scmp.ne.s32.totalorder %s34, %s35
    %p49 = scmp.eq.s32.totalorder %s15, 1
    %p50 = por %p48, %p49
    %p52 = scmp.ne.s32.totalorder %s35, %s51
    %p53 = scmp.eq.s32.totalorder %s15, 0
    %p54 = por %p52, %p53
    %s55 = ssub.s32 %s17, %s24
    %p56 = scmp.eq.s32.totalorder %s55, 0
    %s58 = sadd.s32 %s57, 1
    %s59 = scalar_select %p56, %s57, %s58
    %p62 = pneg %p56
    %p63 = scmp.eq.s32.totalorder %s9, 1
    %p64 = por %p62, %p63
    %p65 = scmp.ne.s32.totalorder %s57, %s60
    %p66 = scmp.eq.s32.totalorder %s9, 0
    %p67 = por %p65, %p66
    %p68 = scmp.ne.s32.totalorder %s57, %s60
    %p69 = scmp.eq.s32.totalorder %s14, 1
    %p70 = por %p68, %p69
    %p71 = scmp.ne.s32.totalorder %s60, %s61
    %p72 = scmp.eq.s32.totalorder %s14, 0
    %p73 = por %p71, %p72
    %p74 = scmp.ne.s32.totalorder %s60, %s61
    %p75 = scmp.eq.s32.totalorder %s15, 1
    %p76 = por %p74, %p75
    %p78 = scmp.ne.s32.totalorder %s61, %s77
    %p79 = scmp.eq.s32.totalorder %s15, 0
    %p80 = por %p78, %p79
    %s81 = ssub.s32 %s17, %s24
    %p82 = scmp.eq.s32.totalorder %s81, 0
    %s84 = sadd.s32 %s83, 1
    %s85 = scalar_select %p82, %s83, %s84
    %p88 = pneg %p82
    %p89 = scmp.eq.s32.totalorder %s9, 1
    %p90 = por %p88, %p89
    %p91 = scmp.ne.s32.totalorder %s83, %s86
    %p92 = scmp.eq.s32.totalorder %s9, 0
    %p93 = por %p91, %p92
    %p94 = scmp.ne.s32.totalorder %s83, %s86
    %p95 = scmp.eq.s32.totalorder %s14, 1
    %p96 = por %p94, %p95
    %p97 = scmp.ne.s32.totalorder %s86, %s87
    %p98 = scmp.eq.s32.totalorder %s14, 0
    %p99 = por %p97, %p98
    %p100 = scmp.ne.s32.totalorder %s86, %s87
    %p101 = scmp.eq.s32.totalorder %s15, 1
    %p102 = por %p100, %p101
    %p104 = scmp.ne.s32.totalorder %s87, %s103
    %p105 = scmp.eq.s32.totalorder %s15, 0
    %p106 = por %p104, %p105
    %s107 = ssub.s32 %s16, %s28
    %s108 = ssub.s32 %s17, %s24
    %s109 = sor.u32 %s107, %s108
    %p110 = scmp.eq.s32.totalorder %s109, 0
    %s112 = sadd.s32 %s111, 1
    %s113 = scalar_select %p110, %s111, %s112
    %p116 = pneg %p110
    %p117 = scmp.eq.s32.totalorder %s9, 1
    %p118 = por %p116, %p117
    %p119 = scmp.ne.s32.totalorder %s111, %s114
    %p120 = scmp.eq.s32.totalorder %s9, 0
    %p121 = por %p119, %p120
    %p122 = scmp.ne.s32.totalorder %s111, %s114
    %p123 = scmp.eq.s32.totalorder %s14, 1
    %p124 = por %p122, %p123
    %p125 = scmp.ne.s32.totalorder %s114, %s115
    %p126 = scmp.eq.s32.totalorder %s14, 0
    %p127 = por %p125, %p126
    %p128 = scmp.ne.s32.totalorder %s114, %s115
    %p129 = scmp.eq.s32.totalorder %s15, 1
    %p130 = por %p128, %p129
    %p132 = scmp.ne.s32.totalorder %s115, %s131
    %p133 = scmp.eq.s32.totalorder %s15, 0
    %p134 = por %p132, %p133
    %p135 = scmp.le.s32.totalorder 1, %s9
    %p136 = scmp.lt.s32.totalorder %s9, 3
    %p137 = pnand %p135, %p136
    %p138 = pneg %p137
    // Predicated region
    $region9: #{_lambda_.24} parent=5 // pred_check
      _
    $region10: #{_lambda_.24} parent=5 // pred_check_branch
      %140 = sbr.rel (%p137) target = $region12
    $region11: #{_lambda_.24} parent=5 // pred_region
      %s141 = ssub.s32 %s9, 1
      // Predicated region
      $region13: #{_lambda_.24} parent=11 // pred_check
        %p142 = pneg %p73
      $region14: #{_lambda_.24} parent=11 // pred_check_branch
        %144 = sbr.rel (%p142) target = $region16
      $region15: #{_lambda_.24} parent=11 // pred_region
        %p145 = scmp.lt.s32.totalorder %s19, 0
        %s146 = scalar_select %p145, %s19, 0
        %s147 = smul.addr %s146, 4
        %s148 = scalar_lea.vmem %s1, %s147
      $region16: #{_lambda_.24} parent=11 // pred_fallthru
        _
      // Predicated region
      $region17: #{_lambda_.24} parent=11 // pred_check
        %p149 = pneg %p99
      $region18: #{_lambda_.24} parent=11 // pred_check_branch
        %151 = sbr.rel (%p149) target = $region20
      $region19: #{_lambda_.24} parent=11 // pred_region
        %p152 = scmp.lt.s32.totalorder %s19, 0
        %s153 = scalar_select %p152, %s19, 0
        %s154 = scalar_lea.vmem %s2, %s153
      $region20: #{_lambda_.24} parent=11 // pred_fallthru
        _
    $region12: #{_lambda_.24} parent=5 // pred_fallthru
      _
    %p155 = scmp.lt.s32.totalorder %s9, 2
    // Predicated region
    $region21: #{_lambda_.24} parent=5 // pred_check
      %p156 = pneg %p155
    $region22: #{_lambda_.24} parent=5 // pred_check_branch
      %158 = sbr.rel (%p156) target = $region24
    $region23: #{_lambda_.24} parent=5 // pred_region
      // Predicated region
      $region25: #{_lambda_.24} parent=23 // pred_check
        %p159 = pneg %p41
      $region26: #{_lambda_.24} parent=23 // pred_check_branch
        %161 = sbr.rel (%p159) target = $region28
      $region27: #{_lambda_.24} parent=23 // pred_region
        %s162 = smul.u32 8, %s16
        %p163 = scmp.lt.s32.totalorder %s162, 15
        %s164 = scalar_select %p163, %s162, 15
        %s165 = smul.addr %s164, 8
        %s166 = scalar_lea.vmem %s0, %s165
        %s167 = smul.u32 8, %s16
      $region28: #{_lambda_.24} parent=23 // pred_fallthru
        _
    $region24: #{_lambda_.24} parent=5 // pred_fallthru
      _
    %p168 = scmp.le.s32.totalorder 1, %s9
    %p169 = scmp.lt.s32.totalorder %s9, 3
    %p170 = pnand %p168, %p169
    %p171 = pneg %p170
    // Predicated region
    $region29: #{_lambda_.24} parent=5 // pred_check
      _
    $region30: #{_lambda_.24} parent=5 // pred_check_branch
      %173 = sbr.rel (%p170) target = $region32
    $region31: #{_lambda_.24} parent=5 // pred_region
      %s174 = ssub.s32 %s9, 1
      %s175 = smul.u32 8, %s18
      %p176 = scmp.lt.s32.totalorder %s175, 15
      %s177 = scalar_select %p176, %s175, 15
      %s178 = smul.addr %s177, 8
      %s179 = scalar_lea.vmem %s0, %s178
      %p180 = pneg %p47
      %p181 = pneg %p44
      %p182 = scmp.lt.s32.totalorder %s19, 0
      %s183 = scalar_select %p182, %s19, 0
      %s184 = smul.addr %s183, 4
      %s185 = scalar_lea.vmem %s1, %s184
      %p186 = pneg %p73
      %p187 = pneg %p70
      %p188 = scmp.lt.s32.totalorder %s19, 0
      %s189 = scalar_select %p188, %s19, 0
      %s190 = scalar_lea.vmem %s2, %s189
      %p191 = pneg %p99
      %p192 = pneg %p96
      %p193 = pneg %p127
      %p194 = pneg %p124
      %s195 = smul.u32 8, %s18
      %p196 = scmp.lt.s32.totalorder %s195, 15
      %s197 = scalar_select %p196, %s195, 15
      %p198 = scmp.lt.s32.totalorder %s19, 0
      %s199 = scalar_select %p198, %s19, 0
      %s200 = sadd.s32 %s199, %s197
      %s201 = smul.addr %s200, 4
      %s202 = scalar_lea.vmem %s3, %s201
      %s203 = smul.u32 8, %s18
      %p204 = scmp.lt.s32.totalorder %s203, 15
      %s205 = scalar_select %p204, %s203, 15
      %s206 = smul.addr %s205, 8
      %s207 = scalar_lea.vmem %s0, %s206
      %s208 = smul.u32 8, %s18
      %p209 = scmp.lt.s32.totalorder %s19, 0
      %s210 = scalar_select %p209, %s19, 0
      %s211 = smul.addr %s210, 4
      %s212 = scalar_lea.vmem %s1, %s211
      %p213 = scmp.lt.s32.totalorder %s19, 0
      %s214 = scalar_select %p213, %s19, 0
      %s215 = scalar_lea.vmem %s2, %s214
      %s216 = smul.u32 8, %s18
      %p217 = scmp.lt.s32.totalorder %s216, 15
      %s218 = scalar_select %p217, %s216, 15
      %p219 = scmp.lt.s32.totalorder %s19, 0
      %s220 = scalar_select %p219, %s19, 0
      %s221 = sadd.s32 %s220, %s218
      %s222 = smul.addr %s221, 4
      %s223 = scalar_lea.vmem %s3, %s222
      %s224 = smul.u32 8, %s18
      %v226 = vld [vmem:[%s207] sm:$0xff]
      %v227 = vld [vmem:[%s207 + $0x8] sm:$0xff]
      %v228 = vld [vmem:[%s207 + $0x10] sm:$0xff]
      %v229 = vld [vmem:[%s207 + $0x18] sm:$0xff]
      %v230 = vld [vmem:[%s207 + $0x20] sm:$0xff]
      %v231 = vld [vmem:[%s207 + $0x28] sm:$0xff]
      %v232 = vld [vmem:[%s207 + $0x30] sm:$0xff]
      %v233 = vld [vmem:[%s207 + $0x38] sm:$0xff]
      %v234 = vpack.c.bf16 %v227, %v226
      %v235 = vpack.c.bf16 %v229, %v228
      %v236 = vpack.c.bf16 %v231, %v230
      %v237 = vpack.c.bf16 %v233, %v232
      %v238 = vld [vmem:[%s212] sm:$0xf]
      %v239 = vld [vmem:[%s212 + $0x4] sm:$0xf]
      %v240 = vld [vmem:[%s212 + $0x8] sm:$0xf]
      %v241 = vld [vmem:[%s212 + $0xc] sm:$0xf]
      %v242 = vld [vmem:[%s212 + $0x10] sm:$0xf]
      %v243 = vld [vmem:[%s212 + $0x14] sm:$0xf]
      %v244 = vld [vmem:[%s212 + $0x18] sm:$0xf]
      %v245 = vld [vmem:[%s212 + $0x1c] sm:$0xf]
      %v246 = vld [vmem:[%s212 + $0x20] sm:$0xf]
      %v247 = vld [vmem:[%s212 + $0x24] sm:$0xf]
      %v248 = vld [vmem:[%s212 + $0x28] sm:$0xf]
      %v249 = vld [vmem:[%s212 + $0x2c] sm:$0xf]
      %v250 = vld [vmem:[%s212 + $0x30] sm:$0xf]
      %v251 = vld [vmem:[%s212 + $0x34] sm:$0xf]
      %v252 = vld [vmem:[%s212 + $0x38] sm:$0xf]
      %v253 = vld [vmem:[%s212 + $0x3c] sm:$0xf]
      %v254 = vld [vmem:[%s215] sm:$0x1]
      %v256 = vlaneseq
      %v257 = vshrl.u32 %v256, 7
      %v258 = vsub.s32 0, %v257
      %v259 = vrot.slane %v254, %v258
      %v277 = vunpack.c.l.b16 %v238
      %v278 = vunpack.c.l.b16 %v239
      %v279 = vunpack.c.l.b16 %v240
      %v280 = vunpack.c.l.b16 %v241
      %v281 = vunpack.c.l.b16 %v242
      %v282 = vunpack.c.l.b16 %v243
      %v283 = vunpack.c.l.b16 %v244
      %v284 = vunpack.c.l.b16 %v245
      %v285 = vunpack.c.l.b16 %v246
      %v286 = vunpack.c.l.b16 %v247
      %v287 = vunpack.c.l.b16 %v248
      %v288 = vunpack.c.l.b16 %v249
      %v289 = vunpack.c.l.b16 %v250
      %v290 = vunpack.c.l.b16 %v251
      %v291 = vunpack.c.l.b16 %v252
      %v292 = vunpack.c.l.b16 %v253
      %v293 = vpack.c.b16 %v278, %v277
      %v294 = vpack.c.b16 %v280, %v279
      %v295 = vpack.c.b16 %v282, %v281
      %v296 = vpack.c.b16 %v284, %v283
      %v297 = vpack.c.b16 %v286, %v285
      %v298 = vpack.c.b16 %v288, %v287
      %v299 = vpack.c.b16 %v290, %v289
      %v300 = vpack.c.b16 %v292, %v291
      %309 = vmatprep.subr.bf16.mxu0 0
      %310 = vmatpush1.bf16.msra.mxu0 %v300
      %311 = vmatprep.subr.bf16.mxu0 0
      %312 = vmatpush1.bf16.msra.mxu0 %v299
      %313 = vmatprep.subr.bf16.mxu0 0
      %314 = vmatpush1.bf16.msra.mxu0 %v298
      %315 = vmatprep.subr.bf16.mxu0 0
      %316 = vmatpush1.bf16.msra.mxu0 %v297
      %317 = vmatprep.subr.bf16.mxu0 0
      %318 = vmatpush1.bf16.msra.mxu0 %v296
      %319 = vmatprep.subr.bf16.mxu0 0
      %320 = vmatpush1.bf16.msra.mxu0 %v295
      %321 = vmatprep.subr.bf16.mxu0 0
      %322 = vmatpush1.bf16.msra.mxu0 %v294
      %323 = vmatprep.subr.bf16.mxu0 0
      %324 = vmatpush1.bf16.msra.mxu0 %v293
      %325 = vmatprep.subr.bf16.mxu0 0
      %326 = vmatpush2.bf16.msra.mxu0 0
      %327 = vmatprep.subr.bf16.mxu0 0
      %328 = vmatpush2.bf16.msra.mxu0 0
      %329 = vmatprep.subr.bf16.mxu0 0
      %330 = vmatpush2.bf16.msra.mxu0 0
      %331 = vmatprep.subr.bf16.mxu0 0
      %332 = vmatpush2.bf16.msra.mxu0 0
      %333 = vmatprep.subr.bf16.mxu0 0
      %334 = vmatpush2.bf16.msra.mxu0 0
      %335 = vmatprep.subr.bf16.mxu0 0
      %336 = vmatpush2.bf16.msra.mxu0 0
      %337 = vmatprep.subr.bf16.mxu0 0
      %338 = vmatpush2.bf16.msra.mxu0 0
      %339 = vmatprep.subr.bf16.mxu0 0
      %340 = vmatpush2.bf16.msra.mxu0 0
      %341 = vmatprep.mubr.bf16.mxu0 0
      %342 = vmatmul.mubr.bf16.gmra.mxu0 %v234
      %v343 = vpop.f32.mrf.mxu0
      %v344 = vadd.f32 %v259, %v343
      %v345 = vpop.f32.mrf.mxu0
      %v346 = vpop.f32.mrf.mxu0
      %v347 = vadd.f32 %v259, %v346
      %v348 = vpop.f32.mrf.mxu0
      %349 = vmatprep.mubr.bf16.mxu0 0
      %350 = vmatmul.mubr.bf16.gmra.mxu0 %v235
      %v351 = vpop.f32.mrf.mxu0
      %v352 = vadd.f32 %v259, %v351
      %v353 = vpop.f32.mrf.mxu0
      %v354 = vpop.f32.mrf.mxu0
      %v355 = vadd.f32 %v259, %v354
      %v356 = vpop.f32.mrf.mxu0
      %357 = vmatprep.mubr.bf16.mxu0 0
      %358 = vmatmul.mubr.bf16.gmra.mxu0 %v236
      %v359 = vpop.f32.mrf.mxu0
      %v360 = vadd.f32 %v259, %v359
      %v361 = vpop.f32.mrf.mxu0
      %v362 = vpop.f32.mrf.mxu0
      %v363 = vadd.f32 %v259, %v362
      %v364 = vpop.f32.mrf.mxu0
      %365 = vmatprep.mubr.bf16.mxu0 0
      %366 = vmatmul.mubr.bf16.gmra.mxu0 %v237
      %v367 = vpop.f32.mrf.mxu0
      %v368 = vadd.f32 %v259, %v367
      %v369 = vpop.f32.mrf.mxu0
      %v370 = vpop.f32.mrf.mxu0
      %v371 = vadd.f32 %v259, %v370
      %v372 = vpop.f32.mrf.mxu0
      %373 = vdwg.mxu0
      %v374 = vpack.c.bf16 %v347, %v344
      %v375 = vpack.c.bf16 %v355, %v352
      %v376 = vpack.c.bf16 %v363, %v360
      %v377 = vpack.c.bf16 %v371, %v368
      %v382 = vunpack.c.l.b16 %v374
      %v383 = vunpack.c.h.b16 %v374
      %v384 = vunpack.c.l.b16 %v375
      %v385 = vunpack.c.h.b16 %v375
      %v386 = vunpack.c.l.b16 %v376
      %v387 = vunpack.c.h.b16 %v376
      %v388 = vunpack.c.l.b16 %v377
      %v389 = vunpack.c.h.b16 %v377
      %v390 = vpack.c.b16 %v382, %v382
      %v391 = vpack.c.b16 %v383, %v383
      %v392 = vpack.c.b16 %v384, %v384
      %v393 = vpack.c.b16 %v385, %v385
      %v394 = vpack.c.b16 %v386, %v386
      %v395 = vpack.c.b16 %v387, %v387
      %v396 = vpack.c.b16 %v388, %v388
      %v397 = vpack.c.b16 %v389, %v389
      %vm406 = vcmask 257024
      %407 = vst.msk [vmem:[%s223] sm:$0xf] %vm406, %v390
      %408 = vst.msk [vmem:[%s223 + $0x4] sm:$0xf] %vm406, %v391
      %409 = vst.msk [vmem:[%s223 + $0x8] sm:$0xf] %vm406, %v392
      %410 = vst.msk [vmem:[%s223 + $0xc] sm:$0xf] %vm406, %v393
      %411 = vst.msk [vmem:[%s223 + $0x10] sm:$0xf] %vm406, %v394
      %412 = vst.msk [vmem:[%s223 + $0x14] sm:$0xf] %vm406, %v395
      %413 = vst.msk [vmem:[%s223 + $0x18] sm:$0xf] %vm406, %v396
      %414 = vst.msk [vmem:[%s223 + $0x1c] sm:$0xf] %vm406, %v397
      %s415 = smul.u32 8, %s18
      %p416 = scmp.lt.s32.totalorder %s415, 15
      %s417 = scalar_select %p416, %s415, 15
      %p418 = scmp.lt.s32.totalorder %s19, 0
      %s419 = scalar_select %p418, %s19, 0
      %s420 = sadd.s32 %s419, %s417
      %s421 = smul.addr %s420, 4
      %s422 = scalar_lea.vmem %s3, %s421
      // Predicated region
      $region33: #{_lambda_.24} parent=31 // pred_check
        %p423 = pneg %p124
      $region34: #{_lambda_.24} parent=31 // pred_check_branch
        %425 = sbr.rel (%p423) target = $region36
      $region35: #{_lambda_.24} parent=31 // pred_region
        %s426 = smul.u32 8, %s18
      $region36: #{_lambda_.24} parent=31 // pred_fallthru
        _
    $region32: #{_lambda_.24} parent=5 // pred_fallthru
      _
    %p427 = scmp.le.s32.totalorder 2, %s9
    // Predicated region
    $region37: #{_lambda_.24} parent=5 // pred_check
      %p428 = pneg %p427
    $region38: #{_lambda_.24} parent=5 // pred_check_branch
      %430 = sbr.rel (%p428) target = $region40
    $region39: #{_lambda_.24} parent=5 // pred_region
      %s431 = ssub.s32 %s9, 2
      // Predicated region
      $region41: #{_lambda_.24} parent=39 // pred_check
        %p432 = pneg %p130
      $region42: #{_lambda_.24} parent=39 // pred_check_branch
        %434 = sbr.rel (%p432) target = $region44
      $region43: #{_lambda_.24} parent=39 // pred_region
        %s435 = smul.u32 8, %s20
        %p436 = scmp.lt.s32.totalorder %s435, 15
        %s437 = scalar_select %p436, %s435, 15
        %p438 = scmp.lt.s32.totalorder %s21, 0
        %s439 = scalar_select %p438, %s21, 0
        %s440 = sadd.s32 %s439, %s437
        %s441 = smul.addr %s440, 4
        %s442 = scalar_lea.vmem %s3, %s441
      $region44: #{_lambda_.24} parent=39 // pred_fallthru
        _
    $region40: #{_lambda_.24} parent=5 // pred_fallthru
      _
  $region6: #{_lambda_.24} parent=0 // loop_footer
    %s13 = sadd.s32 1, %s9
  $region7: #{_lambda_.24} parent=0 // loop_footer_branch
    %8 = sbr.rel target = $region3
  $region8: #{_lambda_.24} parent=0 // loop_exit
    _

// kernel: _lambda_.25
$region0: #{_lambda_.25}
  #allocation0 [shape = 'u32[]', space=smem, size = 0x4, offset = 0x4, fixed_abs, tag = 'smem constant byte address 0x4 - core index']
  #allocation1 [shape = 'u32[144,128]{1,0:T(1,128)}', space=vmem, size = 0x12000, scoped, tag = 'internal scratch']
  %s0 = inlined_call_operand.vmem [shape: bf16[128,32], index: 0, kind: input, shape index: {}]
  %s1 = inlined_call_operand.vmem [shape: f32[1,32], index: 1, kind: input, shape index: {}]
  %s2 = inlined_call_operand.vmem [shape: f32[1,32], index: 2, kind: input, shape index: {}]
  %s3 = inlined_call_operand.vmem [shape: bf16[128,32], index: 3, kind: output, shape index: {}]
  %s4 = sld [smem:[#allocation0]]
  $region45: #{_lambda_.25} parent=0
    _
  %s6 = ssub.s32 1, %s4
  %s7 = scalar_select 0, %s6, %s4
  loop: start=0, step=1, limit=4
  $region2: #{_lambda_.25} parent=0 // loop_pre_header
    _
  $region3: #{_lambda_.25} parent=0 // loop_header
    %s9 = sphi 0, %s13
    %p10 = scmp.ge.s32.totalorder %s9, 4
    %s19 = sphi 0, %s21
    %s22 = sphi 0, %s19
    %s23 = sphi 0, %s22
    %s39 = sphi 0, %s23
    %s43 = sphi 0, %s43
    %s45 = sphi 0, %s43
    %s46 = sphi 0, %s45
    %s60 = sphi 0, %s46
    %s64 = sphi 0, %s64
    %s66 = sphi 0, %s64
    %s67 = sphi 0, %s66
    %s81 = sphi 0, %s67
    %s87 = sphi 0, %s89
    %s90 = sphi 0, %s87
    %s91 = sphi 0, %s90
    %s107 = sphi 0, %s91
  $region4: #{_lambda_.25} parent=0 // loop_header_branch
    %12 = sbr.rel (%p10) target = $region8
  $region5: #{_lambda_.25} parent=0 // loop_body
    %s14 = ssub.s32 %s9, 1
    %s15 = ssub.s32 %s9, 2
    %s16 = sadd.s32 %s9, 1
    %s17 = ssub.s32 %s9, %s16
    %p18 = scmp.eq.s32.totalorder %s17, 0
    %s20 = sadd.s32 %s19, 1
    %s21 = scalar_select %p18, %s19, %s20
    %p24 = pneg %p18
    %p25 = scmp.eq.s32.totalorder %s9, 1
    %p26 = por %p24, %p25
    %p27 = scmp.ne.s32.totalorder %s19, %s22
    %p28 = scmp.eq.s32.totalorder %s9, 0
    %p29 = por %p27, %p28
    %p30 = scmp.ne.s32.totalorder %s19, %s22
    %p31 = scmp.eq.s32.totalorder %s14, 1
    %p32 = por %p30, %p31
    %p33 = scmp.ne.s32.totalorder %s22, %s23
    %p34 = scmp.eq.s32.totalorder %s14, 0
    %p35 = por %p33, %p34
    %p36 = scmp.ne.s32.totalorder %s22, %s23
    %p37 = scmp.eq.s32.totalorder %s15, 1
    %p38 = por %p36, %p37
    %p40 = scmp.ne.s32.totalorder %s23, %s39
    %p41 = scmp.eq.s32.totalorder %s15, 0
    %p42 = por %p40, %p41
    %s44 = sadd.s32 %s43, 1
    %p47 = scmp.eq.s32.totalorder %s9, 1
    %p48 = scmp.ne.s32.totalorder %s43, %s45
    %p49 = scmp.eq.s32.totalorder %s9, 0
    %p50 = por %p48, %p49
    %p51 = scmp.ne.s32.totalorder %s43, %s45
    %p52 = scmp.eq.s32.totalorder %s14, 1
    %p53 = por %p51, %p52
    %p54 = scmp.ne.s32.totalorder %s45, %s46
    %p55 = scmp.eq.s32.totalorder %s14, 0
    %p56 = por %p54, %p55
    %p57 = scmp.ne.s32.totalorder %s45, %s46
    %p58 = scmp.eq.s32.totalorder %s15, 1
    %p59 = por %p57, %p58
    %p61 = scmp.ne.s32.totalorder %s46, %s60
    %p62 = scmp.eq.s32.totalorder %s15, 0
    %p63 = por %p61, %p62
    %s65 = sadd.s32 %s64, 1
    %p68 = scmp.eq.s32.totalorder %s9, 1
    %p69 = scmp.ne.s32.totalorder %s64, %s66
    %p70 = scmp.eq.s32.totalorder %s9, 0
    %p71 = por %p69, %p70
    %p72 = scmp.ne.s32.totalorder %s64, %s66
    %p73 = scmp.eq.s32.totalorder %s14, 1
    %p74 = por %p72, %p73
    %p75 = scmp.ne.s32.totalorder %s66, %s67
    %p76 = scmp.eq.s32.totalorder %s14, 0
    %p77 = por %p75, %p76
    %p78 = scmp.ne.s32.totalorder %s66, %s67
    %p79 = scmp.eq.s32.totalorder %s15, 1
    %p80 = por %p78, %p79
    %p82 = scmp.ne.s32.totalorder %s67, %s81
    %p83 = scmp.eq.s32.totalorder %s15, 0
    %p84 = por %p82, %p83
    %s85 = ssub.s32 %s9, %s16
    %p86 = scmp.eq.s32.totalorder %s85, 0
    %s88 = sadd.s32 %s87, 1
    %s89 = scalar_select %p86, %s87, %s88
    %p92 = pneg %p86
    %p93 = scmp.eq.s32.totalorder %s9, 1
    %p94 = por %p92, %p93
    %p95 = scmp.ne.s32.totalorder %s87, %s90
    %p96 = scmp.eq.s32.totalorder %s9, 0
    %p97 = por %p95, %p96
    %p98 = scmp.ne.s32.totalorder %s87, %s90
    %p99 = scmp.eq.s32.totalorder %s14, 1
    %p100 = por %p98, %p99
    %p101 = scmp.ne.s32.totalorder %s90, %s91
    %p102 = scmp.eq.s32.totalorder %s14, 0
    %p103 = por %p101, %p102
    %p104 = scmp.ne.s32.totalorder %s90, %s91
    %p105 = scmp.eq.s32.totalorder %s15, 1
    %p106 = por %p104, %p105
    %p108 = scmp.ne.s32.totalorder %s91, %s107
    %p109 = scmp.eq.s32.totalorder %s15, 0
    %p110 = por %p108, %p109
    %p111 = scmp.le.s32.totalorder 1, %s9
    %p112 = scmp.lt.s32.totalorder %s9, 3
    %p113 = pnand %p111, %p112
    %p114 = pneg %p113
    // Predicated region
    $region9: #{_lambda_.25} parent=5 // pred_check
      _
    $region10: #{_lambda_.25} parent=5 // pred_check_branch
      %116 = sbr.rel (%p113) target = $region12
    $region11: #{_lambda_.25} parent=5 // pred_region
      %s117 = ssub.s32 %s9, 1
      // Predicated region
      $region13: #{_lambda_.25} parent=11 // pred_check
        %p118 = pneg %p56
      $region14: #{_lambda_.25} parent=11 // pred_check_branch
        %120 = sbr.rel (%p118) target = $region16
      $region15: #{_lambda_.25} parent=11 // pred_region
        _
      $region16: #{_lambda_.25} parent=11 // pred_fallthru
        _
      // Predicated region
      $region17: #{_lambda_.25} parent=11 // pred_check
        %p121 = pneg %p77
      $region18: #{_lambda_.25} parent=11 // pred_check_branch
        %123 = sbr.rel (%p121) target = $region20
      $region19: #{_lambda_.25} parent=11 // pred_region
        _
      $region20: #{_lambda_.25} parent=11 // pred_fallthru
        _
    $region12: #{_lambda_.25} parent=5 // pred_fallthru
      _
    %p124 = scmp.lt.s32.totalorder %s9, 2
    // Predicated region
    $region21: #{_lambda_.25} parent=5 // pred_check
      %p125 = pneg %p124
    $region22: #{_lambda_.25} parent=5 // pred_check_branch
      %127 = sbr.rel (%p125) target = $region24
    $region23: #{_lambda_.25} parent=5 // pred_region
      // Predicated region
      $region25: #{_lambda_.25} parent=23 // pred_check
        %p128 = pneg %p29
      $region26: #{_lambda_.25} parent=23 // pred_check_branch
        %130 = sbr.rel (%p128) target = $region28
      $region27: #{_lambda_.25} parent=23 // pred_region
        %s131 = smul.u32 8, %s9
        %p132 = scmp.lt.s32.totalorder %s131, 15
        %s133 = scalar_select %p132, %s131, 15
        %s134 = smul.addr %s133, 4
        %s135 = scalar_lea.vmem %s0, %s134
        %s136 = smul.u32 8, %s9
      $region28: #{_lambda_.25} parent=23 // pred_fallthru
        _
    $region24: #{_lambda_.25} parent=5 // pred_fallthru
      _
    %p137 = scmp.le.s32.totalorder 1, %s9
    %p138 = scmp.lt.s32.totalorder %s9, 3
    %p139 = pnand %p137, %p138
    %p140 = pneg %p139
    // Predicated region
    $region29: #{_lambda_.25} parent=5 // pred_check
      _
    $region30: #{_lambda_.25} parent=5 // pred_check_branch
      %142 = sbr.rel (%p139) target = $region32
    $region31: #{_lambda_.25} parent=5 // pred_region
      %s143 = ssub.s32 %s9, 1
      %s144 = smul.u32 8, %s14
      %p145 = scmp.lt.s32.totalorder %s144, 15
      %s146 = scalar_select %p145, %s144, 15
      %s147 = smul.addr %s146, 4
      %s148 = scalar_lea.vmem %s0, %s147
      %p149 = pneg %p35
      %p150 = pneg %p32
      %p151 = pneg %p56
      %p152 = pneg %p53
      %p153 = pneg %p77
      %p154 = pneg %p74
      %p155 = pneg %p103
      %p156 = pneg %p100
      %s157 = smul.u32 8, %s14
      %p158 = scmp.lt.s32.totalorder %s157, 15
      %s159 = scalar_select %p158, %s157, 15
      %s160 = smul.addr %s159, 4
      %s161 = scalar_lea.vmem %s3, %s160
      %s162 = smul.u32 8, %s14
      %p163 = scmp.lt.s32.totalorder %s162, 15
      %s164 = scalar_select %p163, %s162, 15
      %s165 = smul.addr %s164, 4
      %s166 = scalar_lea.vmem %s0, %s165
      %s167 = smul.u32 8, %s14
      %s168 = smul.u32 8, %s14
      %p169 = scmp.lt.s32.totalorder %s168, 15
      %s170 = scalar_select %p169, %s168, 15
      %s171 = smul.addr %s170, 4
      %s172 = scalar_lea.vmem %s3, %s171
      %s173 = smul.u32 8, %s14
      %v174 = vld [vmem:[%s166] sm:$0xf]
      %v175 = vld [vmem:[%s166 + $0x4] sm:$0xf]
      %v176 = vld [vmem:[%s166 + $0x8] sm:$0xf]
      %v177 = vld [vmem:[%s166 + $0xc] sm:$0xf]
      %v178 = vld [vmem:[%s166 + $0x10] sm:$0xf]
      %v179 = vld [vmem:[%s166 + $0x14] sm:$0xf]
      %v180 = vld [vmem:[%s166 + $0x18] sm:$0xf]
      %v181 = vld [vmem:[%s166 + $0x1c] sm:$0xf]
      %v182 = vunpack.c.l.bf16 %v174
      %v183 = vunpack.c.l.bf16 %v175
      %v184 = vunpack.c.l.bf16 %v176
      %v185 = vunpack.c.l.bf16 %v177
      %v186 = vunpack.c.l.bf16 %v178
      %v187 = vunpack.c.l.bf16 %v179
      %v188 = vunpack.c.l.bf16 %v180
      %v189 = vunpack.c.l.bf16 %v181
      %vm190 = vcmask 261120
      %v191 = vsel %vm190, %v182, 0.0
      %192 = vadd.xlane.f32.xlu0 %v191
      %v193 = vpop.xlane.xlu0 %192
      %v194 = vsel %vm190, %v183, 0.0
      %195 = vadd.xlane.f32.xlu0 %v194
      %v196 = vpop.xlane.xlu0 %195
      %v197 = vsel %vm190, %v184, 0.0
      %198 = vadd.xlane.f32.xlu0 %v197
      %v199 = vpop.xlane.xlu0 %198
      %v200 = vsel %vm190, %v185, 0.0
      %201 = vadd.xlane.f32.xlu0 %v200
      %v202 = vpop.xlane.xlu0 %201
      %v203 = vsel %vm190, %v186, 0.0
      %204 = vadd.xlane.f32.xlu0 %v203
      %v205 = vpop.xlane.xlu0 %204
      %v206 = vsel %vm190, %v187, 0.0
      %207 = vadd.xlane.f32.xlu0 %v206
      %v208 = vpop.xlane.xlu0 %207
      %v209 = vsel %vm190, %v188, 0.0
      %210 = vadd.xlane.f32.xlu0 %v209
      %v211 = vpop.xlane.xlu0 %210
      %v212 = vsel %vm190, %v189, 0.0
      %213 = vadd.xlane.f32.xlu0 %v212
      %v214 = vpop.xlane.xlu0 %213
      %v215 = vrcp.pop 32.0
      %v216 = vmul.f32 %v193, %v215
      %v217 = vmul.f32 %v196, %v215
      %v218 = vmul.f32 %v199, %v215
      %v219 = vmul.f32 %v202, %v215
      %v220 = vmul.f32 %v205, %v215
      %v221 = vmul.f32 %v208, %v215
      %v222 = vmul.f32 %v211, %v215
      %v223 = vmul.f32 %v214, %v215
      %v224 = vsub.f32 %v182, %v216
      %v225 = vsub.f32 %v183, %v217
      %v226 = vsub.f32 %v184, %v218
      %v227 = vsub.f32 %v185, %v219
      %v228 = vsub.f32 %v186, %v220
      %v229 = vsub.f32 %v187, %v221
      %v230 = vsub.f32 %v188, %v222
      %v231 = vsub.f32 %v189, %v223
      %v232 = vmul.f32 %v224, %v224
      %v233 = vmul.f32 %v225, %v225
      %v234 = vmul.f32 %v226, %v226
      %v235 = vmul.f32 %v227, %v227
      %v236 = vmul.f32 %v228, %v228
      %v237 = vmul.f32 %v229, %v229
      %v238 = vmul.f32 %v230, %v230
      %v239 = vmul.f32 %v231, %v231
      %v240 = vsel %vm190, %v232, 0.0
      %241 = vadd.xlane.f32.xlu0 %v240
      %v242 = vpop.xlane.xlu0 %241
      %v243 = vsel %vm190, %v233, 0.0
      %244 = vadd.xlane.f32.xlu0 %v243
      %v245 = vpop.xlane.xlu0 %244
      %v246 = vsel %vm190, %v234, 0.0
      %247 = vadd.xlane.f32.xlu0 %v246
      %v248 = vpop.xlane.xlu0 %247
      %v249 = vsel %vm190, %v235, 0.0
      %250 = vadd.xlane.f32.xlu0 %v249
      %v251 = vpop.xlane.xlu0 %250
      %v252 = vsel %vm190, %v236, 0.0
      %253 = vadd.xlane.f32.xlu0 %v252
      %v254 = vpop.xlane.xlu0 %253
      %v255 = vsel %vm190, %v237, 0.0
      %256 = vadd.xlane.f32.xlu0 %v255
      %v257 = vpop.xlane.xlu0 %256
      %v258 = vsel %vm190, %v238, 0.0
      %259 = vadd.xlane.f32.xlu0 %v258
      %v260 = vpop.xlane.xlu0 %259
      %v261 = vsel %vm190, %v239, 0.0
      %262 = vadd.xlane.f32.xlu0 %v261
      %v263 = vpop.xlane.xlu0 %262
      %v264 = vmul.f32 %v242, %v215
      %v265 = vmul.f32 %v245, %v215
      %v266 = vmul.f32 %v248, %v215
      %v267 = vmul.f32 %v251, %v215
      %v268 = vmul.f32 %v254, %v215
      %v269 = vmul.f32 %v257, %v215
      %v270 = vmul.f32 %v260, %v215
      %v271 = vmul.f32 %v263, %v215
      %v272 = vadd.f32 %v264, 1e-05
      %v273 = vadd.f32 %v265, 1e-05
      %v274 = vadd.f32 %v266, 1e-05
      %v275 = vadd.f32 %v267, 1e-05
      %v276 = vadd.f32 %v268, 1e-05
      %v277 = vadd.f32 %v269, 1e-05
      %v278 = vadd.f32 %v270, 1e-05
      %v279 = vadd.f32 %v271, 1e-05
      %v280 = vrsqrt.pop %v272
      %v281 = vrsqrt.pop %v273
      %v282 = vrsqrt.pop %v274
      %v283 = vrsqrt.pop %v275
      %v284 = vrsqrt.pop %v276
      %v285 = vrsqrt.pop %v277
      %v286 = vrsqrt.pop %v278
      %v287 = vrsqrt.pop %v279
      %v288 = vmul.f32 %v224, %v280
      %v289 = vmul.f32 %v225, %v281
      %v290 = vmul.f32 %v226, %v282
      %v291 = vmul.f32 %v227, %v283
      %v292 = vmul.f32 %v228, %v284
      %v293 = vmul.f32 %v229, %v285
      %v294 = vmul.f32 %v230, %v286
      %v295 = vmul.f32 %v231, %v287
      %v296 = vld [vmem:[%s1] sm:$0x1]
      %v298 = vlaneseq
      %v299 = vshrl.u32 %v298, 7
      %v300 = vsub.s32 0, %v299
      %v301 = vrot.slane %v296, %v300
      %v303 = vmul.f32 %v288, %v301
      %v304 = vmul.f32 %v289, %v301
      %v305 = vmul.f32 %v290, %v301
      %v306 = vmul.f32 %v291, %v301
      %v307 = vmul.f32 %v292, %v301
      %v308 = vmul.f32 %v293, %v301
      %v309 = vmul.f32 %v294, %v301
      %v310 = vmul.f32 %v295, %v301
      %v311 = vld [vmem:[%s2] sm:$0x1]
      %v313 = vlaneseq
      %v314 = vshrl.u32 %v313, 7
      %v315 = vsub.s32 0, %v314
      %v316 = vrot.slane %v311, %v315
      %v318 = vadd.f32 %v303, %v316
      %v319 = vadd.f32 %v304, %v316
      %v320 = vadd.f32 %v305, %v316
      %v321 = vadd.f32 %v306, %v316
      %v322 = vadd.f32 %v307, %v316
      %v323 = vadd.f32 %v308, %v316
      %v324 = vadd.f32 %v309, %v316
      %v325 = vadd.f32 %v310, %v316
      %v326 = vpack.c.bf16 %v319, %v318
      %v327 = vpack.c.bf16 %v321, %v320
      %v328 = vpack.c.bf16 %v323, %v322
      %v329 = vpack.c.bf16 %v325, %v324
      %v334 = vunpack.c.l.b16 %v326
      %v335 = vunpack.c.h.b16 %v326
      %v336 = vunpack.c.l.b16 %v327
      %v337 = vunpack.c.h.b16 %v327
      %v338 = vunpack.c.l.b16 %v328
      %v339 = vunpack.c.h.b16 %v328
      %v340 = vunpack.c.l.b16 %v329
      %v341 = vunpack.c.h.b16 %v329
      %v342 = vpack.c.b16 %v334, %v334
      %v343 = vpack.c.b16 %v335, %v335
      %v344 = vpack.c.b16 %v336, %v336
      %v345 = vpack.c.b16 %v337, %v337
      %v346 = vpack.c.b16 %v338, %v338
      %v347 = vpack.c.b16 %v339, %v339
      %v348 = vpack.c.b16 %v340, %v340
      %v349 = vpack.c.b16 %v341, %v341
      %vm358 = vcmask 257024
      %359 = vst.msk [vmem:[%s172] sm:$0xf] %vm358, %v342
      %360 = vst.msk [vmem:[%s172 + $0x4] sm:$0xf] %vm358, %v343
      %361 = vst.msk [vmem:[%s172 + $0x8] sm:$0xf] %vm358, %v344
      %362 = vst.msk [vmem:[%s172 + $0xc] sm:$0xf] %vm358, %v345
      %363 = vst.msk [vmem:[%s172 + $0x10] sm:$0xf] %vm358, %v346
      %364 = vst.msk [vmem:[%s172 + $0x14] sm:$0xf] %vm358, %v347
      %365 = vst.msk [vmem:[%s172 + $0x18] sm:$0xf] %vm358, %v348
      %366 = vst.msk [vmem:[%s172 + $0x1c] sm:$0xf] %vm358, %v349
      %s367 = smul.u32 8, %s14
      %p368 = scmp.lt.s32.totalorder %s367, 15
      %s369 = scalar_select %p368, %s367, 15
      %s370 = smul.addr %s369, 4
      %s371 = scalar_lea.vmem %s3, %s370
      // Predicated region
      $region33: #{_lambda_.25} parent=31 // pred_check
        %p372 = pneg %p100
      $region34: #{_lambda_.25} parent=31 // pred_check_branch
        %374 = sbr.rel (%p372) target = $region36
      $region35: #{_lambda_.25} parent=31 // pred_region
        %s375 = smul.u32 8, %s14
      $region36: #{_lambda_.25} parent=31 // pred_fallthru
        _
    $region32: #{_lambda_.25} parent=5 // pred_fallthru
      _
    %p376 = scmp.le.s32.totalorder 2, %s9
    // Predicated region
    $region37: #{_lambda_.25} parent=5 // pred_check
      %p377 = pneg %p376
    $region38: #{_lambda_.25} parent=5 // pred_check_branch
      %379 = sbr.rel (%p377) target = $region40
    $region39: #{_lambda_.25} parent=5 // pred_region
      %s380 = ssub.s32 %s9, 2
      // Predicated region
      $region41: #{_lambda_.25} parent=39 // pred_check
        %p381 = pneg %p106
      $region42: #{_lambda_.25} parent=39 // pred_check_branch
        %383 = sbr.rel (%p381) target = $region44
      $region43: #{_lambda_.25} parent=39 // pred_region
        %s384 = smul.u32 8, %s15
        %p385 = scmp.lt.s32.totalorder %s384, 15
        %s386 = scalar_select %p385, %s384, 15
        %s387 = smul.addr %s386, 4
        %s388 = scalar_lea.vmem %s3, %s387
      $region44: #{_lambda_.25} parent=39 // pred_fallthru
        _
    $region40: #{_lambda_.25} parent=5 // pred_fallthru
      _
  $region6: #{_lambda_.25} parent=0 // loop_footer
    %s13 = sadd.s32 1, %s9
  $region7: #{_lambda_.25} parent=0 // loop_footer_branch
    %8 = sbr.rel target = $region3
  $region8: #{_lambda_.25} parent=0 // loop_exit
    _

// kernel: _lambda_.26
$region0: #{_lambda_.26}
  #allocation0 [shape = 'u32[]', space=smem, size = 0x4, offset = 0x4, fixed_abs, tag = 'smem constant byte address 0x4 - core index']
  #allocation1 [shape = 'u32[144,128]{1,0:T(1,128)}', space=vmem, size = 0x12000, scoped, tag = 'internal scratch']
  %s0 = inlined_call_operand.vmem [shape: bf16[128,32], index: 0, kind: input, shape index: {}]
  %s1 = inlined_call_operand.vmem [shape: f32[1,32], index: 1, kind: input, shape index: {}]
  %s2 = inlined_call_operand.vmem [shape: f32[1,32], index: 2, kind: input, shape index: {}]
  %s3 = inlined_call_operand.vmem [shape: bf16[32,96], index: 3, kind: input, shape index: {}]
  %s4 = inlined_call_operand.vmem [shape: f32[1,96], index: 4, kind: input, shape index: {}]
  %s5 = inlined_call_operand.vmem [shape: bf16[128,96], index: 5, kind: output, shape index: {}]
  %s6 = sld [smem:[#allocation0]]
  $region53: #{_lambda_.26} parent=0
    _
  %s8 = ssub.s32 1, %s6
  %s9 = scalar_select 0, %s8, %s6
  loop: start=0, step=1, limit=4
  $region2: #{_lambda_.26} parent=0 // loop_pre_header
    _
  $region3: #{_lambda_.26} parent=0 // loop_header
    %s11 = sphi 0, %s15
    %p12 = scmp.ge.s32.totalorder %s11, 4
    %s18 = sphi 0, %s30
    %s19 = sphi 0, %s26
    %s20 = sphi 0, %s18
    %s21 = sphi 0, %s19
    %s22 = sphi 0, %s20
    %s23 = sphi 0, %s21
    %s33 = sphi 0, %s35
    %s36 = sphi 0, %s33
    %s37 = sphi 0, %s36
    %s53 = sphi 0, %s37
    %s57 = sphi 0, %s57
    %s59 = sphi 0, %s57
    %s60 = sphi 0, %s59
    %s74 = sphi 0, %s60
    %s78 = sphi 0, %s78
    %s80 = sphi 0, %s78
    %s81 = sphi 0, %s80
    %s95 = sphi 0, %s81
    %s101 = sphi 0, %s103
    %s104 = sphi 0, %s101
    %s105 = sphi 0, %s104
    %s121 = sphi 0, %s105
    %s127 = sphi 0, %s129
    %s130 = sphi 0, %s127
    %s131 = sphi 0, %s130
    %s147 = sphi 0, %s131
    %s155 = sphi 0, %s157
    %s158 = sphi 0, %s155
    %s159 = sphi 0, %s158
    %s175 = sphi 0, %s159
  $region4: #{_lambda_.26} parent=0 // loop_header_branch
    %14 = sbr.rel (%p12) target = $region8
  $region5: #{_lambda_.26} parent=0 // loop_body
    %s16 = ssub.s32 %s11, 1
    %s17 = ssub.s32 %s11, 2
    %s24 = sadd.s32 1, %s19
    %p25 = scmp.ge.s32.totalorder %s24, 1
    %s26 = scalar_select %p25, 0, %s24
    %s27 = sadd.s32 1, %s18
    %s28 = scalar_select %p25, %s27, %s18
    %p29 = scmp.ge.s32.totalorder %s28, 2
    %s30 = scalar_select %p29, 0, %s28
    %s31 = ssub.s32 %s18, %s30
    %p32 = scmp.eq.s32.totalorder %s31, 0
    %s34 = sadd.s32 %s33, 1
    %s35 = scalar_select %p32, %s33, %s34
    %p38 = pneg %p32
    %p39 = scmp.eq.s32.totalorder %s11, 1
    %p40 = por %p38, %p39
    %p41 = scmp.ne.s32.totalorder %s33, %s36
    %p42 = scmp.eq.s32.totalorder %s11, 0
    %p43 = por %p41, %p42
    %p44 = scmp.ne.s32.totalorder %s33, %s36
    %p45 = scmp.eq.s32.totalorder %s16, 1
    %p46 = por %p44, %p45
    %p47 = scmp.ne.s32.totalorder %s36, %s37
    %p48 = scmp.eq.s32.totalorder %s16, 0
    %p49 = por %p47, %p48
    %p50 = scmp.ne.s32.totalorder %s36, %s37
    %p51 = scmp.eq.s32.totalorder %s17, 1
    %p52 = por %p50, %p51
    %p54 = scmp.ne.s32.totalorder %s37, %s53
    %p55 = scmp.eq.s32.totalorder %s17, 0
    %p56 = por %p54, %p55
    %s58 = sadd.s32 %s57, 1
    %p61 = scmp.eq.s32.totalorder %s11, 1
    %p62 = scmp.ne.s32.totalorder %s57, %s59
    %p63 = scmp.eq.s32.totalorder %s11, 0
    %p64 = por %p62, %p63
    %p65 = scmp.ne.s32.totalorder %s57, %s59
    %p66 = scmp.eq.s32.totalorder %s16, 1
    %p67 = por %p65, %p66
    %p68 = scmp.ne.s32.totalorder %s59, %s60
    %p69 = scmp.eq.s32.totalorder %s16, 0
    %p70 = por %p68, %p69
    %p71 = scmp.ne.s32.totalorder %s59, %s60
    %p72 = scmp.eq.s32.totalorder %s17, 1
    %p73 = por %p71, %p72
    %p75 = scmp.ne.s32.totalorder %s60, %s74
    %p76 = scmp.eq.s32.totalorder %s17, 0
    %p77 = por %p75, %p76
    %s79 = sadd.s32 %s78, 1
    %p82 = scmp.eq.s32.totalorder %s11, 1
    %p83 = scmp.ne.s32.totalorder %s78, %s80
    %p84 = scmp.eq.s32.totalorder %s11, 0
    %p85 = por %p83, %p84
    %p86 = scmp.ne.s32.totalorder %s78, %s80
    %p87 = scmp.eq.s32.totalorder %s16, 1
    %p88 = por %p86, %p87
    %p89 = scmp.ne.s32.totalorder %s80, %s81
    %p90 = scmp.eq.s32.totalorder %s16, 0
    %p91 = por %p89, %p90
    %p92 = scmp.ne.s32.totalorder %s80, %s81
    %p93 = scmp.eq.s32.totalorder %s17, 1
    %p94 = por %p92, %p93
    %p96 = scmp.ne.s32.totalorder %s81, %s95
    %p97 = scmp.eq.s32.totalorder %s17, 0
    %p98 = por %p96, %p97
    %s99 = ssub.s32 %s19, %s26
    %p100 = scmp.eq.s32.totalorder %s99, 0
    %s102 = sadd.s32 %s101, 1
    %s103 = scalar_select %p100, %s101, %s102
    %p106 = pneg %p100
    %p107 = scmp.eq.s32.totalorder %s11, 1
    %p108 = por %p106, %p107
    %p109 = scmp.ne.s32.totalorder %s101, %s104
    %p110 = scmp.eq.s32.totalorder %s11, 0
    %p111 = por %p109, %p110
    %p112 = scmp.ne.s32.totalorder %s101, %s104
    %p113 = scmp.eq.s32.totalorder %s16, 1
    %p114 = por %p112, %p113
    %p115 = scmp.ne.s32.totalorder %s104, %s105
    %p116 = scmp.eq.s32.totalorder %s16, 0
    %p117 = por %p115, %p116
    %p118 = scmp.ne.s32.totalorder %s104, %s105
    %p119 = scmp.eq.s32.totalorder %s17, 1
    %p120 = por %p118, %p119
    %p122 = scmp.ne.s32.totalorder %s105, %s121
    %p123 = scmp.eq.s32.totalorder %s17, 0
    %p124 = por %p122, %p123
    %s125 = ssub.s32 %s19, %s26
    %p126 = scmp.eq.s32.totalorder %s125, 0
    %s128 = sadd.s32 %s127, 1
    %s129 = scalar_select %p126, %s127, %s128
    %p132 = pneg %p126
    %p133 = scmp.eq.s32.totalorder %s11, 1
    %p134 = por %p132, %p133
    %p135 = scmp.ne.s32.totalorder %s127, %s130
    %p136 = scmp.eq.s32.totalorder %s11, 0
    %p137 = por %p135, %p136
    %p138 = scmp.ne.s32.totalorder %s127, %s130
    %p139 = scmp.eq.s32.totalorder %s16, 1
    %p140 = por %p138, %p139
    %p141 = scmp.ne.s32.totalorder %s130, %s131
    %p142 = scmp.eq.s32.totalorder %s16, 0
    %p143 = por %p141, %p142
    %p144 = scmp.ne.s32.totalorder %s130, %s131
    %p145 = scmp.eq.s32.totalorder %s17, 1
    %p146 = por %p144, %p145
    %p148 = scmp.ne.s32.totalorder %s131, %s147
    %p149 = scmp.eq.s32.totalorder %s17, 0
    %p150 = por %p148, %p149
    %s151 = ssub.s32 %s18, %s30
    %s152 = ssub.s32 %s19, %s26
    %s153 = sor.u32 %s151, %s152
    %p154 = scmp.eq.s32.totalorder %s153, 0
    %s156 = sadd.s32 %s155, 1
    %s157 = scalar_select %p154, %s155, %s156
    %p160 = pneg %p154
    %p161 = scmp.eq.s32.totalorder %s11, 1
    %p162 = por %p160, %p161
    %p163 = scmp.ne.s32.totalorder %s155, %s158
    %p164 = scmp.eq.s32.totalorder %s11, 0
    %p165 = por %p163, %p164
    %p166 = scmp.ne.s32.totalorder %s155, %s158
    %p167 = scmp.eq.s32.totalorder %s16, 1
    %p168 = por %p166, %p167
    %p169 = scmp.ne.s32.totalorder %s158, %s159
    %p170 = scmp.eq.s32.totalorder %s16, 0
    %p171 = por %p169, %p170
    %p172 = scmp.ne.s32.totalorder %s158, %s159
    %p173 = scmp.eq.s32.totalorder %s17, 1
    %p174 = por %p172, %p173
    %p176 = scmp.ne.s32.totalorder %s159, %s175
    %p177 = scmp.eq.s32.totalorder %s17, 0
    %p178 = por %p176, %p177
    %p179 = scmp.le.s32.totalorder 1, %s11
    %p180 = scmp.lt.s32.totalorder %s11, 3
    %p181 = pnand %p179, %p180
    %p182 = pneg %p181
    // Predicated region
    $region9: #{_lambda_.26} parent=5 // pred_check
      _
    $region10: #{_lambda_.26} parent=5 // pred_check_branch
      %184 = sbr.rel (%p181) target = $region12
    $region11: #{_lambda_.26} parent=5 // pred_region
      %s185 = ssub.s32 %s11, 1
      // Predicated region
      $region13: #{_lambda_.26} parent=11 // pred_check
        %p186 = pneg %p70
      $region14: #{_lambda_.26} parent=11 // pred_check_branch
        %188 = sbr.rel (%p186) target = $region16
      $region15: #{_lambda_.26} parent=11 // pred_region
        _
      $region16: #{_lambda_.26} parent=11 // pred_fallthru
        _
      // Predicated region
      $region17: #{_lambda_.26} parent=11 // pred_check
        %p189 = pneg %p91
      $region18: #{_lambda_.26} parent=11 // pred_check_branch
        %191 = sbr.rel (%p189) target = $region20
      $region19: #{_lambda_.26} parent=11 // pred_region
        _
      $region20: #{_lambda_.26} parent=11 // pred_fallthru
        _
      // Predicated region
      $region21: #{_lambda_.26} parent=11 // pred_check
        %p192 = pneg %p117
      $region22: #{_lambda_.26} parent=11 // pred_check_branch
        %194 = sbr.rel (%p192) target = $region24
      $region23: #{_lambda_.26} parent=11 // pred_region
        %p195 = scmp.lt.s32.totalorder %s21, 0
        %s196 = scalar_select %p195, %s21, 0
        %s197 = smul.addr %s196, 4
        %s198 = scalar_lea.vmem %s3, %s197
      $region24: #{_lambda_.26} parent=11 // pred_fallthru
        _
      // Predicated region
      $region25: #{_lambda_.26} parent=11 // pred_check
        %p199 = pneg %p143
      $region26: #{_lambda_.26} parent=11 // pred_check_branch
        %201 = sbr.rel (%p199) target = $region28
      $region27: #{_lambda_.26} parent=11 // pred_region
        %p202 = scmp.lt.s32.totalorder %s21, 0
        %s203 = scalar_select %p202, %s21, 0
        %s204 = scalar_lea.vmem %s4, %s203
      $region28: #{_lambda_.26} parent=11 // pred_fallthru
        _
    $region12: #{_lambda_.26} parent=5 // pred_fallthru
      _
    %p205 = scmp.lt.s32.totalorder %s11, 2
    // Predicated region
    $region29: #{_lambda_.26} parent=5 // pred_check
      %p206 = pneg %p205
    $region30: #{_lambda_.26} parent=5 // pred_check_branch
      %208 = sbr.rel (%p206) target = $region32
    $region31: #{_lambda_.26} parent=5 // pred_region
      // Predicated region
      $region33: #{_lambda_.26} parent=31 // pred_check
        %p209 = pneg %p43
      $region34: #{_lambda_.26} parent=31 // pred_check_branch
        %211 = sbr.rel (%p209) target = $region36
      $region35: #{_lambda_.26} parent=31 // pred_region
        %s212 = smul.u32 8, %s18
        %p213 = scmp.lt.s32.totalorder %s212, 15
        %s214 = scalar_select %p213, %s212, 15
        %s215 = smul.addr %s214, 4
        %s216 = scalar_lea.vmem %s0, %s215
        %s217 = smul.u32 8, %s18
      $region36: #{_lambda_.26} parent=31 // pred_fallthru
        _
    $region32: #{_lambda_.26} parent=5 // pred_fallthru
      _
    %p218 = scmp.le.s32.totalorder 1, %s11
    %p219 = scmp.lt.s32.totalorder %s11, 3
    %p220 = pnand %p218, %p219
    %p221 = pneg %p220
    // Predicated region
    $region37: #{_lambda_.26} parent=5 // pred_check
      _
    $region38: #{_lambda_.26} parent=5 // pred_check_branch
      %223 = sbr.rel (%p220) target = $region40
    $region39: #{_lambda_.26} parent=5 // pred_region
      %s224 = ssub.s32 %s11, 1
      %s225 = smul.u32 8, %s20
      %p226 = scmp.lt.s32.totalorder %s225, 15
      %s227 = scalar_select %p226, %s225, 15
      %s228 = smul.addr %s227, 4
      %s229 = scalar_lea.vmem %s0, %s228
      %p230 = pneg %p49
      %p231 = pneg %p46
      %p232 = pneg %p70
      %p233 = pneg %p67
      %p234 = pneg %p91
      %p235 = pneg %p88
      %p236 = scmp.lt.s32.totalorder %s21, 0
      %s237 = scalar_select %p236, %s21, 0
      %s238 = smul.addr %s237, 4
      %s239 = scalar_lea.vmem %s3, %s238
      %p240 = pneg %p117
      %p241 = pneg %p114
      %p242 = scmp.lt.s32.totalorder %s21, 0
      %s243 = scalar_select %p242, %s21, 0
      %s244 = scalar_lea.vmem %s4, %s243
      %p245 = pneg %p143
      %p246 = pneg %p140
      %p247 = pneg %p171
      %p248 = pneg %p168
      %s249 = smul.u32 8, %s20
      %p250 = scmp.lt.s32.totalorder %s249, 15
      %s251 = scalar_select %p250, %s249, 15
      %p252 = scmp.lt.s32.totalorder %s21, 0
      %s253 = scalar_select %p252, %s21, 0
      %s254 = sadd.s32 %s253, %s251
      %s255 = smul.addr %s254, 4
      %s256 = scalar_lea.vmem %s5, %s255
      %s257 = smul.u32 8, %s20
      %p258 = scmp.lt.s32.totalorder %s257, 15
      %s259 = scalar_select %p258, %s257, 15
      %s260 = smul.addr %s259, 4
      %s261 = scalar_lea.vmem %s0, %s260
      %s262 = smul.u32 8, %s20
      %p263 = scmp.lt.s32.totalorder %s21, 0
      %s264 = scalar_select %p263, %s21, 0
      %s265 = smul.addr %s264, 4
      %s266 = scalar_lea.vmem %s3, %s265
      %p267 = scmp.lt.s32.totalorder %s21, 0
      %s268 = scalar_select %p267, %s21, 0
      %s269 = scalar_lea.vmem %s4, %s268
      %s270 = smul.u32 8, %s20
      %p271 = scmp.lt.s32.totalorder %s270, 15
      %s272 = scalar_select %p271, %s270, 15
      %p273 = scmp.lt.s32.totalorder %s21, 0
      %s274 = scalar_select %p273, %s21, 0
      %s275 = sadd.s32 %s274, %s272
      %s276 = smul.addr %s275, 4
      %s277 = scalar_lea.vmem %s5, %s276
      %s278 = smul.u32 8, %s20
      %v280 = vld [vmem:[%s261] sm:$0xf]
      %v281 = vld [vmem:[%s261 + $0x4] sm:$0xf]
      %v282 = vld [vmem:[%s261 + $0x8] sm:$0xf]
      %v283 = vld [vmem:[%s261 + $0xc] sm:$0xf]
      %v284 = vld [vmem:[%s261 + $0x10] sm:$0xf]
      %v285 = vld [vmem:[%s261 + $0x14] sm:$0xf]
      %v286 = vld [vmem:[%s261 + $0x18] sm:$0xf]
      %v287 = vld [vmem:[%s261 + $0x1c] sm:$0xf]
      %v288 = vunpack.c.l.bf16 %v280
      %v289 = vunpack.c.l.bf16 %v281
      %v290 = vunpack.c.l.bf16 %v282
      %v291 = vunpack.c.l.bf16 %v283
      %v292 = vunpack.c.l.bf16 %v284
      %v293 = vunpack.c.l.bf16 %v285
      %v294 = vunpack.c.l.bf16 %v286
      %v295 = vunpack.c.l.bf16 %v287
      %vm296 = vcmask 261120
      %v297 = vsel %vm296, %v288, 0.0
      %298 = vadd.xlane.f32.xlu0 %v297
      %v299 = vpop.xlane.xlu0 %298
      %v300 = vsel %vm296, %v289, 0.0
      %301 = vadd.xlane.f32.xlu0 %v300
      %v302 = vpop.xlane.xlu0 %301
      %v303 = vsel %vm296, %v290, 0.0
      %304 = vadd.xlane.f32.xlu0 %v303
      %v305 = vpop.xlane.xlu0 %304
      %v306 = vsel %vm296, %v291, 0.0
      %307 = vadd.xlane.f32.xlu0 %v306
      %v308 = vpop.xlane.xlu0 %307
      %v309 = vsel %vm296, %v292, 0.0
      %310 = vadd.xlane.f32.xlu0 %v309
      %v311 = vpop.xlane.xlu0 %310
      %v312 = vsel %vm296, %v293, 0.0
      %313 = vadd.xlane.f32.xlu0 %v312
      %v314 = vpop.xlane.xlu0 %313
      %v315 = vsel %vm296, %v294, 0.0
      %316 = vadd.xlane.f32.xlu0 %v315
      %v317 = vpop.xlane.xlu0 %316
      %v318 = vsel %vm296, %v295, 0.0
      %319 = vadd.xlane.f32.xlu0 %v318
      %v320 = vpop.xlane.xlu0 %319
      %v321 = vrcp.pop 32.0
      %v322 = vmul.f32 %v299, %v321
      %v323 = vmul.f32 %v302, %v321
      %v324 = vmul.f32 %v305, %v321
      %v325 = vmul.f32 %v308, %v321
      %v326 = vmul.f32 %v311, %v321
      %v327 = vmul.f32 %v314, %v321
      %v328 = vmul.f32 %v317, %v321
      %v329 = vmul.f32 %v320, %v321
      %v330 = vsub.f32 %v288, %v322
      %v331 = vsub.f32 %v289, %v323
      %v332 = vsub.f32 %v290, %v324
      %v333 = vsub.f32 %v291, %v325
      %v334 = vsub.f32 %v292, %v326
      %v335 = vsub.f32 %v293, %v327
      %v336 = vsub.f32 %v294, %v328
      %v337 = vsub.f32 %v295, %v329
      %v338 = vmul.f32 %v330, %v330
      %v339 = vmul.f32 %v331, %v331
      %v340 = vmul.f32 %v332, %v332
      %v341 = vmul.f32 %v333, %v333
      %v342 = vmul.f32 %v334, %v334
      %v343 = vmul.f32 %v335, %v335
      %v344 = vmul.f32 %v336, %v336
      %v345 = vmul.f32 %v337, %v337
      %v346 = vsel %vm296, %v338, 0.0
      %347 = vadd.xlane.f32.xlu0 %v346
      %v348 = vpop.xlane.xlu0 %347
      %v349 = vsel %vm296, %v339, 0.0
      %350 = vadd.xlane.f32.xlu0 %v349
      %v351 = vpop.xlane.xlu0 %350
      %v352 = vsel %vm296, %v340, 0.0
      %353 = vadd.xlane.f32.xlu0 %v352
      %v354 = vpop.xlane.xlu0 %353
      %v355 = vsel %vm296, %v341, 0.0
      %356 = vadd.xlane.f32.xlu0 %v355
      %v357 = vpop.xlane.xlu0 %356
      %v358 = vsel %vm296, %v342, 0.0
      %359 = vadd.xlane.f32.xlu0 %v358
      %v360 = vpop.xlane.xlu0 %359
      %v361 = vsel %vm296, %v343, 0.0
      %362 = vadd.xlane.f32.xlu0 %v361
      %v363 = vpop.xlane.xlu0 %362
      %v364 = vsel %vm296, %v344, 0.0
      %365 = vadd.xlane.f32.xlu0 %v364
      %v366 = vpop.xlane.xlu0 %365
      %v367 = vsel %vm296, %v345, 0.0
      %368 = vadd.xlane.f32.xlu0 %v367
      %v369 = vpop.xlane.xlu0 %368
      %v370 = vmul.f32 %v348, %v321
      %v371 = vmul.f32 %v351, %v321
      %v372 = vmul.f32 %v354, %v321
      %v373 = vmul.f32 %v357, %v321
      %v374 = vmul.f32 %v360, %v321
      %v375 = vmul.f32 %v363, %v321
      %v376 = vmul.f32 %v366, %v321
      %v377 = vmul.f32 %v369, %v321
      %v378 = vadd.f32 %v370, 1e-05
      %v379 = vadd.f32 %v371, 1e-05
      %v380 = vadd.f32 %v372, 1e-05
      %v381 = vadd.f32 %v373, 1e-05
      %v382 = vadd.f32 %v374, 1e-05
      %v383 = vadd.f32 %v375, 1e-05
      %v384 = vadd.f32 %v376, 1e-05
      %v385 = vadd.f32 %v377, 1e-05
      %v386 = vrsqrt.pop %v378
      %v387 = vrsqrt.pop %v379
      %v388 = vrsqrt.pop %v380
      %v389 = vrsqrt.pop %v381
      %v390 = vrsqrt.pop %v382
      %v391 = vrsqrt.pop %v383
      %v392 = vrsqrt.pop %v384
      %v393 = vrsqrt.pop %v385
      %v394 = vmul.f32 %v330, %v386
      %v395 = vmul.f32 %v331, %v387
      %v396 = vmul.f32 %v332, %v388
      %v397 = vmul.f32 %v333, %v389
      %v398 = vmul.f32 %v334, %v390
      %v399 = vmul.f32 %v335, %v391
      %v400 = vmul.f32 %v336, %v392
      %v401 = vmul.f32 %v337, %v393
      %v402 = vld [vmem:[%s1] sm:$0x1]
      %v404 = vlaneseq
      %v405 = vshrl.u32 %v404, 7
      %v406 = vsub.s32 0, %v405
      %v407 = vrot.slane %v402, %v406
      %v409 = vmul.f32 %v394, %v407
      %v410 = vmul.f32 %v395, %v407
      %v411 = vmul.f32 %v396, %v407
      %v412 = vmul.f32 %v397, %v407
      %v413 = vmul.f32 %v398, %v407
      %v414 = vmul.f32 %v399, %v407
      %v415 = vmul.f32 %v400, %v407
      %v416 = vmul.f32 %v401, %v407
      %v417 = vld [vmem:[%s2] sm:$0x1]
      %v419 = vlaneseq
      %v420 = vshrl.u32 %v419, 7
      %v421 = vsub.s32 0, %v420
      %v422 = vrot.slane %v417, %v421
      %v424 = vadd.f32 %v409, %v422
      %v425 = vadd.f32 %v410, %v422
      %v426 = vadd.f32 %v411, %v422
      %v427 = vadd.f32 %v412, %v422
      %v428 = vadd.f32 %v413, %v422
      %v429 = vadd.f32 %v414, %v422
      %v430 = vadd.f32 %v415, %v422
      %v431 = vadd.f32 %v416, %v422
      %v432 = vpack.c.bf16 %v425, %v424
      %v433 = vpack.c.bf16 %v427, %v426
      %v434 = vpack.c.bf16 %v429, %v428
      %v435 = vpack.c.bf16 %v431, %v430
      %v436 = vld [vmem:[%s266] sm:$0xf]
      %v437 = vld [vmem:[%s266 + $0x4] sm:$0xf]
      %v438 = vld [vmem:[%s266 + $0x8] sm:$0xf]
      %v439 = vld [vmem:[%s266 + $0xc] sm:$0xf]
      %v440 = vld [vmem:[%s269] sm:$0x1]
      %v442 = vlaneseq
      %v443 = vshrl.u32 %v442, 7
      %v444 = vsub.s32 0, %v443
      %v445 = vrot.slane %v440, %v444
      %v451 = vunpack.c.l.b16 %v436
      %v452 = vunpack.c.l.b16 %v437
      %v453 = vunpack.c.l.b16 %v438
      %v454 = vunpack.c.l.b16 %v439
      %v455 = vpack.c.b16 %v452, %v451
      %v456 = vpack.c.b16 %v454, %v453
      %v460 = vsel %vm296, %v432, 0
      %v463 = vsel %vm296, %v433, 0
      %v466 = vsel %vm296, %v434, 0
      %v469 = vsel %vm296, %v435, 0
      %471 = vmatprep.subr.bf16.mxu0 0
      %472 = vmatpush1.bf16.msra.mxu0 0
      %473 = vmatprep.subr.bf16.mxu0 0
      %474 = vmatpush1.bf16.msra.mxu0 0
      %475 = vmatprep.subr.bf16.mxu0 0
      %476 = vmatpush1.bf16.msra.mxu0 0
      %477 = vmatprep.subr.bf16.mxu0 0
      %478 = vmatpush1.bf16.msra.mxu0 0
      %479 = vmatprep.subr.bf16.mxu0 0
      %480 = vmatpush1.bf16.msra.mxu0 0
      %481 = vmatprep.subr.bf16.mxu0 0
      %482 = vmatpush1.bf16.msra.mxu0 0
      %483 = vmatprep.subr.bf16.mxu0 0
      %484 = vmatpush1.bf16.msra.mxu0 %v456
      %485 = vmatprep.subr.bf16.mxu0 0
      %486 = vmatpush1.bf16.msra.mxu0 %v455
      %487 = vmatprep.subr.bf16.mxu0 0
      %488 = vmatpush2.bf16.msra.mxu0 0
      %489 = vmatprep.subr.bf16.mxu0 0
      %490 = vmatpush2.bf16.msra.mxu0 0
      %491 = vmatprep.subr.bf16.mxu0 0
      %492 = vmatpush2.bf16.msra.mxu0 0
      %493 = vmatprep.subr.bf16.mxu0 0
      %494 = vmatpush2.bf16.msra.mxu0 0
      %495 = vmatprep.subr.bf16.mxu0 0
      %496 = vmatpush2.bf16.msra.mxu0 0
      %497 = vmatprep.subr.bf16.mxu0 0
      %498 = vmatpush2.bf16.msra.mxu0 0
      %499 = vmatprep.subr.bf16.mxu0 0
      %500 = vmatpush2.bf16.msra.mxu0 0
      %501 = vmatprep.subr.bf16.mxu0 0
      %502 = vmatpush2.bf16.msra.mxu0 0
      %503 = vmatprep.mubr.bf16.mxu0 0
      %504 = vmatmul.mubr.bf16.gmra.mxu0 %v460
      %v505 = vpop.f32.mrf.mxu0
      %v506 = vadd.f32 %v445, %v505
      %v507 = vpop.f32.mrf.mxu0
      %v508 = vpop.f32.mrf.mxu0
      %v509 = vadd.f32 %v445, %v508
      %v510 = vpop.f32.mrf.mxu0
      %511 = vmatprep.mubr.bf16.mxu0 0
      %512 = vmatmul.mubr.bf16.gmra.mxu0 %v463
      %v513 = vpop.f32.mrf.mxu0
      %v514 = vadd.f32 %v445, %v513
      %v515 = vpop.f32.mrf.mxu0
      %v516 = vpop.f32.mrf.mxu0
      %v517 = vadd.f32 %v445, %v516
      %v518 = vpop.f32.mrf.mxu0
      %519 = vmatprep.mubr.bf16.mxu0 0
      %520 = vmatmul.mubr.bf16.gmra.mxu0 %v466
      %v521 = vpop.f32.mrf.mxu0
      %v522 = vadd.f32 %v445, %v521
      %v523 = vpop.f32.mrf.mxu0
      %v524 = vpop.f32.mrf.mxu0
      %v525 = vadd.f32 %v445, %v524
      %v526 = vpop.f32.mrf.mxu0
      %527 = vmatprep.mubr.bf16.mxu0 0
      %528 = vmatmul.mubr.bf16.gmra.mxu0 %v469
      %v529 = vpop.f32.mrf.mxu0
      %v530 = vadd.f32 %v445, %v529
      %v531 = vpop.f32.mrf.mxu0
      %v532 = vpop.f32.mrf.mxu0
      %v533 = vadd.f32 %v445, %v532
      %v534 = vpop.f32.mrf.mxu0
      %535 = vdwg.mxu0
      %v536 = vpack.c.bf16 %v509, %v506
      %v537 = vpack.c.bf16 %v517, %v514
      %v538 = vpack.c.bf16 %v525, %v522
      %v539 = vpack.c.bf16 %v533, %v530
      %v544 = vunpack.c.l.b16 %v536
      %v545 = vunpack.c.h.b16 %v536
      %v546 = vunpack.c.l.b16 %v537
      %v547 = vunpack.c.h.b16 %v537
      %v548 = vunpack.c.l.b16 %v538
      %v549 = vunpack.c.h.b16 %v538
      %v550 = vunpack.c.l.b16 %v539
      %v551 = vunpack.c.h.b16 %v539
      %v552 = vpack.c.b16 %v544, %v544
      %v553 = vpack.c.b16 %v545, %v545
      %v554 = vpack.c.b16 %v546, %v546
      %v555 = vpack.c.b16 %v547, %v547
      %v556 = vpack.c.b16 %v548, %v548
      %v557 = vpack.c.b16 %v549, %v549
      %v558 = vpack.c.b16 %v550, %v550
      %v559 = vpack.c.b16 %v551, %v551
      %vm568 = vcmask 781312
      %569 = vst.msk [vmem:[%s277] sm:$0xf] %vm568, %v552
      %570 = vst.msk [vmem:[%s277 + $0x4] sm:$0xf] %vm568, %v553
      %571 = vst.msk [vmem:[%s277 + $0x8] sm:$0xf] %vm568, %v554
      %572 = vst.msk [vmem:[%s277 + $0xc] sm:$0xf] %vm568, %v555
      %573 = vst.msk [vmem:[%s277 + $0x10] sm:$0xf] %vm568, %v556
      %574 = vst.msk [vmem:[%s277 + $0x14] sm:$0xf] %vm568, %v557
      %575 = vst.msk [vmem:[%s277 + $0x18] sm:$0xf] %vm568, %v558
      %576 = vst.msk [vmem:[%s277 + $0x1c] sm:$0xf] %vm568, %v559
      %s577 = smul.u32 8, %s20
      %p578 = scmp.lt.s32.totalorder %s577, 15
      %s579 = scalar_select %p578, %s577, 15
      %p580 = scmp.lt.s32.totalorder %s21, 0
      %s581 = scalar_select %p580, %s21, 0
      %s582 = sadd.s32 %s581, %s579
      %s583 = smul.addr %s582, 4
      %s584 = scalar_lea.vmem %s5, %s583
      // Predicated region
      $region41: #{_lambda_.26} parent=39 // pred_check
        %p585 = pneg %p168
      $region42: #{_lambda_.26} parent=39 // pred_check_branch
        %587 = sbr.rel (%p585) target = $region44
      $region43: #{_lambda_.26} parent=39 // pred_region
        %s588 = smul.u32 8, %s20
      $region44: #{_lambda_.26} parent=39 // pred_fallthru
        _
    $region40: #{_lambda_.26} parent=5 // pred_fallthru
      _
    %p589 = scmp.le.s32.totalorder 2, %s11
    // Predicated region
    $region45: #{_lambda_.26} parent=5 // pred_check
      %p590 = pneg %p589
    $region46: #{_lambda_.26} parent=5 // pred_check_branch
      %592 = sbr.rel (%p590) target = $region48
    $region47: #{_lambda_.26} parent=5 // pred_region
      %s593 = ssub.s32 %s11, 2
      // Predicated region
      $region49: #{_lambda_.26} parent=47 // pred_check
        %p594 = pneg %p174
      $region50: #{_lambda_.26} parent=47 // pred_check_branch
        %596 = sbr.rel (%p594) target = $region52
      $region51: #{_lambda_.26} parent=47 // pred_region
        %s597 = smul.u32 8, %s22
        %p598 = scmp.lt.s32.totalorder %s597, 15
        %s599 = scalar_select %p598, %s597, 15
        %p600 = scmp.lt.s32.totalorder %s23, 0
        %s601 = scalar_select %p600, %s23, 0
        %s602 = sadd.s32 %s601, %s599
        %s603 = smul.addr %s602, 4
        %s604 = scalar_lea.vmem %s5, %s603
      $region52: #{_lambda_.26} parent=47 // pred_fallthru
        _
    $region48: #{_lambda_.26} parent=5 // pred_fallthru
      _
  $region6: #{_lambda_.26} parent=0 // loop_footer
    %s15 = sadd.s32 1, %s11
  $region7: #{_lambda_.26} parent=0 // loop_footer_branch
    %10 = sbr.rel target = $region3
  $region8: #{_lambda_.26} parent=0 // loop_exit
    _

// kernel: _lambda_.28
$region0: #{_lambda_.28}
  #allocation0 [shape = 'u32[]', space=smem, size = 0x4, offset = 0x4, fixed_abs, tag = 'smem constant byte address 0x4 - core index']
  #allocation1 [shape = 'u32[144,128]{1,0:T(1,128)}', space=vmem, size = 0x12000, scoped, tag = 'internal scratch']
  %s0 = inlined_call_operand.vmem [shape: bf16[128,32], index: 0, kind: input, shape index: {}]
  %s1 = inlined_call_operand.vmem [shape: bf16[32,32], index: 1, kind: input, shape index: {}]
  %s2 = inlined_call_operand.vmem [shape: f32[1,32], index: 2, kind: input, shape index: {}]
  %s3 = inlined_call_operand.vmem [shape: bf16[128,32], index: 3, kind: input, shape index: {}]
  %s4 = inlined_call_operand.vmem [shape: bf16[128,32], index: 4, kind: output, shape index: {}]
  %s5 = sld [smem:[#allocation0]]
  $region49: #{_lambda_.28} parent=0
    _
  %s7 = ssub.s32 1, %s5
  %s8 = scalar_select 0, %s7, %s5
  loop: start=0, step=1, limit=4
  $region2: #{_lambda_.28} parent=0 // loop_pre_header
    _
  $region3: #{_lambda_.28} parent=0 // loop_header
    %s10 = sphi 0, %s14
    %p11 = scmp.ge.s32.totalorder %s10, 4
    %s17 = sphi 0, %s29
    %s18 = sphi 0, %s25
    %s19 = sphi 0, %s17
    %s20 = sphi 0, %s18
    %s21 = sphi 0, %s19
    %s22 = sphi 0, %s20
    %s32 = sphi 0, %s34
    %s35 = sphi 0, %s32
    %s36 = sphi 0, %s35
    %s52 = sphi 0, %s36
    %s58 = sphi 0, %s60
    %s61 = sphi 0, %s58
    %s62 = sphi 0, %s61
    %s78 = sphi 0, %s62
    %s84 = sphi 0, %s86
    %s87 = sphi 0, %s84
    %s88 = sphi 0, %s87
    %s104 = sphi 0, %s88
    %s112 = sphi 0, %s114
    %s115 = sphi 0, %s112
    %s116 = sphi 0, %s115
    %s132 = sphi 0, %s116
    %s140 = sphi 0, %s142
    %s143 = sphi 0, %s140
    %s144 = sphi 0, %s143
    %s160 = sphi 0, %s144
  $region4: #{_lambda_.28} parent=0 // loop_header_branch
    %13 = sbr.rel (%p11) target = $region8
  $region5: #{_lambda_.28} parent=0 // loop_body
    %s15 = ssub.s32 %s10, 1
    %s16 = ssub.s32 %s10, 2
    %s23 = sadd.s32 1, %s18
    %p24 = scmp.ge.s32.totalorder %s23, 1
    %s25 = scalar_select %p24, 0, %s23
    %s26 = sadd.s32 1, %s17
    %s27 = scalar_select %p24, %s26, %s17
    %p28 = scmp.ge.s32.totalorder %s27, 2
    %s29 = scalar_select %p28, 0, %s27
    %s30 = ssub.s32 %s17, %s29
    %p31 = scmp.eq.s32.totalorder %s30, 0
    %s33 = sadd.s32 %s32, 1
    %s34 = scalar_select %p31, %s32, %s33
    %p37 = pneg %p31
    %p38 = scmp.eq.s32.totalorder %s10, 1
    %p39 = por %p37, %p38
    %p40 = scmp.ne.s32.totalorder %s32, %s35
    %p41 = scmp.eq.s32.totalorder %s10, 0
    %p42 = por %p40, %p41
    %p43 = scmp.ne.s32.totalorder %s32, %s35
    %p44 = scmp.eq.s32.totalorder %s15, 1
    %p45 = por %p43, %p44
    %p46 = scmp.ne.s32.totalorder %s35, %s36
    %p47 = scmp.eq.s32.totalorder %s15, 0
    %p48 = por %p46, %p47
    %p49 = scmp.ne.s32.totalorder %s35, %s36
    %p50 = scmp.eq.s32.totalorder %s16, 1
    %p51 = por %p49, %p50
    %p53 = scmp.ne.s32.totalorder %s36, %s52
    %p54 = scmp.eq.s32.totalorder %s16, 0
    %p55 = por %p53, %p54
    %s56 = ssub.s32 %s18, %s25
    %p57 = scmp.eq.s32.totalorder %s56, 0
    %s59 = sadd.s32 %s58, 1
    %s60 = scalar_select %p57, %s58, %s59
    %p63 = pneg %p57
    %p64 = scmp.eq.s32.totalorder %s10, 1
    %p65 = por %p63, %p64
    %p66 = scmp.ne.s32.totalorder %s58, %s61
    %p67 = scmp.eq.s32.totalorder %s10, 0
    %p68 = por %p66, %p67
    %p69 = scmp.ne.s32.totalorder %s58, %s61
    %p70 = scmp.eq.s32.totalorder %s15, 1
    %p71 = por %p69, %p70
    %p72 = scmp.ne.s32.totalorder %s61, %s62
    %p73 = scmp.eq.s32.totalorder %s15, 0
    %p74 = por %p72, %p73
    %p75 = scmp.ne.s32.totalorder %s61, %s62
    %p76 = scmp.eq.s32.totalorder %s16, 1
    %p77 = por %p75, %p76
    %p79 = scmp.ne.s32.totalorder %s62, %s78
    %p80 = scmp.eq.s32.totalorder %s16, 0
    %p81 = por %p79, %p80
    %s82 = ssub.s32 %s18, %s25
    %p83 = scmp.eq.s32.totalorder %s82, 0
    %s85 = sadd.s32 %s84, 1
    %s86 = scalar_select %p83, %s84, %s85
    %p89 = pneg %p83
    %p90 = scmp.eq.s32.totalorder %s10, 1
    %p91 = por %p89, %p90
    %p92 = scmp.ne.s32.totalorder %s84, %s87
    %p93 = scmp.eq.s32.totalorder %s10, 0
    %p94 = por %p92, %p93
    %p95 = scmp.ne.s32.totalorder %s84, %s87
    %p96 = scmp.eq.s32.totalorder %s15, 1
    %p97 = por %p95, %p96
    %p98 = scmp.ne.s32.totalorder %s87, %s88
    %p99 = scmp.eq.s32.totalorder %s15, 0
    %p100 = por %p98, %p99
    %p101 = scmp.ne.s32.totalorder %s87, %s88
    %p102 = scmp.eq.s32.totalorder %s16, 1
    %p103 = por %p101, %p102
    %p105 = scmp.ne.s32.totalorder %s88, %s104
    %p106 = scmp.eq.s32.totalorder %s16, 0
    %p107 = por %p105, %p106
    %s108 = ssub.s32 %s17, %s29
    %s109 = ssub.s32 %s18, %s25
    %s110 = sor.u32 %s108, %s109
    %p111 = scmp.eq.s32.totalorder %s110, 0
    %s113 = sadd.s32 %s112, 1
    %s114 = scalar_select %p111, %s112, %s113
    %p117 = pneg %p111
    %p118 = scmp.eq.s32.totalorder %s10, 1
    %p119 = por %p117, %p118
    %p120 = scmp.ne.s32.totalorder %s112, %s115
    %p121 = scmp.eq.s32.totalorder %s10, 0
    %p122 = por %p120, %p121
    %p123 = scmp.ne.s32.totalorder %s112, %s115
    %p124 = scmp.eq.s32.totalorder %s15, 1
    %p125 = por %p123, %p124
    %p126 = scmp.ne.s32.totalorder %s115, %s116
    %p127 = scmp.eq.s32.totalorder %s15, 0
    %p128 = por %p126, %p127
    %p129 = scmp.ne.s32.totalorder %s115, %s116
    %p130 = scmp.eq.s32.totalorder %s16, 1
    %p131 = por %p129, %p130
    %p133 = scmp.ne.s32.totalorder %s116, %s132
    %p134 = scmp.eq.s32.totalorder %s16, 0
    %p135 = por %p133, %p134
    %s136 = ssub.s32 %s17, %s29
    %s137 = ssub.s32 %s18, %s25
    %s138 = sor.u32 %s136, %s137
    %p139 = scmp.eq.s32.totalorder %s138, 0
    %s141 = sadd.s32 %s140, 1
    %s142 = scalar_select %p139, %s140, %s141
    %p145 = pneg %p139
    %p146 = scmp.eq.s32.totalorder %s10, 1
    %p147 = por %p145, %p146
    %p148 = scmp.ne.s32.totalorder %s140, %s143
    %p149 = scmp.eq.s32.totalorder %s10, 0
    %p150 = por %p148, %p149
    %p151 = scmp.ne.s32.totalorder %s140, %s143
    %p152 = scmp.eq.s32.totalorder %s15, 1
    %p153 = por %p151, %p152
    %p154 = scmp.ne.s32.totalorder %s143, %s144
    %p155 = scmp.eq.s32.totalorder %s15, 0
    %p156 = por %p154, %p155
    %p157 = scmp.ne.s32.totalorder %s143, %s144
    %p158 = scmp.eq.s32.totalorder %s16, 1
    %p159 = por %p157, %p158
    %p161 = scmp.ne.s32.totalorder %s144, %s160
    %p162 = scmp.eq.s32.totalorder %s16, 0
    %p163 = por %p161, %p162
    %p164 = scmp.le.s32.totalorder 1, %s10
    %p165 = scmp.lt.s32.totalorder %s10, 3
    %p166 = pnand %p164, %p165
    %p167 = pneg %p166
    // Predicated region
    $region9: #{_lambda_.28} parent=5 // pred_check
      _
    $region10: #{_lambda_.28} parent=5 // pred_check_branch
      %169 = sbr.rel (%p166) target = $region12
    $region11: #{_lambda_.28} parent=5 // pred_region
      %s170 = ssub.s32 %s10, 1
      // Predicated region
      $region13: #{_lambda_.28} parent=11 // pred_check
        %p171 = pneg %p74
      $region14: #{_lambda_.28} parent=11 // pred_check_branch
        %173 = sbr.rel (%p171) target = $region16
      $region15: #{_lambda_.28} parent=11 // pred_region
        %p174 = scmp.lt.s32.totalorder %s20, 0
        %s175 = scalar_select %p174, %s20, 0
        %s176 = smul.addr %s175, 4
        %s177 = scalar_lea.vmem %s1, %s176
      $region16: #{_lambda_.28} parent=11 // pred_fallthru
        _
      // Predicated region
      $region17: #{_lambda_.28} parent=11 // pred_check
        %p178 = pneg %p100
      $region18: #{_lambda_.28} parent=11 // pred_check_branch
        %180 = sbr.rel (%p178) target = $region20
      $region19: #{_lambda_.28} parent=11 // pred_region
        %p181 = scmp.lt.s32.totalorder %s20, 0
        %s182 = scalar_select %p181, %s20, 0
        %s183 = scalar_lea.vmem %s2, %s182
      $region20: #{_lambda_.28} parent=11 // pred_fallthru
        _
    $region12: #{_lambda_.28} parent=5 // pred_fallthru
      _
    %p184 = scmp.lt.s32.totalorder %s10, 2
    // Predicated region
    $region21: #{_lambda_.28} parent=5 // pred_check
      %p185 = pneg %p184
    $region22: #{_lambda_.28} parent=5 // pred_check_branch
      %187 = sbr.rel (%p185) target = $region24
    $region23: #{_lambda_.28} parent=5 // pred_region
      // Predicated region
      $region25: #{_lambda_.28} parent=23 // pred_check
        %p188 = pneg %p42
      $region26: #{_lambda_.28} parent=23 // pred_check_branch
        %190 = sbr.rel (%p188) target = $region28
      $region27: #{_lambda_.28} parent=23 // pred_region
        %s191 = smul.u32 8, %s17
        %p192 = scmp.lt.s32.totalorder %s191, 15
        %s193 = scalar_select %p192, %s191, 15
        %s194 = smul.addr %s193, 4
        %s195 = scalar_lea.vmem %s0, %s194
        %s196 = smul.u32 8, %s17
      $region28: #{_lambda_.28} parent=23 // pred_fallthru
        _
      // Predicated region
      $region29: #{_lambda_.28} parent=23 // pred_check
        %p197 = pneg %p122
      $region30: #{_lambda_.28} parent=23 // pred_check_branch
        %199 = sbr.rel (%p197) target = $region32
      $region31: #{_lambda_.28} parent=23 // pred_region
        %s200 = smul.u32 8, %s17
        %p201 = scmp.lt.s32.totalorder %s200, 15
        %s202 = scalar_select %p201, %s200, 15
        %p203 = scmp.lt.s32.totalorder %s18, 0
        %s204 = scalar_select %p203, %s18, 0
        %s205 = sadd.s32 %s204, %s202
        %s206 = smul.addr %s205, 4
        %s207 = scalar_lea.vmem %s3, %s206
        %s208 = smul.u32 8, %s17
      $region32: #{_lambda_.28} parent=23 // pred_fallthru
        _
    $region24: #{_lambda_.28} parent=5 // pred_fallthru
      _
    %p209 = scmp.le.s32.totalorder 1, %s10
    %p210 = scmp.lt.s32.totalorder %s10, 3
    %p211 = pnand %p209, %p210
    %p212 = pneg %p211
    // Predicated region
    $region33: #{_lambda_.28} parent=5 // pred_check
      _
    $region34: #{_lambda_.28} parent=5 // pred_check_branch
      %214 = sbr.rel (%p211) target = $region36
    $region35: #{_lambda_.28} parent=5 // pred_region
      %s215 = ssub.s32 %s10, 1
      %s216 = smul.u32 8, %s19
      %p217 = scmp.lt.s32.totalorder %s216, 15
      %s218 = scalar_select %p217, %s216, 15
      %s219 = smul.addr %s218, 4
      %s220 = scalar_lea.vmem %s0, %s219
      %p221 = pneg %p48
      %p222 = pneg %p45
      %p223 = scmp.lt.s32.totalorder %s20, 0
      %s224 = scalar_select %p223, %s20, 0
      %s225 = smul.addr %s224, 4
      %s226 = scalar_lea.vmem %s1, %s225
      %p227 = pneg %p74
      %p228 = pneg %p71
      %p229 = scmp.lt.s32.totalorder %s20, 0
      %s230 = scalar_select %p229, %s20, 0
      %s231 = scalar_lea.vmem %s2, %s230
      %p232 = pneg %p100
      %p233 = pneg %p97
      %s234 = smul.u32 8, %s19
      %p235 = scmp.lt.s32.totalorder %s234, 15
      %s236 = scalar_select %p235, %s234, 15
      %p237 = scmp.lt.s32.totalorder %s20, 0
      %s238 = scalar_select %p237, %s20, 0
      %s239 = sadd.s32 %s238, %s236
      %s240 = smul.addr %s239, 4
      %s241 = scalar_lea.vmem %s3, %s240
      %p242 = pneg %p128
      %p243 = pneg %p125
      %p244 = pneg %p156
      %p245 = pneg %p153
      %s246 = smul.u32 8, %s19
      %p247 = scmp.lt.s32.totalorder %s246, 15
      %s248 = scalar_select %p247, %s246, 15
      %p249 = scmp.lt.s32.totalorder %s20, 0
      %s250 = scalar_select %p249, %s20, 0
      %s251 = sadd.s32 %s250, %s248
      %s252 = smul.addr %s251, 4
      %s253 = scalar_lea.vmem %s4, %s252
      %s254 = smul.u32 8, %s19
      %p255 = scmp.lt.s32.totalorder %s254, 15
      %s256 = scalar_select %p255, %s254, 15
      %s257 = smul.addr %s256, 4
      %s258 = scalar_lea.vmem %s0, %s257
      %s259 = smul.u32 8, %s19
      %p260 = scmp.lt.s32.totalorder %s20, 0
      %s261 = scalar_select %p260, %s20, 0
      %s262 = smul.addr %s261, 4
      %s263 = scalar_lea.vmem %s1, %s262
      %p264 = scmp.lt.s32.totalorder %s20, 0
      %s265 = scalar_select %p264, %s20, 0
      %s266 = scalar_lea.vmem %s2, %s265
      %s267 = smul.u32 8, %s19
      %p268 = scmp.lt.s32.totalorder %s267, 15
      %s269 = scalar_select %p268, %s267, 15
      %p270 = scmp.lt.s32.totalorder %s20, 0
      %s271 = scalar_select %p270, %s20, 0
      %s272 = sadd.s32 %s271, %s269
      %s273 = smul.addr %s272, 4
      %s274 = scalar_lea.vmem %s3, %s273
      %s275 = smul.u32 8, %s19
      %s276 = smul.u32 8, %s19
      %p277 = scmp.lt.s32.totalorder %s276, 15
      %s278 = scalar_select %p277, %s276, 15
      %p279 = scmp.lt.s32.totalorder %s20, 0
      %s280 = scalar_select %p279, %s20, 0
      %s281 = sadd.s32 %s280, %s278
      %s282 = smul.addr %s281, 4
      %s283 = scalar_lea.vmem %s4, %s282
      %s284 = smul.u32 8, %s19
      %v286 = vld [vmem:[%s258] sm:$0xf]
      %v287 = vld [vmem:[%s258 + $0x4] sm:$0xf]
      %v288 = vld [vmem:[%s258 + $0x8] sm:$0xf]
      %v289 = vld [vmem:[%s258 + $0xc] sm:$0xf]
      %v290 = vld [vmem:[%s258 + $0x10] sm:$0xf]
      %v291 = vld [vmem:[%s258 + $0x14] sm:$0xf]
      %v292 = vld [vmem:[%s258 + $0x18] sm:$0xf]
      %v293 = vld [vmem:[%s258 + $0x1c] sm:$0xf]
      %v294 = vld [vmem:[%s263] sm:$0xf]
      %v295 = vld [vmem:[%s263 + $0x4] sm:$0xf]
      %v296 = vld [vmem:[%s263 + $0x8] sm:$0xf]
      %v297 = vld [vmem:[%s263 + $0xc] sm:$0xf]
      %v298 = vld [vmem:[%s266] sm:$0x1]
      %v300 = vlaneseq
      %v301 = vshrl.u32 %v300, 7
      %v302 = vsub.s32 0, %v301
      %v303 = vrot.slane %v298, %v302
      %v313 = vunpack.c.l.b16 %v286
      %v314 = vunpack.c.l.b16 %v287
      %v315 = vunpack.c.l.b16 %v288
      %v316 = vunpack.c.l.b16 %v289
      %v317 = vunpack.c.l.b16 %v290
      %v318 = vunpack.c.l.b16 %v291
      %v319 = vunpack.c.l.b16 %v292
      %v320 = vunpack.c.l.b16 %v293
      %v321 = vpack.c.b16 %v314, %v313
      %v322 = vpack.c.b16 %v316, %v315
      %v323 = vpack.c.b16 %v318, %v317
      %v324 = vpack.c.b16 %v320, %v319
      %v329 = vunpack.c.l.b16 %v294
      %v330 = vunpack.c.l.b16 %v295
      %v331 = vunpack.c.l.b16 %v296
      %v332 = vunpack.c.l.b16 %v297
      %v333 = vpack.c.b16 %v330, %v329
      %v334 = vpack.c.b16 %v332, %v331
      %vm337 = vcmask 261120
      %v339 = vsel %vm337, %v321, 0
      %v342 = vsel %vm337, %v322, 0
      %v345 = vsel %vm337, %v323, 0
      %v348 = vsel %vm337, %v324, 0
      %350 = vmatprep.subr.bf16.mxu0 0
      %351 = vmatpush1.bf16.msra.mxu0 0
      %352 = vmatprep.subr.bf16.mxu0 0
      %353 = vmatpush1.bf16.msra.mxu0 0
      %354 = vmatprep.subr.bf16.mxu0 0
      %355 = vmatpush1.bf16.msra.mxu0 0
      %356 = vmatprep.subr.bf16.mxu0 0
      %357 = vmatpush1.bf16.msra.mxu0 0
      %358 = vmatprep.subr.bf16.mxu0 0
      %359 = vmatpush1.bf16.msra.mxu0 0
      %360 = vmatprep.subr.bf16.mxu0 0
      %361 = vmatpush1.bf16.msra.mxu0 0
      %362 = vmatprep.subr.bf16.mxu0 0
      %363 = vmatpush1.bf16.msra.mxu0 %v334
      %364 = vmatprep.subr.bf16.mxu0 0
      %365 = vmatpush1.bf16.msra.mxu0 %v333
      %366 = vmatprep.subr.bf16.mxu0 0
      %367 = vmatpush2.bf16.msra.mxu0 0
      %368 = vmatprep.subr.bf16.mxu0 0
      %369 = vmatpush2.bf16.msra.mxu0 0
      %370 = vmatprep.subr.bf16.mxu0 0
      %371 = vmatpush2.bf16.msra.mxu0 0
      %372 = vmatprep.subr.bf16.mxu0 0
      %373 = vmatpush2.bf16.msra.mxu0 0
      %374 = vmatprep.subr.bf16.mxu0 0
      %375 = vmatpush2.bf16.msra.mxu0 0
      %376 = vmatprep.subr.bf16.mxu0 0
      %377 = vmatpush2.bf16.msra.mxu0 0
      %378 = vmatprep.subr.bf16.mxu0 0
      %379 = vmatpush2.bf16.msra.mxu0 0
      %380 = vmatprep.subr.bf16.mxu0 0
      %381 = vmatpush2.bf16.msra.mxu0 0
      %382 = vmatprep.mubr.bf16.mxu0 0
      %383 = vmatmul.mubr.bf16.gmra.mxu0 %v339
      %v384 = vpop.f32.mrf.mxu0
      %v385 = vadd.f32 %v303, %v384
      %v386 = vpop.f32.mrf.mxu0
      %v387 = vpop.f32.mrf.mxu0
      %v388 = vadd.f32 %v303, %v387
      %v389 = vpop.f32.mrf.mxu0
      %390 = vmatprep.mubr.bf16.mxu0 0
      %391 = vmatmul.mubr.bf16.gmra.mxu0 %v342
      %v392 = vpop.f32.mrf.mxu0
      %v393 = vadd.f32 %v303, %v392
      %v394 = vpop.f32.mrf.mxu0
      %v395 = vpop.f32.mrf.mxu0
      %v396 = vadd.f32 %v303, %v395
      %v397 = vpop.f32.mrf.mxu0
      %398 = vmatprep.mubr.bf16.mxu0 0
      %399 = vmatmul.mubr.bf16.gmra.mxu0 %v345
      %v400 = vpop.f32.mrf.mxu0
      %v401 = vadd.f32 %v303, %v400
      %v402 = vpop.f32.mrf.mxu0
      %v403 = vpop.f32.mrf.mxu0
      %v404 = vadd.f32 %v303, %v403
      %v405 = vpop.f32.mrf.mxu0
      %406 = vmatprep.mubr.bf16.mxu0 0
      %407 = vmatmul.mubr.bf16.gmra.mxu0 %v348
      %v408 = vpop.f32.mrf.mxu0
      %v409 = vadd.f32 %v303, %v408
      %v410 = vpop.f32.mrf.mxu0
      %v411 = vpop.f32.mrf.mxu0
      %v412 = vadd.f32 %v303, %v411
      %v413 = vpop.f32.mrf.mxu0
      %414 = vdwg.mxu0
      %v415 = vld [vmem:[%s274] sm:$0xf]
      %v416 = vld [vmem:[%s274 + $0x4] sm:$0xf]
      %v417 = vld [vmem:[%s274 + $0x8] sm:$0xf]
      %v418 = vld [vmem:[%s274 + $0xc] sm:$0xf]
      %v419 = vld [vmem:[%s274 + $0x10] sm:$0xf]
      %v420 = vld [vmem:[%s274 + $0x14] sm:$0xf]
      %v421 = vld [vmem:[%s274 + $0x18] sm:$0xf]
      %v422 = vld [vmem:[%s274 + $0x1c] sm:$0xf]
      %v423 = vunpack.c.l.bf16 %v415
      %v424 = vunpack.c.l.bf16 %v416
      %v425 = vunpack.c.l.bf16 %v417
      %v426 = vunpack.c.l.bf16 %v418
      %v427 = vunpack.c.l.bf16 %v419
      %v428 = vunpack.c.l.bf16 %v420
      %v429 = vunpack.c.l.bf16 %v421
      %v430 = vunpack.c.l.bf16 %v422
      %v431 = vadd.f32 %v385, %v423
      %v432 = vadd.f32 %v388, %v424
      %v433 = vadd.f32 %v393, %v425
      %v434 = vadd.f32 %v396, %v426
      %v435 = vadd.f32 %v401, %v427
      %v436 = vadd.f32 %v404, %v428
      %v437 = vadd.f32 %v409, %v429
      %v438 = vadd.f32 %v412, %v430
      %v439 = vpack.c.bf16 %v432, %v431
      %v440 = vpack.c.bf16 %v434, %v433
      %v441 = vpack.c.bf16 %v436, %v435
      %v442 = vpack.c.bf16 %v438, %v437
      %v447 = vunpack.c.l.b16 %v439
      %v448 = vunpack.c.h.b16 %v439
      %v449 = vunpack.c.l.b16 %v440
      %v450 = vunpack.c.h.b16 %v440
      %v451 = vunpack.c.l.b16 %v441
      %v452 = vunpack.c.h.b16 %v441
      %v453 = vunpack.c.l.b16 %v442
      %v454 = vunpack.c.h.b16 %v442
      %v455 = vpack.c.b16 %v447, %v447
      %v456 = vpack.c.b16 %v448, %v448
      %v457 = vpack.c.b16 %v449, %v449
      %v458 = vpack.c.b16 %v450, %v450
      %v459 = vpack.c.b16 %v451, %v451
      %v460 = vpack.c.b16 %v452, %v452
      %v461 = vpack.c.b16 %v453, %v453
      %v462 = vpack.c.b16 %v454, %v454
      %vm471 = vcmask 257024
      %472 = vst.msk [vmem:[%s283] sm:$0xf] %vm471, %v455
      %473 = vst.msk [vmem:[%s283 + $0x4] sm:$0xf] %vm471, %v456
      %474 = vst.msk [vmem:[%s283 + $0x8] sm:$0xf] %vm471, %v457
      %475 = vst.msk [vmem:[%s283 + $0xc] sm:$0xf] %vm471, %v458
      %476 = vst.msk [vmem:[%s283 + $0x10] sm:$0xf] %vm471, %v459
      %477 = vst.msk [vmem:[%s283 + $0x14] sm:$0xf] %vm471, %v460
      %478 = vst.msk [vmem:[%s283 + $0x18] sm:$0xf] %vm471, %v461
      %479 = vst.msk [vmem:[%s283 + $0x1c] sm:$0xf] %vm471, %v462
      %s480 = smul.u32 8, %s19
      %p481 = scmp.lt.s32.totalorder %s480, 15
      %s482 = scalar_select %p481, %s480, 15
      %p483 = scmp.lt.s32.totalorder %s20, 0
      %s484 = scalar_select %p483, %s20, 0
      %s485 = sadd.s32 %s484, %s482
      %s486 = smul.addr %s485, 4
      %s487 = scalar_lea.vmem %s4, %s486
      // Predicated region
      $region37: #{_lambda_.28} parent=35 // pred_check
        %p488 = pneg %p153
      $region38: #{_lambda_.28} parent=35 // pred_check_branch
        %490 = sbr.rel (%p488) target = $region40
      $region39: #{_lambda_.28} parent=35 // pred_region
        %s491 = smul.u32 8, %s19
      $region40: #{_lambda_.28} parent=35 // pred_fallthru
        _
    $region36: #{_lambda_.28} parent=5 // pred_fallthru
      _
    %p492 = scmp.le.s32.totalorder 2, %s10
    // Predicated region
    $region41: #{_lambda_.28} parent=5 // pred_check
      %p493 = pneg %p492
    $region42: #{_lambda_.28} parent=5 // pred_check_branch
      %495 = sbr.rel (%p493) target = $region44
    $region43: #{_lambda_.28} parent=5 // pred_region
      %s496 = ssub.s32 %s10, 2
      // Predicated region
      $region45: #{_lambda_.28} parent=43 // pred_check
        %p497 = pneg %p159
      $region46: #{_lambda_.28} parent=43 // pred_check_branch
        %499 = sbr.rel (%p497) target = $region48
      $region47: #{_lambda_.28} parent=43 // pred_region
        %s500 = smul.u32 8, %s21
        %p501 = scmp.lt.s32.totalorder %s500, 15
        %s502 = scalar_select %p501, %s500, 15
        %p503 = scmp.lt.s32.totalorder %s22, 0
        %s504 = scalar_select %p503, %s22, 0
        %s505 = sadd.s32 %s504, %s502
        %s506 = smul.addr %s505, 4
        %s507 = scalar_lea.vmem %s4, %s506
      $region48: #{_lambda_.28} parent=43 // pred_fallthru
        _
    $region44: #{_lambda_.28} parent=5 // pred_fallthru
      _
  $region6: #{_lambda_.28} parent=0 // loop_footer
    %s14 = sadd.s32 1, %s10
  $region7: #{_lambda_.28} parent=0 // loop_footer_branch
    %9 = sbr.rel target = $region3
  $region8: #{_lambda_.28} parent=0 // loop_exit
    _

// kernel: _lambda_.27
$region0: #{_lambda_.27}
  #allocation0 [shape = 'u32[]', space=smem, size = 0x4, offset = 0x4, fixed_abs, tag = 'smem constant byte address 0x4 - core index']
  #allocation1 [shape = 'u32[144,128]{1,0:T(1,128)}', space=vmem, size = 0x12000, scoped, tag = 'internal scratch']
  %s0 = inlined_call_operand.vmem [shape: bf16[8,16,96], index: 0, kind: input, shape index: {}]
  %s1 = inlined_call_operand.vmem [shape: f32[2,16,16], index: 1, kind: input, shape index: {}]
  %s2 = inlined_call_operand.vmem [shape: bf16[8,16,32], index: 2, kind: output, shape index: {}]
  %s3 = sld [smem:[#allocation0]]
  $region41: #{_lambda_.27} parent=0
    _
  %s5 = ssub.s32 1, %s3
  %s6 = scalar_select 0, %s5, %s3
  loop: start=0, step=1, limit=4
  $region2: #{_lambda_.27} parent=0 // loop_pre_header
    _
  $region3: #{_lambda_.27} parent=0 // loop_header
    %s8 = sphi 0, %s12
    %p9 = scmp.ge.s32.totalorder %s8, 4
    %s18 = sphi 0, %s20
    %s21 = sphi 0, %s18
    %s22 = sphi 0, %s21
    %s38 = sphi 0, %s22
    %s42 = sphi 0, %s42
    %s44 = sphi 0, %s42
    %s45 = sphi 0, %s44
    %s59 = sphi 0, %s45
    %s65 = sphi 0, %s67
    %s68 = sphi 0, %s65
    %s69 = sphi 0, %s68
    %s85 = sphi 0, %s69
  $region4: #{_lambda_.27} parent=0 // loop_header_branch
    %11 = sbr.rel (%p9) target = $region8
  $region5: #{_lambda_.27} parent=0 // loop_body
    %s13 = ssub.s32 %s8, 1
    %s14 = ssub.s32 %s8, 2
    %s15 = sadd.s32 %s8, 1
    %s16 = ssub.s32 %s8, %s15
    %p17 = scmp.eq.s32.totalorder %s16, 0
    %s19 = sadd.s32 %s18, 1
    %s20 = scalar_select %p17, %s18, %s19
    %p23 = pneg %p17
    %p24 = scmp.eq.s32.totalorder %s8, 1
    %p25 = por %p23, %p24
    %p26 = scmp.ne.s32.totalorder %s18, %s21
    %p27 = scmp.eq.s32.totalorder %s8, 0
    %p28 = por %p26, %p27
    %p29 = scmp.ne.s32.totalorder %s18, %s21
    %p30 = scmp.eq.s32.totalorder %s13, 1
    %p31 = por %p29, %p30
    %p32 = scmp.ne.s32.totalorder %s21, %s22
    %p33 = scmp.eq.s32.totalorder %s13, 0
    %p34 = por %p32, %p33
    %p35 = scmp.ne.s32.totalorder %s21, %s22
    %p36 = scmp.eq.s32.totalorder %s14, 1
    %p37 = por %p35, %p36
    %p39 = scmp.ne.s32.totalorder %s22, %s38
    %p40 = scmp.eq.s32.totalorder %s14, 0
    %p41 = por %p39, %p40
    %s43 = sadd.s32 %s42, 1
    %p46 = scmp.eq.s32.totalorder %s8, 1
    %p47 = scmp.ne.s32.totalorder %s42, %s44
    %p48 = scmp.eq.s32.totalorder %s8, 0
    %p49 = por %p47, %p48
    %p50 = scmp.ne.s32.totalorder %s42, %s44
    %p51 = scmp.eq.s32.totalorder %s13, 1
    %p52 = por %p50, %p51
    %p53 = scmp.ne.s32.totalorder %s44, %s45
    %p54 = scmp.eq.s32.totalorder %s13, 0
    %p55 = por %p53, %p54
    %p56 = scmp.ne.s32.totalorder %s44, %s45
    %p57 = scmp.eq.s32.totalorder %s14, 1
    %p58 = por %p56, %p57
    %p60 = scmp.ne.s32.totalorder %s45, %s59
    %p61 = scmp.eq.s32.totalorder %s14, 0
    %p62 = por %p60, %p61
    %s63 = ssub.s32 %s8, %s15
    %p64 = scmp.eq.s32.totalorder %s63, 0
    %s66 = sadd.s32 %s65, 1
    %s67 = scalar_select %p64, %s65, %s66
    %p70 = pneg %p64
    %p71 = scmp.eq.s32.totalorder %s8, 1
    %p72 = por %p70, %p71
    %p73 = scmp.ne.s32.totalorder %s65, %s68
    %p74 = scmp.eq.s32.totalorder %s8, 0
    %p75 = por %p73, %p74
    %p76 = scmp.ne.s32.totalorder %s65, %s68
    %p77 = scmp.eq.s32.totalorder %s13, 1
    %p78 = por %p76, %p77
    %p79 = scmp.ne.s32.totalorder %s68, %s69
    %p80 = scmp.eq.s32.totalorder %s13, 0
    %p81 = por %p79, %p80
    %p82 = scmp.ne.s32.totalorder %s68, %s69
    %p83 = scmp.eq.s32.totalorder %s14, 1
    %p84 = por %p82, %p83
    %p86 = scmp.ne.s32.totalorder %s69, %s85
    %p87 = scmp.eq.s32.totalorder %s14, 0
    %p88 = por %p86, %p87
    %p89 = scmp.le.s32.totalorder 1, %s8
    %p90 = scmp.lt.s32.totalorder %s8, 3
    %p91 = pnand %p89, %p90
    %p92 = pneg %p91
    // Predicated region
    $region9: #{_lambda_.27} parent=5 // pred_check
      _
    $region10: #{_lambda_.27} parent=5 // pred_check_branch
      %94 = sbr.rel (%p91) target = $region12
    $region11: #{_lambda_.27} parent=5 // pred_region
      %s95 = ssub.s32 %s8, 1
      // Predicated region
      $region13: #{_lambda_.27} parent=11 // pred_check
        %p96 = pneg %p55
      $region14: #{_lambda_.27} parent=11 // pred_check_branch
        %98 = sbr.rel (%p96) target = $region16
      $region15: #{_lambda_.27} parent=11 // pred_region
        _
      $region16: #{_lambda_.27} parent=11 // pred_fallthru
        _
    $region12: #{_lambda_.27} parent=5 // pred_fallthru
      _
    %p99 = scmp.lt.s32.totalorder %s8, 2
    // Predicated region
    $region17: #{_lambda_.27} parent=5 // pred_check
      %p100 = pneg %p99
    $region18: #{_lambda_.27} parent=5 // pred_check_branch
      %102 = sbr.rel (%p100) target = $region20
    $region19: #{_lambda_.27} parent=5 // pred_region
      // Predicated region
      $region21: #{_lambda_.27} parent=19 // pred_check
        %p103 = pneg %p28
      $region22: #{_lambda_.27} parent=19 // pred_check_branch
        %105 = sbr.rel (%p103) target = $region24
      $region23: #{_lambda_.27} parent=19 // pred_region
        %s106 = smul.u32 4, %s8
        %p107 = scmp.lt.s32.totalorder %s106, 7
        %s108 = scalar_select %p107, %s106, 7
        %s109 = smul.addr %s108, 2
        %s110 = smul.addr %s109, 4
        %s111 = scalar_lea.vmem %s0, %s110
        %s112 = smul.u32 4, %s8
      $region24: #{_lambda_.27} parent=19 // pred_fallthru
        _
    $region20: #{_lambda_.27} parent=5 // pred_fallthru
      _
    %p113 = scmp.le.s32.totalorder 1, %s8
    %p114 = scmp.lt.s32.totalorder %s8, 3
    %p115 = pnand %p113, %p114
    %p116 = pneg %p115
    // Predicated region
    $region25: #{_lambda_.27} parent=5 // pred_check
      _
    $region26: #{_lambda_.27} parent=5 // pred_check_branch
      %118 = sbr.rel (%p115) target = $region28
    $region27: #{_lambda_.27} parent=5 // pred_region
      %s119 = ssub.s32 %s8, 1
      %s120 = smul.u32 4, %s13
      %p121 = scmp.lt.s32.totalorder %s120, 7
      %s122 = scalar_select %p121, %s120, 7
      %s123 = smul.addr %s122, 2
      %s124 = smul.addr %s123, 4
      %s125 = scalar_lea.vmem %s0, %s124
      %p126 = pneg %p34
      %p127 = pneg %p31
      %p128 = pneg %p55
      %p129 = pneg %p52
      %p130 = pneg %p81
      %p131 = pneg %p78
      %s132 = smul.u32 4, %s13
      %p133 = scmp.lt.s32.totalorder %s132, 7
      %s134 = scalar_select %p133, %s132, 7
      %s135 = smul.addr %s134, 2
      %s136 = smul.addr %s135, 4
      %s137 = scalar_lea.vmem %s2, %s136
      %s138 = smul.u32 4, %s13
      %p139 = scmp.lt.s32.totalorder %s138, 7
      %s140 = scalar_select %p139, %s138, 7
      %s141 = smul.addr %s140, 2
      %s142 = smul.addr %s141, 4
      %s143 = scalar_lea.vmem %s0, %s142
      %s144 = smul.u32 4, %s13
      %s145 = smul.u32 4, %s13
      %p146 = scmp.lt.s32.totalorder %s145, 7
      %s147 = scalar_select %p146, %s145, 7
      %s148 = smul.addr %s147, 2
      %s149 = smul.addr %s148, 4
      %s150 = scalar_lea.vmem %s2, %s149
      %s151 = smul.u32 4, %s13
      %v153 = vld [vmem:[%s143] sm:$0xf]
      %v154 = vld [vmem:[%s143 + $0x4] sm:$0xf]
      %v155 = vld [vmem:[%s143 + $0x8] sm:$0xf]
      %v156 = vld [vmem:[%s143 + $0xc] sm:$0xf]
      %v157 = vld [vmem:[%s143 + $0x10] sm:$0xf]
      %v158 = vld [vmem:[%s143 + $0x14] sm:$0xf]
      %v159 = vld [vmem:[%s143 + $0x18] sm:$0xf]
      %v160 = vld [vmem:[%s143 + $0x1c] sm:$0xf]
      %v163 = vunpack.c.l.b16 %v153
      %v164 = vunpack.c.l.b16 %v154
      %v165 = vpack.c.b16 %v164, %v163
      %166 = vrot.lane.b32.xlu0 %v165, 96
      %v167 = vpop.permute.xlu0 %166
      %vm168 = vcmask 130048
      %v170 = vsel %vm168, %v165, 0
      %v173 = vsel %vm168, %v167, 0
      %175 = vmatprep.subr.bf16.mxu0 0
      %176 = vmatpush1.bf16.xpose.msra.mxu0 0
      %177 = vmatprep.subr.bf16.mxu0 0
      %178 = vmatpush1.bf16.xpose.msra.mxu0 0
      %179 = vmatprep.subr.bf16.mxu0 0
      %180 = vmatpush1.bf16.xpose.msra.mxu0 0
      %181 = vmatprep.subr.bf16.mxu0 0
      %182 = vmatpush1.bf16.xpose.msra.mxu0 0
      %183 = vmatprep.subr.bf16.mxu0 0
      %184 = vmatpush1.bf16.xpose.msra.mxu0 0
      %185 = vmatprep.subr.bf16.mxu0 0
      %186 = vmatpush1.bf16.xpose.msra.mxu0 0
      %187 = vmatprep.subr.bf16.mxu0 0
      %188 = vmatpush1.bf16.xpose.msra.mxu0 0
      %189 = vmatprep.subr.bf16.mxu0 0
      %190 = vmatpush1.bf16.xpose.msra.mxu0 %v173
      %191 = vmatprep.subr.bf16.mxu0 0
      %192 = vmatpush2.bf16.xpose.msra.mxu0 0
      %193 = vmatprep.subr.bf16.mxu0 0
      %194 = vmatpush2.bf16.xpose.msra.mxu0 0
      %195 = vmatprep.subr.bf16.mxu0 0
      %196 = vmatpush2.bf16.xpose.msra.mxu0 0
      %197 = vmatprep.subr.bf16.mxu0 0
      %198 = vmatpush2.bf16.xpose.msra.mxu0 0
      %199 = vmatprep.subr.bf16.mxu0 0
      %200 = vmatpush2.bf16.xpose.msra.mxu0 0
      %201 = vmatprep.subr.bf16.mxu0 0
      %202 = vmatpush2.bf16.xpose.msra.mxu0 0
      %203 = vmatprep.subr.bf16.mxu0 0
      %204 = vmatpush2.bf16.xpose.msra.mxu0 0
      %205 = vmatprep.subr.bf16.mxu0 0
      %206 = vmatpush2.bf16.xpose.msra.mxu0 0
      %207 = vmatprep.mubr.bf16.mxu0 0
      %208 = vmatmul.mubr.bf16.gmra.mxu0 %v170
      %v209 = vpop.f32.mrf.mxu0
      %v210 = vadd.f32 0.0, %v209
      %v211 = vpop.f32.mrf.mxu0
      %v212 = vpop.f32.mrf.mxu0
      %v213 = vadd.f32 0.0, %v212
      %v214 = vpop.f32.mrf.mxu0
      %215 = vdwg.mxu0
      %v218 = vunpack.c.l.b16 %v155
      %v219 = vunpack.c.l.b16 %v156
      %v220 = vpack.c.b16 %v219, %v218
      %221 = vrot.lane.b32.xlu0 %v220, 96
      %v222 = vpop.permute.xlu0 %221
      %v224 = vsel %vm168, %v220, 0
      %v227 = vsel %vm168, %v222, 0
      %229 = vmatprep.subr.bf16.mxu0 0
      %230 = vmatpush1.bf16.xpose.msra.mxu0 0
      %231 = vmatprep.subr.bf16.mxu0 0
      %232 = vmatpush1.bf16.xpose.msra.mxu0 0
      %233 = vmatprep.subr.bf16.mxu0 0
      %234 = vmatpush1.bf16.xpose.msra.mxu0 0
      %235 = vmatprep.subr.bf16.mxu0 0
      %236 = vmatpush1.bf16.xpose.msra.mxu0 0
      %237 = vmatprep.subr.bf16.mxu0 0
      %238 = vmatpush1.bf16.xpose.msra.mxu0 0
      %239 = vmatprep.subr.bf16.mxu0 0
      %240 = vmatpush1.bf16.xpose.msra.mxu0 0
      %241 = vmatprep.subr.bf16.mxu0 0
      %242 = vmatpush1.bf16.xpose.msra.mxu0 0
      %243 = vmatprep.subr.bf16.mxu0 0
      %244 = vmatpush1.bf16.xpose.msra.mxu0 %v227
      %245 = vmatprep.subr.bf16.mxu0 0
      %246 = vmatpush2.bf16.xpose.msra.mxu0 0
      %247 = vmatprep.subr.bf16.mxu0 0
      %248 = vmatpush2.bf16.xpose.msra.mxu0 0
      %249 = vmatprep.subr.bf16.mxu0 0
      %250 = vmatpush2.bf16.xpose.msra.mxu0 0
      %251 = vmatprep.subr.bf16.mxu0 0
      %252 = vmatpush2.bf16.xpose.msra.mxu0 0
      %253 = vmatprep.subr.bf16.mxu0 0
      %254 = vmatpush2.bf16.xpose.msra.mxu0 0
      %255 = vmatprep.subr.bf16.mxu0 0
      %256 = vmatpush2.bf16.xpose.msra.mxu0 0
      %257 = vmatprep.subr.bf16.mxu0 0
      %258 = vmatpush2.bf16.xpose.msra.mxu0 0
      %259 = vmatprep.subr.bf16.mxu0 0
      %260 = vmatpush2.bf16.xpose.msra.mxu0 0
      %261 = vmatprep.mubr.bf16.mxu0 0
      %262 = vmatmul.mubr.bf16.gmra.mxu0 %v224
      %v263 = vpop.f32.mrf.mxu0
      %v264 = vadd.f32 0.0, %v263
      %v265 = vpop.f32.mrf.mxu0
      %v266 = vpop.f32.mrf.mxu0
      %v267 = vadd.f32 0.0, %v266
      %v268 = vpop.f32.mrf.mxu0
      %269 = vdwg.mxu0
      %v272 = vunpack.c.l.b16 %v157
      %v273 = vunpack.c.l.b16 %v158
      %v274 = vpack.c.b16 %v273, %v272
      %275 = vrot.lane.b32.xlu0 %v274, 96
      %v276 = vpop.permute.xlu0 %275
      %v278 = vsel %vm168, %v274, 0
      %v281 = vsel %vm168, %v276, 0
      %283 = vmatprep.subr.bf16.mxu0 0
      %284 = vmatpush1.bf16.xpose.msra.mxu0 0
      %285 = vmatprep.subr.bf16.mxu0 0
      %286 = vmatpush1.bf16.xpose.msra.mxu0 0
      %287 = vmatprep.subr.bf16.mxu0 0
      %288 = vmatpush1.bf16.xpose.msra.mxu0 0
      %289 = vmatprep.subr.bf16.mxu0 0
      %290 = vmatpush1.bf16.xpose.msra.mxu0 0
      %291 = vmatprep.subr.bf16.mxu0 0
      %292 = vmatpush1.bf16.xpose.msra.mxu0 0
      %293 = vmatprep.subr.bf16.mxu0 0
      %294 = vmatpush1.bf16.xpose.msra.mxu0 0
      %295 = vmatprep.subr.bf16.mxu0 0
      %296 = vmatpush1.bf16.xpose.msra.mxu0 0
      %297 = vmatprep.subr.bf16.mxu0 0
      %298 = vmatpush1.bf16.xpose.msra.mxu0 %v281
      %299 = vmatprep.subr.bf16.mxu0 0
      %300 = vmatpush2.bf16.xpose.msra.mxu0 0
      %301 = vmatprep.subr.bf16.mxu0 0
      %302 = vmatpush2.bf16.xpose.msra.mxu0 0
      %303 = vmatprep.subr.bf16.mxu0 0
      %304 = vmatpush2.bf16.xpose.msra.mxu0 0
      %305 = vmatprep.subr.bf16.mxu0 0
      %306 = vmatpush2.bf16.xpose.msra.mxu0 0
      %307 = vmatprep.subr.bf16.mxu0 0
      %308 = vmatpush2.bf16.xpose.msra.mxu0 0
      %309 = vmatprep.subr.bf16.mxu0 0
      %310 = vmatpush2.bf16.xpose.msra.mxu0 0
      %311 = vmatprep.subr.bf16.mxu0 0
      %312 = vmatpush2.bf16.xpose.msra.mxu0 0
      %313 = vmatprep.subr.bf16.mxu0 0
      %314 = vmatpush2.bf16.xpose.msra.mxu0 0
      %315 = vmatprep.mubr.bf16.mxu0 0
      %316 = vmatmul.mubr.bf16.gmra.mxu0 %v278
      %v317 = vpop.f32.mrf.mxu0
      %v318 = vadd.f32 0.0, %v317
      %v319 = vpop.f32.mrf.mxu0
      %v320 = vpop.f32.mrf.mxu0
      %v321 = vadd.f32 0.0, %v320
      %v322 = vpop.f32.mrf.mxu0
      %323 = vdwg.mxu0
      %v326 = vunpack.c.l.b16 %v159
      %v327 = vunpack.c.l.b16 %v160
      %v328 = vpack.c.b16 %v327, %v326
      %329 = vrot.lane.b32.xlu0 %v328, 96
      %v330 = vpop.permute.xlu0 %329
      %v332 = vsel %vm168, %v328, 0
      %v335 = vsel %vm168, %v330, 0
      %337 = vmatprep.subr.bf16.mxu0 0
      %338 = vmatpush1.bf16.xpose.msra.mxu0 0
      %339 = vmatprep.subr.bf16.mxu0 0
      %340 = vmatpush1.bf16.xpose.msra.mxu0 0
      %341 = vmatprep.subr.bf16.mxu0 0
      %342 = vmatpush1.bf16.xpose.msra.mxu0 0
      %343 = vmatprep.subr.bf16.mxu0 0
      %344 = vmatpush1.bf16.xpose.msra.mxu0 0
      %345 = vmatprep.subr.bf16.mxu0 0
      %346 = vmatpush1.bf16.xpose.msra.mxu0 0
      %347 = vmatprep.subr.bf16.mxu0 0
      %348 = vmatpush1.bf16.xpose.msra.mxu0 0
      %349 = vmatprep.subr.bf16.mxu0 0
      %350 = vmatpush1.bf16.xpose.msra.mxu0 0
      %351 = vmatprep.subr.bf16.mxu0 0
      %352 = vmatpush1.bf16.xpose.msra.mxu0 %v335
      %353 = vmatprep.subr.bf16.mxu0 0
      %354 = vmatpush2.bf16.xpose.msra.mxu0 0
      %355 = vmatprep.subr.bf16.mxu0 0
      %356 = vmatpush2.bf16.xpose.msra.mxu0 0
      %357 = vmatprep.subr.bf16.mxu0 0
      %358 = vmatpush2.bf16.xpose.msra.mxu0 0
      %359 = vmatprep.subr.bf16.mxu0 0
      %360 = vmatpush2.bf16.xpose.msra.mxu0 0
      %361 = vmatprep.subr.bf16.mxu0 0
      %362 = vmatpush2.bf16.xpose.msra.mxu0 0
      %363 = vmatprep.subr.bf16.mxu0 0
      %364 = vmatpush2.bf16.xpose.msra.mxu0 0
      %365 = vmatprep.subr.bf16.mxu0 0
      %366 = vmatpush2.bf16.xpose.msra.mxu0 0
      %367 = vmatprep.subr.bf16.mxu0 0
      %368 = vmatpush2.bf16.xpose.msra.mxu0 0
      %369 = vmatprep.mubr.bf16.mxu0 0
      %370 = vmatmul.mubr.bf16.gmra.mxu0 %v332
      %v371 = vpop.f32.mrf.mxu0
      %v372 = vadd.f32 0.0, %v371
      %v373 = vpop.f32.mrf.mxu0
      %v374 = vpop.f32.mrf.mxu0
      %v375 = vadd.f32 0.0, %v374
      %v376 = vpop.f32.mrf.mxu0
      %377 = vdwg.mxu0
      %v378 = vmul.f32 %v210, 0.25
      %v379 = vmul.f32 %v213, 0.25
      %v380 = vmul.f32 %v264, 0.25
      %v381 = vmul.f32 %v267, 0.25
      %v382 = vmul.f32 %v318, 0.25
      %v383 = vmul.f32 %v321, 0.25
      %v384 = vmul.f32 %v372, 0.25
      %v385 = vmul.f32 %v375, 0.25
      %v386 = vld [vmem:[%s1] sm:$0xff]
      %v387 = vld [vmem:[%s1 + $0x8] sm:$0xff]
      %v388 = vadd.f32 %v378, %v386
      %v389 = vadd.f32 %v379, %v387
      %v390 = vadd.f32 %v380, %v386
      %v391 = vadd.f32 %v381, %v387
      %v392 = vadd.f32 %v382, %v386
      %v393 = vadd.f32 %v383, %v387
      %v394 = vadd.f32 %v384, %v386
      %v395 = vadd.f32 %v385, %v387
      %v396 = vsel %vm168, %v388, -inf
      %397 = vmax.xlane.f32.xlu0 %v396
      %v398 = vpop.xlane.xlu0 %397
      %v399 = vsel %vm168, %v389, -inf
      %400 = vmax.xlane.f32.xlu0 %v399
      %v401 = vpop.xlane.xlu0 %400
      %v402 = vsel %vm168, %v390, -inf
      %403 = vmax.xlane.f32.xlu0 %v402
      %v404 = vpop.xlane.xlu0 %403
      %v405 = vsel %vm168, %v391, -inf
      %406 = vmax.xlane.f32.xlu0 %v405
      %v407 = vpop.xlane.xlu0 %406
      %v408 = vsel %vm168, %v392, -inf
      %409 = vmax.xlane.f32.xlu0 %v408
      %v410 = vpop.xlane.xlu0 %409
      %v411 = vsel %vm168, %v393, -inf
      %412 = vmax.xlane.f32.xlu0 %v411
      %v413 = vpop.xlane.xlu0 %412
      %v414 = vsel %vm168, %v394, -inf
      %415 = vmax.xlane.f32.xlu0 %v414
      %v416 = vpop.xlane.xlu0 %415
      %v417 = vsel %vm168, %v395, -inf
      %418 = vmax.xlane.f32.xlu0 %v417
      %v419 = vpop.xlane.xlu0 %418
      %v420 = vsub.f32 %v388, %v398
      %v421 = vsub.f32 %v389, %v401
      %v422 = vsub.f32 %v390, %v404
      %v423 = vsub.f32 %v391, %v407
      %v424 = vsub.f32 %v392, %v410
      %v425 = vsub.f32 %v393, %v413
      %v426 = vsub.f32 %v394, %v416
      %v427 = vsub.f32 %v395, %v419
      %v428 = vmul.f32 %v420, 1.442695
      %v429 = vpow.pop %v428
      %v430 = vmul.f32 %v421, 1.442695
      %v431 = vpow.pop %v430
      %v432 = vmul.f32 %v422, 1.442695
      %v433 = vpow.pop %v432
      %v434 = vmul.f32 %v423, 1.442695
      %v435 = vpow.pop %v434
      %v436 = vmul.f32 %v424, 1.442695
      %v437 = vpow.pop %v436
      %v438 = vmul.f32 %v425, 1.442695
      %v439 = vpow.pop %v438
      %v440 = vmul.f32 %v426, 1.442695
      %v441 = vpow.pop %v440
      %v442 = vmul.f32 %v427, 1.442695
      %v443 = vpow.pop %v442
      %v444 = vsel %vm168, %v429, 0.0
      %445 = vadd.xlane.f32.xlu0 %v444
      %v446 = vpop.xlane.xlu0 %445
      %v447 = vsel %vm168, %v431, 0.0
      %448 = vadd.xlane.f32.xlu0 %v447
      %v449 = vpop.xlane.xlu0 %448
      %v450 = vsel %vm168, %v433, 0.0
      %451 = vadd.xlane.f32.xlu0 %v450
      %v452 = vpop.xlane.xlu0 %451
      %v453 = vsel %vm168, %v435, 0.0
      %454 = vadd.xlane.f32.xlu0 %v453
      %v455 = vpop.xlane.xlu0 %454
      %v456 = vsel %vm168, %v437, 0.0
      %457 = vadd.xlane.f32.xlu0 %v456
      %v458 = vpop.xlane.xlu0 %457
      %v459 = vsel %vm168, %v439, 0.0
      %460 = vadd.xlane.f32.xlu0 %v459
      %v461 = vpop.xlane.xlu0 %460
      %v462 = vsel %vm168, %v441, 0.0
      %463 = vadd.xlane.f32.xlu0 %v462
      %v464 = vpop.xlane.xlu0 %463
      %v465 = vsel %vm168, %v443, 0.0
      %466 = vadd.xlane.f32.xlu0 %v465
      %v467 = vpop.xlane.xlu0 %466
      %v468 = vrcp.pop %v446
      %v469 = vrcp.pop %v449
      %v470 = vrcp.pop %v452
      %v471 = vrcp.pop %v455
      %v472 = vrcp.pop %v458
      %v473 = vrcp.pop %v461
      %v474 = vrcp.pop %v464
      %v475 = vrcp.pop %v467
      %v476 = vmul.f32 %v429, %v468
      %v477 = vmul.f32 %v431, %v469
      %v478 = vmul.f32 %v433, %v470
      %v479 = vmul.f32 %v435, %v471
      %v480 = vmul.f32 %v437, %v472
      %v481 = vmul.f32 %v439, %v473
      %v482 = vmul.f32 %v441, %v474
      %v483 = vmul.f32 %v443, %v475
      %v484 = vpack.c.bf16 %v477, %v476
      %v485 = vpack.c.bf16 %v479, %v478
      %v486 = vpack.c.bf16 %v481, %v480
      %v487 = vpack.c.bf16 %v483, %v482
      %488 = vrot.lane.b32.xlu0 %v165, 64
      %v489 = vpop.permute.xlu0 %488
      %v492 = vsel %vm168, %v484, 0
      %494 = vmatprep.subr.bf16.mxu0 0
      %495 = vmatpush1.bf16.msra.mxu0 0
      %496 = vmatprep.subr.bf16.mxu0 0
      %497 = vmatpush1.bf16.msra.mxu0 0
      %498 = vmatprep.subr.bf16.mxu0 0
      %499 = vmatpush1.bf16.msra.mxu0 0
      %500 = vmatprep.subr.bf16.mxu0 0
      %501 = vmatpush1.bf16.msra.mxu0 0
      %502 = vmatprep.subr.bf16.mxu0 0
      %503 = vmatpush1.bf16.msra.mxu0 0
      %504 = vmatprep.subr.bf16.mxu0 0
      %505 = vmatpush1.bf16.msra.mxu0 0
      %506 = vmatprep.subr.bf16.mxu0 0
      %507 = vmatpush1.bf16.msra.mxu0 0
      %508 = vmatprep.subr.bf16.mxu0 0
      %509 = vmatpush1.bf16.msra.mxu0 %v489
      %510 = vmatprep.subr.bf16.mxu0 0
      %511 = vmatpush2.bf16.msra.mxu0 0
      %512 = vmatprep.subr.bf16.mxu0 0
      %513 = vmatpush2.bf16.msra.mxu0 0
      %514 = vmatprep.subr.bf16.mxu0 0
      %515 = vmatpush2.bf16.msra.mxu0 0
      %516 = vmatprep.subr.bf16.mxu0 0
      %517 = vmatpush2.bf16.msra.mxu0 0
      %518 = vmatprep.subr.bf16.mxu0 0
      %519 = vmatpush2.bf16.msra.mxu0 0
      %520 = vmatprep.subr.bf16.mxu0 0
      %521 = vmatpush2.bf16.msra.mxu0 0
      %522 = vmatprep.subr.bf16.mxu0 0
      %523 = vmatpush2.bf16.msra.mxu0 0
      %524 = vmatprep.subr.bf16.mxu0 0
      %525 = vmatpush2.bf16.msra.mxu0 0
      %526 = vmatprep.mubr.bf16.mxu0 0
      %527 = vmatmul.mubr.bf16.gmra.mxu0 %v492
      %v528 = vpop.f32.mrf.mxu0
      %v529 = vadd.f32 0.0, %v528
      %v530 = vpop.f32.mrf.mxu0
      %v531 = vpop.f32.mrf.mxu0
      %v532 = vadd.f32 0.0, %v531
      %v533 = vpop.f32.mrf.mxu0
      %534 = vdwg.mxu0
      %535 = vrot.lane.b32.xlu0 %v220, 64
      %v536 = vpop.permute.xlu0 %535
      %v539 = vsel %vm168, %v485, 0
      %541 = vmatprep.subr.bf16.mxu0 0
      %542 = vmatpush1.bf16.msra.mxu0 0
      %543 = vmatprep.subr.bf16.mxu0 0
      %544 = vmatpush1.bf16.msra.mxu0 0
      %545 = vmatprep.subr.bf16.mxu0 0
      %546 = vmatpush1.bf16.msra.mxu0 0
      %547 = vmatprep.subr.bf16.mxu0 0
      %548 = vmatpush1.bf16.msra.mxu0 0
      %549 = vmatprep.subr.bf16.mxu0 0
      %550 = vmatpush1.bf16.msra.mxu0 0
      %551 = vmatprep.subr.bf16.mxu0 0
      %552 = vmatpush1.bf16.msra.mxu0 0
      %553 = vmatprep.subr.bf16.mxu0 0
      %554 = vmatpush1.bf16.msra.mxu0 0
      %555 = vmatprep.subr.bf16.mxu0 0
      %556 = vmatpush1.bf16.msra.mxu0 %v536
      %557 = vmatprep.subr.bf16.mxu0 0
      %558 = vmatpush2.bf16.msra.mxu0 0
      %559 = vmatprep.subr.bf16.mxu0 0
      %560 = vmatpush2.bf16.msra.mxu0 0
      %561 = vmatprep.subr.bf16.mxu0 0
      %562 = vmatpush2.bf16.msra.mxu0 0
      %563 = vmatprep.subr.bf16.mxu0 0
      %564 = vmatpush2.bf16.msra.mxu0 0
      %565 = vmatprep.subr.bf16.mxu0 0
      %566 = vmatpush2.bf16.msra.mxu0 0
      %567 = vmatprep.subr.bf16.mxu0 0
      %568 = vmatpush2.bf16.msra.mxu0 0
      %569 = vmatprep.subr.bf16.mxu0 0
      %570 = vmatpush2.bf16.msra.mxu0 0
      %571 = vmatprep.subr.bf16.mxu0 0
      %572 = vmatpush2.bf16.msra.mxu0 0
      %573 = vmatprep.mubr.bf16.mxu0 0
      %574 = vmatmul.mubr.bf16.gmra.mxu0 %v539
      %v575 = vpop.f32.mrf.mxu0
      %v576 = vadd.f32 0.0, %v575
      %v577 = vpop.f32.mrf.mxu0
      %v578 = vpop.f32.mrf.mxu0
      %v579 = vadd.f32 0.0, %v578
      %v580 = vpop.f32.mrf.mxu0
      %581 = vdwg.mxu0
      %582 = vrot.lane.b32.xlu0 %v274, 64
      %v583 = vpop.permute.xlu0 %582
      %v586 = vsel %vm168, %v486, 0
      %588 = vmatprep.subr.bf16.mxu0 0
      %589 = vmatpush1.bf16.msra.mxu0 0
      %590 = vmatprep.subr.bf16.mxu0 0
      %591 = vmatpush1.bf16.msra.mxu0 0
      %592 = vmatprep.subr.bf16.mxu0 0
      %593 = vmatpush1.bf16.msra.mxu0 0
      %594 = vmatprep.subr.bf16.mxu0 0
      %595 = vmatpush1.bf16.msra.mxu0 0
      %596 = vmatprep.subr.bf16.mxu0 0
      %597 = vmatpush1.bf16.msra.mxu0 0
      %598 = vmatprep.subr.bf16.mxu0 0
      %599 = vmatpush1.bf16.msra.mxu0 0
      %600 = vmatprep.subr.bf16.mxu0 0
      %601 = vmatpush1.bf16.msra.mxu0 0
      %602 = vmatprep.subr.bf16.mxu0 0
      %603 = vmatpush1.bf16.msra.mxu0 %v583
      %604 = vmatprep.subr.bf16.mxu0 0
      %605 = vmatpush2.bf16.msra.mxu0 0
      %606 = vmatprep.subr.bf16.mxu0 0
      %607 = vmatpush2.bf16.msra.mxu0 0
      %608 = vmatprep.subr.bf16.mxu0 0
      %609 = vmatpush2.bf16.msra.mxu0 0
      %610 = vmatprep.subr.bf16.mxu0 0
      %611 = vmatpush2.bf16.msra.mxu0 0
      %612 = vmatprep.subr.bf16.mxu0 0
      %613 = vmatpush2.bf16.msra.mxu0 0
      %614 = vmatprep.subr.bf16.mxu0 0
      %615 = vmatpush2.bf16.msra.mxu0 0
      %616 = vmatprep.subr.bf16.mxu0 0
      %617 = vmatpush2.bf16.msra.mxu0 0
      %618 = vmatprep.subr.bf16.mxu0 0
      %619 = vmatpush2.bf16.msra.mxu0 0
      %620 = vmatprep.mubr.bf16.mxu0 0
      %621 = vmatmul.mubr.bf16.gmra.mxu0 %v586
      %v622 = vpop.f32.mrf.mxu0
      %v623 = vadd.f32 0.0, %v622
      %v624 = vpop.f32.mrf.mxu0
      %v625 = vpop.f32.mrf.mxu0
      %v626 = vadd.f32 0.0, %v625
      %v627 = vpop.f32.mrf.mxu0
      %628 = vdwg.mxu0
      %629 = vrot.lane.b32.xlu0 %v328, 64
      %v630 = vpop.permute.xlu0 %629
      %v633 = vsel %vm168, %v487, 0
      %635 = vmatprep.subr.bf16.mxu0 0
      %636 = vmatpush1.bf16.msra.mxu0 0
      %637 = vmatprep.subr.bf16.mxu0 0
      %638 = vmatpush1.bf16.msra.mxu0 0
      %639 = vmatprep.subr.bf16.mxu0 0
      %640 = vmatpush1.bf16.msra.mxu0 0
      %641 = vmatprep.subr.bf16.mxu0 0
      %642 = vmatpush1.bf16.msra.mxu0 0
      %643 = vmatprep.subr.bf16.mxu0 0
      %644 = vmatpush1.bf16.msra.mxu0 0
      %645 = vmatprep.subr.bf16.mxu0 0
      %646 = vmatpush1.bf16.msra.mxu0 0
      %647 = vmatprep.subr.bf16.mxu0 0
      %648 = vmatpush1.bf16.msra.mxu0 0
      %649 = vmatprep.subr.bf16.mxu0 0
      %650 = vmatpush1.bf16.msra.mxu0 %v630
      %651 = vmatprep.subr.bf16.mxu0 0
      %652 = vmatpush2.bf16.msra.mxu0 0
      %653 = vmatprep.subr.bf16.mxu0 0
      %654 = vmatpush2.bf16.msra.mxu0 0
      %655 = vmatprep.subr.bf16.mxu0 0
      %656 = vmatpush2.bf16.msra.mxu0 0
      %657 = vmatprep.subr.bf16.mxu0 0
      %658 = vmatpush2.bf16.msra.mxu0 0
      %659 = vmatprep.subr.bf16.mxu0 0
      %660 = vmatpush2.bf16.msra.mxu0 0
      %661 = vmatprep.subr.bf16.mxu0 0
      %662 = vmatpush2.bf16.msra.mxu0 0
      %663 = vmatprep.subr.bf16.mxu0 0
      %664 = vmatpush2.bf16.msra.mxu0 0
      %665 = vmatprep.subr.bf16.mxu0 0
      %666 = vmatpush2.bf16.msra.mxu0 0
      %667 = vmatprep.mubr.bf16.mxu0 0
      %668 = vmatmul.mubr.bf16.gmra.mxu0 %v633
      %v669 = vpop.f32.mrf.mxu0
      %v670 = vadd.f32 0.0, %v669
      %v671 = vpop.f32.mrf.mxu0
      %v672 = vpop.f32.mrf.mxu0
      %v673 = vadd.f32 0.0, %v672
      %v674 = vpop.f32.mrf.mxu0
      %675 = vdwg.mxu0
      %v676 = vpack.c.bf16 %v532, %v529
      %v677 = vpack.c.bf16 %v579, %v576
      %v678 = vpack.c.bf16 %v626, %v623
      %v679 = vpack.c.bf16 %v673, %v670
      %v684 = vunpack.c.l.b16 %v676
      %v685 = vunpack.c.h.b16 %v676
      %v686 = vunpack.c.l.b16 %v677
      %v687 = vunpack.c.h.b16 %v677
      %v688 = vunpack.c.l.b16 %v678
      %v689 = vunpack.c.h.b16 %v678
      %v690 = vunpack.c.l.b16 %v679
      %v691 = vunpack.c.h.b16 %v679
      %v692 = vpack.c.b16 %v684, %v684
      %v693 = vpack.c.b16 %v685, %v685
      %v694 = vpack.c.b16 %v686, %v686
      %v695 = vpack.c.b16 %v687, %v687
      %v696 = vpack.c.b16 %v688, %v688
      %v697 = vpack.c.b16 %v689, %v689
      %v698 = vpack.c.b16 %v690, %v690
      %v699 = vpack.c.b16 %v691, %v691
      %vm708 = vcmask 125952
      %709 = vst.msk [vmem:[%s150] sm:$0xf] %vm708, %v692
      %710 = vst.msk [vmem:[%s150 + $0x4] sm:$0xf] %vm708, %v693
      %711 = vst.msk [vmem:[%s150 + $0x8] sm:$0xf] %vm708, %v694
      %712 = vst.msk [vmem:[%s150 + $0xc] sm:$0xf] %vm708, %v695
      %713 = vst.msk [vmem:[%s150 + $0x10] sm:$0xf] %vm708, %v696
      %714 = vst.msk [vmem:[%s150 + $0x14] sm:$0xf] %vm708, %v697
      %715 = vst.msk [vmem:[%s150 + $0x18] sm:$0xf] %vm708, %v698
      %716 = vst.msk [vmem:[%s150 + $0x1c] sm:$0xf] %vm708, %v699
      %v717 = vld [vmem:[%s143] sm:$0xf]
      %v718 = vld [vmem:[%s143 + $0x4] sm:$0xf]
      %v719 = vld [vmem:[%s143 + $0x8] sm:$0xf]
      %v720 = vld [vmem:[%s143 + $0xc] sm:$0xf]
      %v721 = vld [vmem:[%s143 + $0x10] sm:$0xf]
      %v722 = vld [vmem:[%s143 + $0x14] sm:$0xf]
      %v723 = vld [vmem:[%s143 + $0x18] sm:$0xf]
      %v724 = vld [vmem:[%s143 + $0x1c] sm:$0xf]
      %v727 = vunpack.c.l.b16 %v717
      %v728 = vunpack.c.l.b16 %v718
      %v729 = vpack.c.b16 %v728, %v727
      %730 = vrot.lane.b32.xlu0 %v729, 112
      %v731 = vpop.permute.xlu0 %730
      %732 = vrot.lane.b32.xlu0 %v729, 80
      %v733 = vpop.permute.xlu0 %732
      %v735 = vsel %vm168, %v731, 0
      %v738 = vsel %vm168, %v733, 0
      %740 = vmatprep.subr.bf16.mxu0 0
      %741 = vmatpush1.bf16.xpose.msra.mxu0 0
      %742 = vmatprep.subr.bf16.mxu0 0
      %743 = vmatpush1.bf16.xpose.msra.mxu0 0
      %744 = vmatprep.subr.bf16.mxu0 0
      %745 = vmatpush1.bf16.xpose.msra.mxu0 0
      %746 = vmatprep.subr.bf16.mxu0 0
      %747 = vmatpush1.bf16.xpose.msra.mxu0 0
      %748 = vmatprep.subr.bf16.mxu0 0
      %749 = vmatpush1.bf16.xpose.msra.mxu0 0
      %750 = vmatprep.subr.bf16.mxu0 0
      %751 = vmatpush1.bf16.xpose.msra.mxu0 0
      %752 = vmatprep.subr.bf16.mxu0 0
      %753 = vmatpush1.bf16.xpose.msra.mxu0 0
      %754 = vmatprep.subr.bf16.mxu0 0
      %755 = vmatpush1.bf16.xpose.msra.mxu0 %v738
      %756 = vmatprep.subr.bf16.mxu0 0
      %757 = vmatpush2.bf16.xpose.msra.mxu0 0
      %758 = vmatprep.subr.bf16.mxu0 0
      %759 = vmatpush2.bf16.xpose.msra.mxu0 0
      %760 = vmatprep.subr.bf16.mxu0 0
      %761 = vmatpush2.bf16.xpose.msra.mxu0 0
      %762 = vmatprep.subr.bf16.mxu0 0
      %763 = vmatpush2.bf16.xpose.msra.mxu0 0
      %764 = vmatprep.subr.bf16.mxu0 0
      %765 = vmatpush2.bf16.xpose.msra.mxu0 0
      %766 = vmatprep.subr.bf16.mxu0 0
      %767 = vmatpush2.bf16.xpose.msra.mxu0 0
      %768 = vmatprep.subr.bf16.mxu0 0
      %769 = vmatpush2.bf16.xpose.msra.mxu0 0
      %770 = vmatprep.subr.bf16.mxu0 0
      %771 = vmatpush2.bf16.xpose.msra.mxu0 0
      %772 = vmatprep.mubr.bf16.mxu0 0
      %773 = vmatmul.mubr.bf16.gmra.mxu0 %v735
      %v774 = vpop.f32.mrf.mxu0
      %v775 = vadd.f32 0.0, %v774
      %v776 = vpop.f32.mrf.mxu0
      %v777 = vpop.f32.mrf.mxu0
      %v778 = vadd.f32 0.0, %v777
      %v779 = vpop.f32.mrf.mxu0
      %780 = vdwg.mxu0
      %v783 = vunpack.c.l.b16 %v719
      %v784 = vunpack.c.l.b16 %v720
      %v785 = vpack.c.b16 %v784, %v783
      %786 = vrot.lane.b32.xlu0 %v785, 112
      %v787 = vpop.permute.xlu0 %786
      %788 = vrot.lane.b32.xlu0 %v785, 80
      %v789 = vpop.permute.xlu0 %788
      %v791 = vsel %vm168, %v787, 0
      %v794 = vsel %vm168, %v789, 0
      %796 = vmatprep.subr.bf16.mxu0 0
      %797 = vmatpush1.bf16.xpose.msra.mxu0 0
      %798 = vmatprep.subr.bf16.mxu0 0
      %799 = vmatpush1.bf16.xpose.msra.mxu0 0
      %800 = vmatprep.subr.bf16.mxu0 0
      %801 = vmatpush1.bf16.xpose.msra.mxu0 0
      %802 = vmatprep.subr.bf16.mxu0 0
      %803 = vmatpush1.bf16.xpose.msra.mxu0 0
      %804 = vmatprep.subr.bf16.mxu0 0
      %805 = vmatpush1.bf16.xpose.msra.mxu0 0
      %806 = vmatprep.subr.bf16.mxu0 0
      %807 = vmatpush1.bf16.xpose.msra.mxu0 0
      %808 = vmatprep.subr.bf16.mxu0 0
      %809 = vmatpush1.bf16.xpose.msra.mxu0 0
      %810 = vmatprep.subr.bf16.mxu0 0
      %811 = vmatpush1.bf16.xpose.msra.mxu0 %v794
      %812 = vmatprep.subr.bf16.mxu0 0
      %813 = vmatpush2.bf16.xpose.msra.mxu0 0
      %814 = vmatprep.subr.bf16.mxu0 0
      %815 = vmatpush2.bf16.xpose.msra.mxu0 0
      %816 = vmatprep.subr.bf16.mxu0 0
      %817 = vmatpush2.bf16.xpose.msra.mxu0 0
      %818 = vmatprep.subr.bf16.mxu0 0
      %819 = vmatpush2.bf16.xpose.msra.mxu0 0
      %820 = vmatprep.subr.bf16.mxu0 0
      %821 = vmatpush2.bf16.xpose.msra.mxu0 0
      %822 = vmatprep.subr.bf16.mxu0 0
      %823 = vmatpush2.bf16.xpose.msra.mxu0 0
      %824 = vmatprep.subr.bf16.mxu0 0
      %825 = vmatpush2.bf16.xpose.msra.mxu0 0
      %826 = vmatprep.subr.bf16.mxu0 0
      %827 = vmatpush2.bf16.xpose.msra.mxu0 0
      %828 = vmatprep.mubr.bf16.mxu0 0
      %829 = vmatmul.mubr.bf16.gmra.mxu0 %v791
      %v830 = vpop.f32.mrf.mxu0
      %v831 = vadd.f32 0.0, %v830
      %v832 = vpop.f32.mrf.mxu0
      %v833 = vpop.f32.mrf.mxu0
      %v834 = vadd.f32 0.0, %v833
      %v835 = vpop.f32.mrf.mxu0
      %836 = vdwg.mxu0
      %v839 = vunpack.c.l.b16 %v721
      %v840 = vunpack.c.l.b16 %v722
      %v841 = vpack.c.b16 %v840, %v839
      %842 = vrot.lane.b32.xlu0 %v841, 112
      %v843 = vpop.permute.xlu0 %842
      %844 = vrot.lane.b32.xlu0 %v841, 80
      %v845 = vpop.permute.xlu0 %844
      %v847 = vsel %vm168, %v843, 0
      %v850 = vsel %vm168, %v845, 0
      %852 = vmatprep.subr.bf16.mxu0 0
      %853 = vmatpush1.bf16.xpose.msra.mxu0 0
      %854 = vmatprep.subr.bf16.mxu0 0
      %855 = vmatpush1.bf16.xpose.msra.mxu0 0
      %856 = vmatprep.subr.bf16.mxu0 0
      %857 = vmatpush1.bf16.xpose.msra.mxu0 0
      %858 = vmatprep.subr.bf16.mxu0 0
      %859 = vmatpush1.bf16.xpose.msra.mxu0 0
      %860 = vmatprep.subr.bf16.mxu0 0
      %861 = vmatpush1.bf16.xpose.msra.mxu0 0
      %862 = vmatprep.subr.bf16.mxu0 0
      %863 = vmatpush1.bf16.xpose.msra.mxu0 0
      %864 = vmatprep.subr.bf16.mxu0 0
      %865 = vmatpush1.bf16.xpose.msra.mxu0 0
      %866 = vmatprep.subr.bf16.mxu0 0
      %867 = vmatpush1.bf16.xpose.msra.mxu0 %v850
      %868 = vmatprep.subr.bf16.mxu0 0
      %869 = vmatpush2.bf16.xpose.msra.mxu0 0
      %870 = vmatprep.subr.bf16.mxu0 0
      %871 = vmatpush2.bf16.xpose.msra.mxu0 0
      %872 = vmatprep.subr.bf16.mxu0 0
      %873 = vmatpush2.bf16.xpose.msra.mxu0 0
      %874 = vmatprep.subr.bf16.mxu0 0
      %875 = vmatpush2.bf16.xpose.msra.mxu0 0
      %876 = vmatprep.subr.bf16.mxu0 0
      %877 = vmatpush2.bf16.xpose.msra.mxu0 0
      %878 = vmatprep.subr.bf16.mxu0 0
      %879 = vmatpush2.bf16.xpose.msra.mxu0 0
      %880 = vmatprep.subr.bf16.mxu0 0
      %881 = vmatpush2.bf16.xpose.msra.mxu0 0
      %882 = vmatprep.subr.bf16.mxu0 0
      %883 = vmatpush2.bf16.xpose.msra.mxu0 0
      %884 = vmatprep.mubr.bf16.mxu0 0
      %885 = vmatmul.mubr.bf16.gmra.mxu0 %v847
      %v886 = vpop.f32.mrf.mxu0
      %v887 = vadd.f32 0.0, %v886
      %v888 = vpop.f32.mrf.mxu0
      %v889 = vpop.f32.mrf.mxu0
      %v890 = vadd.f32 0.0, %v889
      %v891 = vpop.f32.mrf.mxu0
      %892 = vdwg.mxu0
      %v895 = vunpack.c.l.b16 %v723
      %v896 = vunpack.c.l.b16 %v724
      %v897 = vpack.c.b16 %v896, %v895
      %898 = vrot.lane.b32.xlu0 %v897, 112
      %v899 = vpop.permute.xlu0 %898
      %900 = vrot.lane.b32.xlu0 %v897, 80
      %v901 = vpop.permute.xlu0 %900
      %v903 = vsel %vm168, %v899, 0
      %v906 = vsel %vm168, %v901, 0
      %908 = vmatprep.subr.bf16.mxu0 0
      %909 = vmatpush1.bf16.xpose.msra.mxu0 0
      %910 = vmatprep.subr.bf16.mxu0 0
      %911 = vmatpush1.bf16.xpose.msra.mxu0 0
      %912 = vmatprep.subr.bf16.mxu0 0
      %913 = vmatpush1.bf16.xpose.msra.mxu0 0
      %914 = vmatprep.subr.bf16.mxu0 0
      %915 = vmatpush1.bf16.xpose.msra.mxu0 0
      %916 = vmatprep.subr.bf16.mxu0 0
      %917 = vmatpush1.bf16.xpose.msra.mxu0 0
      %918 = vmatprep.subr.bf16.mxu0 0
      %919 = vmatpush1.bf16.xpose.msra.mxu0 0
      %920 = vmatprep.subr.bf16.mxu0 0
      %921 = vmatpush1.bf16.xpose.msra.mxu0 0
      %922 = vmatprep.subr.bf16.mxu0 0
      %923 = vmatpush1.bf16.xpose.msra.mxu0 %v906
      %924 = vmatprep.subr.bf16.mxu0 0
      %925 = vmatpush2.bf16.xpose.msra.mxu0 0
      %926 = vmatprep.subr.bf16.mxu0 0
      %927 = vmatpush2.bf16.xpose.msra.mxu0 0
      %928 = vmatprep.subr.bf16.mxu0 0
      %929 = vmatpush2.bf16.xpose.msra.mxu0 0
      %930 = vmatprep.subr.bf16.mxu0 0
      %931 = vmatpush2.bf16.xpose.msra.mxu0 0
      %932 = vmatprep.subr.bf16.mxu0 0
      %933 = vmatpush2.bf16.xpose.msra.mxu0 0
      %934 = vmatprep.subr.bf16.mxu0 0
      %935 = vmatpush2.bf16.xpose.msra.mxu0 0
      %936 = vmatprep.subr.bf16.mxu0 0
      %937 = vmatpush2.bf16.xpose.msra.mxu0 0
      %938 = vmatprep.subr.bf16.mxu0 0
      %939 = vmatpush2.bf16.xpose.msra.mxu0 0
      %940 = vmatprep.mubr.bf16.mxu0 0
      %941 = vmatmul.mubr.bf16.gmra.mxu0 %v903
      %v942 = vpop.f32.mrf.mxu0
      %v943 = vadd.f32 0.0, %v942
      %v944 = vpop.f32.mrf.mxu0
      %v945 = vpop.f32.mrf.mxu0
      %v946 = vadd.f32 0.0, %v945
      %v947 = vpop.f32.mrf.mxu0
      %948 = vdwg.mxu0
      %v949 = vmul.f32 %v775, 0.25
      %v950 = vmul.f32 %v778, 0.25
      %v951 = vmul.f32 %v831, 0.25
      %v952 = vmul.f32 %v834, 0.25
      %v953 = vmul.f32 %v887, 0.25
      %v954 = vmul.f32 %v890, 0.25
      %v955 = vmul.f32 %v943, 0.25
      %v956 = vmul.f32 %v946, 0.25
      %s957 = scalar_lea.vmem %s1, 16
      %v958 = vld [vmem:[%s957] sm:$0xff]
      %v959 = vld [vmem:[%s957 + $0x8] sm:$0xff]
      %v960 = vadd.f32 %v949, %v958
      %v961 = vadd.f32 %v950, %v959
      %v962 = vadd.f32 %v951, %v958
      %v963 = vadd.f32 %v952, %v959
      %v964 = vadd.f32 %v953, %v958
      %v965 = vadd.f32 %v954, %v959
      %v966 = vadd.f32 %v955, %v958
      %v967 = vadd.f32 %v956, %v959
      %v968 = vsel %vm168, %v960, -inf
      %969 = vmax.xlane.f32.xlu0 %v968
      %v970 = vpop.xlane.xlu0 %969
      %v971 = vsel %vm168, %v961, -inf
      %972 = vmax.xlane.f32.xlu0 %v971
      %v973 = vpop.xlane.xlu0 %972
      %v974 = vsel %vm168, %v962, -inf
      %975 = vmax.xlane.f32.xlu0 %v974
      %v976 = vpop.xlane.xlu0 %975
      %v977 = vsel %vm168, %v963, -inf
      %978 = vmax.xlane.f32.xlu0 %v977
      %v979 = vpop.xlane.xlu0 %978
      %v980 = vsel %vm168, %v964, -inf
      %981 = vmax.xlane.f32.xlu0 %v980
      %v982 = vpop.xlane.xlu0 %981
      %v983 = vsel %vm168, %v965, -inf
      %984 = vmax.xlane.f32.xlu0 %v983
      %v985 = vpop.xlane.xlu0 %984
      %v986 = vsel %vm168, %v966, -inf
      %987 = vmax.xlane.f32.xlu0 %v986
      %v988 = vpop.xlane.xlu0 %987
      %v989 = vsel %vm168, %v967, -inf
      %990 = vmax.xlane.f32.xlu0 %v989
      %v991 = vpop.xlane.xlu0 %990
      %v992 = vsub.f32 %v960, %v970
      %v993 = vsub.f32 %v961, %v973
      %v994 = vsub.f32 %v962, %v976
      %v995 = vsub.f32 %v963, %v979
      %v996 = vsub.f32 %v964, %v982
      %v997 = vsub.f32 %v965, %v985
      %v998 = vsub.f32 %v966, %v988
      %v999 = vsub.f32 %v967, %v991
      %v1000 = vmul.f32 %v992, 1.442695
      %v1001 = vpow.pop %v1000
      %v1002 = vmul.f32 %v993, 1.442695
      %v1003 = vpow.pop %v1002
      %v1004 = vmul.f32 %v994, 1.442695
      %v1005 = vpow.pop %v1004
      %v1006 = vmul.f32 %v995, 1.442695
      %v1007 = vpow.pop %v1006
      %v1008 = vmul.f32 %v996, 1.442695
      %v1009 = vpow.pop %v1008
      %v1010 = vmul.f32 %v997, 1.442695
      %v1011 = vpow.pop %v1010
      %v1012 = vmul.f32 %v998, 1.442695
      %v1013 = vpow.pop %v1012
      %v1014 = vmul.f32 %v999, 1.442695
      %v1015 = vpow.pop %v1014
      %v1016 = vsel %vm168, %v1001, 0.0
      %1017 = vadd.xlane.f32.xlu0 %v1016
      %v1018 = vpop.xlane.xlu0 %1017
      %v1019 = vsel %vm168, %v1003, 0.0
      %1020 = vadd.xlane.f32.xlu0 %v1019
      %v1021 = vpop.xlane.xlu0 %1020
      %v1022 = vsel %vm168, %v1005, 0.0
      %1023 = vadd.xlane.f32.xlu0 %v1022
      %v1024 = vpop.xlane.xlu0 %1023
      %v1025 = vsel %vm168, %v1007, 0.0
      %1026 = vadd.xlane.f32.xlu0 %v1025
      %v1027 = vpop.xlane.xlu0 %1026
      %v1028 = vsel %vm168, %v1009, 0.0
      %1029 = vadd.xlane.f32.xlu0 %v1028
      %v1030 = vpop.xlane.xlu0 %1029
      %v1031 = vsel %vm168, %v1011, 0.0
      %1032 = vadd.xlane.f32.xlu0 %v1031
      %v1033 = vpop.xlane.xlu0 %1032
      %v1034 = vsel %vm168, %v1013, 0.0
      %1035 = vadd.xlane.f32.xlu0 %v1034
      %v1036 = vpop.xlane.xlu0 %1035
      %v1037 = vsel %vm168, %v1015, 0.0
      %1038 = vadd.xlane.f32.xlu0 %v1037
      %v1039 = vpop.xlane.xlu0 %1038
      %v1040 = vrcp.pop %v1018
      %v1041 = vrcp.pop %v1021
      %v1042 = vrcp.pop %v1024
      %v1043 = vrcp.pop %v1027
      %v1044 = vrcp.pop %v1030
      %v1045 = vrcp.pop %v1033
      %v1046 = vrcp.pop %v1036
      %v1047 = vrcp.pop %v1039
      %v1048 = vmul.f32 %v1001, %v1040
      %v1049 = vmul.f32 %v1003, %v1041
      %v1050 = vmul.f32 %v1005, %v1042
      %v1051 = vmul.f32 %v1007, %v1043
      %v1052 = vmul.f32 %v1009, %v1044
      %v1053 = vmul.f32 %v1011, %v1045
      %v1054 = vmul.f32 %v1013, %v1046
      %v1055 = vmul.f32 %v1015, %v1047
      %v1056 = vpack.c.bf16 %v1049, %v1048
      %v1057 = vpack.c.bf16 %v1051, %v1050
      %v1058 = vpack.c.bf16 %v1053, %v1052
      %v1059 = vpack.c.bf16 %v1055, %v1054
      %1060 = vrot.lane.b32.xlu0 %v729, 48
      %v1061 = vpop.permute.xlu0 %1060
      %v1064 = vsel %vm168, %v1056, 0
      %1066 = vmatprep.subr.bf16.mxu0 0
      %1067 = vmatpush1.bf16.msra.mxu0 0
      %1068 = vmatprep.subr.bf16.mxu0 0
      %1069 = vmatpush1.bf16.msra.mxu0 0
      %1070 = vmatprep.subr.bf16.mxu0 0
      %1071 = vmatpush1.bf16.msra.mxu0 0
      %1072 = vmatprep.subr.bf16.mxu0 0
      %1073 = vmatpush1.bf16.msra.mxu0 0
      %1074 = vmatprep.subr.bf16.mxu0 0
      %1075 = vmatpush1.bf16.msra.mxu0 0
      %1076 = vmatprep.subr.bf16.mxu0 0
      %1077 = vmatpush1.bf16.msra.mxu0 0
      %1078 = vmatprep.subr.bf16.mxu0 0
      %1079 = vmatpush1.bf16.msra.mxu0 0
      %1080 = vmatprep.subr.bf16.mxu0 0
      %1081 = vmatpush1.bf16.msra.mxu0 %v1061
      %1082 = vmatprep.subr.bf16.mxu0 0
      %1083 = vmatpush2.bf16.msra.mxu0 0
      %1084 = vmatprep.subr.bf16.mxu0 0
      %1085 = vmatpush2.bf16.msra.mxu0 0
      %1086 = vmatprep.subr.bf16.mxu0 0
      %1087 = vmatpush2.bf16.msra.mxu0 0
      %1088 = vmatprep.subr.bf16.mxu0 0
      %1089 = vmatpush2.bf16.msra.mxu0 0
      %1090 = vmatprep.subr.bf16.mxu0 0
      %1091 = vmatpush2.bf16.msra.mxu0 0
      %1092 = vmatprep.subr.bf16.mxu0 0
      %1093 = vmatpush2.bf16.msra.mxu0 0
      %1094 = vmatprep.subr.bf16.mxu0 0
      %1095 = vmatpush2.bf16.msra.mxu0 0
      %1096 = vmatprep.subr.bf16.mxu0 0
      %1097 = vmatpush2.bf16.msra.mxu0 0
      %1098 = vmatprep.mubr.bf16.mxu0 0
      %1099 = vmatmul.mubr.bf16.gmra.mxu0 %v1064
      %v1100 = vpop.f32.mrf.mxu0
      %v1101 = vadd.f32 0.0, %v1100
      %v1102 = vpop.f32.mrf.mxu0
      %v1103 = vpop.f32.mrf.mxu0
      %v1104 = vadd.f32 0.0, %v1103
      %v1105 = vpop.f32.mrf.mxu0
      %1106 = vdwg.mxu0
      %1107 = vrot.lane.b32.xlu0 %v785, 48
      %v1108 = vpop.permute.xlu0 %1107
      %v1111 = vsel %vm168, %v1057, 0
      %1113 = vmatprep.subr.bf16.mxu0 0
      %1114 = vmatpush1.bf16.msra.mxu0 0
      %1115 = vmatprep.subr.bf16.mxu0 0
      %1116 = vmatpush1.bf16.msra.mxu0 0
      %1117 = vmatprep.subr.bf16.mxu0 0
      %1118 = vmatpush1.bf16.msra.mxu0 0
      %1119 = vmatprep.subr.bf16.mxu0 0
      %1120 = vmatpush1.bf16.msra.mxu0 0
      %1121 = vmatprep.subr.bf16.mxu0 0
      %1122 = vmatpush1.bf16.msra.mxu0 0
      %1123 = vmatprep.subr.bf16.mxu0 0
      %1124 = vmatpush1.bf16.msra.mxu0 0
      %1125 = vmatprep.subr.bf16.mxu0 0
      %1126 = vmatpush1.bf16.msra.mxu0 0
      %1127 = vmatprep.subr.bf16.mxu0 0
      %1128 = vmatpush1.bf16.msra.mxu0 %v1108
      %1129 = vmatprep.subr.bf16.mxu0 0
      %1130 = vmatpush2.bf16.msra.mxu0 0
      %1131 = vmatprep.subr.bf16.mxu0 0
      %1132 = vmatpush2.bf16.msra.mxu0 0
      %1133 = vmatprep.subr.bf16.mxu0 0
      %1134 = vmatpush2.bf16.msra.mxu0 0
      %1135 = vmatprep.subr.bf16.mxu0 0
      %1136 = vmatpush2.bf16.msra.mxu0 0
      %1137 = vmatprep.subr.bf16.mxu0 0
      %1138 = vmatpush2.bf16.msra.mxu0 0
      %1139 = vmatprep.subr.bf16.mxu0 0
      %1140 = vmatpush2.bf16.msra.mxu0 0
      %1141 = vmatprep.subr.bf16.mxu0 0
      %1142 = vmatpush2.bf16.msra.mxu0 0
      %1143 = vmatprep.subr.bf16.mxu0 0
      %1144 = vmatpush2.bf16.msra.mxu0 0
      %1145 = vmatprep.mubr.bf16.mxu0 0
      %1146 = vmatmul.mubr.bf16.gmra.mxu0 %v1111
      %v1147 = vpop.f32.mrf.mxu0
      %v1148 = vadd.f32 0.0, %v1147
      %v1149 = vpop.f32.mrf.mxu0
      %v1150 = vpop.f32.mrf.mxu0
      %v1151 = vadd.f32 0.0, %v1150
      %v1152 = vpop.f32.mrf.mxu0
      %1153 = vdwg.mxu0
      %1154 = vrot.lane.b32.xlu0 %v841, 48
      %v1155 = vpop.permute.xlu0 %1154
      %v1158 = vsel %vm168, %v1058, 0
      %1160 = vmatprep.subr.bf16.mxu0 0
      %1161 = vmatpush1.bf16.msra.mxu0 0
      %1162 = vmatprep.subr.bf16.mxu0 0
      %1163 = vmatpush1.bf16.msra.mxu0 0
      %1164 = vmatprep.subr.bf16.mxu0 0
      %1165 = vmatpush1.bf16.msra.mxu0 0
      %1166 = vmatprep.subr.bf16.mxu0 0
      %1167 = vmatpush1.bf16.msra.mxu0 0
      %1168 = vmatprep.subr.bf16.mxu0 0
      %1169 = vmatpush1.bf16.msra.mxu0 0
      %1170 = vmatprep.subr.bf16.mxu0 0
      %1171 = vmatpush1.bf16.msra.mxu0 0
      %1172 = vmatprep.subr.bf16.mxu0 0
      %1173 = vmatpush1.bf16.msra.mxu0 0
      %1174 = vmatprep.subr.bf16.mxu0 0
      %1175 = vmatpush1.bf16.msra.mxu0 %v1155
      %1176 = vmatprep.subr.bf16.mxu0 0
      %1177 = vmatpush2.bf16.msra.mxu0 0
      %1178 = vmatprep.subr.bf16.mxu0 0
      %1179 = vmatpush2.bf16.msra.mxu0 0
      %1180 = vmatprep.subr.bf16.mxu0 0
      %1181 = vmatpush2.bf16.msra.mxu0 0
      %1182 = vmatprep.subr.bf16.mxu0 0
      %1183 = vmatpush2.bf16.msra.mxu0 0
      %1184 = vmatprep.subr.bf16.mxu0 0
      %1185 = vmatpush2.bf16.msra.mxu0 0
      %1186 = vmatprep.subr.bf16.mxu0 0
      %1187 = vmatpush2.bf16.msra.mxu0 0
      %1188 = vmatprep.subr.bf16.mxu0 0
      %1189 = vmatpush2.bf16.msra.mxu0 0
      %1190 = vmatprep.subr.bf16.mxu0 0
      %1191 = vmatpush2.bf16.msra.mxu0 0
      %1192 = vmatprep.mubr.bf16.mxu0 0
      %1193 = vmatmul.mubr.bf16.gmra.mxu0 %v1158
      %v1194 = vpop.f32.mrf.mxu0
      %v1195 = vadd.f32 0.0, %v1194
      %v1196 = vpop.f32.mrf.mxu0
      %v1197 = vpop.f32.mrf.mxu0
      %v1198 = vadd.f32 0.0, %v1197
      %v1199 = vpop.f32.mrf.mxu0
      %1200 = vdwg.mxu0
      %1201 = vrot.lane.b32.xlu0 %v897, 48
      %v1202 = vpop.permute.xlu0 %1201
      %v1205 = vsel %vm168, %v1059, 0
      %1207 = vmatprep.subr.bf16.mxu0 0
      %1208 = vmatpush1.bf16.msra.mxu0 0
      %1209 = vmatprep.subr.bf16.mxu0 0
      %1210 = vmatpush1.bf16.msra.mxu0 0
      %1211 = vmatprep.subr.bf16.mxu0 0
      %1212 = vmatpush1.bf16.msra.mxu0 0
      %1213 = vmatprep.subr.bf16.mxu0 0
      %1214 = vmatpush1.bf16.msra.mxu0 0
      %1215 = vmatprep.subr.bf16.mxu0 0
      %1216 = vmatpush1.bf16.msra.mxu0 0
      %1217 = vmatprep.subr.bf16.mxu0 0
      %1218 = vmatpush1.bf16.msra.mxu0 0
      %1219 = vmatprep.subr.bf16.mxu0 0
      %1220 = vmatpush1.bf16.msra.mxu0 0
      %1221 = vmatprep.subr.bf16.mxu0 0
      %1222 = vmatpush1.bf16.msra.mxu0 %v1202
      %1223 = vmatprep.subr.bf16.mxu0 0
      %1224 = vmatpush2.bf16.msra.mxu0 0
      %1225 = vmatprep.subr.bf16.mxu0 0
      %1226 = vmatpush2.bf16.msra.mxu0 0
      %1227 = vmatprep.subr.bf16.mxu0 0
      %1228 = vmatpush2.bf16.msra.mxu0 0
      %1229 = vmatprep.subr.bf16.mxu0 0
      %1230 = vmatpush2.bf16.msra.mxu0 0
      %1231 = vmatprep.subr.bf16.mxu0 0
      %1232 = vmatpush2.bf16.msra.mxu0 0
      %1233 = vmatprep.subr.bf16.mxu0 0
      %1234 = vmatpush2.bf16.msra.mxu0 0
      %1235 = vmatprep.subr.bf16.mxu0 0
      %1236 = vmatpush2.bf16.msra.mxu0 0
      %1237 = vmatprep.subr.bf16.mxu0 0
      %1238 = vmatpush2.bf16.msra.mxu0 0
      %1239 = vmatprep.mubr.bf16.mxu0 0
      %1240 = vmatmul.mubr.bf16.gmra.mxu0 %v1205
      %v1241 = vpop.f32.mrf.mxu0
      %v1242 = vadd.f32 0.0, %v1241
      %v1243 = vpop.f32.mrf.mxu0
      %v1244 = vpop.f32.mrf.mxu0
      %v1245 = vadd.f32 0.0, %v1244
      %v1246 = vpop.f32.mrf.mxu0
      %1247 = vdwg.mxu0
      %v1248 = vpack.c.bf16 %v1104, %v1101
      %v1249 = vpack.c.bf16 %v1151, %v1148
      %v1250 = vpack.c.bf16 %v1198, %v1195
      %v1251 = vpack.c.bf16 %v1245, %v1242
      %v1256 = vunpack.c.l.b16 %v1248
      %v1257 = vunpack.c.h.b16 %v1248
      %v1258 = vunpack.c.l.b16 %v1249
      %v1259 = vunpack.c.h.b16 %v1249
      %v1260 = vunpack.c.l.b16 %v1250
      %v1261 = vunpack.c.h.b16 %v1250
      %v1262 = vunpack.c.l.b16 %v1251
      %v1263 = vunpack.c.h.b16 %v1251
      %v1264 = vpack.c.b16 %v1256, %v1256
      %v1265 = vpack.c.b16 %v1257, %v1257
      %v1266 = vpack.c.b16 %v1258, %v1258
      %v1267 = vpack.c.b16 %v1259, %v1259
      %v1268 = vpack.c.b16 %v1260, %v1260
      %v1269 = vpack.c.b16 %v1261, %v1261
      %v1270 = vpack.c.b16 %v1262, %v1262
      %v1271 = vpack.c.b16 %v1263, %v1263
      %1272 = vrot.lane.b32.xlu0 %v1264, 16
      %v1273 = vpop.permute.xlu0 %1272
      %1274 = vrot.lane.b32.xlu0 %v1265, 16
      %v1275 = vpop.permute.xlu0 %1274
      %1276 = vrot.lane.b32.xlu0 %v1266, 16
      %v1277 = vpop.permute.xlu0 %1276
      %1278 = vrot.lane.b32.xlu0 %v1267, 16
      %v1279 = vpop.permute.xlu0 %1278
      %1280 = vrot.lane.b32.xlu0 %v1268, 16
      %v1281 = vpop.permute.xlu0 %1280
      %1282 = vrot.lane.b32.xlu0 %v1269, 16
      %v1283 = vpop.permute.xlu0 %1282
      %1284 = vrot.lane.b32.xlu0 %v1270, 16
      %v1285 = vpop.permute.xlu0 %1284
      %1286 = vrot.lane.b32.xlu0 %v1271, 16
      %v1287 = vpop.permute.xlu0 %1286
      %vm1296 = vcmask 257152
      %1297 = vst.msk [vmem:[%s150] sm:$0xf] %vm1296, %v1273
      %1298 = vst.msk [vmem:[%s150 + $0x4] sm:$0xf] %vm1296, %v1275
      %1299 = vst.msk [vmem:[%s150 + $0x8] sm:$0xf] %vm1296, %v1277
      %1300 = vst.msk [vmem:[%s150 + $0xc] sm:$0xf] %vm1296, %v1279
      %1301 = vst.msk [vmem:[%s150 + $0x10] sm:$0xf] %vm1296, %v1281
      %1302 = vst.msk [vmem:[%s150 + $0x14] sm:$0xf] %vm1296, %v1283
      %1303 = vst.msk [vmem:[%s150 + $0x18] sm:$0xf] %vm1296, %v1285
      %1304 = vst.msk [vmem:[%s150 + $0x1c] sm:$0xf] %vm1296, %v1287
      %s1305 = smul.u32 4, %s13
      %p1306 = scmp.lt.s32.totalorder %s1305, 7
      %s1307 = scalar_select %p1306, %s1305, 7
      %s1308 = smul.addr %s1307, 2
      %s1309 = smul.addr %s1308, 4
      %s1310 = scalar_lea.vmem %s2, %s1309
      // Predicated region
      $region29: #{_lambda_.27} parent=27 // pred_check
        %p1311 = pneg %p78
      $region30: #{_lambda_.27} parent=27 // pred_check_branch
        %1313 = sbr.rel (%p1311) target = $region32
      $region31: #{_lambda_.27} parent=27 // pred_region
        %s1314 = smul.u32 4, %s13
      $region32: #{_lambda_.27} parent=27 // pred_fallthru
        _
    $region28: #{_lambda_.27} parent=5 // pred_fallthru
      _
    %p1315 = scmp.le.s32.totalorder 2, %s8
    // Predicated region
    $region33: #{_lambda_.27} parent=5 // pred_check
      %p1316 = pneg %p1315
    $region34: #{_lambda_.27} parent=5 // pred_check_branch
      %1318 = sbr.rel (%p1316) target = $region36
    $region35: #{_lambda_.27} parent=5 // pred_region
      %s1319 = ssub.s32 %s8, 2
      // Predicated region
      $region37: #{_lambda_.27} parent=35 // pred_check
        %p1320 = pneg %p84
      $region38: #{_lambda_.27} parent=35 // pred_check_branch
        %1322 = sbr.rel (%p1320) target = $region40
      $region39: #{_lambda_.27} parent=35 // pred_region
        %s1323 = smul.u32 4, %s14
        %p1324 = scmp.lt.s32.totalorder %s1323, 7
        %s1325 = scalar_select %p1324, %s1323, 7
        %s1326 = smul.addr %s1325, 2
        %s1327 = smul.addr %s1326, 4
        %s1328 = scalar_lea.vmem %s2, %s1327
      $region40: #{_lambda_.27} parent=35 // pred_fallthru
        _
    $region36: #{_lambda_.27} parent=5 // pred_fallthru
      _
  $region6: #{_lambda_.27} parent=0 // loop_footer
    %s12 = sadd.s32 1, %s8
  $region7: #{_lambda_.27} parent=0 // loop_footer_branch
    %7 = sbr.rel target = $region3
  $region8: #{_lambda_.27} parent=0 // loop_exit
    _

// kernel: _lambda_.30
$region0: #{_lambda_.30}
  #allocation0 [shape = 'u32[]', space=smem, size = 0x4, offset = 0x4, fixed_abs, tag = 'smem constant byte address 0x4 - core index']
  #allocation1 [shape = 'u32[144,128]{1,0:T(1,128)}', space=vmem, size = 0x12000, scoped, tag = 'internal scratch']
  %s0 = inlined_call_operand.vmem [shape: bf16[128,128], index: 0, kind: input, shape index: {}]
  %s1 = inlined_call_operand.vmem [shape: bf16[128,32], index: 1, kind: input, shape index: {}]
  %s2 = inlined_call_operand.vmem [shape: f32[1,32], index: 2, kind: input, shape index: {}]
  %s3 = inlined_call_operand.vmem [shape: bf16[128,32], index: 3, kind: input, shape index: {}]
  %s4 = inlined_call_operand.vmem [shape: bf16[128,32], index: 4, kind: output, shape index: {}]
  %s5 = sld [smem:[#allocation0]]
  $region49: #{_lambda_.30} parent=0
    _
  %s7 = ssub.s32 1, %s5
  %s8 = scalar_select 0, %s7, %s5
  loop: start=0, step=1, limit=4
  $region2: #{_lambda_.30} parent=0 // loop_pre_header
    _
  $region3: #{_lambda_.30} parent=0 // loop_header
    %s10 = sphi 0, %s14
    %p11 = scmp.ge.s32.totalorder %s10, 4
    %s17 = sphi 0, %s29
    %s18 = sphi 0, %s25
    %s19 = sphi 0, %s17
    %s20 = sphi 0, %s18
    %s21 = sphi 0, %s19
    %s22 = sphi 0, %s20
    %s32 = sphi 0, %s34
    %s35 = sphi 0, %s32
    %s36 = sphi 0, %s35
    %s52 = sphi 0, %s36
    %s58 = sphi 0, %s60
    %s61 = sphi 0, %s58
    %s62 = sphi 0, %s61
    %s78 = sphi 0, %s62
    %s84 = sphi 0, %s86
    %s87 = sphi 0, %s84
    %s88 = sphi 0, %s87
    %s104 = sphi 0, %s88
    %s112 = sphi 0, %s114
    %s115 = sphi 0, %s112
    %s116 = sphi 0, %s115
    %s132 = sphi 0, %s116
    %s140 = sphi 0, %s142
    %s143 = sphi 0, %s140
    %s144 = sphi 0, %s143
    %s160 = sphi 0, %s144
  $region4: #{_lambda_.30} parent=0 // loop_header_branch
    %13 = sbr.rel (%p11) target = $region8
  $region5: #{_lambda_.30} parent=0 // loop_body
    %s15 = ssub.s32 %s10, 1
    %s16 = ssub.s32 %s10, 2
    %s23 = sadd.s32 1, %s18
    %p24 = scmp.ge.s32.totalorder %s23, 1
    %s25 = scalar_select %p24, 0, %s23
    %s26 = sadd.s32 1, %s17
    %s27 = scalar_select %p24, %s26, %s17
    %p28 = scmp.ge.s32.totalorder %s27, 2
    %s29 = scalar_select %p28, 0, %s27
    %s30 = ssub.s32 %s17, %s29
    %p31 = scmp.eq.s32.totalorder %s30, 0
    %s33 = sadd.s32 %s32, 1
    %s34 = scalar_select %p31, %s32, %s33
    %p37 = pneg %p31
    %p38 = scmp.eq.s32.totalorder %s10, 1
    %p39 = por %p37, %p38
    %p40 = scmp.ne.s32.totalorder %s32, %s35
    %p41 = scmp.eq.s32.totalorder %s10, 0
    %p42 = por %p40, %p41
    %p43 = scmp.ne.s32.totalorder %s32, %s35
    %p44 = scmp.eq.s32.totalorder %s15, 1
    %p45 = por %p43, %p44
    %p46 = scmp.ne.s32.totalorder %s35, %s36
    %p47 = scmp.eq.s32.totalorder %s15, 0
    %p48 = por %p46, %p47
    %p49 = scmp.ne.s32.totalorder %s35, %s36
    %p50 = scmp.eq.s32.totalorder %s16, 1
    %p51 = por %p49, %p50
    %p53 = scmp.ne.s32.totalorder %s36, %s52
    %p54 = scmp.eq.s32.totalorder %s16, 0
    %p55 = por %p53, %p54
    %s56 = ssub.s32 %s18, %s25
    %p57 = scmp.eq.s32.totalorder %s56, 0
    %s59 = sadd.s32 %s58, 1
    %s60 = scalar_select %p57, %s58, %s59
    %p63 = pneg %p57
    %p64 = scmp.eq.s32.totalorder %s10, 1
    %p65 = por %p63, %p64
    %p66 = scmp.ne.s32.totalorder %s58, %s61
    %p67 = scmp.eq.s32.totalorder %s10, 0
    %p68 = por %p66, %p67
    %p69 = scmp.ne.s32.totalorder %s58, %s61
    %p70 = scmp.eq.s32.totalorder %s15, 1
    %p71 = por %p69, %p70
    %p72 = scmp.ne.s32.totalorder %s61, %s62
    %p73 = scmp.eq.s32.totalorder %s15, 0
    %p74 = por %p72, %p73
    %p75 = scmp.ne.s32.totalorder %s61, %s62
    %p76 = scmp.eq.s32.totalorder %s16, 1
    %p77 = por %p75, %p76
    %p79 = scmp.ne.s32.totalorder %s62, %s78
    %p80 = scmp.eq.s32.totalorder %s16, 0
    %p81 = por %p79, %p80
    %s82 = ssub.s32 %s18, %s25
    %p83 = scmp.eq.s32.totalorder %s82, 0
    %s85 = sadd.s32 %s84, 1
    %s86 = scalar_select %p83, %s84, %s85
    %p89 = pneg %p83
    %p90 = scmp.eq.s32.totalorder %s10, 1
    %p91 = por %p89, %p90
    %p92 = scmp.ne.s32.totalorder %s84, %s87
    %p93 = scmp.eq.s32.totalorder %s10, 0
    %p94 = por %p92, %p93
    %p95 = scmp.ne.s32.totalorder %s84, %s87
    %p96 = scmp.eq.s32.totalorder %s15, 1
    %p97 = por %p95, %p96
    %p98 = scmp.ne.s32.totalorder %s87, %s88
    %p99 = scmp.eq.s32.totalorder %s15, 0
    %p100 = por %p98, %p99
    %p101 = scmp.ne.s32.totalorder %s87, %s88
    %p102 = scmp.eq.s32.totalorder %s16, 1
    %p103 = por %p101, %p102
    %p105 = scmp.ne.s32.totalorder %s88, %s104
    %p106 = scmp.eq.s32.totalorder %s16, 0
    %p107 = por %p105, %p106
    %s108 = ssub.s32 %s17, %s29
    %s109 = ssub.s32 %s18, %s25
    %s110 = sor.u32 %s108, %s109
    %p111 = scmp.eq.s32.totalorder %s110, 0
    %s113 = sadd.s32 %s112, 1
    %s114 = scalar_select %p111, %s112, %s113
    %p117 = pneg %p111
    %p118 = scmp.eq.s32.totalorder %s10, 1
    %p119 = por %p117, %p118
    %p120 = scmp.ne.s32.totalorder %s112, %s115
    %p121 = scmp.eq.s32.totalorder %s10, 0
    %p122 = por %p120, %p121
    %p123 = scmp.ne.s32.totalorder %s112, %s115
    %p124 = scmp.eq.s32.totalorder %s15, 1
    %p125 = por %p123, %p124
    %p126 = scmp.ne.s32.totalorder %s115, %s116
    %p127 = scmp.eq.s32.totalorder %s15, 0
    %p128 = por %p126, %p127
    %p129 = scmp.ne.s32.totalorder %s115, %s116
    %p130 = scmp.eq.s32.totalorder %s16, 1
    %p131 = por %p129, %p130
    %p133 = scmp.ne.s32.totalorder %s116, %s132
    %p134 = scmp.eq.s32.totalorder %s16, 0
    %p135 = por %p133, %p134
    %s136 = ssub.s32 %s17, %s29
    %s137 = ssub.s32 %s18, %s25
    %s138 = sor.u32 %s136, %s137
    %p139 = scmp.eq.s32.totalorder %s138, 0
    %s141 = sadd.s32 %s140, 1
    %s142 = scalar_select %p139, %s140, %s141
    %p145 = pneg %p139
    %p146 = scmp.eq.s32.totalorder %s10, 1
    %p147 = por %p145, %p146
    %p148 = scmp.ne.s32.totalorder %s140, %s143
    %p149 = scmp.eq.s32.totalorder %s10, 0
    %p150 = por %p148, %p149
    %p151 = scmp.ne.s32.totalorder %s140, %s143
    %p152 = scmp.eq.s32.totalorder %s15, 1
    %p153 = por %p151, %p152
    %p154 = scmp.ne.s32.totalorder %s143, %s144
    %p155 = scmp.eq.s32.totalorder %s15, 0
    %p156 = por %p154, %p155
    %p157 = scmp.ne.s32.totalorder %s143, %s144
    %p158 = scmp.eq.s32.totalorder %s16, 1
    %p159 = por %p157, %p158
    %p161 = scmp.ne.s32.totalorder %s144, %s160
    %p162 = scmp.eq.s32.totalorder %s16, 0
    %p163 = por %p161, %p162
    %p164 = scmp.le.s32.totalorder 1, %s10
    %p165 = scmp.lt.s32.totalorder %s10, 3
    %p166 = pnand %p164, %p165
    %p167 = pneg %p166
    // Predicated region
    $region9: #{_lambda_.30} parent=5 // pred_check
      _
    $region10: #{_lambda_.30} parent=5 // pred_check_branch
      %169 = sbr.rel (%p166) target = $region12
    $region11: #{_lambda_.30} parent=5 // pred_region
      %s170 = ssub.s32 %s10, 1
      // Predicated region
      $region13: #{_lambda_.30} parent=11 // pred_check
        %p171 = pneg %p74
      $region14: #{_lambda_.30} parent=11 // pred_check_branch
        %173 = sbr.rel (%p171) target = $region16
      $region15: #{_lambda_.30} parent=11 // pred_region
        %p174 = scmp.lt.s32.totalorder %s20, 0
        %s175 = scalar_select %p174, %s20, 0
        %s176 = smul.addr %s175, 4
        %s177 = scalar_lea.vmem %s1, %s176
      $region16: #{_lambda_.30} parent=11 // pred_fallthru
        _
      // Predicated region
      $region17: #{_lambda_.30} parent=11 // pred_check
        %p178 = pneg %p100
      $region18: #{_lambda_.30} parent=11 // pred_check_branch
        %180 = sbr.rel (%p178) target = $region20
      $region19: #{_lambda_.30} parent=11 // pred_region
        %p181 = scmp.lt.s32.totalorder %s20, 0
        %s182 = scalar_select %p181, %s20, 0
        %s183 = scalar_lea.vmem %s2, %s182
      $region20: #{_lambda_.30} parent=11 // pred_fallthru
        _
    $region12: #{_lambda_.30} parent=5 // pred_fallthru
      _
    %p184 = scmp.lt.s32.totalorder %s10, 2
    // Predicated region
    $region21: #{_lambda_.30} parent=5 // pred_check
      %p185 = pneg %p184
    $region22: #{_lambda_.30} parent=5 // pred_check_branch
      %187 = sbr.rel (%p185) target = $region24
    $region23: #{_lambda_.30} parent=5 // pred_region
      // Predicated region
      $region25: #{_lambda_.30} parent=23 // pred_check
        %p188 = pneg %p42
      $region26: #{_lambda_.30} parent=23 // pred_check_branch
        %190 = sbr.rel (%p188) target = $region28
      $region27: #{_lambda_.30} parent=23 // pred_region
        %s191 = smul.u32 8, %s17
        %p192 = scmp.lt.s32.totalorder %s191, 15
        %s193 = scalar_select %p192, %s191, 15
        %s194 = smul.addr %s193, 4
        %s195 = scalar_lea.vmem %s0, %s194
        %s196 = smul.u32 8, %s17
      $region28: #{_lambda_.30} parent=23 // pred_fallthru
        _
      // Predicated region
      $region29: #{_lambda_.30} parent=23 // pred_check
        %p197 = pneg %p122
      $region30: #{_lambda_.30} parent=23 // pred_check_branch
        %199 = sbr.rel (%p197) target = $region32
      $region31: #{_lambda_.30} parent=23 // pred_region
        %s200 = smul.u32 8, %s17
        %p201 = scmp.lt.s32.totalorder %s200, 15
        %s202 = scalar_select %p201, %s200, 15
        %p203 = scmp.lt.s32.totalorder %s18, 0
        %s204 = scalar_select %p203, %s18, 0
        %s205 = sadd.s32 %s204, %s202
        %s206 = smul.addr %s205, 4
        %s207 = scalar_lea.vmem %s3, %s206
        %s208 = smul.u32 8, %s17
      $region32: #{_lambda_.30} parent=23 // pred_fallthru
        _
    $region24: #{_lambda_.30} parent=5 // pred_fallthru
      _
    %p209 = scmp.le.s32.totalorder 1, %s10
    %p210 = scmp.lt.s32.totalorder %s10, 3
    %p211 = pnand %p209, %p210
    %p212 = pneg %p211
    // Predicated region
    $region33: #{_lambda_.30} parent=5 // pred_check
      _
    $region34: #{_lambda_.30} parent=5 // pred_check_branch
      %214 = sbr.rel (%p211) target = $region36
    $region35: #{_lambda_.30} parent=5 // pred_region
      %s215 = ssub.s32 %s10, 1
      %s216 = smul.u32 8, %s19
      %p217 = scmp.lt.s32.totalorder %s216, 15
      %s218 = scalar_select %p217, %s216, 15
      %s219 = smul.addr %s218, 4
      %s220 = scalar_lea.vmem %s0, %s219
      %p221 = pneg %p48
      %p222 = pneg %p45
      %p223 = scmp.lt.s32.totalorder %s20, 0
      %s224 = scalar_select %p223, %s20, 0
      %s225 = smul.addr %s224, 4
      %s226 = scalar_lea.vmem %s1, %s225
      %p227 = pneg %p74
      %p228 = pneg %p71
      %p229 = scmp.lt.s32.totalorder %s20, 0
      %s230 = scalar_select %p229, %s20, 0
      %s231 = scalar_lea.vmem %s2, %s230
      %p232 = pneg %p100
      %p233 = pneg %p97
      %s234 = smul.u32 8, %s19
      %p235 = scmp.lt.s32.totalorder %s234, 15
      %s236 = scalar_select %p235, %s234, 15
      %p237 = scmp.lt.s32.totalorder %s20, 0
      %s238 = scalar_select %p237, %s20, 0
      %s239 = sadd.s32 %s238, %s236
      %s240 = smul.addr %s239, 4
      %s241 = scalar_lea.vmem %s3, %s240
      %p242 = pneg %p128
      %p243 = pneg %p125
      %p244 = pneg %p156
      %p245 = pneg %p153
      %s246 = smul.u32 8, %s19
      %p247 = scmp.lt.s32.totalorder %s246, 15
      %s248 = scalar_select %p247, %s246, 15
      %p249 = scmp.lt.s32.totalorder %s20, 0
      %s250 = scalar_select %p249, %s20, 0
      %s251 = sadd.s32 %s250, %s248
      %s252 = smul.addr %s251, 4
      %s253 = scalar_lea.vmem %s4, %s252
      %s254 = smul.u32 8, %s19
      %p255 = scmp.lt.s32.totalorder %s254, 15
      %s256 = scalar_select %p255, %s254, 15
      %s257 = smul.addr %s256, 4
      %s258 = scalar_lea.vmem %s0, %s257
      %s259 = smul.u32 8, %s19
      %p260 = scmp.lt.s32.totalorder %s20, 0
      %s261 = scalar_select %p260, %s20, 0
      %s262 = smul.addr %s261, 4
      %s263 = scalar_lea.vmem %s1, %s262
      %p264 = scmp.lt.s32.totalorder %s20, 0
      %s265 = scalar_select %p264, %s20, 0
      %s266 = scalar_lea.vmem %s2, %s265
      %s267 = smul.u32 8, %s19
      %p268 = scmp.lt.s32.totalorder %s267, 15
      %s269 = scalar_select %p268, %s267, 15
      %p270 = scmp.lt.s32.totalorder %s20, 0
      %s271 = scalar_select %p270, %s20, 0
      %s272 = sadd.s32 %s271, %s269
      %s273 = smul.addr %s272, 4
      %s274 = scalar_lea.vmem %s3, %s273
      %s275 = smul.u32 8, %s19
      %s276 = smul.u32 8, %s19
      %p277 = scmp.lt.s32.totalorder %s276, 15
      %s278 = scalar_select %p277, %s276, 15
      %p279 = scmp.lt.s32.totalorder %s20, 0
      %s280 = scalar_select %p279, %s20, 0
      %s281 = sadd.s32 %s280, %s278
      %s282 = smul.addr %s281, 4
      %s283 = scalar_lea.vmem %s4, %s282
      %s284 = smul.u32 8, %s19
      %v286 = vld [vmem:[%s258] sm:$0xf]
      %v287 = vld [vmem:[%s258 + $0x4] sm:$0xf]
      %v288 = vld [vmem:[%s258 + $0x8] sm:$0xf]
      %v289 = vld [vmem:[%s258 + $0xc] sm:$0xf]
      %v290 = vld [vmem:[%s258 + $0x10] sm:$0xf]
      %v291 = vld [vmem:[%s258 + $0x14] sm:$0xf]
      %v292 = vld [vmem:[%s258 + $0x18] sm:$0xf]
      %v293 = vld [vmem:[%s258 + $0x1c] sm:$0xf]
      %v294 = vld [vmem:[%s263] sm:$0xf]
      %v295 = vld [vmem:[%s263 + $0x4] sm:$0xf]
      %v296 = vld [vmem:[%s263 + $0x8] sm:$0xf]
      %v297 = vld [vmem:[%s263 + $0xc] sm:$0xf]
      %v298 = vld [vmem:[%s263 + $0x10] sm:$0xf]
      %v299 = vld [vmem:[%s263 + $0x14] sm:$0xf]
      %v300 = vld [vmem:[%s263 + $0x18] sm:$0xf]
      %v301 = vld [vmem:[%s263 + $0x1c] sm:$0xf]
      %v302 = vld [vmem:[%s263 + $0x20] sm:$0xf]
      %v303 = vld [vmem:[%s263 + $0x24] sm:$0xf]
      %v304 = vld [vmem:[%s263 + $0x28] sm:$0xf]
      %v305 = vld [vmem:[%s263 + $0x2c] sm:$0xf]
      %v306 = vld [vmem:[%s263 + $0x30] sm:$0xf]
      %v307 = vld [vmem:[%s263 + $0x34] sm:$0xf]
      %v308 = vld [vmem:[%s263 + $0x38] sm:$0xf]
      %v309 = vld [vmem:[%s263 + $0x3c] sm:$0xf]
      %v310 = vld [vmem:[%s266] sm:$0x1]
      %v312 = vlaneseq
      %v313 = vshrl.u32 %v312, 7
      %v314 = vsub.s32 0, %v313
      %v315 = vrot.slane %v310, %v314
      %v325 = vunpack.c.l.b16 %v286
      %v326 = vunpack.c.l.b16 %v287
      %v327 = vunpack.c.l.b16 %v288
      %v328 = vunpack.c.l.b16 %v289
      %v329 = vunpack.c.l.b16 %v290
      %v330 = vunpack.c.l.b16 %v291
      %v331 = vunpack.c.l.b16 %v292
      %v332 = vunpack.c.l.b16 %v293
      %v333 = vpack.c.b16 %v326, %v325
      %v334 = vpack.c.b16 %v328, %v327
      %v335 = vpack.c.b16 %v330, %v329
      %v336 = vpack.c.b16 %v332, %v331
      %v357 = vunpack.c.l.b16 %v294
      %v358 = vunpack.c.l.b16 %v295
      %v359 = vunpack.c.l.b16 %v296
      %v360 = vunpack.c.l.b16 %v297
      %v361 = vunpack.c.l.b16 %v298
      %v362 = vunpack.c.l.b16 %v299
      %v363 = vunpack.c.l.b16 %v300
      %v364 = vunpack.c.l.b16 %v301
      %v365 = vunpack.c.l.b16 %v302
      %v366 = vunpack.c.l.b16 %v303
      %v367 = vunpack.c.l.b16 %v304
      %v368 = vunpack.c.l.b16 %v305
      %v369 = vunpack.c.l.b16 %v306
      %v370 = vunpack.c.l.b16 %v307
      %v371 = vunpack.c.l.b16 %v308
      %v372 = vunpack.c.l.b16 %v309
      %v373 = vpack.c.b16 %v358, %v357
      %v374 = vpack.c.b16 %v360, %v359
      %v375 = vpack.c.b16 %v362, %v361
      %v376 = vpack.c.b16 %v364, %v363
      %v377 = vpack.c.b16 %v366, %v365
      %v378 = vpack.c.b16 %v368, %v367
      %v379 = vpack.c.b16 %v370, %v369
      %v380 = vpack.c.b16 %v372, %v371
      %389 = vmatprep.subr.bf16.mxu0 0
      %390 = vmatpush1.bf16.msra.mxu0 %v380
      %391 = vmatprep.subr.bf16.mxu0 0
      %392 = vmatpush1.bf16.msra.mxu0 %v379
      %393 = vmatprep.subr.bf16.mxu0 0
      %394 = vmatpush1.bf16.msra.mxu0 %v378
      %395 = vmatprep.subr.bf16.mxu0 0
      %396 = vmatpush1.bf16.msra.mxu0 %v377
      %397 = vmatprep.subr.bf16.mxu0 0
      %398 = vmatpush1.bf16.msra.mxu0 %v376
      %399 = vmatprep.subr.bf16.mxu0 0
      %400 = vmatpush1.bf16.msra.mxu0 %v375
      %401 = vmatprep.subr.bf16.mxu0 0
      %402 = vmatpush1.bf16.msra.mxu0 %v374
      %403 = vmatprep.subr.bf16.mxu0 0
      %404 = vmatpush1.bf16.msra.mxu0 %v373
      %405 = vmatprep.subr.bf16.mxu0 0
      %406 = vmatpush2.bf16.msra.mxu0 0
      %407 = vmatprep.subr.bf16.mxu0 0
      %408 = vmatpush2.bf16.msra.mxu0 0
      %409 = vmatprep.subr.bf16.mxu0 0
      %410 = vmatpush2.bf16.msra.mxu0 0
      %411 = vmatprep.subr.bf16.mxu0 0
      %412 = vmatpush2.bf16.msra.mxu0 0
      %413 = vmatprep.subr.bf16.mxu0 0
      %414 = vmatpush2.bf16.msra.mxu0 0
      %415 = vmatprep.subr.bf16.mxu0 0
      %416 = vmatpush2.bf16.msra.mxu0 0
      %417 = vmatprep.subr.bf16.mxu0 0
      %418 = vmatpush2.bf16.msra.mxu0 0
      %419 = vmatprep.subr.bf16.mxu0 0
      %420 = vmatpush2.bf16.msra.mxu0 0
      %421 = vmatprep.mubr.bf16.mxu0 0
      %422 = vmatmul.mubr.bf16.gmra.mxu0 %v333
      %v423 = vpop.f32.mrf.mxu0
      %v424 = vadd.f32 %v315, %v423
      %v425 = vpop.f32.mrf.mxu0
      %v426 = vpop.f32.mrf.mxu0
      %v427 = vadd.f32 %v315, %v426
      %v428 = vpop.f32.mrf.mxu0
      %429 = vmatprep.mubr.bf16.mxu0 0
      %430 = vmatmul.mubr.bf16.gmra.mxu0 %v334
      %v431 = vpop.f32.mrf.mxu0
      %v432 = vadd.f32 %v315, %v431
      %v433 = vpop.f32.mrf.mxu0
      %v434 = vpop.f32.mrf.mxu0
      %v435 = vadd.f32 %v315, %v434
      %v436 = vpop.f32.mrf.mxu0
      %437 = vmatprep.mubr.bf16.mxu0 0
      %438 = vmatmul.mubr.bf16.gmra.mxu0 %v335
      %v439 = vpop.f32.mrf.mxu0
      %v440 = vadd.f32 %v315, %v439
      %v441 = vpop.f32.mrf.mxu0
      %v442 = vpop.f32.mrf.mxu0
      %v443 = vadd.f32 %v315, %v442
      %v444 = vpop.f32.mrf.mxu0
      %445 = vmatprep.mubr.bf16.mxu0 0
      %446 = vmatmul.mubr.bf16.gmra.mxu0 %v336
      %v447 = vpop.f32.mrf.mxu0
      %v448 = vadd.f32 %v315, %v447
      %v449 = vpop.f32.mrf.mxu0
      %v450 = vpop.f32.mrf.mxu0
      %v451 = vadd.f32 %v315, %v450
      %v452 = vpop.f32.mrf.mxu0
      %453 = vdwg.mxu0
      %v454 = vld [vmem:[%s274] sm:$0xf]
      %v455 = vld [vmem:[%s274 + $0x4] sm:$0xf]
      %v456 = vld [vmem:[%s274 + $0x8] sm:$0xf]
      %v457 = vld [vmem:[%s274 + $0xc] sm:$0xf]
      %v458 = vld [vmem:[%s274 + $0x10] sm:$0xf]
      %v459 = vld [vmem:[%s274 + $0x14] sm:$0xf]
      %v460 = vld [vmem:[%s274 + $0x18] sm:$0xf]
      %v461 = vld [vmem:[%s274 + $0x1c] sm:$0xf]
      %v462 = vunpack.c.l.bf16 %v454
      %v463 = vunpack.c.l.bf16 %v455
      %v464 = vunpack.c.l.bf16 %v456
      %v465 = vunpack.c.l.bf16 %v457
      %v466 = vunpack.c.l.bf16 %v458
      %v467 = vunpack.c.l.bf16 %v459
      %v468 = vunpack.c.l.bf16 %v460
      %v469 = vunpack.c.l.bf16 %v461
      %v470 = vadd.f32 %v424, %v462
      %v471 = vadd.f32 %v427, %v463
      %v472 = vadd.f32 %v432, %v464
      %v473 = vadd.f32 %v435, %v465
      %v474 = vadd.f32 %v440, %v466
      %v475 = vadd.f32 %v443, %v467
      %v476 = vadd.f32 %v448, %v468
      %v477 = vadd.f32 %v451, %v469
      %v478 = vpack.c.bf16 %v471, %v470
      %v479 = vpack.c.bf16 %v473, %v472
      %v480 = vpack.c.bf16 %v475, %v474
      %v481 = vpack.c.bf16 %v477, %v476
      %v486 = vunpack.c.l.b16 %v478
      %v487 = vunpack.c.h.b16 %v478
      %v488 = vunpack.c.l.b16 %v479
      %v489 = vunpack.c.h.b16 %v479
      %v490 = vunpack.c.l.b16 %v480
      %v491 = vunpack.c.h.b16 %v480
      %v492 = vunpack.c.l.b16 %v481
      %v493 = vunpack.c.h.b16 %v481
      %v494 = vpack.c.b16 %v486, %v486
      %v495 = vpack.c.b16 %v487, %v487
      %v496 = vpack.c.b16 %v488, %v488
      %v497 = vpack.c.b16 %v489, %v489
      %v498 = vpack.c.b16 %v490, %v490
      %v499 = vpack.c.b16 %v491, %v491
      %v500 = vpack.c.b16 %v492, %v492
      %v501 = vpack.c.b16 %v493, %v493
      %vm510 = vcmask 257024
      %511 = vst.msk [vmem:[%s283] sm:$0xf] %vm510, %v494
      %512 = vst.msk [vmem:[%s283 + $0x4] sm:$0xf] %vm510, %v495
      %513 = vst.msk [vmem:[%s283 + $0x8] sm:$0xf] %vm510, %v496
      %514 = vst.msk [vmem:[%s283 + $0xc] sm:$0xf] %vm510, %v497
      %515 = vst.msk [vmem:[%s283 + $0x10] sm:$0xf] %vm510, %v498
      %516 = vst.msk [vmem:[%s283 + $0x14] sm:$0xf] %vm510, %v499
      %517 = vst.msk [vmem:[%s283 + $0x18] sm:$0xf] %vm510, %v500
      %518 = vst.msk [vmem:[%s283 + $0x1c] sm:$0xf] %vm510, %v501
      %s519 = smul.u32 8, %s19
      %p520 = scmp.lt.s32.totalorder %s519, 15
      %s521 = scalar_select %p520, %s519, 15
      %p522 = scmp.lt.s32.totalorder %s20, 0
      %s523 = scalar_select %p522, %s20, 0
      %s524 = sadd.s32 %s523, %s521
      %s525 = smul.addr %s524, 4
      %s526 = scalar_lea.vmem %s4, %s525
      // Predicated region
      $region37: #{_lambda_.30} parent=35 // pred_check
        %p527 = pneg %p153
      $region38: #{_lambda_.30} parent=35 // pred_check_branch
        %529 = sbr.rel (%p527) target = $region40
      $region39: #{_lambda_.30} parent=35 // pred_region
        %s530 = smul.u32 8, %s19
      $region40: #{_lambda_.30} parent=35 // pred_fallthru
        _
    $region36: #{_lambda_.30} parent=5 // pred_fallthru
      _
    %p531 = scmp.le.s32.totalorder 2, %s10
    // Predicated region
    $region41: #{_lambda_.30} parent=5 // pred_check
      %p532 = pneg %p531
    $region42: #{_lambda_.30} parent=5 // pred_check_branch
      %534 = sbr.rel (%p532) target = $region44
    $region43: #{_lambda_.30} parent=5 // pred_region
      %s535 = ssub.s32 %s10, 2
      // Predicated region
      $region45: #{_lambda_.30} parent=43 // pred_check
        %p536 = pneg %p159
      $region46: #{_lambda_.30} parent=43 // pred_check_branch
        %538 = sbr.rel (%p536) target = $region48
      $region47: #{_lambda_.30} parent=43 // pred_region
        %s539 = smul.u32 8, %s21
        %p540 = scmp.lt.s32.totalorder %s539, 15
        %s541 = scalar_select %p540, %s539, 15
        %p542 = scmp.lt.s32.totalorder %s22, 0
        %s543 = scalar_select %p542, %s22, 0
        %s544 = sadd.s32 %s543, %s541
        %s545 = smul.addr %s544, 4
        %s546 = scalar_lea.vmem %s4, %s545
      $region48: #{_lambda_.30} parent=43 // pred_fallthru
        _
    $region44: #{_lambda_.30} parent=5 // pred_fallthru
      _
  $region6: #{_lambda_.30} parent=0 // loop_footer
    %s14 = sadd.s32 1, %s10
  $region7: #{_lambda_.30} parent=0 // loop_footer_branch
    %9 = sbr.rel target = $region3
  $region8: #{_lambda_.30} parent=0 // loop_exit
    _

// kernel: _lambda_.29
$region0: #{_lambda_.29}
  #allocation0 [shape = 'u32[]', space=smem, size = 0x4, offset = 0x4, fixed_abs, tag = 'smem constant byte address 0x4 - core index']
  #allocation1 [shape = 'u32[144,128]{1,0:T(1,128)}', space=vmem, size = 0x12000, scoped, tag = 'internal scratch']
  %s0 = inlined_call_operand.vmem [shape: bf16[128,32], index: 0, kind: input, shape index: {}]
  %s1 = inlined_call_operand.vmem [shape: f32[1,32], index: 1, kind: input, shape index: {}]
  %s2 = inlined_call_operand.vmem [shape: f32[1,32], index: 2, kind: input, shape index: {}]
  %s3 = inlined_call_operand.vmem [shape: bf16[32,128], index: 3, kind: input, shape index: {}]
  %s4 = inlined_call_operand.vmem [shape: f32[1,128], index: 4, kind: input, shape index: {}]
  %s5 = inlined_call_operand.vmem [shape: bf16[128,128], index: 5, kind: output, shape index: {}]
  %s6 = sld [smem:[#allocation0]]
  $region53: #{_lambda_.29} parent=0
    _
  %s8 = ssub.s32 1, %s6
  %s9 = scalar_select 0, %s8, %s6
  loop: start=0, step=1, limit=4
  $region2: #{_lambda_.29} parent=0 // loop_pre_header
    _
  $region3: #{_lambda_.29} parent=0 // loop_header
    %s11 = sphi 0, %s15
    %p12 = scmp.ge.s32.totalorder %s11, 4
    %s18 = sphi 0, %s30
    %s19 = sphi 0, %s26
    %s20 = sphi 0, %s18
    %s21 = sphi 0, %s19
    %s22 = sphi 0, %s20
    %s23 = sphi 0, %s21
    %s33 = sphi 0, %s35
    %s36 = sphi 0, %s33
    %s37 = sphi 0, %s36
    %s53 = sphi 0, %s37
    %s57 = sphi 0, %s57
    %s59 = sphi 0, %s57
    %s60 = sphi 0, %s59
    %s74 = sphi 0, %s60
    %s78 = sphi 0, %s78
    %s80 = sphi 0, %s78
    %s81 = sphi 0, %s80
    %s95 = sphi 0, %s81
    %s101 = sphi 0, %s103
    %s104 = sphi 0, %s101
    %s105 = sphi 0, %s104
    %s121 = sphi 0, %s105
    %s127 = sphi 0, %s129
    %s130 = sphi 0, %s127
    %s131 = sphi 0, %s130
    %s147 = sphi 0, %s131
    %s155 = sphi 0, %s157
    %s158 = sphi 0, %s155
    %s159 = sphi 0, %s158
    %s175 = sphi 0, %s159
  $region4: #{_lambda_.29} parent=0 // loop_header_branch
    %14 = sbr.rel (%p12) target = $region8
  $region5: #{_lambda_.29} parent=0 // loop_body
    %s16 = ssub.s32 %s11, 1
    %s17 = ssub.s32 %s11, 2
    %s24 = sadd.s32 1, %s19
    %p25 = scmp.ge.s32.totalorder %s24, 1
    %s26 = scalar_select %p25, 0, %s24
    %s27 = sadd.s32 1, %s18
    %s28 = scalar_select %p25, %s27, %s18
    %p29 = scmp.ge.s32.totalorder %s28, 2
    %s30 = scalar_select %p29, 0, %s28
    %s31 = ssub.s32 %s18, %s30
    %p32 = scmp.eq.s32.totalorder %s31, 0
    %s34 = sadd.s32 %s33, 1
    %s35 = scalar_select %p32, %s33, %s34
    %p38 = pneg %p32
    %p39 = scmp.eq.s32.totalorder %s11, 1
    %p40 = por %p38, %p39
    %p41 = scmp.ne.s32.totalorder %s33, %s36
    %p42 = scmp.eq.s32.totalorder %s11, 0
    %p43 = por %p41, %p42
    %p44 = scmp.ne.s32.totalorder %s33, %s36
    %p45 = scmp.eq.s32.totalorder %s16, 1
    %p46 = por %p44, %p45
    %p47 = scmp.ne.s32.totalorder %s36, %s37
    %p48 = scmp.eq.s32.totalorder %s16, 0
    %p49 = por %p47, %p48
    %p50 = scmp.ne.s32.totalorder %s36, %s37
    %p51 = scmp.eq.s32.totalorder %s17, 1
    %p52 = por %p50, %p51
    %p54 = scmp.ne.s32.totalorder %s37, %s53
    %p55 = scmp.eq.s32.totalorder %s17, 0
    %p56 = por %p54, %p55
    %s58 = sadd.s32 %s57, 1
    %p61 = scmp.eq.s32.totalorder %s11, 1
    %p62 = scmp.ne.s32.totalorder %s57, %s59
    %p63 = scmp.eq.s32.totalorder %s11, 0
    %p64 = por %p62, %p63
    %p65 = scmp.ne.s32.totalorder %s57, %s59
    %p66 = scmp.eq.s32.totalorder %s16, 1
    %p67 = por %p65, %p66
    %p68 = scmp.ne.s32.totalorder %s59, %s60
    %p69 = scmp.eq.s32.totalorder %s16, 0
    %p70 = por %p68, %p69
    %p71 = scmp.ne.s32.totalorder %s59, %s60
    %p72 = scmp.eq.s32.totalorder %s17, 1
    %p73 = por %p71, %p72
    %p75 = scmp.ne.s32.totalorder %s60, %s74
    %p76 = scmp.eq.s32.totalorder %s17, 0
    %p77 = por %p75, %p76
    %s79 = sadd.s32 %s78, 1
    %p82 = scmp.eq.s32.totalorder %s11, 1
    %p83 = scmp.ne.s32.totalorder %s78, %s80
    %p84 = scmp.eq.s32.totalorder %s11, 0
    %p85 = por %p83, %p84
    %p86 = scmp.ne.s32.totalorder %s78, %s80
    %p87 = scmp.eq.s32.totalorder %s16, 1
    %p88 = por %p86, %p87
    %p89 = scmp.ne.s32.totalorder %s80, %s81
    %p90 = scmp.eq.s32.totalorder %s16, 0
    %p91 = por %p89, %p90
    %p92 = scmp.ne.s32.totalorder %s80, %s81
    %p93 = scmp.eq.s32.totalorder %s17, 1
    %p94 = por %p92, %p93
    %p96 = scmp.ne.s32.totalorder %s81, %s95
    %p97 = scmp.eq.s32.totalorder %s17, 0
    %p98 = por %p96, %p97
    %s99 = ssub.s32 %s19, %s26
    %p100 = scmp.eq.s32.totalorder %s99, 0
    %s102 = sadd.s32 %s101, 1
    %s103 = scalar_select %p100, %s101, %s102
    %p106 = pneg %p100
    %p107 = scmp.eq.s32.totalorder %s11, 1
    %p108 = por %p106, %p107
    %p109 = scmp.ne.s32.totalorder %s101, %s104
    %p110 = scmp.eq.s32.totalorder %s11, 0
    %p111 = por %p109, %p110
    %p112 = scmp.ne.s32.totalorder %s101, %s104
    %p113 = scmp.eq.s32.totalorder %s16, 1
    %p114 = por %p112, %p113
    %p115 = scmp.ne.s32.totalorder %s104, %s105
    %p116 = scmp.eq.s32.totalorder %s16, 0
    %p117 = por %p115, %p116
    %p118 = scmp.ne.s32.totalorder %s104, %s105
    %p119 = scmp.eq.s32.totalorder %s17, 1
    %p120 = por %p118, %p119
    %p122 = scmp.ne.s32.totalorder %s105, %s121
    %p123 = scmp.eq.s32.totalorder %s17, 0
    %p124 = por %p122, %p123
    %s125 = ssub.s32 %s19, %s26
    %p126 = scmp.eq.s32.totalorder %s125, 0
    %s128 = sadd.s32 %s127, 1
    %s129 = scalar_select %p126, %s127, %s128
    %p132 = pneg %p126
    %p133 = scmp.eq.s32.totalorder %s11, 1
    %p134 = por %p132, %p133
    %p135 = scmp.ne.s32.totalorder %s127, %s130
    %p136 = scmp.eq.s32.totalorder %s11, 0
    %p137 = por %p135, %p136
    %p138 = scmp.ne.s32.totalorder %s127, %s130
    %p139 = scmp.eq.s32.totalorder %s16, 1
    %p140 = por %p138, %p139
    %p141 = scmp.ne.s32.totalorder %s130, %s131
    %p142 = scmp.eq.s32.totalorder %s16, 0
    %p143 = por %p141, %p142
    %p144 = scmp.ne.s32.totalorder %s130, %s131
    %p145 = scmp.eq.s32.totalorder %s17, 1
    %p146 = por %p144, %p145
    %p148 = scmp.ne.s32.totalorder %s131, %s147
    %p149 = scmp.eq.s32.totalorder %s17, 0
    %p150 = por %p148, %p149
    %s151 = ssub.s32 %s18, %s30
    %s152 = ssub.s32 %s19, %s26
    %s153 = sor.u32 %s151, %s152
    %p154 = scmp.eq.s32.totalorder %s153, 0
    %s156 = sadd.s32 %s155, 1
    %s157 = scalar_select %p154, %s155, %s156
    %p160 = pneg %p154
    %p161 = scmp.eq.s32.totalorder %s11, 1
    %p162 = por %p160, %p161
    %p163 = scmp.ne.s32.totalorder %s155, %s158
    %p164 = scmp.eq.s32.totalorder %s11, 0
    %p165 = por %p163, %p164
    %p166 = scmp.ne.s32.totalorder %s155, %s158
    %p167 = scmp.eq.s32.totalorder %s16, 1
    %p168 = por %p166, %p167
    %p169 = scmp.ne.s32.totalorder %s158, %s159
    %p170 = scmp.eq.s32.totalorder %s16, 0
    %p171 = por %p169, %p170
    %p172 = scmp.ne.s32.totalorder %s158, %s159
    %p173 = scmp.eq.s32.totalorder %s17, 1
    %p174 = por %p172, %p173
    %p176 = scmp.ne.s32.totalorder %s159, %s175
    %p177 = scmp.eq.s32.totalorder %s17, 0
    %p178 = por %p176, %p177
    %p179 = scmp.le.s32.totalorder 1, %s11
    %p180 = scmp.lt.s32.totalorder %s11, 3
    %p181 = pnand %p179, %p180
    %p182 = pneg %p181
    // Predicated region
    $region9: #{_lambda_.29} parent=5 // pred_check
      _
    $region10: #{_lambda_.29} parent=5 // pred_check_branch
      %184 = sbr.rel (%p181) target = $region12
    $region11: #{_lambda_.29} parent=5 // pred_region
      %s185 = ssub.s32 %s11, 1
      // Predicated region
      $region13: #{_lambda_.29} parent=11 // pred_check
        %p186 = pneg %p70
      $region14: #{_lambda_.29} parent=11 // pred_check_branch
        %188 = sbr.rel (%p186) target = $region16
      $region15: #{_lambda_.29} parent=11 // pred_region
        _
      $region16: #{_lambda_.29} parent=11 // pred_fallthru
        _
      // Predicated region
      $region17: #{_lambda_.29} parent=11 // pred_check
        %p189 = pneg %p91
      $region18: #{_lambda_.29} parent=11 // pred_check_branch
        %191 = sbr.rel (%p189) target = $region20
      $region19: #{_lambda_.29} parent=11 // pred_region
        _
      $region20: #{_lambda_.29} parent=11 // pred_fallthru
        _
      // Predicated region
      $region21: #{_lambda_.29} parent=11 // pred_check
        %p192 = pneg %p117
      $region22: #{_lambda_.29} parent=11 // pred_check_branch
        %194 = sbr.rel (%p192) target = $region24
      $region23: #{_lambda_.29} parent=11 // pred_region
        %p195 = scmp.lt.s32.totalorder %s21, 0
        %s196 = scalar_select %p195, %s21, 0
        %s197 = smul.addr %s196, 4
        %s198 = scalar_lea.vmem %s3, %s197
      $region24: #{_lambda_.29} parent=11 // pred_fallthru
        _
      // Predicated region
      $region25: #{_lambda_.29} parent=11 // pred_check
        %p199 = pneg %p143
      $region26: #{_lambda_.29} parent=11 // pred_check_branch
        %201 = sbr.rel (%p199) target = $region28
      $region27: #{_lambda_.29} parent=11 // pred_region
        %p202 = scmp.lt.s32.totalorder %s21, 0
        %s203 = scalar_select %p202, %s21, 0
        %s204 = scalar_lea.vmem %s4, %s203
      $region28: #{_lambda_.29} parent=11 // pred_fallthru
        _
    $region12: #{_lambda_.29} parent=5 // pred_fallthru
      _
    %p205 = scmp.lt.s32.totalorder %s11, 2
    // Predicated region
    $region29: #{_lambda_.29} parent=5 // pred_check
      %p206 = pneg %p205
    $region30: #{_lambda_.29} parent=5 // pred_check_branch
      %208 = sbr.rel (%p206) target = $region32
    $region31: #{_lambda_.29} parent=5 // pred_region
      // Predicated region
      $region33: #{_lambda_.29} parent=31 // pred_check
        %p209 = pneg %p43
      $region34: #{_lambda_.29} parent=31 // pred_check_branch
        %211 = sbr.rel (%p209) target = $region36
      $region35: #{_lambda_.29} parent=31 // pred_region
        %s212 = smul.u32 8, %s18
        %p213 = scmp.lt.s32.totalorder %s212, 15
        %s214 = scalar_select %p213, %s212, 15
        %s215 = smul.addr %s214, 4
        %s216 = scalar_lea.vmem %s0, %s215
        %s217 = smul.u32 8, %s18
      $region36: #{_lambda_.29} parent=31 // pred_fallthru
        _
    $region32: #{_lambda_.29} parent=5 // pred_fallthru
      _
    %p218 = scmp.le.s32.totalorder 1, %s11
    %p219 = scmp.lt.s32.totalorder %s11, 3
    %p220 = pnand %p218, %p219
    %p221 = pneg %p220
    // Predicated region
    $region37: #{_lambda_.29} parent=5 // pred_check
      _
    $region38: #{_lambda_.29} parent=5 // pred_check_branch
      %223 = sbr.rel (%p220) target = $region40
    $region39: #{_lambda_.29} parent=5 // pred_region
      %s224 = ssub.s32 %s11, 1
      %s225 = smul.u32 8, %s20
      %p226 = scmp.lt.s32.totalorder %s225, 15
      %s227 = scalar_select %p226, %s225, 15
      %s228 = smul.addr %s227, 4
      %s229 = scalar_lea.vmem %s0, %s228
      %p230 = pneg %p49
      %p231 = pneg %p46
      %p232 = pneg %p70
      %p233 = pneg %p67
      %p234 = pneg %p91
      %p235 = pneg %p88
      %p236 = scmp.lt.s32.totalorder %s21, 0
      %s237 = scalar_select %p236, %s21, 0
      %s238 = smul.addr %s237, 4
      %s239 = scalar_lea.vmem %s3, %s238
      %p240 = pneg %p117
      %p241 = pneg %p114
      %p242 = scmp.lt.s32.totalorder %s21, 0
      %s243 = scalar_select %p242, %s21, 0
      %s244 = scalar_lea.vmem %s4, %s243
      %p245 = pneg %p143
      %p246 = pneg %p140
      %p247 = pneg %p171
      %p248 = pneg %p168
      %s249 = smul.u32 8, %s20
      %p250 = scmp.lt.s32.totalorder %s249, 15
      %s251 = scalar_select %p250, %s249, 15
      %p252 = scmp.lt.s32.totalorder %s21, 0
      %s253 = scalar_select %p252, %s21, 0
      %s254 = sadd.s32 %s253, %s251
      %s255 = smul.addr %s254, 4
      %s256 = scalar_lea.vmem %s5, %s255
      %s257 = smul.u32 8, %s20
      %p258 = scmp.lt.s32.totalorder %s257, 15
      %s259 = scalar_select %p258, %s257, 15
      %s260 = smul.addr %s259, 4
      %s261 = scalar_lea.vmem %s0, %s260
      %s262 = smul.u32 8, %s20
      %p263 = scmp.lt.s32.totalorder %s21, 0
      %s264 = scalar_select %p263, %s21, 0
      %s265 = smul.addr %s264, 4
      %s266 = scalar_lea.vmem %s3, %s265
      %p267 = scmp.lt.s32.totalorder %s21, 0
      %s268 = scalar_select %p267, %s21, 0
      %s269 = scalar_lea.vmem %s4, %s268
      %s270 = smul.u32 8, %s20
      %p271 = scmp.lt.s32.totalorder %s270, 15
      %s272 = scalar_select %p271, %s270, 15
      %p273 = scmp.lt.s32.totalorder %s21, 0
      %s274 = scalar_select %p273, %s21, 0
      %s275 = sadd.s32 %s274, %s272
      %s276 = smul.addr %s275, 4
      %s277 = scalar_lea.vmem %s5, %s276
      %s278 = smul.u32 8, %s20
      %v280 = vld [vmem:[%s261] sm:$0xf]
      %v281 = vld [vmem:[%s261 + $0x4] sm:$0xf]
      %v282 = vld [vmem:[%s261 + $0x8] sm:$0xf]
      %v283 = vld [vmem:[%s261 + $0xc] sm:$0xf]
      %v284 = vld [vmem:[%s261 + $0x10] sm:$0xf]
      %v285 = vld [vmem:[%s261 + $0x14] sm:$0xf]
      %v286 = vld [vmem:[%s261 + $0x18] sm:$0xf]
      %v287 = vld [vmem:[%s261 + $0x1c] sm:$0xf]
      %v288 = vunpack.c.l.bf16 %v280
      %v289 = vunpack.c.l.bf16 %v281
      %v290 = vunpack.c.l.bf16 %v282
      %v291 = vunpack.c.l.bf16 %v283
      %v292 = vunpack.c.l.bf16 %v284
      %v293 = vunpack.c.l.bf16 %v285
      %v294 = vunpack.c.l.bf16 %v286
      %v295 = vunpack.c.l.bf16 %v287
      %vm296 = vcmask 261120
      %v297 = vsel %vm296, %v288, 0.0
      %298 = vadd.xlane.f32.xlu0 %v297
      %v299 = vpop.xlane.xlu0 %298
      %v300 = vsel %vm296, %v289, 0.0
      %301 = vadd.xlane.f32.xlu0 %v300
      %v302 = vpop.xlane.xlu0 %301
      %v303 = vsel %vm296, %v290, 0.0
      %304 = vadd.xlane.f32.xlu0 %v303
      %v305 = vpop.xlane.xlu0 %304
      %v306 = vsel %vm296, %v291, 0.0
      %307 = vadd.xlane.f32.xlu0 %v306
      %v308 = vpop.xlane.xlu0 %307
      %v309 = vsel %vm296, %v292, 0.0
      %310 = vadd.xlane.f32.xlu0 %v309
      %v311 = vpop.xlane.xlu0 %310
      %v312 = vsel %vm296, %v293, 0.0
      %313 = vadd.xlane.f32.xlu0 %v312
      %v314 = vpop.xlane.xlu0 %313
      %v315 = vsel %vm296, %v294, 0.0
      %316 = vadd.xlane.f32.xlu0 %v315
      %v317 = vpop.xlane.xlu0 %316
      %v318 = vsel %vm296, %v295, 0.0
      %319 = vadd.xlane.f32.xlu0 %v318
      %v320 = vpop.xlane.xlu0 %319
      %v321 = vrcp.pop 32.0
      %v322 = vmul.f32 %v299, %v321
      %v323 = vmul.f32 %v302, %v321
      %v324 = vmul.f32 %v305, %v321
      %v325 = vmul.f32 %v308, %v321
      %v326 = vmul.f32 %v311, %v321
      %v327 = vmul.f32 %v314, %v321
      %v328 = vmul.f32 %v317, %v321
      %v329 = vmul.f32 %v320, %v321
      %v330 = vsub.f32 %v288, %v322
      %v331 = vsub.f32 %v289, %v323
      %v332 = vsub.f32 %v290, %v324
      %v333 = vsub.f32 %v291, %v325
      %v334 = vsub.f32 %v292, %v326
      %v335 = vsub.f32 %v293, %v327
      %v336 = vsub.f32 %v294, %v328
      %v337 = vsub.f32 %v295, %v329
      %v338 = vmul.f32 %v330, %v330
      %v339 = vmul.f32 %v331, %v331
      %v340 = vmul.f32 %v332, %v332
      %v341 = vmul.f32 %v333, %v333
      %v342 = vmul.f32 %v334, %v334
      %v343 = vmul.f32 %v335, %v335
      %v344 = vmul.f32 %v336, %v336
      %v345 = vmul.f32 %v337, %v337
      %v346 = vsel %vm296, %v338, 0.0
      %347 = vadd.xlane.f32.xlu0 %v346
      %v348 = vpop.xlane.xlu0 %347
      %v349 = vsel %vm296, %v339, 0.0
      %350 = vadd.xlane.f32.xlu0 %v349
      %v351 = vpop.xlane.xlu0 %350
      %v352 = vsel %vm296, %v340, 0.0
      %353 = vadd.xlane.f32.xlu0 %v352
      %v354 = vpop.xlane.xlu0 %353
      %v355 = vsel %vm296, %v341, 0.0
      %356 = vadd.xlane.f32.xlu0 %v355
      %v357 = vpop.xlane.xlu0 %356
      %v358 = vsel %vm296, %v342, 0.0
      %359 = vadd.xlane.f32.xlu0 %v358
      %v360 = vpop.xlane.xlu0 %359
      %v361 = vsel %vm296, %v343, 0.0
      %362 = vadd.xlane.f32.xlu0 %v361
      %v363 = vpop.xlane.xlu0 %362
      %v364 = vsel %vm296, %v344, 0.0
      %365 = vadd.xlane.f32.xlu0 %v364
      %v366 = vpop.xlane.xlu0 %365
      %v367 = vsel %vm296, %v345, 0.0
      %368 = vadd.xlane.f32.xlu0 %v367
      %v369 = vpop.xlane.xlu0 %368
      %v370 = vmul.f32 %v348, %v321
      %v371 = vmul.f32 %v351, %v321
      %v372 = vmul.f32 %v354, %v321
      %v373 = vmul.f32 %v357, %v321
      %v374 = vmul.f32 %v360, %v321
      %v375 = vmul.f32 %v363, %v321
      %v376 = vmul.f32 %v366, %v321
      %v377 = vmul.f32 %v369, %v321
      %v378 = vadd.f32 %v370, 1e-05
      %v379 = vadd.f32 %v371, 1e-05
      %v380 = vadd.f32 %v372, 1e-05
      %v381 = vadd.f32 %v373, 1e-05
      %v382 = vadd.f32 %v374, 1e-05
      %v383 = vadd.f32 %v375, 1e-05
      %v384 = vadd.f32 %v376, 1e-05
      %v385 = vadd.f32 %v377, 1e-05
      %v386 = vrsqrt.pop %v378
      %v387 = vrsqrt.pop %v379
      %v388 = vrsqrt.pop %v380
      %v389 = vrsqrt.pop %v381
      %v390 = vrsqrt.pop %v382
      %v391 = vrsqrt.pop %v383
      %v392 = vrsqrt.pop %v384
      %v393 = vrsqrt.pop %v385
      %v394 = vmul.f32 %v330, %v386
      %v395 = vmul.f32 %v331, %v387
      %v396 = vmul.f32 %v332, %v388
      %v397 = vmul.f32 %v333, %v389
      %v398 = vmul.f32 %v334, %v390
      %v399 = vmul.f32 %v335, %v391
      %v400 = vmul.f32 %v336, %v392
      %v401 = vmul.f32 %v337, %v393
      %v402 = vld [vmem:[%s1] sm:$0x1]
      %v404 = vlaneseq
      %v405 = vshrl.u32 %v404, 7
      %v406 = vsub.s32 0, %v405
      %v407 = vrot.slane %v402, %v406
      %v409 = vmul.f32 %v394, %v407
      %v410 = vmul.f32 %v395, %v407
      %v411 = vmul.f32 %v396, %v407
      %v412 = vmul.f32 %v397, %v407
      %v413 = vmul.f32 %v398, %v407
      %v414 = vmul.f32 %v399, %v407
      %v415 = vmul.f32 %v400, %v407
      %v416 = vmul.f32 %v401, %v407
      %v417 = vld [vmem:[%s2] sm:$0x1]
      %v419 = vlaneseq
      %v420 = vshrl.u32 %v419, 7
      %v421 = vsub.s32 0, %v420
      %v422 = vrot.slane %v417, %v421
      %v424 = vadd.f32 %v409, %v422
      %v425 = vadd.f32 %v410, %v422
      %v426 = vadd.f32 %v411, %v422
      %v427 = vadd.f32 %v412, %v422
      %v428 = vadd.f32 %v413, %v422
      %v429 = vadd.f32 %v414, %v422
      %v430 = vadd.f32 %v415, %v422
      %v431 = vadd.f32 %v416, %v422
      %v432 = vpack.c.bf16 %v425, %v424
      %v433 = vpack.c.bf16 %v427, %v426
      %v434 = vpack.c.bf16 %v429, %v428
      %v435 = vpack.c.bf16 %v431, %v430
      %v436 = vld [vmem:[%s266] sm:$0xf]
      %v437 = vld [vmem:[%s266 + $0x4] sm:$0xf]
      %v438 = vld [vmem:[%s266 + $0x8] sm:$0xf]
      %v439 = vld [vmem:[%s266 + $0xc] sm:$0xf]
      %v440 = vld [vmem:[%s269] sm:$0x1]
      %v442 = vlaneseq
      %v443 = vshrl.u32 %v442, 7
      %v444 = vsub.s32 0, %v443
      %v445 = vrot.slane %v440, %v444
      %v451 = vunpack.c.l.b16 %v436
      %v452 = vunpack.c.l.b16 %v437
      %v453 = vunpack.c.l.b16 %v438
      %v454 = vunpack.c.l.b16 %v439
      %v455 = vpack.c.b16 %v452, %v451
      %v456 = vpack.c.b16 %v454, %v453
      %v460 = vsel %vm296, %v432, 0
      %v463 = vsel %vm296, %v433, 0
      %v466 = vsel %vm296, %v434, 0
      %v469 = vsel %vm296, %v435, 0
      %471 = vmatprep.subr.bf16.mxu0 0
      %472 = vmatpush1.bf16.msra.mxu0 0
      %473 = vmatprep.subr.bf16.mxu0 0
      %474 = vmatpush1.bf16.msra.mxu0 0
      %475 = vmatprep.subr.bf16.mxu0 0
      %476 = vmatpush1.bf16.msra.mxu0 0
      %477 = vmatprep.subr.bf16.mxu0 0
      %478 = vmatpush1.bf16.msra.mxu0 0
      %479 = vmatprep.subr.bf16.mxu0 0
      %480 = vmatpush1.bf16.msra.mxu0 0
      %481 = vmatprep.subr.bf16.mxu0 0
      %482 = vmatpush1.bf16.msra.mxu0 0
      %483 = vmatprep.subr.bf16.mxu0 0
      %484 = vmatpush1.bf16.msra.mxu0 %v456
      %485 = vmatprep.subr.bf16.mxu0 0
      %486 = vmatpush1.bf16.msra.mxu0 %v455
      %487 = vmatprep.subr.bf16.mxu0 0
      %488 = vmatpush2.bf16.msra.mxu0 0
      %489 = vmatprep.subr.bf16.mxu0 0
      %490 = vmatpush2.bf16.msra.mxu0 0
      %491 = vmatprep.subr.bf16.mxu0 0
      %492 = vmatpush2.bf16.msra.mxu0 0
      %493 = vmatprep.subr.bf16.mxu0 0
      %494 = vmatpush2.bf16.msra.mxu0 0
      %495 = vmatprep.subr.bf16.mxu0 0
      %496 = vmatpush2.bf16.msra.mxu0 0
      %497 = vmatprep.subr.bf16.mxu0 0
      %498 = vmatpush2.bf16.msra.mxu0 0
      %499 = vmatprep.subr.bf16.mxu0 0
      %500 = vmatpush2.bf16.msra.mxu0 0
      %501 = vmatprep.subr.bf16.mxu0 0
      %502 = vmatpush2.bf16.msra.mxu0 0
      %503 = vmatprep.mubr.bf16.mxu0 0
      %504 = vmatmul.mubr.bf16.gmra.mxu0 %v460
      %v505 = vpop.f32.mrf.mxu0
      %v506 = vadd.f32 %v445, %v505
      %v507 = vpop.f32.mrf.mxu0
      %v508 = vpop.f32.mrf.mxu0
      %v509 = vadd.f32 %v445, %v508
      %v510 = vpop.f32.mrf.mxu0
      %511 = vmatprep.mubr.bf16.mxu0 0
      %512 = vmatmul.mubr.bf16.gmra.mxu0 %v463
      %v513 = vpop.f32.mrf.mxu0
      %v514 = vadd.f32 %v445, %v513
      %v515 = vpop.f32.mrf.mxu0
      %v516 = vpop.f32.mrf.mxu0
      %v517 = vadd.f32 %v445, %v516
      %v518 = vpop.f32.mrf.mxu0
      %519 = vmatprep.mubr.bf16.mxu0 0
      %520 = vmatmul.mubr.bf16.gmra.mxu0 %v466
      %v521 = vpop.f32.mrf.mxu0
      %v522 = vadd.f32 %v445, %v521
      %v523 = vpop.f32.mrf.mxu0
      %v524 = vpop.f32.mrf.mxu0
      %v525 = vadd.f32 %v445, %v524
      %v526 = vpop.f32.mrf.mxu0
      %527 = vmatprep.mubr.bf16.mxu0 0
      %528 = vmatmul.mubr.bf16.gmra.mxu0 %v469
      %v529 = vpop.f32.mrf.mxu0
      %v530 = vadd.f32 %v445, %v529
      %v531 = vpop.f32.mrf.mxu0
      %v532 = vpop.f32.mrf.mxu0
      %v533 = vadd.f32 %v445, %v532
      %v534 = vpop.f32.mrf.mxu0
      %535 = vdwg.mxu0
      %v536 = vmul.f32 %v506, 0.5
      %v537 = vmul.f32 %v509, 0.5
      %v538 = vmul.f32 %v514, 0.5
      %v539 = vmul.f32 %v517, 0.5
      %v540 = vmul.f32 %v522, 0.5
      %v541 = vmul.f32 %v525, 0.5
      %v542 = vmul.f32 %v530, 0.5
      %v543 = vmul.f32 %v533, 0.5
      %v544 = vmul.f32 %v506, 0.044715
      %v545 = vmul.f32 %v509, 0.044715
      %v546 = vmul.f32 %v514, 0.044715
      %v547 = vmul.f32 %v517, 0.044715
      %v548 = vmul.f32 %v522, 0.044715
      %v549 = vmul.f32 %v525, 0.044715
      %v550 = vmul.f32 %v530, 0.044715
      %v551 = vmul.f32 %v533, 0.044715
      %v552 = vmul.f32 %v544, %v506
      %v553 = vmul.f32 %v545, %v509
      %v554 = vmul.f32 %v546, %v514
      %v555 = vmul.f32 %v547, %v517
      %v556 = vmul.f32 %v548, %v522
      %v557 = vmul.f32 %v549, %v525
      %v558 = vmul.f32 %v550, %v530
      %v559 = vmul.f32 %v551, %v533
      %v560 = vmul.f32 %v552, %v506
      %v561 = vmul.f32 %v553, %v509
      %v562 = vmul.f32 %v554, %v514
      %v563 = vmul.f32 %v555, %v517
      %v564 = vmul.f32 %v556, %v522
      %v565 = vmul.f32 %v557, %v525
      %v566 = vmul.f32 %v558, %v530
      %v567 = vmul.f32 %v559, %v533
      %v568 = vadd.f32 %v506, %v560
      %v569 = vadd.f32 %v509, %v561
      %v570 = vadd.f32 %v514, %v562
      %v571 = vadd.f32 %v517, %v563
      %v572 = vadd.f32 %v522, %v564
      %v573 = vadd.f32 %v525, %v565
      %v574 = vadd.f32 %v530, %v566
      %v575 = vadd.f32 %v533, %v567
      %v576 = vmul.f32 %v568, 0.7978846
      %v577 = vmul.f32 %v569, 0.7978846
      %v578 = vmul.f32 %v570, 0.7978846
      %v579 = vmul.f32 %v571, 0.7978846
      %v580 = vmul.f32 %v572, 0.7978846
      %v581 = vmul.f32 %v573, 0.7978846
      %v582 = vmul.f32 %v574, 0.7978846
      %v583 = vmul.f32 %v575, 0.7978846
      %v584 = vtanh.pop %v576
      %v585 = vtanh.pop %v577
      %v586 = vtanh.pop %v578
      %v587 = vtanh.pop %v579
      %v588 = vtanh.pop %v580
      %v589 = vtanh.pop %v581
      %v590 = vtanh.pop %v582
      %v591 = vtanh.pop %v583
      %v592 = vadd.f32 %v584, 1.0
      %v593 = vadd.f32 %v585, 1.0
      %v594 = vadd.f32 %v586, 1.0
      %v595 = vadd.f32 %v587, 1.0
      %v596 = vadd.f32 %v588, 1.0
      %v597 = vadd.f32 %v589, 1.0
      %v598 = vadd.f32 %v590, 1.0
      %v599 = vadd.f32 %v591, 1.0
      %v600 = vmul.f32 %v536, %v592
      %v601 = vmul.f32 %v537, %v593
      %v602 = vmul.f32 %v538, %v594
      %v603 = vmul.f32 %v539, %v595
      %v604 = vmul.f32 %v540, %v596
      %v605 = vmul.f32 %v541, %v597
      %v606 = vmul.f32 %v542, %v598
      %v607 = vmul.f32 %v543, %v599
      %v608 = vpack.c.bf16 %v601, %v600
      %v609 = vpack.c.bf16 %v603, %v602
      %v610 = vpack.c.bf16 %v605, %v604
      %v611 = vpack.c.bf16 %v607, %v606
      %v616 = vunpack.c.l.b16 %v608
      %v617 = vunpack.c.h.b16 %v608
      %v618 = vunpack.c.l.b16 %v609
      %v619 = vunpack.c.h.b16 %v609
      %v620 = vunpack.c.l.b16 %v610
      %v621 = vunpack.c.h.b16 %v610
      %v622 = vunpack.c.l.b16 %v611
      %v623 = vunpack.c.h.b16 %v611
      %v624 = vpack.c.b16 %v616, %v616
      %v625 = vpack.c.b16 %v617, %v617
      %v626 = vpack.c.b16 %v618, %v618
      %v627 = vpack.c.b16 %v619, %v619
      %v628 = vpack.c.b16 %v620, %v620
      %v629 = vpack.c.b16 %v621, %v621
      %v630 = vpack.c.b16 %v622, %v622
      %v631 = vpack.c.b16 %v623, %v623
      %640 = vst [vmem:[%s277] sm:$0xf] %v624
      %641 = vst [vmem:[%s277 + $0x4] sm:$0xf] %v625
      %642 = vst [vmem:[%s277 + $0x8] sm:$0xf] %v626
      %643 = vst [vmem:[%s277 + $0xc] sm:$0xf] %v627
      %644 = vst [vmem:[%s277 + $0x10] sm:$0xf] %v628
      %645 = vst [vmem:[%s277 + $0x14] sm:$0xf] %v629
      %646 = vst [vmem:[%s277 + $0x18] sm:$0xf] %v630
      %647 = vst [vmem:[%s277 + $0x1c] sm:$0xf] %v631
      %s648 = smul.u32 8, %s20
      %p649 = scmp.lt.s32.totalorder %s648, 15
      %s650 = scalar_select %p649, %s648, 15
      %p651 = scmp.lt.s32.totalorder %s21, 0
      %s652 = scalar_select %p651, %s21, 0
      %s653 = sadd.s32 %s652, %s650
      %s654 = smul.addr %s653, 4
      %s655 = scalar_lea.vmem %s5, %s654
      // Predicated region
      $region41: #{_lambda_.29} parent=39 // pred_check
        %p656 = pneg %p168
      $region42: #{_lambda_.29} parent=39 // pred_check_branch
        %658 = sbr.rel (%p656) target = $region44
      $region43: #{_lambda_.29} parent=39 // pred_region
        %s659 = smul.u32 8, %s20
      $region44: #{_lambda_.29} parent=39 // pred_fallthru
        _
    $region40: #{_lambda_.29} parent=5 // pred_fallthru
      _
    %p660 = scmp.le.s32.totalorder 2, %s11
    // Predicated region
    $region45: #{_lambda_.29} parent=5 // pred_check
      %p661 = pneg %p660
    $region46: #{_lambda_.29} parent=5 // pred_check_branch
      %663 = sbr.rel (%p661) target = $region48
    $region47: #{_lambda_.29} parent=5 // pred_region
      %s664 = ssub.s32 %s11, 2
      // Predicated region
      $region49: #{_lambda_.29} parent=47 // pred_check
        %p665 = pneg %p174
      $region50: #{_lambda_.29} parent=47 // pred_check_branch
        %667 = sbr.rel (%p665) target = $region52
      $region51: #{_lambda_.29} parent=47 // pred_region
        %s668 = smul.u32 8, %s22
        %p669 = scmp.lt.s32.totalorder %s668, 15
        %s670 = scalar_select %p669, %s668, 15
        %p671 = scmp.lt.s32.totalorder %s23, 0
        %s672 = scalar_select %p671, %s23, 0
        %s673 = sadd.s32 %s672, %s670
        %s674 = smul.addr %s673, 4
        %s675 = scalar_lea.vmem %s5, %s674
      $region52: #{_lambda_.29} parent=47 // pred_fallthru
        _
    $region48: #{_lambda_.29} parent=5 // pred_fallthru
      _
  $region6: #{_lambda_.29} parent=0 // loop_footer
    %s15 = sadd.s32 1, %s11
  $region7: #{_lambda_.29} parent=0 // loop_footer_branch
    %10 = sbr.rel target = $region3
  $region8: #{_lambda_.29} parent=0 // loop_exit
    _

// kernel: _lambda_.32
$region0: #{_lambda_.32}
  #allocation0 [shape = 'u32[]', space=smem, size = 0x4, offset = 0x4, fixed_abs, tag = 'smem constant byte address 0x4 - core index']
  #allocation1 [shape = 'u32[144,128]{1,0:T(1,128)}', space=vmem, size = 0x12000, scoped, tag = 'internal scratch']
  %s0 = inlined_call_operand.vmem [shape: bf16[8,16,96], index: 0, kind: input, shape index: {}]
  %s1 = inlined_call_operand.vmem [shape: f32[2,16,16], index: 1, kind: input, shape index: {}]
  %s2 = inlined_call_operand.vmem [shape: f32[4,16,16], index: 2, kind: input, shape index: {}]
  %s3 = inlined_call_operand.vmem [shape: bf16[8,16,32], index: 3, kind: output, shape index: {}]
  %s4 = sld [smem:[#allocation0]]
  $region45: #{_lambda_.32} parent=0
    _
  %s6 = ssub.s32 1, %s4
  %s7 = scalar_select 0, %s6, %s4
  loop: start=0, step=1, limit=4
  $region2: #{_lambda_.32} parent=0 // loop_pre_header
    _
  $region3: #{_lambda_.32} parent=0 // loop_header
    %s9 = sphi 0, %s13
    %p10 = scmp.ge.s32.totalorder %s9, 4
    %s19 = sphi 0, %s21
    %s22 = sphi 0, %s19
    %s23 = sphi 0, %s22
    %s39 = sphi 0, %s23
    %s43 = sphi 0, %s43
    %s45 = sphi 0, %s43
    %s46 = sphi 0, %s45
    %s60 = sphi 0, %s46
    %s64 = sphi 0, %s64
    %s66 = sphi 0, %s64
    %s67 = sphi 0, %s66
    %s81 = sphi 0, %s67
    %s87 = sphi 0, %s89
    %s90 = sphi 0, %s87
    %s91 = sphi 0, %s90
    %s107 = sphi 0, %s91
  $region4: #{_lambda_.32} parent=0 // loop_header_branch
    %12 = sbr.rel (%p10) target = $region8
  $region5: #{_lambda_.32} parent=0 // loop_body
    %s14 = ssub.s32 %s9, 1
    %s15 = ssub.s32 %s9, 2
    %s16 = sadd.s32 %s9, 1
    %s17 = ssub.s32 %s9, %s16
    %p18 = scmp.eq.s32.totalorder %s17, 0
    %s20 = sadd.s32 %s19, 1
    %s21 = scalar_select %p18, %s19, %s20
    %p24 = pneg %p18
    %p25 = scmp.eq.s32.totalorder %s9, 1
    %p26 = por %p24, %p25
    %p27 = scmp.ne.s32.totalorder %s19, %s22
    %p28 = scmp.eq.s32.totalorder %s9, 0
    %p29 = por %p27, %p28
    %p30 = scmp.ne.s32.totalorder %s19, %s22
    %p31 = scmp.eq.s32.totalorder %s14, 1
    %p32 = por %p30, %p31
    %p33 = scmp.ne.s32.totalorder %s22, %s23
    %p34 = scmp.eq.s32.totalorder %s14, 0
    %p35 = por %p33, %p34
    %p36 = scmp.ne.s32.totalorder %s22, %s23
    %p37 = scmp.eq.s32.totalorder %s15, 1
    %p38 = por %p36, %p37
    %p40 = scmp.ne.s32.totalorder %s23, %s39
    %p41 = scmp.eq.s32.totalorder %s15, 0
    %p42 = por %p40, %p41
    %s44 = sadd.s32 %s43, 1
    %p47 = scmp.eq.s32.totalorder %s9, 1
    %p48 = scmp.ne.s32.totalorder %s43, %s45
    %p49 = scmp.eq.s32.totalorder %s9, 0
    %p50 = por %p48, %p49
    %p51 = scmp.ne.s32.totalorder %s43, %s45
    %p52 = scmp.eq.s32.totalorder %s14, 1
    %p53 = por %p51, %p52
    %p54 = scmp.ne.s32.totalorder %s45, %s46
    %p55 = scmp.eq.s32.totalorder %s14, 0
    %p56 = por %p54, %p55
    %p57 = scmp.ne.s32.totalorder %s45, %s46
    %p58 = scmp.eq.s32.totalorder %s15, 1
    %p59 = por %p57, %p58
    %p61 = scmp.ne.s32.totalorder %s46, %s60
    %p62 = scmp.eq.s32.totalorder %s15, 0
    %p63 = por %p61, %p62
    %s65 = sadd.s32 %s64, 1
    %p68 = scmp.eq.s32.totalorder %s9, 1
    %p69 = scmp.ne.s32.totalorder %s64, %s66
    %p70 = scmp.eq.s32.totalorder %s9, 0
    %p71 = por %p69, %p70
    %p72 = scmp.ne.s32.totalorder %s64, %s66
    %p73 = scmp.eq.s32.totalorder %s14, 1
    %p74 = por %p72, %p73
    %p75 = scmp.ne.s32.totalorder %s66, %s67
    %p76 = scmp.eq.s32.totalorder %s14, 0
    %p77 = por %p75, %p76
    %p78 = scmp.ne.s32.totalorder %s66, %s67
    %p79 = scmp.eq.s32.totalorder %s15, 1
    %p80 = por %p78, %p79
    %p82 = scmp.ne.s32.totalorder %s67, %s81
    %p83 = scmp.eq.s32.totalorder %s15, 0
    %p84 = por %p82, %p83
    %s85 = ssub.s32 %s9, %s16
    %p86 = scmp.eq.s32.totalorder %s85, 0
    %s88 = sadd.s32 %s87, 1
    %s89 = scalar_select %p86, %s87, %s88
    %p92 = pneg %p86
    %p93 = scmp.eq.s32.totalorder %s9, 1
    %p94 = por %p92, %p93
    %p95 = scmp.ne.s32.totalorder %s87, %s90
    %p96 = scmp.eq.s32.totalorder %s9, 0
    %p97 = por %p95, %p96
    %p98 = scmp.ne.s32.totalorder %s87, %s90
    %p99 = scmp.eq.s32.totalorder %s14, 1
    %p100 = por %p98, %p99
    %p101 = scmp.ne.s32.totalorder %s90, %s91
    %p102 = scmp.eq.s32.totalorder %s14, 0
    %p103 = por %p101, %p102
    %p104 = scmp.ne.s32.totalorder %s90, %s91
    %p105 = scmp.eq.s32.totalorder %s15, 1
    %p106 = por %p104, %p105
    %p108 = scmp.ne.s32.totalorder %s91, %s107
    %p109 = scmp.eq.s32.totalorder %s15, 0
    %p110 = por %p108, %p109
    %p111 = scmp.le.s32.totalorder 1, %s9
    %p112 = scmp.lt.s32.totalorder %s9, 3
    %p113 = pnand %p111, %p112
    %p114 = pneg %p113
    // Predicated region
    $region9: #{_lambda_.32} parent=5 // pred_check
      _
    $region10: #{_lambda_.32} parent=5 // pred_check_branch
      %116 = sbr.rel (%p113) target = $region12
    $region11: #{_lambda_.32} parent=5 // pred_region
      %s117 = ssub.s32 %s9, 1
      // Predicated region
      $region13: #{_lambda_.32} parent=11 // pred_check
        %p118 = pneg %p56
      $region14: #{_lambda_.32} parent=11 // pred_check_branch
        %120 = sbr.rel (%p118) target = $region16
      $region15: #{_lambda_.32} parent=11 // pred_region
        _
      $region16: #{_lambda_.32} parent=11 // pred_fallthru
        _
      // Predicated region
      $region17: #{_lambda_.32} parent=11 // pred_check
        %p121 = pneg %p77
      $region18: #{_lambda_.32} parent=11 // pred_check_branch
        %123 = sbr.rel (%p121) target = $region20
      $region19: #{_lambda_.32} parent=11 // pred_region
        _
      $region20: #{_lambda_.32} parent=11 // pred_fallthru
        _
    $region12: #{_lambda_.32} parent=5 // pred_fallthru
      _
    %p124 = scmp.lt.s32.totalorder %s9, 2
    // Predicated region
    $region21: #{_lambda_.32} parent=5 // pred_check
      %p125 = pneg %p124
    $region22: #{_lambda_.32} parent=5 // pred_check_branch
      %127 = sbr.rel (%p125) target = $region24
    $region23: #{_lambda_.32} parent=5 // pred_region
      // Predicated region
      $region25: #{_lambda_.32} parent=23 // pred_check
        %p128 = pneg %p29
      $region26: #{_lambda_.32} parent=23 // pred_check_branch
        %130 = sbr.rel (%p128) target = $region28
      $region27: #{_lambda_.32} parent=23 // pred_region
        %s131 = smul.u32 4, %s9
        %p132 = scmp.lt.s32.totalorder %s131, 7
        %s133 = scalar_select %p132, %s131, 7
        %s134 = smul.addr %s133, 2
        %s135 = smul.addr %s134, 4
        %s136 = scalar_lea.vmem %s0, %s135
        %s137 = smul.u32 4, %s9
      $region28: #{_lambda_.32} parent=23 // pred_fallthru
        _
    $region24: #{_lambda_.32} parent=5 // pred_fallthru
      _
    %p138 = scmp.le.s32.totalorder 1, %s9
    %p139 = scmp.lt.s32.totalorder %s9, 3
    %p140 = pnand %p138, %p139
    %p141 = pneg %p140
    // Predicated region
    $region29: #{_lambda_.32} parent=5 // pred_check
      _
    $region30: #{_lambda_.32} parent=5 // pred_check_branch
      %143 = sbr.rel (%p140) target = $region32
    $region31: #{_lambda_.32} parent=5 // pred_region
      %s144 = ssub.s32 %s9, 1
      %s145 = smul.u32 4, %s14
      %p146 = scmp.lt.s32.totalorder %s145, 7
      %s147 = scalar_select %p146, %s145, 7
      %s148 = smul.addr %s147, 2
      %s149 = smul.addr %s148, 4
      %s150 = scalar_lea.vmem %s0, %s149
      %p151 = pneg %p35
      %p152 = pneg %p32
      %p153 = pneg %p56
      %p154 = pneg %p53
      %p155 = pneg %p77
      %p156 = pneg %p74
      %p157 = pneg %p103
      %p158 = pneg %p100
      %s159 = smul.u32 4, %s14
      %p160 = scmp.lt.s32.totalorder %s159, 7
      %s161 = scalar_select %p160, %s159, 7
      %s162 = smul.addr %s161, 2
      %s163 = smul.addr %s162, 4
      %s164 = scalar_lea.vmem %s3, %s163
      %s165 = smul.u32 4, %s14
      %p166 = scmp.lt.s32.totalorder %s165, 7
      %s167 = scalar_select %p166, %s165, 7
      %s168 = smul.addr %s167, 2
      %s169 = smul.addr %s168, 4
      %s170 = scalar_lea.vmem %s0, %s169
      %s171 = smul.u32 4, %s14
      %s172 = smul.u32 4, %s14
      %p173 = scmp.lt.s32.totalorder %s172, 7
      %s174 = scalar_select %p173, %s172, 7
      %s175 = smul.addr %s174, 2
      %s176 = smul.addr %s175, 4
      %s177 = scalar_lea.vmem %s3, %s176
      %s178 = smul.u32 4, %s14
      %v180 = vld [vmem:[%s2] sm:$0xff]
      %v181 = vld [vmem:[%s2 + $0x8] sm:$0xff]
      %v182 = vld [vmem:[%s2 + $0x10] sm:$0xff]
      %v183 = vld [vmem:[%s2 + $0x18] sm:$0xff]
      %v184 = vld [vmem:[%s2 + $0x20] sm:$0xff]
      %v185 = vld [vmem:[%s2 + $0x28] sm:$0xff]
      %v186 = vld [vmem:[%s2 + $0x30] sm:$0xff]
      %v187 = vld [vmem:[%s2 + $0x38] sm:$0xff]
      %v188 = vld [vmem:[%s170] sm:$0xf]
      %v189 = vld [vmem:[%s170 + $0x4] sm:$0xf]
      %v190 = vld [vmem:[%s170 + $0x8] sm:$0xf]
      %v191 = vld [vmem:[%s170 + $0xc] sm:$0xf]
      %v192 = vld [vmem:[%s170 + $0x10] sm:$0xf]
      %v193 = vld [vmem:[%s170 + $0x14] sm:$0xf]
      %v194 = vld [vmem:[%s170 + $0x18] sm:$0xf]
      %v195 = vld [vmem:[%s170 + $0x1c] sm:$0xf]
      %v198 = vunpack.c.l.b16 %v188
      %v199 = vunpack.c.l.b16 %v189
      %v200 = vpack.c.b16 %v199, %v198
      %201 = vrot.lane.b32.xlu0 %v200, 96
      %v202 = vpop.permute.xlu0 %201
      %vm203 = vcmask 130048
      %v205 = vsel %vm203, %v200, 0
      %v208 = vsel %vm203, %v202, 0
      %210 = vmatprep.subr.bf16.mxu0 0
      %211 = vmatpush1.bf16.xpose.msra.mxu0 0
      %212 = vmatprep.subr.bf16.mxu0 0
      %213 = vmatpush1.bf16.xpose.msra.mxu0 0
      %214 = vmatprep.subr.bf16.mxu0 0
      %215 = vmatpush1.bf16.xpose.msra.mxu0 0
      %216 = vmatprep.subr.bf16.mxu0 0
      %217 = vmatpush1.bf16.xpose.msra.mxu0 0
      %218 = vmatprep.subr.bf16.mxu0 0
      %219 = vmatpush1.bf16.xpose.msra.mxu0 0
      %220 = vmatprep.subr.bf16.mxu0 0
      %221 = vmatpush1.bf16.xpose.msra.mxu0 0
      %222 = vmatprep.subr.bf16.mxu0 0
      %223 = vmatpush1.bf16.xpose.msra.mxu0 0
      %224 = vmatprep.subr.bf16.mxu0 0
      %225 = vmatpush1.bf16.xpose.msra.mxu0 %v208
      %226 = vmatprep.subr.bf16.mxu0 0
      %227 = vmatpush2.bf16.xpose.msra.mxu0 0
      %228 = vmatprep.subr.bf16.mxu0 0
      %229 = vmatpush2.bf16.xpose.msra.mxu0 0
      %230 = vmatprep.subr.bf16.mxu0 0
      %231 = vmatpush2.bf16.xpose.msra.mxu0 0
      %232 = vmatprep.subr.bf16.mxu0 0
      %233 = vmatpush2.bf16.xpose.msra.mxu0 0
      %234 = vmatprep.subr.bf16.mxu0 0
      %235 = vmatpush2.bf16.xpose.msra.mxu0 0
      %236 = vmatprep.subr.bf16.mxu0 0
      %237 = vmatpush2.bf16.xpose.msra.mxu0 0
      %238 = vmatprep.subr.bf16.mxu0 0
      %239 = vmatpush2.bf16.xpose.msra.mxu0 0
      %240 = vmatprep.subr.bf16.mxu0 0
      %241 = vmatpush2.bf16.xpose.msra.mxu0 0
      %242 = vmatprep.mubr.bf16.mxu0 0
      %243 = vmatmul.mubr.bf16.gmra.mxu0 %v205
      %v244 = vpop.f32.mrf.mxu0
      %v245 = vadd.f32 0.0, %v244
      %v246 = vpop.f32.mrf.mxu0
      %v247 = vpop.f32.mrf.mxu0
      %v248 = vadd.f32 0.0, %v247
      %v249 = vpop.f32.mrf.mxu0
      %250 = vdwg.mxu0
      %v253 = vunpack.c.l.b16 %v190
      %v254 = vunpack.c.l.b16 %v191
      %v255 = vpack.c.b16 %v254, %v253
      %256 = vrot.lane.b32.xlu0 %v255, 96
      %v257 = vpop.permute.xlu0 %256
      %v259 = vsel %vm203, %v255, 0
      %v262 = vsel %vm203, %v257, 0
      %264 = vmatprep.subr.bf16.mxu0 0
      %265 = vmatpush1.bf16.xpose.msra.mxu0 0
      %266 = vmatprep.subr.bf16.mxu0 0
      %267 = vmatpush1.bf16.xpose.msra.mxu0 0
      %268 = vmatprep.subr.bf16.mxu0 0
      %269 = vmatpush1.bf16.xpose.msra.mxu0 0
      %270 = vmatprep.subr.bf16.mxu0 0
      %271 = vmatpush1.bf16.xpose.msra.mxu0 0
      %272 = vmatprep.subr.bf16.mxu0 0
      %273 = vmatpush1.bf16.xpose.msra.mxu0 0
      %274 = vmatprep.subr.bf16.mxu0 0
      %275 = vmatpush1.bf16.xpose.msra.mxu0 0
      %276 = vmatprep.subr.bf16.mxu0 0
      %277 = vmatpush1.bf16.xpose.msra.mxu0 0
      %278 = vmatprep.subr.bf16.mxu0 0
      %279 = vmatpush1.bf16.xpose.msra.mxu0 %v262
      %280 = vmatprep.subr.bf16.mxu0 0
      %281 = vmatpush2.bf16.xpose.msra.mxu0 0
      %282 = vmatprep.subr.bf16.mxu0 0
      %283 = vmatpush2.bf16.xpose.msra.mxu0 0
      %284 = vmatprep.subr.bf16.mxu0 0
      %285 = vmatpush2.bf16.xpose.msra.mxu0 0
      %286 = vmatprep.subr.bf16.mxu0 0
      %287 = vmatpush2.bf16.xpose.msra.mxu0 0
      %288 = vmatprep.subr.bf16.mxu0 0
      %289 = vmatpush2.bf16.xpose.msra.mxu0 0
      %290 = vmatprep.subr.bf16.mxu0 0
      %291 = vmatpush2.bf16.xpose.msra.mxu0 0
      %292 = vmatprep.subr.bf16.mxu0 0
      %293 = vmatpush2.bf16.xpose.msra.mxu0 0
      %294 = vmatprep.subr.bf16.mxu0 0
      %295 = vmatpush2.bf16.xpose.msra.mxu0 0
      %296 = vmatprep.mubr.bf16.mxu0 0
      %297 = vmatmul.mubr.bf16.gmra.mxu0 %v259
      %v298 = vpop.f32.mrf.mxu0
      %v299 = vadd.f32 0.0, %v298
      %v300 = vpop.f32.mrf.mxu0
      %v301 = vpop.f32.mrf.mxu0
      %v302 = vadd.f32 0.0, %v301
      %v303 = vpop.f32.mrf.mxu0
      %304 = vdwg.mxu0
      %v307 = vunpack.c.l.b16 %v192
      %v308 = vunpack.c.l.b16 %v193
      %v309 = vpack.c.b16 %v308, %v307
      %310 = vrot.lane.b32.xlu0 %v309, 96
      %v311 = vpop.permute.xlu0 %310
      %v313 = vsel %vm203, %v309, 0
      %v316 = vsel %vm203, %v311, 0
      %318 = vmatprep.subr.bf16.mxu0 0
      %319 = vmatpush1.bf16.xpose.msra.mxu0 0
      %320 = vmatprep.subr.bf16.mxu0 0
      %321 = vmatpush1.bf16.xpose.msra.mxu0 0
      %322 = vmatprep.subr.bf16.mxu0 0
      %323 = vmatpush1.bf16.xpose.msra.mxu0 0
      %324 = vmatprep.subr.bf16.mxu0 0
      %325 = vmatpush1.bf16.xpose.msra.mxu0 0
      %326 = vmatprep.subr.bf16.mxu0 0
      %327 = vmatpush1.bf16.xpose.msra.mxu0 0
      %328 = vmatprep.subr.bf16.mxu0 0
      %329 = vmatpush1.bf16.xpose.msra.mxu0 0
      %330 = vmatprep.subr.bf16.mxu0 0
      %331 = vmatpush1.bf16.xpose.msra.mxu0 0
      %332 = vmatprep.subr.bf16.mxu0 0
      %333 = vmatpush1.bf16.xpose.msra.mxu0 %v316
      %334 = vmatprep.subr.bf16.mxu0 0
      %335 = vmatpush2.bf16.xpose.msra.mxu0 0
      %336 = vmatprep.subr.bf16.mxu0 0
      %337 = vmatpush2.bf16.xpose.msra.mxu0 0
      %338 = vmatprep.subr.bf16.mxu0 0
      %339 = vmatpush2.bf16.xpose.msra.mxu0 0
      %340 = vmatprep.subr.bf16.mxu0 0
      %341 = vmatpush2.bf16.xpose.msra.mxu0 0
      %342 = vmatprep.subr.bf16.mxu0 0
      %343 = vmatpush2.bf16.xpose.msra.mxu0 0
      %344 = vmatprep.subr.bf16.mxu0 0
      %345 = vmatpush2.bf16.xpose.msra.mxu0 0
      %346 = vmatprep.subr.bf16.mxu0 0
      %347 = vmatpush2.bf16.xpose.msra.mxu0 0
      %348 = vmatprep.subr.bf16.mxu0 0
      %349 = vmatpush2.bf16.xpose.msra.mxu0 0
      %350 = vmatprep.mubr.bf16.mxu0 0
      %351 = vmatmul.mubr.bf16.gmra.mxu0 %v313
      %v352 = vpop.f32.mrf.mxu0
      %v353 = vadd.f32 0.0, %v352
      %v354 = vpop.f32.mrf.mxu0
      %v355 = vpop.f32.mrf.mxu0
      %v356 = vadd.f32 0.0, %v355
      %v357 = vpop.f32.mrf.mxu0
      %358 = vdwg.mxu0
      %v361 = vunpack.c.l.b16 %v194
      %v362 = vunpack.c.l.b16 %v195
      %v363 = vpack.c.b16 %v362, %v361
      %364 = vrot.lane.b32.xlu0 %v363, 96
      %v365 = vpop.permute.xlu0 %364
      %v367 = vsel %vm203, %v363, 0
      %v370 = vsel %vm203, %v365, 0
      %372 = vmatprep.subr.bf16.mxu0 0
      %373 = vmatpush1.bf16.xpose.msra.mxu0 0
      %374 = vmatprep.subr.bf16.mxu0 0
      %375 = vmatpush1.bf16.xpose.msra.mxu0 0
      %376 = vmatprep.subr.bf16.mxu0 0
      %377 = vmatpush1.bf16.xpose.msra.mxu0 0
      %378 = vmatprep.subr.bf16.mxu0 0
      %379 = vmatpush1.bf16.xpose.msra.mxu0 0
      %380 = vmatprep.subr.bf16.mxu0 0
      %381 = vmatpush1.bf16.xpose.msra.mxu0 0
      %382 = vmatprep.subr.bf16.mxu0 0
      %383 = vmatpush1.bf16.xpose.msra.mxu0 0
      %384 = vmatprep.subr.bf16.mxu0 0
      %385 = vmatpush1.bf16.xpose.msra.mxu0 0
      %386 = vmatprep.subr.bf16.mxu0 0
      %387 = vmatpush1.bf16.xpose.msra.mxu0 %v370
      %388 = vmatprep.subr.bf16.mxu0 0
      %389 = vmatpush2.bf16.xpose.msra.mxu0 0
      %390 = vmatprep.subr.bf16.mxu0 0
      %391 = vmatpush2.bf16.xpose.msra.mxu0 0
      %392 = vmatprep.subr.bf16.mxu0 0
      %393 = vmatpush2.bf16.xpose.msra.mxu0 0
      %394 = vmatprep.subr.bf16.mxu0 0
      %395 = vmatpush2.bf16.xpose.msra.mxu0 0
      %396 = vmatprep.subr.bf16.mxu0 0
      %397 = vmatpush2.bf16.xpose.msra.mxu0 0
      %398 = vmatprep.subr.bf16.mxu0 0
      %399 = vmatpush2.bf16.xpose.msra.mxu0 0
      %400 = vmatprep.subr.bf16.mxu0 0
      %401 = vmatpush2.bf16.xpose.msra.mxu0 0
      %402 = vmatprep.subr.bf16.mxu0 0
      %403 = vmatpush2.bf16.xpose.msra.mxu0 0
      %404 = vmatprep.mubr.bf16.mxu0 0
      %405 = vmatmul.mubr.bf16.gmra.mxu0 %v367
      %v406 = vpop.f32.mrf.mxu0
      %v407 = vadd.f32 0.0, %v406
      %v408 = vpop.f32.mrf.mxu0
      %v409 = vpop.f32.mrf.mxu0
      %v410 = vadd.f32 0.0, %v409
      %v411 = vpop.f32.mrf.mxu0
      %412 = vdwg.mxu0
      %v413 = vmul.f32 %v245, 0.25
      %v414 = vmul.f32 %v248, 0.25
      %v415 = vmul.f32 %v299, 0.25
      %v416 = vmul.f32 %v302, 0.25
      %v417 = vmul.f32 %v353, 0.25
      %v418 = vmul.f32 %v356, 0.25
      %v419 = vmul.f32 %v407, 0.25
      %v420 = vmul.f32 %v410, 0.25
      %v421 = vld [vmem:[%s1] sm:$0xff]
      %v422 = vld [vmem:[%s1 + $0x8] sm:$0xff]
      %v423 = vadd.f32 %v413, %v421
      %v424 = vadd.f32 %v414, %v422
      %v425 = vadd.f32 %v415, %v421
      %v426 = vadd.f32 %v416, %v422
      %v427 = vadd.f32 %v417, %v421
      %v428 = vadd.f32 %v418, %v422
      %v429 = vadd.f32 %v419, %v421
      %v430 = vadd.f32 %v420, %v422
      %v431 = vadd.f32 %v423, %v180
      %v432 = vadd.f32 %v424, %v181
      %v433 = vadd.f32 %v425, %v182
      %v434 = vadd.f32 %v426, %v183
      %v435 = vadd.f32 %v427, %v184
      %v436 = vadd.f32 %v428, %v185
      %v437 = vadd.f32 %v429, %v186
      %v438 = vadd.f32 %v430, %v187
      %v439 = vsel %vm203, %v431, -inf
      %440 = vmax.xlane.f32.xlu0 %v439
      %v441 = vpop.xlane.xlu0 %440
      %v442 = vsel %vm203, %v432, -inf
      %443 = vmax.xlane.f32.xlu0 %v442
      %v444 = vpop.xlane.xlu0 %443
      %v445 = vsel %vm203, %v433, -inf
      %446 = vmax.xlane.f32.xlu0 %v445
      %v447 = vpop.xlane.xlu0 %446
      %v448 = vsel %vm203, %v434, -inf
      %449 = vmax.xlane.f32.xlu0 %v448
      %v450 = vpop.xlane.xlu0 %449
      %v451 = vsel %vm203, %v435, -inf
      %452 = vmax.xlane.f32.xlu0 %v451
      %v453 = vpop.xlane.xlu0 %452
      %v454 = vsel %vm203, %v436, -inf
      %455 = vmax.xlane.f32.xlu0 %v454
      %v456 = vpop.xlane.xlu0 %455
      %v457 = vsel %vm203, %v437, -inf
      %458 = vmax.xlane.f32.xlu0 %v457
      %v459 = vpop.xlane.xlu0 %458
      %v460 = vsel %vm203, %v438, -inf
      %461 = vmax.xlane.f32.xlu0 %v460
      %v462 = vpop.xlane.xlu0 %461
      %v463 = vsub.f32 %v431, %v441
      %v464 = vsub.f32 %v432, %v444
      %v465 = vsub.f32 %v433, %v447
      %v466 = vsub.f32 %v434, %v450
      %v467 = vsub.f32 %v435, %v453
      %v468 = vsub.f32 %v436, %v456
      %v469 = vsub.f32 %v437, %v459
      %v470 = vsub.f32 %v438, %v462
      %v471 = vmul.f32 %v463, 1.442695
      %v472 = vpow.pop %v471
      %v473 = vmul.f32 %v464, 1.442695
      %v474 = vpow.pop %v473
      %v475 = vmul.f32 %v465, 1.442695
      %v476 = vpow.pop %v475
      %v477 = vmul.f32 %v466, 1.442695
      %v478 = vpow.pop %v477
      %v479 = vmul.f32 %v467, 1.442695
      %v480 = vpow.pop %v479
      %v481 = vmul.f32 %v468, 1.442695
      %v482 = vpow.pop %v481
      %v483 = vmul.f32 %v469, 1.442695
      %v484 = vpow.pop %v483
      %v485 = vmul.f32 %v470, 1.442695
      %v486 = vpow.pop %v485
      %v487 = vsel %vm203, %v472, 0.0
      %488 = vadd.xlane.f32.xlu0 %v487
      %v489 = vpop.xlane.xlu0 %488
      %v490 = vsel %vm203, %v474, 0.0
      %491 = vadd.xlane.f32.xlu0 %v490
      %v492 = vpop.xlane.xlu0 %491
      %v493 = vsel %vm203, %v476, 0.0
      %494 = vadd.xlane.f32.xlu0 %v493
      %v495 = vpop.xlane.xlu0 %494
      %v496 = vsel %vm203, %v478, 0.0
      %497 = vadd.xlane.f32.xlu0 %v496
      %v498 = vpop.xlane.xlu0 %497
      %v499 = vsel %vm203, %v480, 0.0
      %500 = vadd.xlane.f32.xlu0 %v499
      %v501 = vpop.xlane.xlu0 %500
      %v502 = vsel %vm203, %v482, 0.0
      %503 = vadd.xlane.f32.xlu0 %v502
      %v504 = vpop.xlane.xlu0 %503
      %v505 = vsel %vm203, %v484, 0.0
      %506 = vadd.xlane.f32.xlu0 %v505
      %v507 = vpop.xlane.xlu0 %506
      %v508 = vsel %vm203, %v486, 0.0
      %509 = vadd.xlane.f32.xlu0 %v508
      %v510 = vpop.xlane.xlu0 %509
      %v511 = vrcp.pop %v489
      %v512 = vrcp.pop %v492
      %v513 = vrcp.pop %v495
      %v514 = vrcp.pop %v498
      %v515 = vrcp.pop %v501
      %v516 = vrcp.pop %v504
      %v517 = vrcp.pop %v507
      %v518 = vrcp.pop %v510
      %v519 = vmul.f32 %v472, %v511
      %v520 = vmul.f32 %v474, %v512
      %v521 = vmul.f32 %v476, %v513
      %v522 = vmul.f32 %v478, %v514
      %v523 = vmul.f32 %v480, %v515
      %v524 = vmul.f32 %v482, %v516
      %v525 = vmul.f32 %v484, %v517
      %v526 = vmul.f32 %v486, %v518
      %v527 = vpack.c.bf16 %v520, %v519
      %v528 = vpack.c.bf16 %v522, %v521
      %v529 = vpack.c.bf16 %v524, %v523
      %v530 = vpack.c.bf16 %v526, %v525
      %531 = vrot.lane.b32.xlu0 %v200, 64
      %v532 = vpop.permute.xlu0 %531
      %v535 = vsel %vm203, %v527, 0
      %537 = vmatprep.subr.bf16.mxu0 0
      %538 = vmatpush1.bf16.msra.mxu0 0
      %539 = vmatprep.subr.bf16.mxu0 0
      %540 = vmatpush1.bf16.msra.mxu0 0
      %541 = vmatprep.subr.bf16.mxu0 0
      %542 = vmatpush1.bf16.msra.mxu0 0
      %543 = vmatprep.subr.bf16.mxu0 0
      %544 = vmatpush1.bf16.msra.mxu0 0
      %545 = vmatprep.subr.bf16.mxu0 0
      %546 = vmatpush1.bf16.msra.mxu0 0
      %547 = vmatprep.subr.bf16.mxu0 0
      %548 = vmatpush1.bf16.msra.mxu0 0
      %549 = vmatprep.subr.bf16.mxu0 0
      %550 = vmatpush1.bf16.msra.mxu0 0
      %551 = vmatprep.subr.bf16.mxu0 0
      %552 = vmatpush1.bf16.msra.mxu0 %v532
      %553 = vmatprep.subr.bf16.mxu0 0
      %554 = vmatpush2.bf16.msra.mxu0 0
      %555 = vmatprep.subr.bf16.mxu0 0
      %556 = vmatpush2.bf16.msra.mxu0 0
      %557 = vmatprep.subr.bf16.mxu0 0
      %558 = vmatpush2.bf16.msra.mxu0 0
      %559 = vmatprep.subr.bf16.mxu0 0
      %560 = vmatpush2.bf16.msra.mxu0 0
      %561 = vmatprep.subr.bf16.mxu0 0
      %562 = vmatpush2.bf16.msra.mxu0 0
      %563 = vmatprep.subr.bf16.mxu0 0
      %564 = vmatpush2.bf16.msra.mxu0 0
      %565 = vmatprep.subr.bf16.mxu0 0
      %566 = vmatpush2.bf16.msra.mxu0 0
      %567 = vmatprep.subr.bf16.mxu0 0
      %568 = vmatpush2.bf16.msra.mxu0 0
      %569 = vmatprep.mubr.bf16.mxu0 0
      %570 = vmatmul.mubr.bf16.gmra.mxu0 %v535
      %v571 = vpop.f32.mrf.mxu0
      %v572 = vadd.f32 0.0, %v571
      %v573 = vpop.f32.mrf.mxu0
      %v574 = vpop.f32.mrf.mxu0
      %v575 = vadd.f32 0.0, %v574
      %v576 = vpop.f32.mrf.mxu0
      %577 = vdwg.mxu0
      %578 = vrot.lane.b32.xlu0 %v255, 64
      %v579 = vpop.permute.xlu0 %578
      %v582 = vsel %vm203, %v528, 0
      %584 = vmatprep.subr.bf16.mxu0 0
      %585 = vmatpush1.bf16.msra.mxu0 0
      %586 = vmatprep.subr.bf16.mxu0 0
      %587 = vmatpush1.bf16.msra.mxu0 0
      %588 = vmatprep.subr.bf16.mxu0 0
      %589 = vmatpush1.bf16.msra.mxu0 0
      %590 = vmatprep.subr.bf16.mxu0 0
      %591 = vmatpush1.bf16.msra.mxu0 0
      %592 = vmatprep.subr.bf16.mxu0 0
      %593 = vmatpush1.bf16.msra.mxu0 0
      %594 = vmatprep.subr.bf16.mxu0 0
      %595 = vmatpush1.bf16.msra.mxu0 0
      %596 = vmatprep.subr.bf16.mxu0 0
      %597 = vmatpush1.bf16.msra.mxu0 0
      %598 = vmatprep.subr.bf16.mxu0 0
      %599 = vmatpush1.bf16.msra.mxu0 %v579
      %600 = vmatprep.subr.bf16.mxu0 0
      %601 = vmatpush2.bf16.msra.mxu0 0
      %602 = vmatprep.subr.bf16.mxu0 0
      %603 = vmatpush2.bf16.msra.mxu0 0
      %604 = vmatprep.subr.bf16.mxu0 0
      %605 = vmatpush2.bf16.msra.mxu0 0
      %606 = vmatprep.subr.bf16.mxu0 0
      %607 = vmatpush2.bf16.msra.mxu0 0
      %608 = vmatprep.subr.bf16.mxu0 0
      %609 = vmatpush2.bf16.msra.mxu0 0
      %610 = vmatprep.subr.bf16.mxu0 0
      %611 = vmatpush2.bf16.msra.mxu0 0
      %612 = vmatprep.subr.bf16.mxu0 0
      %613 = vmatpush2.bf16.msra.mxu0 0
      %614 = vmatprep.subr.bf16.mxu0 0
      %615 = vmatpush2.bf16.msra.mxu0 0
      %616 = vmatprep.mubr.bf16.mxu0 0
      %617 = vmatmul.mubr.bf16.gmra.mxu0 %v582
      %v618 = vpop.f32.mrf.mxu0
      %v619 = vadd.f32 0.0, %v618
      %v620 = vpop.f32.mrf.mxu0
      %v621 = vpop.f32.mrf.mxu0
      %v622 = vadd.f32 0.0, %v621
      %v623 = vpop.f32.mrf.mxu0
      %624 = vdwg.mxu0
      %625 = vrot.lane.b32.xlu0 %v309, 64
      %v626 = vpop.permute.xlu0 %625
      %v629 = vsel %vm203, %v529, 0
      %631 = vmatprep.subr.bf16.mxu0 0
      %632 = vmatpush1.bf16.msra.mxu0 0
      %633 = vmatprep.subr.bf16.mxu0 0
      %634 = vmatpush1.bf16.msra.mxu0 0
      %635 = vmatprep.subr.bf16.mxu0 0
      %636 = vmatpush1.bf16.msra.mxu0 0
      %637 = vmatprep.subr.bf16.mxu0 0
      %638 = vmatpush1.bf16.msra.mxu0 0
      %639 = vmatprep.subr.bf16.mxu0 0
      %640 = vmatpush1.bf16.msra.mxu0 0
      %641 = vmatprep.subr.bf16.mxu0 0
      %642 = vmatpush1.bf16.msra.mxu0 0
      %643 = vmatprep.subr.bf16.mxu0 0
      %644 = vmatpush1.bf16.msra.mxu0 0
      %645 = vmatprep.subr.bf16.mxu0 0
      %646 = vmatpush1.bf16.msra.mxu0 %v626
      %647 = vmatprep.subr.bf16.mxu0 0
      %648 = vmatpush2.bf16.msra.mxu0 0
      %649 = vmatprep.subr.bf16.mxu0 0
      %650 = vmatpush2.bf16.msra.mxu0 0
      %651 = vmatprep.subr.bf16.mxu0 0
      %652 = vmatpush2.bf16.msra.mxu0 0
      %653 = vmatprep.subr.bf16.mxu0 0
      %654 = vmatpush2.bf16.msra.mxu0 0
      %655 = vmatprep.subr.bf16.mxu0 0
      %656 = vmatpush2.bf16.msra.mxu0 0
      %657 = vmatprep.subr.bf16.mxu0 0
      %658 = vmatpush2.bf16.msra.mxu0 0
      %659 = vmatprep.subr.bf16.mxu0 0
      %660 = vmatpush2.bf16.msra.mxu0 0
      %661 = vmatprep.subr.bf16.mxu0 0
      %662 = vmatpush2.bf16.msra.mxu0 0
      %663 = vmatprep.mubr.bf16.mxu0 0
      %664 = vmatmul.mubr.bf16.gmra.mxu0 %v629
      %v665 = vpop.f32.mrf.mxu0
      %v666 = vadd.f32 0.0, %v665
      %v667 = vpop.f32.mrf.mxu0
      %v668 = vpop.f32.mrf.mxu0
      %v669 = vadd.f32 0.0, %v668
      %v670 = vpop.f32.mrf.mxu0
      %671 = vdwg.mxu0
      %672 = vrot.lane.b32.xlu0 %v363, 64
      %v673 = vpop.permute.xlu0 %672
      %v676 = vsel %vm203, %v530, 0
      %678 = vmatprep.subr.bf16.mxu0 0
      %679 = vmatpush1.bf16.msra.mxu0 0
      %680 = vmatprep.subr.bf16.mxu0 0
      %681 = vmatpush1.bf16.msra.mxu0 0
      %682 = vmatprep.subr.bf16.mxu0 0
      %683 = vmatpush1.bf16.msra.mxu0 0
      %684 = vmatprep.subr.bf16.mxu0 0
      %685 = vmatpush1.bf16.msra.mxu0 0
      %686 = vmatprep.subr.bf16.mxu0 0
      %687 = vmatpush1.bf16.msra.mxu0 0
      %688 = vmatprep.subr.bf16.mxu0 0
      %689 = vmatpush1.bf16.msra.mxu0 0
      %690 = vmatprep.subr.bf16.mxu0 0
      %691 = vmatpush1.bf16.msra.mxu0 0
      %692 = vmatprep.subr.bf16.mxu0 0
      %693 = vmatpush1.bf16.msra.mxu0 %v673
      %694 = vmatprep.subr.bf16.mxu0 0
      %695 = vmatpush2.bf16.msra.mxu0 0
      %696 = vmatprep.subr.bf16.mxu0 0
      %697 = vmatpush2.bf16.msra.mxu0 0
      %698 = vmatprep.subr.bf16.mxu0 0
      %699 = vmatpush2.bf16.msra.mxu0 0
      %700 = vmatprep.subr.bf16.mxu0 0
      %701 = vmatpush2.bf16.msra.mxu0 0
      %702 = vmatprep.subr.bf16.mxu0 0
      %703 = vmatpush2.bf16.msra.mxu0 0
      %704 = vmatprep.subr.bf16.mxu0 0
      %705 = vmatpush2.bf16.msra.mxu0 0
      %706 = vmatprep.subr.bf16.mxu0 0
      %707 = vmatpush2.bf16.msra.mxu0 0
      %708 = vmatprep.subr.bf16.mxu0 0
      %709 = vmatpush2.bf16.msra.mxu0 0
      %710 = vmatprep.mubr.bf16.mxu0 0
      %711 = vmatmul.mubr.bf16.gmra.mxu0 %v676
      %v712 = vpop.f32.mrf.mxu0
      %v713 = vadd.f32 0.0, %v712
      %v714 = vpop.f32.mrf.mxu0
      %v715 = vpop.f32.mrf.mxu0
      %v716 = vadd.f32 0.0, %v715
      %v717 = vpop.f32.mrf.mxu0
      %718 = vdwg.mxu0
      %v719 = vpack.c.bf16 %v575, %v572
      %v720 = vpack.c.bf16 %v622, %v619
      %v721 = vpack.c.bf16 %v669, %v666
      %v722 = vpack.c.bf16 %v716, %v713
      %v727 = vunpack.c.l.b16 %v719
      %v728 = vunpack.c.h.b16 %v719
      %v729 = vunpack.c.l.b16 %v720
      %v730 = vunpack.c.h.b16 %v720
      %v731 = vunpack.c.l.b16 %v721
      %v732 = vunpack.c.h.b16 %v721
      %v733 = vunpack.c.l.b16 %v722
      %v734 = vunpack.c.h.b16 %v722
      %v735 = vpack.c.b16 %v727, %v727
      %v736 = vpack.c.b16 %v728, %v728
      %v737 = vpack.c.b16 %v729, %v729
      %v738 = vpack.c.b16 %v730, %v730
      %v739 = vpack.c.b16 %v731, %v731
      %v740 = vpack.c.b16 %v732, %v732
      %v741 = vpack.c.b16 %v733, %v733
      %v742 = vpack.c.b16 %v734, %v734
      %vm751 = vcmask 125952
      %752 = vst.msk [vmem:[%s177] sm:$0xf] %vm751, %v735
      %753 = vst.msk [vmem:[%s177 + $0x4] sm:$0xf] %vm751, %v736
      %754 = vst.msk [vmem:[%s177 + $0x8] sm:$0xf] %vm751, %v737
      %755 = vst.msk [vmem:[%s177 + $0xc] sm:$0xf] %vm751, %v738
      %756 = vst.msk [vmem:[%s177 + $0x10] sm:$0xf] %vm751, %v739
      %757 = vst.msk [vmem:[%s177 + $0x14] sm:$0xf] %vm751, %v740
      %758 = vst.msk [vmem:[%s177 + $0x18] sm:$0xf] %vm751, %v741
      %759 = vst.msk [vmem:[%s177 + $0x1c] sm:$0xf] %vm751, %v742
      %v760 = vld [vmem:[%s170] sm:$0xf]
      %v761 = vld [vmem:[%s170 + $0x4] sm:$0xf]
      %v762 = vld [vmem:[%s170 + $0x8] sm:$0xf]
      %v763 = vld [vmem:[%s170 + $0xc] sm:$0xf]
      %v764 = vld [vmem:[%s170 + $0x10] sm:$0xf]
      %v765 = vld [vmem:[%s170 + $0x14] sm:$0xf]
      %v766 = vld [vmem:[%s170 + $0x18] sm:$0xf]
      %v767 = vld [vmem:[%s170 + $0x1c] sm:$0xf]
      %v770 = vunpack.c.l.b16 %v760
      %v771 = vunpack.c.l.b16 %v761
      %v772 = vpack.c.b16 %v771, %v770
      %773 = vrot.lane.b32.xlu0 %v772, 112
      %v774 = vpop.permute.xlu0 %773
      %775 = vrot.lane.b32.xlu0 %v772, 80
      %v776 = vpop.permute.xlu0 %775
      %v778 = vsel %vm203, %v774, 0
      %v781 = vsel %vm203, %v776, 0
      %783 = vmatprep.subr.bf16.mxu0 0
      %784 = vmatpush1.bf16.xpose.msra.mxu0 0
      %785 = vmatprep.subr.bf16.mxu0 0
      %786 = vmatpush1.bf16.xpose.msra.mxu0 0
      %787 = vmatprep.subr.bf16.mxu0 0
      %788 = vmatpush1.bf16.xpose.msra.mxu0 0
      %789 = vmatprep.subr.bf16.mxu0 0
      %790 = vmatpush1.bf16.xpose.msra.mxu0 0
      %791 = vmatprep.subr.bf16.mxu0 0
      %792 = vmatpush1.bf16.xpose.msra.mxu0 0
      %793 = vmatprep.subr.bf16.mxu0 0
      %794 = vmatpush1.bf16.xpose.msra.mxu0 0
      %795 = vmatprep.subr.bf16.mxu0 0
      %796 = vmatpush1.bf16.xpose.msra.mxu0 0
      %797 = vmatprep.subr.bf16.mxu0 0
      %798 = vmatpush1.bf16.xpose.msra.mxu0 %v781
      %799 = vmatprep.subr.bf16.mxu0 0
      %800 = vmatpush2.bf16.xpose.msra.mxu0 0
      %801 = vmatprep.subr.bf16.mxu0 0
      %802 = vmatpush2.bf16.xpose.msra.mxu0 0
      %803 = vmatprep.subr.bf16.mxu0 0
      %804 = vmatpush2.bf16.xpose.msra.mxu0 0
      %805 = vmatprep.subr.bf16.mxu0 0
      %806 = vmatpush2.bf16.xpose.msra.mxu0 0
      %807 = vmatprep.subr.bf16.mxu0 0
      %808 = vmatpush2.bf16.xpose.msra.mxu0 0
      %809 = vmatprep.subr.bf16.mxu0 0
      %810 = vmatpush2.bf16.xpose.msra.mxu0 0
      %811 = vmatprep.subr.bf16.mxu0 0
      %812 = vmatpush2.bf16.xpose.msra.mxu0 0
      %813 = vmatprep.subr.bf16.mxu0 0
      %814 = vmatpush2.bf16.xpose.msra.mxu0 0
      %815 = vmatprep.mubr.bf16.mxu0 0
      %816 = vmatmul.mubr.bf16.gmra.mxu0 %v778
      %v817 = vpop.f32.mrf.mxu0
      %v818 = vadd.f32 0.0, %v817
      %v819 = vpop.f32.mrf.mxu0
      %v820 = vpop.f32.mrf.mxu0
      %v821 = vadd.f32 0.0, %v820
      %v822 = vpop.f32.mrf.mxu0
      %823 = vdwg.mxu0
      %v826 = vunpack.c.l.b16 %v762
      %v827 = vunpack.c.l.b16 %v763
      %v828 = vpack.c.b16 %v827, %v826
      %829 = vrot.lane.b32.xlu0 %v828, 112
      %v830 = vpop.permute.xlu0 %829
      %831 = vrot.lane.b32.xlu0 %v828, 80
      %v832 = vpop.permute.xlu0 %831
      %v834 = vsel %vm203, %v830, 0
      %v837 = vsel %vm203, %v832, 0
      %839 = vmatprep.subr.bf16.mxu0 0
      %840 = vmatpush1.bf16.xpose.msra.mxu0 0
      %841 = vmatprep.subr.bf16.mxu0 0
      %842 = vmatpush1.bf16.xpose.msra.mxu0 0
      %843 = vmatprep.subr.bf16.mxu0 0
      %844 = vmatpush1.bf16.xpose.msra.mxu0 0
      %845 = vmatprep.subr.bf16.mxu0 0
      %846 = vmatpush1.bf16.xpose.msra.mxu0 0
      %847 = vmatprep.subr.bf16.mxu0 0
      %848 = vmatpush1.bf16.xpose.msra.mxu0 0
      %849 = vmatprep.subr.bf16.mxu0 0
      %850 = vmatpush1.bf16.xpose.msra.mxu0 0
      %851 = vmatprep.subr.bf16.mxu0 0
      %852 = vmatpush1.bf16.xpose.msra.mxu0 0
      %853 = vmatprep.subr.bf16.mxu0 0
      %854 = vmatpush1.bf16.xpose.msra.mxu0 %v837
      %855 = vmatprep.subr.bf16.mxu0 0
      %856 = vmatpush2.bf16.xpose.msra.mxu0 0
      %857 = vmatprep.subr.bf16.mxu0 0
      %858 = vmatpush2.bf16.xpose.msra.mxu0 0
      %859 = vmatprep.subr.bf16.mxu0 0
      %860 = vmatpush2.bf16.xpose.msra.mxu0 0
      %861 = vmatprep.subr.bf16.mxu0 0
      %862 = vmatpush2.bf16.xpose.msra.mxu0 0
      %863 = vmatprep.subr.bf16.mxu0 0
      %864 = vmatpush2.bf16.xpose.msra.mxu0 0
      %865 = vmatprep.subr.bf16.mxu0 0
      %866 = vmatpush2.bf16.xpose.msra.mxu0 0
      %867 = vmatprep.subr.bf16.mxu0 0
      %868 = vmatpush2.bf16.xpose.msra.mxu0 0
      %869 = vmatprep.subr.bf16.mxu0 0
      %870 = vmatpush2.bf16.xpose.msra.mxu0 0
      %871 = vmatprep.mubr.bf16.mxu0 0
      %872 = vmatmul.mubr.bf16.gmra.mxu0 %v834
      %v873 = vpop.f32.mrf.mxu0
      %v874 = vadd.f32 0.0, %v873
      %v875 = vpop.f32.mrf.mxu0
      %v876 = vpop.f32.mrf.mxu0
      %v877 = vadd.f32 0.0, %v876
      %v878 = vpop.f32.mrf.mxu0
      %879 = vdwg.mxu0
      %v882 = vunpack.c.l.b16 %v764
      %v883 = vunpack.c.l.b16 %v765
      %v884 = vpack.c.b16 %v883, %v882
      %885 = vrot.lane.b32.xlu0 %v884, 112
      %v886 = vpop.permute.xlu0 %885
      %887 = vrot.lane.b32.xlu0 %v884, 80
      %v888 = vpop.permute.xlu0 %887
      %v890 = vsel %vm203, %v886, 0
      %v893 = vsel %vm203, %v888, 0
      %895 = vmatprep.subr.bf16.mxu0 0
      %896 = vmatpush1.bf16.xpose.msra.mxu0 0
      %897 = vmatprep.subr.bf16.mxu0 0
      %898 = vmatpush1.bf16.xpose.msra.mxu0 0
      %899 = vmatprep.subr.bf16.mxu0 0
      %900 = vmatpush1.bf16.xpose.msra.mxu0 0
      %901 = vmatprep.subr.bf16.mxu0 0
      %902 = vmatpush1.bf16.xpose.msra.mxu0 0
      %903 = vmatprep.subr.bf16.mxu0 0
      %904 = vmatpush1.bf16.xpose.msra.mxu0 0
      %905 = vmatprep.subr.bf16.mxu0 0
      %906 = vmatpush1.bf16.xpose.msra.mxu0 0
      %907 = vmatprep.subr.bf16.mxu0 0
      %908 = vmatpush1.bf16.xpose.msra.mxu0 0
      %909 = vmatprep.subr.bf16.mxu0 0
      %910 = vmatpush1.bf16.xpose.msra.mxu0 %v893
      %911 = vmatprep.subr.bf16.mxu0 0
      %912 = vmatpush2.bf16.xpose.msra.mxu0 0
      %913 = vmatprep.subr.bf16.mxu0 0
      %914 = vmatpush2.bf16.xpose.msra.mxu0 0
      %915 = vmatprep.subr.bf16.mxu0 0
      %916 = vmatpush2.bf16.xpose.msra.mxu0 0
      %917 = vmatprep.subr.bf16.mxu0 0
      %918 = vmatpush2.bf16.xpose.msra.mxu0 0
      %919 = vmatprep.subr.bf16.mxu0 0
      %920 = vmatpush2.bf16.xpose.msra.mxu0 0
      %921 = vmatprep.subr.bf16.mxu0 0
      %922 = vmatpush2.bf16.xpose.msra.mxu0 0
      %923 = vmatprep.subr.bf16.mxu0 0
      %924 = vmatpush2.bf16.xpose.msra.mxu0 0
      %925 = vmatprep.subr.bf16.mxu0 0
      %926 = vmatpush2.bf16.xpose.msra.mxu0 0
      %927 = vmatprep.mubr.bf16.mxu0 0
      %928 = vmatmul.mubr.bf16.gmra.mxu0 %v890
      %v929 = vpop.f32.mrf.mxu0
      %v930 = vadd.f32 0.0, %v929
      %v931 = vpop.f32.mrf.mxu0
      %v932 = vpop.f32.mrf.mxu0
      %v933 = vadd.f32 0.0, %v932
      %v934 = vpop.f32.mrf.mxu0
      %935 = vdwg.mxu0
      %v938 = vunpack.c.l.b16 %v766
      %v939 = vunpack.c.l.b16 %v767
      %v940 = vpack.c.b16 %v939, %v938
      %941 = vrot.lane.b32.xlu0 %v940, 112
      %v942 = vpop.permute.xlu0 %941
      %943 = vrot.lane.b32.xlu0 %v940, 80
      %v944 = vpop.permute.xlu0 %943
      %v946 = vsel %vm203, %v942, 0
      %v949 = vsel %vm203, %v944, 0
      %951 = vmatprep.subr.bf16.mxu0 0
      %952 = vmatpush1.bf16.xpose.msra.mxu0 0
      %953 = vmatprep.subr.bf16.mxu0 0
      %954 = vmatpush1.bf16.xpose.msra.mxu0 0
      %955 = vmatprep.subr.bf16.mxu0 0
      %956 = vmatpush1.bf16.xpose.msra.mxu0 0
      %957 = vmatprep.subr.bf16.mxu0 0
      %958 = vmatpush1.bf16.xpose.msra.mxu0 0
      %959 = vmatprep.subr.bf16.mxu0 0
      %960 = vmatpush1.bf16.xpose.msra.mxu0 0
      %961 = vmatprep.subr.bf16.mxu0 0
      %962 = vmatpush1.bf16.xpose.msra.mxu0 0
      %963 = vmatprep.subr.bf16.mxu0 0
      %964 = vmatpush1.bf16.xpose.msra.mxu0 0
      %965 = vmatprep.subr.bf16.mxu0 0
      %966 = vmatpush1.bf16.xpose.msra.mxu0 %v949
      %967 = vmatprep.subr.bf16.mxu0 0
      %968 = vmatpush2.bf16.xpose.msra.mxu0 0
      %969 = vmatprep.subr.bf16.mxu0 0
      %970 = vmatpush2.bf16.xpose.msra.mxu0 0
      %971 = vmatprep.subr.bf16.mxu0 0
      %972 = vmatpush2.bf16.xpose.msra.mxu0 0
      %973 = vmatprep.subr.bf16.mxu0 0
      %974 = vmatpush2.bf16.xpose.msra.mxu0 0
      %975 = vmatprep.subr.bf16.mxu0 0
      %976 = vmatpush2.bf16.xpose.msra.mxu0 0
      %977 = vmatprep.subr.bf16.mxu0 0
      %978 = vmatpush2.bf16.xpose.msra.mxu0 0
      %979 = vmatprep.subr.bf16.mxu0 0
      %980 = vmatpush2.bf16.xpose.msra.mxu0 0
      %981 = vmatprep.subr.bf16.mxu0 0
      %982 = vmatpush2.bf16.xpose.msra.mxu0 0
      %983 = vmatprep.mubr.bf16.mxu0 0
      %984 = vmatmul.mubr.bf16.gmra.mxu0 %v946
      %v985 = vpop.f32.mrf.mxu0
      %v986 = vadd.f32 0.0, %v985
      %v987 = vpop.f32.mrf.mxu0
      %v988 = vpop.f32.mrf.mxu0
      %v989 = vadd.f32 0.0, %v988
      %v990 = vpop.f32.mrf.mxu0
      %991 = vdwg.mxu0
      %v992 = vmul.f32 %v818, 0.25
      %v993 = vmul.f32 %v821, 0.25
      %v994 = vmul.f32 %v874, 0.25
      %v995 = vmul.f32 %v877, 0.25
      %v996 = vmul.f32 %v930, 0.25
      %v997 = vmul.f32 %v933, 0.25
      %v998 = vmul.f32 %v986, 0.25
      %v999 = vmul.f32 %v989, 0.25
      %s1000 = scalar_lea.vmem %s1, 16
      %v1001 = vld [vmem:[%s1000] sm:$0xff]
      %v1002 = vld [vmem:[%s1000 + $0x8] sm:$0xff]
      %v1003 = vadd.f32 %v992, %v1001
      %v1004 = vadd.f32 %v993, %v1002
      %v1005 = vadd.f32 %v994, %v1001
      %v1006 = vadd.f32 %v995, %v1002
      %v1007 = vadd.f32 %v996, %v1001
      %v1008 = vadd.f32 %v997, %v1002
      %v1009 = vadd.f32 %v998, %v1001
      %v1010 = vadd.f32 %v999, %v1002
      %v1011 = vadd.f32 %v1003, %v180
      %v1012 = vadd.f32 %v1004, %v181
      %v1013 = vadd.f32 %v1005, %v182
      %v1014 = vadd.f32 %v1006, %v183
      %v1015 = vadd.f32 %v1007, %v184
      %v1016 = vadd.f32 %v1008, %v185
      %v1017 = vadd.f32 %v1009, %v186
      %v1018 = vadd.f32 %v1010, %v187
      %v1019 = vsel %vm203, %v1011, -inf
      %1020 = vmax.xlane.f32.xlu0 %v1019
      %v1021 = vpop.xlane.xlu0 %1020
      %v1022 = vsel %vm203, %v1012, -inf
      %1023 = vmax.xlane.f32.xlu0 %v1022
      %v1024 = vpop.xlane.xlu0 %1023
      %v1025 = vsel %vm203, %v1013, -inf
      %1026 = vmax.xlane.f32.xlu0 %v1025
      %v1027 = vpop.xlane.xlu0 %1026
      %v1028 = vsel %vm203, %v1014, -inf
      %1029 = vmax.xlane.f32.xlu0 %v1028
      %v1030 = vpop.xlane.xlu0 %1029
      %v1031 = vsel %vm203, %v1015, -inf
      %1032 = vmax.xlane.f32.xlu0 %v1031
      %v1033 = vpop.xlane.xlu0 %1032
      %v1034 = vsel %vm203, %v1016, -inf
      %1035 = vmax.xlane.f32.xlu0 %v1034
      %v1036 = vpop.xlane.xlu0 %1035
      %v1037 = vsel %vm203, %v1017, -inf
      %1038 = vmax.xlane.f32.xlu0 %v1037
      %v1039 = vpop.xlane.xlu0 %1038
      %v1040 = vsel %vm203, %v1018, -inf
      %1041 = vmax.xlane.f32.xlu0 %v1040
      %v1042 = vpop.xlane.xlu0 %1041
      %v1043 = vsub.f32 %v1011, %v1021
      %v1044 = vsub.f32 %v1012, %v1024
      %v1045 = vsub.f32 %v1013, %v1027
      %v1046 = vsub.f32 %v1014, %v1030
      %v1047 = vsub.f32 %v1015, %v1033
      %v1048 = vsub.f32 %v1016, %v1036
      %v1049 = vsub.f32 %v1017, %v1039
      %v1050 = vsub.f32 %v1018, %v1042
      %v1051 = vmul.f32 %v1043, 1.442695
      %v1052 = vpow.pop %v1051
      %v1053 = vmul.f32 %v1044, 1.442695
      %v1054 = vpow.pop %v1053
      %v1055 = vmul.f32 %v1045, 1.442695
      %v1056 = vpow.pop %v1055
      %v1057 = vmul.f32 %v1046, 1.442695
      %v1058 = vpow.pop %v1057
      %v1059 = vmul.f32 %v1047, 1.442695
      %v1060 = vpow.pop %v1059
      %v1061 = vmul.f32 %v1048, 1.442695
      %v1062 = vpow.pop %v1061
      %v1063 = vmul.f32 %v1049, 1.442695
      %v1064 = vpow.pop %v1063
      %v1065 = vmul.f32 %v1050, 1.442695
      %v1066 = vpow.pop %v1065
      %v1067 = vsel %vm203, %v1052, 0.0
      %1068 = vadd.xlane.f32.xlu0 %v1067
      %v1069 = vpop.xlane.xlu0 %1068
      %v1070 = vsel %vm203, %v1054, 0.0
      %1071 = vadd.xlane.f32.xlu0 %v1070
      %v1072 = vpop.xlane.xlu0 %1071
      %v1073 = vsel %vm203, %v1056, 0.0
      %1074 = vadd.xlane.f32.xlu0 %v1073
      %v1075 = vpop.xlane.xlu0 %1074
      %v1076 = vsel %vm203, %v1058, 0.0
      %1077 = vadd.xlane.f32.xlu0 %v1076
      %v1078 = vpop.xlane.xlu0 %1077
      %v1079 = vsel %vm203, %v1060, 0.0
      %1080 = vadd.xlane.f32.xlu0 %v1079
      %v1081 = vpop.xlane.xlu0 %1080
      %v1082 = vsel %vm203, %v1062, 0.0
      %1083 = vadd.xlane.f32.xlu0 %v1082
      %v1084 = vpop.xlane.xlu0 %1083
      %v1085 = vsel %vm203, %v1064, 0.0
      %1086 = vadd.xlane.f32.xlu0 %v1085
      %v1087 = vpop.xlane.xlu0 %1086
      %v1088 = vsel %vm203, %v1066, 0.0
      %1089 = vadd.xlane.f32.xlu0 %v1088
      %v1090 = vpop.xlane.xlu0 %1089
      %v1091 = vrcp.pop %v1069
      %v1092 = vrcp.pop %v1072
      %v1093 = vrcp.pop %v1075
      %v1094 = vrcp.pop %v1078
      %v1095 = vrcp.pop %v1081
      %v1096 = vrcp.pop %v1084
      %v1097 = vrcp.pop %v1087
      %v1098 = vrcp.pop %v1090
      %v1099 = vmul.f32 %v1052, %v1091
      %v1100 = vmul.f32 %v1054, %v1092
      %v1101 = vmul.f32 %v1056, %v1093
      %v1102 = vmul.f32 %v1058, %v1094
      %v1103 = vmul.f32 %v1060, %v1095
      %v1104 = vmul.f32 %v1062, %v1096
      %v1105 = vmul.f32 %v1064, %v1097
      %v1106 = vmul.f32 %v1066, %v1098
      %v1107 = vpack.c.bf16 %v1100, %v1099
      %v1108 = vpack.c.bf16 %v1102, %v1101
      %v1109 = vpack.c.bf16 %v1104, %v1103
      %v1110 = vpack.c.bf16 %v1106, %v1105
      %1111 = vrot.lane.b32.xlu0 %v772, 48
      %v1112 = vpop.permute.xlu0 %1111
      %v1115 = vsel %vm203, %v1107, 0
      %1117 = vmatprep.subr.bf16.mxu0 0
      %1118 = vmatpush1.bf16.msra.mxu0 0
      %1119 = vmatprep.subr.bf16.mxu0 0
      %1120 = vmatpush1.bf16.msra.mxu0 0
      %1121 = vmatprep.subr.bf16.mxu0 0
      %1122 = vmatpush1.bf16.msra.mxu0 0
      %1123 = vmatprep.subr.bf16.mxu0 0
      %1124 = vmatpush1.bf16.msra.mxu0 0
      %1125 = vmatprep.subr.bf16.mxu0 0
      %1126 = vmatpush1.bf16.msra.mxu0 0
      %1127 = vmatprep.subr.bf16.mxu0 0
      %1128 = vmatpush1.bf16.msra.mxu0 0
      %1129 = vmatprep.subr.bf16.mxu0 0
      %1130 = vmatpush1.bf16.msra.mxu0 0
      %1131 = vmatprep.subr.bf16.mxu0 0
      %1132 = vmatpush1.bf16.msra.mxu0 %v1112
      %1133 = vmatprep.subr.bf16.mxu0 0
      %1134 = vmatpush2.bf16.msra.mxu0 0
      %1135 = vmatprep.subr.bf16.mxu0 0
      %1136 = vmatpush2.bf16.msra.mxu0 0
      %1137 = vmatprep.subr.bf16.mxu0 0
      %1138 = vmatpush2.bf16.msra.mxu0 0
      %1139 = vmatprep.subr.bf16.mxu0 0
      %1140 = vmatpush2.bf16.msra.mxu0 0
      %1141 = vmatprep.subr.bf16.mxu0 0
      %1142 = vmatpush2.bf16.msra.mxu0 0
      %1143 = vmatprep.subr.bf16.mxu0 0
      %1144 = vmatpush2.bf16.msra.mxu0 0
      %1145 = vmatprep.subr.bf16.mxu0 0
      %1146 = vmatpush2.bf16.msra.mxu0 0
      %1147 = vmatprep.subr.bf16.mxu0 0
      %1148 = vmatpush2.bf16.msra.mxu0 0
      %1149 = vmatprep.mubr.bf16.mxu0 0
      %1150 = vmatmul.mubr.bf16.gmra.mxu0 %v1115
      %v1151 = vpop.f32.mrf.mxu0
      %v1152 = vadd.f32 0.0, %v1151
      %v1153 = vpop.f32.mrf.mxu0
      %v1154 = vpop.f32.mrf.mxu0
      %v1155 = vadd.f32 0.0, %v1154
      %v1156 = vpop.f32.mrf.mxu0
      %1157 = vdwg.mxu0
      %1158 = vrot.lane.b32.xlu0 %v828, 48
      %v1159 = vpop.permute.xlu0 %1158
      %v1162 = vsel %vm203, %v1108, 0
      %1164 = vmatprep.subr.bf16.mxu0 0
      %1165 = vmatpush1.bf16.msra.mxu0 0
      %1166 = vmatprep.subr.bf16.mxu0 0
      %1167 = vmatpush1.bf16.msra.mxu0 0
      %1168 = vmatprep.subr.bf16.mxu0 0
      %1169 = vmatpush1.bf16.msra.mxu0 0
      %1170 = vmatprep.subr.bf16.mxu0 0
      %1171 = vmatpush1.bf16.msra.mxu0 0
      %1172 = vmatprep.subr.bf16.mxu0 0
      %1173 = vmatpush1.bf16.msra.mxu0 0
      %1174 = vmatprep.subr.bf16.mxu0 0
      %1175 = vmatpush1.bf16.msra.mxu0 0
      %1176 = vmatprep.subr.bf16.mxu0 0
      %1177 = vmatpush1.bf16.msra.mxu0 0
      %1178 = vmatprep.subr.bf16.mxu0 0
      %1179 = vmatpush1.bf16.msra.mxu0 %v1159
      %1180 = vmatprep.subr.bf16.mxu0 0
      %1181 = vmatpush2.bf16.msra.mxu0 0
      %1182 = vmatprep.subr.bf16.mxu0 0
      %1183 = vmatpush2.bf16.msra.mxu0 0
      %1184 = vmatprep.subr.bf16.mxu0 0
      %1185 = vmatpush2.bf16.msra.mxu0 0
      %1186 = vmatprep.subr.bf16.mxu0 0
      %1187 = vmatpush2.bf16.msra.mxu0 0
      %1188 = vmatprep.subr.bf16.mxu0 0
      %1189 = vmatpush2.bf16.msra.mxu0 0
      %1190 = vmatprep.subr.bf16.mxu0 0
      %1191 = vmatpush2.bf16.msra.mxu0 0
      %1192 = vmatprep.subr.bf16.mxu0 0
      %1193 = vmatpush2.bf16.msra.mxu0 0
      %1194 = vmatprep.subr.bf16.mxu0 0
      %1195 = vmatpush2.bf16.msra.mxu0 0
      %1196 = vmatprep.mubr.bf16.mxu0 0
      %1197 = vmatmul.mubr.bf16.gmra.mxu0 %v1162
      %v1198 = vpop.f32.mrf.mxu0
      %v1199 = vadd.f32 0.0, %v1198
      %v1200 = vpop.f32.mrf.mxu0
      %v1201 = vpop.f32.mrf.mxu0
      %v1202 = vadd.f32 0.0, %v1201
      %v1203 = vpop.f32.mrf.mxu0
      %1204 = vdwg.mxu0
      %1205 = vrot.lane.b32.xlu0 %v884, 48
      %v1206 = vpop.permute.xlu0 %1205
      %v1209 = vsel %vm203, %v1109, 0
      %1211 = vmatprep.subr.bf16.mxu0 0
      %1212 = vmatpush1.bf16.msra.mxu0 0
      %1213 = vmatprep.subr.bf16.mxu0 0
      %1214 = vmatpush1.bf16.msra.mxu0 0
      %1215 = vmatprep.subr.bf16.mxu0 0
      %1216 = vmatpush1.bf16.msra.mxu0 0
      %1217 = vmatprep.subr.bf16.mxu0 0
      %1218 = vmatpush1.bf16.msra.mxu0 0
      %1219 = vmatprep.subr.bf16.mxu0 0
      %1220 = vmatpush1.bf16.msra.mxu0 0
      %1221 = vmatprep.subr.bf16.mxu0 0
      %1222 = vmatpush1.bf16.msra.mxu0 0
      %1223 = vmatprep.subr.bf16.mxu0 0
      %1224 = vmatpush1.bf16.msra.mxu0 0
      %1225 = vmatprep.subr.bf16.mxu0 0
      %1226 = vmatpush1.bf16.msra.mxu0 %v1206
      %1227 = vmatprep.subr.bf16.mxu0 0
      %1228 = vmatpush2.bf16.msra.mxu0 0
      %1229 = vmatprep.subr.bf16.mxu0 0
      %1230 = vmatpush2.bf16.msra.mxu0 0
      %1231 = vmatprep.subr.bf16.mxu0 0
      %1232 = vmatpush2.bf16.msra.mxu0 0
      %1233 = vmatprep.subr.bf16.mxu0 0
      %1234 = vmatpush2.bf16.msra.mxu0 0
      %1235 = vmatprep.subr.bf16.mxu0 0
      %1236 = vmatpush2.bf16.msra.mxu0 0
      %1237 = vmatprep.subr.bf16.mxu0 0
      %1238 = vmatpush2.bf16.msra.mxu0 0
      %1239 = vmatprep.subr.bf16.mxu0 0
      %1240 = vmatpush2.bf16.msra.mxu0 0
      %1241 = vmatprep.subr.bf16.mxu0 0
      %1242 = vmatpush2.bf16.msra.mxu0 0
      %1243 = vmatprep.mubr.bf16.mxu0 0
      %1244 = vmatmul.mubr.bf16.gmra.mxu0 %v1209
      %v1245 = vpop.f32.mrf.mxu0
      %v1246 = vadd.f32 0.0, %v1245
      %v1247 = vpop.f32.mrf.mxu0
      %v1248 = vpop.f32.mrf.mxu0
      %v1249 = vadd.f32 0.0, %v1248
      %v1250 = vpop.f32.mrf.mxu0
      %1251 = vdwg.mxu0
      %1252 = vrot.lane.b32.xlu0 %v940, 48
      %v1253 = vpop.permute.xlu0 %1252
      %v1256 = vsel %vm203, %v1110, 0
      %1258 = vmatprep.subr.bf16.mxu0 0
      %1259 = vmatpush1.bf16.msra.mxu0 0
      %1260 = vmatprep.subr.bf16.mxu0 0
      %1261 = vmatpush1.bf16.msra.mxu0 0
      %1262 = vmatprep.subr.bf16.mxu0 0
      %1263 = vmatpush1.bf16.msra.mxu0 0
      %1264 = vmatprep.subr.bf16.mxu0 0
      %1265 = vmatpush1.bf16.msra.mxu0 0
      %1266 = vmatprep.subr.bf16.mxu0 0
      %1267 = vmatpush1.bf16.msra.mxu0 0
      %1268 = vmatprep.subr.bf16.mxu0 0
      %1269 = vmatpush1.bf16.msra.mxu0 0
      %1270 = vmatprep.subr.bf16.mxu0 0
      %1271 = vmatpush1.bf16.msra.mxu0 0
      %1272 = vmatprep.subr.bf16.mxu0 0
      %1273 = vmatpush1.bf16.msra.mxu0 %v1253
      %1274 = vmatprep.subr.bf16.mxu0 0
      %1275 = vmatpush2.bf16.msra.mxu0 0
      %1276 = vmatprep.subr.bf16.mxu0 0
      %1277 = vmatpush2.bf16.msra.mxu0 0
      %1278 = vmatprep.subr.bf16.mxu0 0
      %1279 = vmatpush2.bf16.msra.mxu0 0
      %1280 = vmatprep.subr.bf16.mxu0 0
      %1281 = vmatpush2.bf16.msra.mxu0 0
      %1282 = vmatprep.subr.bf16.mxu0 0
      %1283 = vmatpush2.bf16.msra.mxu0 0
      %1284 = vmatprep.subr.bf16.mxu0 0
      %1285 = vmatpush2.bf16.msra.mxu0 0
      %1286 = vmatprep.subr.bf16.mxu0 0
      %1287 = vmatpush2.bf16.msra.mxu0 0
      %1288 = vmatprep.subr.bf16.mxu0 0
      %1289 = vmatpush2.bf16.msra.mxu0 0
      %1290 = vmatprep.mubr.bf16.mxu0 0
      %1291 = vmatmul.mubr.bf16.gmra.mxu0 %v1256
      %v1292 = vpop.f32.mrf.mxu0
      %v1293 = vadd.f32 0.0, %v1292
      %v1294 = vpop.f32.mrf.mxu0
      %v1295 = vpop.f32.mrf.mxu0
      %v1296 = vadd.f32 0.0, %v1295
      %v1297 = vpop.f32.mrf.mxu0
      %1298 = vdwg.mxu0
      %v1299 = vpack.c.bf16 %v1155, %v1152
      %v1300 = vpack.c.bf16 %v1202, %v1199
      %v1301 = vpack.c.bf16 %v1249, %v1246
      %v1302 = vpack.c.bf16 %v1296, %v1293
      %v1307 = vunpack.c.l.b16 %v1299
      %v1308 = vunpack.c.h.b16 %v1299
      %v1309 = vunpack.c.l.b16 %v1300
      %v1310 = vunpack.c.h.b16 %v1300
      %v1311 = vunpack.c.l.b16 %v1301
      %v1312 = vunpack.c.h.b16 %v1301
      %v1313 = vunpack.c.l.b16 %v1302
      %v1314 = vunpack.c.h.b16 %v1302
      %v1315 = vpack.c.b16 %v1307, %v1307
      %v1316 = vpack.c.b16 %v1308, %v1308
      %v1317 = vpack.c.b16 %v1309, %v1309
      %v1318 = vpack.c.b16 %v1310, %v1310
      %v1319 = vpack.c.b16 %v1311, %v1311
      %v1320 = vpack.c.b16 %v1312, %v1312
      %v1321 = vpack.c.b16 %v1313, %v1313
      %v1322 = vpack.c.b16 %v1314, %v1314
      %1323 = vrot.lane.b32.xlu0 %v1315, 16
      %v1324 = vpop.permute.xlu0 %1323
      %1325 = vrot.lane.b32.xlu0 %v1316, 16
      %v1326 = vpop.permute.xlu0 %1325
      %1327 = vrot.lane.b32.xlu0 %v1317, 16
      %v1328 = vpop.permute.xlu0 %1327
      %1329 = vrot.lane.b32.xlu0 %v1318, 16
      %v1330 = vpop.permute.xlu0 %1329
      %1331 = vrot.lane.b32.xlu0 %v1319, 16
      %v1332 = vpop.permute.xlu0 %1331
      %1333 = vrot.lane.b32.xlu0 %v1320, 16
      %v1334 = vpop.permute.xlu0 %1333
      %1335 = vrot.lane.b32.xlu0 %v1321, 16
      %v1336 = vpop.permute.xlu0 %1335
      %1337 = vrot.lane.b32.xlu0 %v1322, 16
      %v1338 = vpop.permute.xlu0 %1337
      %vm1347 = vcmask 257152
      %1348 = vst.msk [vmem:[%s177] sm:$0xf] %vm1347, %v1324
      %1349 = vst.msk [vmem:[%s177 + $0x4] sm:$0xf] %vm1347, %v1326
      %1350 = vst.msk [vmem:[%s177 + $0x8] sm:$0xf] %vm1347, %v1328
      %1351 = vst.msk [vmem:[%s177 + $0xc] sm:$0xf] %vm1347, %v1330
      %1352 = vst.msk [vmem:[%s177 + $0x10] sm:$0xf] %vm1347, %v1332
      %1353 = vst.msk [vmem:[%s177 + $0x14] sm:$0xf] %vm1347, %v1334
      %1354 = vst.msk [vmem:[%s177 + $0x18] sm:$0xf] %vm1347, %v1336
      %1355 = vst.msk [vmem:[%s177 + $0x1c] sm:$0xf] %vm1347, %v1338
      %s1356 = smul.u32 4, %s14
      %p1357 = scmp.lt.s32.totalorder %s1356, 7
      %s1358 = scalar_select %p1357, %s1356, 7
      %s1359 = smul.addr %s1358, 2
      %s1360 = smul.addr %s1359, 4
      %s1361 = scalar_lea.vmem %s3, %s1360
      // Predicated region
      $region33: #{_lambda_.32} parent=31 // pred_check
        %p1362 = pneg %p100
      $region34: #{_lambda_.32} parent=31 // pred_check_branch
        %1364 = sbr.rel (%p1362) target = $region36
      $region35: #{_lambda_.32} parent=31 // pred_region
        %s1365 = smul.u32 4, %s14
      $region36: #{_lambda_.32} parent=31 // pred_fallthru
        _
    $region32: #{_lambda_.32} parent=5 // pred_fallthru
      _
    %p1366 = scmp.le.s32.totalorder 2, %s9
    // Predicated region
    $region37: #{_lambda_.32} parent=5 // pred_check
      %p1367 = pneg %p1366
    $region38: #{_lambda_.32} parent=5 // pred_check_branch
      %1369 = sbr.rel (%p1367) target = $region40
    $region39: #{_lambda_.32} parent=5 // pred_region
      %s1370 = ssub.s32 %s9, 2
      // Predicated region
      $region41: #{_lambda_.32} parent=39 // pred_check
        %p1371 = pneg %p106
      $region42: #{_lambda_.32} parent=39 // pred_check_branch
        %1373 = sbr.rel (%p1371) target = $region44
      $region43: #{_lambda_.32} parent=39 // pred_region
        %s1374 = smul.u32 4, %s15
        %p1375 = scmp.lt.s32.totalorder %s1374, 7
        %s1376 = scalar_select %p1375, %s1374, 7
        %s1377 = smul.addr %s1376, 2
        %s1378 = smul.addr %s1377, 4
        %s1379 = scalar_lea.vmem %s3, %s1378
      $region44: #{_lambda_.32} parent=39 // pred_fallthru
        _
    $region40: #{_lambda_.32} parent=5 // pred_fallthru
      _
  $region6: #{_lambda_.32} parent=0 // loop_footer
    %s13 = sadd.s32 1, %s9
  $region7: #{_lambda_.32} parent=0 // loop_footer_branch
    %8 = sbr.rel target = $region3
  $region8: #{_lambda_.32} parent=0 // loop_exit
    _

// kernel: _lambda_.37
$region0: #{_lambda_.37}
  #allocation0 [shape = 'u32[]', space=smem, size = 0x4, offset = 0x4, fixed_abs, tag = 'smem constant byte address 0x4 - core index']
  #allocation1 [shape = 'u32[144,128]{1,0:T(1,128)}', space=vmem, size = 0x12000, scoped, tag = 'internal scratch']
  %s0 = inlined_call_operand.vmem [shape: bf16[32,64], index: 0, kind: input, shape index: {}]
  %s1 = inlined_call_operand.vmem [shape: f32[1,64], index: 1, kind: input, shape index: {}]
  %s2 = inlined_call_operand.vmem [shape: f32[1,64], index: 2, kind: input, shape index: {}]
  %s3 = inlined_call_operand.vmem [shape: bf16[64,192], index: 3, kind: input, shape index: {}]
  %s4 = inlined_call_operand.vmem [shape: f32[1,192], index: 4, kind: input, shape index: {}]
  %s5 = inlined_call_operand.vmem [shape: bf16[32,192], index: 5, kind: output, shape index: {}]
  %s6 = sld [smem:[#allocation0]]
  $region53: #{_lambda_.37} parent=0
    _
  %s8 = ssub.s32 1, %s6
  %s9 = scalar_select 0, %s8, %s6
  loop: start=0, step=1, limit=4
  $region2: #{_lambda_.37} parent=0 // loop_pre_header
    _
  $region3: #{_lambda_.37} parent=0 // loop_header
    %s11 = sphi 0, %s15
    %p12 = scmp.ge.s32.totalorder %s11, 4
    %s18 = sphi 0, %s30
    %s19 = sphi 0, %s26
    %s20 = sphi 0, %s18
    %s21 = sphi 0, %s19
    %s22 = sphi 0, %s20
    %s23 = sphi 0, %s21
    %s33 = sphi 0, %s35
    %s36 = sphi 0, %s33
    %s37 = sphi 0, %s36
    %s53 = sphi 0, %s37
    %s57 = sphi 0, %s57
    %s59 = sphi 0, %s57
    %s60 = sphi 0, %s59
    %s74 = sphi 0, %s60
    %s78 = sphi 0, %s78
    %s80 = sphi 0, %s78
    %s81 = sphi 0, %s80
    %s95 = sphi 0, %s81
    %s101 = sphi 0, %s103
    %s104 = sphi 0, %s101
    %s105 = sphi 0, %s104
    %s121 = sphi 0, %s105
    %s127 = sphi 0, %s129
    %s130 = sphi 0, %s127
    %s131 = sphi 0, %s130
    %s147 = sphi 0, %s131
    %s155 = sphi 0, %s157
    %s158 = sphi 0, %s155
    %s159 = sphi 0, %s158
    %s175 = sphi 0, %s159
  $region4: #{_lambda_.37} parent=0 // loop_header_branch
    %14 = sbr.rel (%p12) target = $region8
  $region5: #{_lambda_.37} parent=0 // loop_body
    %s16 = ssub.s32 %s11, 1
    %s17 = ssub.s32 %s11, 2
    %s24 = sadd.s32 1, %s19
    %p25 = scmp.ge.s32.totalorder %s24, 1
    %s26 = scalar_select %p25, 0, %s24
    %s27 = sadd.s32 1, %s18
    %s28 = scalar_select %p25, %s27, %s18
    %p29 = scmp.ge.s32.totalorder %s28, 2
    %s30 = scalar_select %p29, 0, %s28
    %s31 = ssub.s32 %s18, %s30
    %p32 = scmp.eq.s32.totalorder %s31, 0
    %s34 = sadd.s32 %s33, 1
    %s35 = scalar_select %p32, %s33, %s34
    %p38 = pneg %p32
    %p39 = scmp.eq.s32.totalorder %s11, 1
    %p40 = por %p38, %p39
    %p41 = scmp.ne.s32.totalorder %s33, %s36
    %p42 = scmp.eq.s32.totalorder %s11, 0
    %p43 = por %p41, %p42
    %p44 = scmp.ne.s32.totalorder %s33, %s36
    %p45 = scmp.eq.s32.totalorder %s16, 1
    %p46 = por %p44, %p45
    %p47 = scmp.ne.s32.totalorder %s36, %s37
    %p48 = scmp.eq.s32.totalorder %s16, 0
    %p49 = por %p47, %p48
    %p50 = scmp.ne.s32.totalorder %s36, %s37
    %p51 = scmp.eq.s32.totalorder %s17, 1
    %p52 = por %p50, %p51
    %p54 = scmp.ne.s32.totalorder %s37, %s53
    %p55 = scmp.eq.s32.totalorder %s17, 0
    %p56 = por %p54, %p55
    %s58 = sadd.s32 %s57, 1
    %p61 = scmp.eq.s32.totalorder %s11, 1
    %p62 = scmp.ne.s32.totalorder %s57, %s59
    %p63 = scmp.eq.s32.totalorder %s11, 0
    %p64 = por %p62, %p63
    %p65 = scmp.ne.s32.totalorder %s57, %s59
    %p66 = scmp.eq.s32.totalorder %s16, 1
    %p67 = por %p65, %p66
    %p68 = scmp.ne.s32.totalorder %s59, %s60
    %p69 = scmp.eq.s32.totalorder %s16, 0
    %p70 = por %p68, %p69
    %p71 = scmp.ne.s32.totalorder %s59, %s60
    %p72 = scmp.eq.s32.totalorder %s17, 1
    %p73 = por %p71, %p72
    %p75 = scmp.ne.s32.totalorder %s60, %s74
    %p76 = scmp.eq.s32.totalorder %s17, 0
    %p77 = por %p75, %p76
    %s79 = sadd.s32 %s78, 1
    %p82 = scmp.eq.s32.totalorder %s11, 1
    %p83 = scmp.ne.s32.totalorder %s78, %s80
    %p84 = scmp.eq.s32.totalorder %s11, 0
    %p85 = por %p83, %p84
    %p86 = scmp.ne.s32.totalorder %s78, %s80
    %p87 = scmp.eq.s32.totalorder %s16, 1
    %p88 = por %p86, %p87
    %p89 = scmp.ne.s32.totalorder %s80, %s81
    %p90 = scmp.eq.s32.totalorder %s16, 0
    %p91 = por %p89, %p90
    %p92 = scmp.ne.s32.totalorder %s80, %s81
    %p93 = scmp.eq.s32.totalorder %s17, 1
    %p94 = por %p92, %p93
    %p96 = scmp.ne.s32.totalorder %s81, %s95
    %p97 = scmp.eq.s32.totalorder %s17, 0
    %p98 = por %p96, %p97
    %s99 = ssub.s32 %s19, %s26
    %p100 = scmp.eq.s32.totalorder %s99, 0
    %s102 = sadd.s32 %s101, 1
    %s103 = scalar_select %p100, %s101, %s102
    %p106 = pneg %p100
    %p107 = scmp.eq.s32.totalorder %s11, 1
    %p108 = por %p106, %p107
    %p109 = scmp.ne.s32.totalorder %s101, %s104
    %p110 = scmp.eq.s32.totalorder %s11, 0
    %p111 = por %p109, %p110
    %p112 = scmp.ne.s32.totalorder %s101, %s104
    %p113 = scmp.eq.s32.totalorder %s16, 1
    %p114 = por %p112, %p113
    %p115 = scmp.ne.s32.totalorder %s104, %s105
    %p116 = scmp.eq.s32.totalorder %s16, 0
    %p117 = por %p115, %p116
    %p118 = scmp.ne.s32.totalorder %s104, %s105
    %p119 = scmp.eq.s32.totalorder %s17, 1
    %p120 = por %p118, %p119
    %p122 = scmp.ne.s32.totalorder %s105, %s121
    %p123 = scmp.eq.s32.totalorder %s17, 0
    %p124 = por %p122, %p123
    %s125 = ssub.s32 %s19, %s26
    %p126 = scmp.eq.s32.totalorder %s125, 0
    %s128 = sadd.s32 %s127, 1
    %s129 = scalar_select %p126, %s127, %s128
    %p132 = pneg %p126
    %p133 = scmp.eq.s32.totalorder %s11, 1
    %p134 = por %p132, %p133
    %p135 = scmp.ne.s32.totalorder %s127, %s130
    %p136 = scmp.eq.s32.totalorder %s11, 0
    %p137 = por %p135, %p136
    %p138 = scmp.ne.s32.totalorder %s127, %s130
    %p139 = scmp.eq.s32.totalorder %s16, 1
    %p140 = por %p138, %p139
    %p141 = scmp.ne.s32.totalorder %s130, %s131
    %p142 = scmp.eq.s32.totalorder %s16, 0
    %p143 = por %p141, %p142
    %p144 = scmp.ne.s32.totalorder %s130, %s131
    %p145 = scmp.eq.s32.totalorder %s17, 1
    %p146 = por %p144, %p145
    %p148 = scmp.ne.s32.totalorder %s131, %s147
    %p149 = scmp.eq.s32.totalorder %s17, 0
    %p150 = por %p148, %p149
    %s151 = ssub.s32 %s18, %s30
    %s152 = ssub.s32 %s19, %s26
    %s153 = sor.u32 %s151, %s152
    %p154 = scmp.eq.s32.totalorder %s153, 0
    %s156 = sadd.s32 %s155, 1
    %s157 = scalar_select %p154, %s155, %s156
    %p160 = pneg %p154
    %p161 = scmp.eq.s32.totalorder %s11, 1
    %p162 = por %p160, %p161
    %p163 = scmp.ne.s32.totalorder %s155, %s158
    %p164 = scmp.eq.s32.totalorder %s11, 0
    %p165 = por %p163, %p164
    %p166 = scmp.ne.s32.totalorder %s155, %s158
    %p167 = scmp.eq.s32.totalorder %s16, 1
    %p168 = por %p166, %p167
    %p169 = scmp.ne.s32.totalorder %s158, %s159
    %p170 = scmp.eq.s32.totalorder %s16, 0
    %p171 = por %p169, %p170
    %p172 = scmp.ne.s32.totalorder %s158, %s159
    %p173 = scmp.eq.s32.totalorder %s17, 1
    %p174 = por %p172, %p173
    %p176 = scmp.ne.s32.totalorder %s159, %s175
    %p177 = scmp.eq.s32.totalorder %s17, 0
    %p178 = por %p176, %p177
    %p179 = scmp.le.s32.totalorder 1, %s11
    %p180 = scmp.lt.s32.totalorder %s11, 3
    %p181 = pnand %p179, %p180
    %p182 = pneg %p181
    // Predicated region
    $region9: #{_lambda_.37} parent=5 // pred_check
      _
    $region10: #{_lambda_.37} parent=5 // pred_check_branch
      %184 = sbr.rel (%p181) target = $region12
    $region11: #{_lambda_.37} parent=5 // pred_region
      %s185 = ssub.s32 %s11, 1
      // Predicated region
      $region13: #{_lambda_.37} parent=11 // pred_check
        %p186 = pneg %p70
      $region14: #{_lambda_.37} parent=11 // pred_check_branch
        %188 = sbr.rel (%p186) target = $region16
      $region15: #{_lambda_.37} parent=11 // pred_region
        _
      $region16: #{_lambda_.37} parent=11 // pred_fallthru
        _
      // Predicated region
      $region17: #{_lambda_.37} parent=11 // pred_check
        %p189 = pneg %p91
      $region18: #{_lambda_.37} parent=11 // pred_check_branch
        %191 = sbr.rel (%p189) target = $region20
      $region19: #{_lambda_.37} parent=11 // pred_region
        _
      $region20: #{_lambda_.37} parent=11 // pred_fallthru
        _
      // Predicated region
      $region21: #{_lambda_.37} parent=11 // pred_check
        %p192 = pneg %p117
      $region22: #{_lambda_.37} parent=11 // pred_check_branch
        %194 = sbr.rel (%p192) target = $region24
      $region23: #{_lambda_.37} parent=11 // pred_region
        %s195 = smul.u32 2, %s21
        %p196 = scmp.lt.s32.totalorder %s195, 1
        %s197 = scalar_select %p196, %s195, 1
        %s198 = smul.addr %s197, 4
        %s199 = scalar_lea.vmem %s3, %s198
        %s200 = smul.u32 2, %s21
      $region24: #{_lambda_.37} parent=11 // pred_fallthru
        _
      // Predicated region
      $region25: #{_lambda_.37} parent=11 // pred_check
        %p201 = pneg %p143
      $region26: #{_lambda_.37} parent=11 // pred_check_branch
        %203 = sbr.rel (%p201) target = $region28
      $region27: #{_lambda_.37} parent=11 // pred_region
        %s204 = smul.u32 2, %s21
        %p205 = scmp.lt.s32.totalorder %s204, 1
        %s206 = scalar_select %p205, %s204, 1
        %s207 = scalar_lea.vmem %s4, %s206
        %s208 = smul.u32 2, %s21
      $region28: #{_lambda_.37} parent=11 // pred_fallthru
        _
    $region12: #{_lambda_.37} parent=5 // pred_fallthru
      _
    %p209 = scmp.lt.s32.totalorder %s11, 2
    // Predicated region
    $region29: #{_lambda_.37} parent=5 // pred_check
      %p210 = pneg %p209
    $region30: #{_lambda_.37} parent=5 // pred_check_branch
      %212 = sbr.rel (%p210) target = $region32
    $region31: #{_lambda_.37} parent=5 // pred_region
      // Predicated region
      $region33: #{_lambda_.37} parent=31 // pred_check
        %p213 = pneg %p43
      $region34: #{_lambda_.37} parent=31 // pred_check_branch
        %215 = sbr.rel (%p213) target = $region36
      $region35: #{_lambda_.37} parent=31 // pred_region
        %s216 = smul.u32 2, %s18
        %p217 = scmp.lt.s32.totalorder %s216, 3
        %s218 = scalar_select %p217, %s216, 3
        %s219 = smul.addr %s218, 4
        %s220 = scalar_lea.vmem %s0, %s219
        %s221 = smul.u32 2, %s18
      $region36: #{_lambda_.37} parent=31 // pred_fallthru
        _
    $region32: #{_lambda_.37} parent=5 // pred_fallthru
      _
    %p222 = scmp.le.s32.totalorder 1, %s11
    %p223 = scmp.lt.s32.totalorder %s11, 3
    %p224 = pnand %p222, %p223
    %p225 = pneg %p224
    // Predicated region
    $region37: #{_lambda_.37} parent=5 // pred_check
      _
    $region38: #{_lambda_.37} parent=5 // pred_check_branch
      %227 = sbr.rel (%p224) target = $region40
    $region39: #{_lambda_.37} parent=5 // pred_region
      %s228 = ssub.s32 %s11, 1
      %s229 = smul.u32 2, %s20
      %p230 = scmp.lt.s32.totalorder %s229, 3
      %s231 = scalar_select %p230, %s229, 3
      %s232 = smul.addr %s231, 4
      %s233 = scalar_lea.vmem %s0, %s232
      %p234 = pneg %p49
      %p235 = pneg %p46
      %p236 = pneg %p70
      %p237 = pneg %p67
      %p238 = pneg %p91
      %p239 = pneg %p88
      %s240 = smul.u32 2, %s21
      %p241 = scmp.lt.s32.totalorder %s240, 1
      %s242 = scalar_select %p241, %s240, 1
      %s243 = smul.addr %s242, 4
      %s244 = scalar_lea.vmem %s3, %s243
      %p245 = pneg %p117
      %p246 = pneg %p114
      %s247 = smul.u32 2, %s21
      %p248 = scmp.lt.s32.totalorder %s247, 1
      %s249 = scalar_select %p248, %s247, 1
      %s250 = scalar_lea.vmem %s4, %s249
      %p251 = pneg %p143
      %p252 = pneg %p140
      %p253 = pneg %p171
      %p254 = pneg %p168
      %s255 = smul.u32 2, %s20
      %s256 = smul.u32 2, %s21
      %p257 = scmp.lt.s32.totalorder %s255, 3
      %s258 = scalar_select %p257, %s255, 3
      %p259 = scmp.lt.s32.totalorder %s256, 1
      %s260 = scalar_select %p259, %s256, 1
      %s261 = smul.addr %s258, 2
      %s262 = sadd.s32 %s260, %s261
      %s263 = smul.addr %s262, 4
      %s264 = scalar_lea.vmem %s5, %s263
      %s265 = smul.u32 2, %s20
      %p266 = scmp.lt.s32.totalorder %s265, 3
      %s267 = scalar_select %p266, %s265, 3
      %s268 = smul.addr %s267, 4
      %s269 = scalar_lea.vmem %s0, %s268
      %s270 = smul.u32 2, %s20
      %s271 = smul.u32 2, %s21
      %p272 = scmp.lt.s32.totalorder %s271, 1
      %s273 = scalar_select %p272, %s271, 1
      %s274 = smul.addr %s273, 4
      %s275 = scalar_lea.vmem %s3, %s274
      %s276 = smul.u32 2, %s21
      %s277 = smul.u32 2, %s21
      %p278 = scmp.lt.s32.totalorder %s277, 1
      %s279 = scalar_select %p278, %s277, 1
      %s280 = scalar_lea.vmem %s4, %s279
      %s281 = smul.u32 2, %s21
      %s282 = smul.u32 2, %s20
      %s283 = smul.u32 2, %s21
      %p284 = scmp.lt.s32.totalorder %s282, 3
      %s285 = scalar_select %p284, %s282, 3
      %p286 = scmp.lt.s32.totalorder %s283, 1
      %s287 = scalar_select %p286, %s283, 1
      %s288 = smul.addr %s285, 2
      %s289 = sadd.s32 %s287, %s288
      %s290 = smul.addr %s289, 4
      %s291 = scalar_lea.vmem %s5, %s290
      %s292 = smul.u32 2, %s20
      %s293 = smul.u32 2, %s21
      %v295 = vld [vmem:[%s269] sm:$0xf]
      %v296 = vld [vmem:[%s269 + $0x4] sm:$0xf]
      %v297 = vunpack.c.l.bf16 %v295
      %v298 = vunpack.c.l.bf16 %v296
      %vm299 = vcmask 523264
      %v300 = vsel %vm299, %v297, 0.0
      %301 = vadd.xlane.f32.xlu0 %v300
      %v302 = vpop.xlane.xlu0 %301
      %v303 = vsel %vm299, %v298, 0.0
      %304 = vadd.xlane.f32.xlu0 %v303
      %v305 = vpop.xlane.xlu0 %304
      %v306 = vrcp.pop 64.0
      %v307 = vmul.f32 %v302, %v306
      %v308 = vmul.f32 %v305, %v306
      %v309 = vsub.f32 %v297, %v307
      %v310 = vsub.f32 %v298, %v308
      %v311 = vmul.f32 %v309, %v309
      %v312 = vmul.f32 %v310, %v310
      %v313 = vsel %vm299, %v311, 0.0
      %314 = vadd.xlane.f32.xlu0 %v313
      %v315 = vpop.xlane.xlu0 %314
      %v316 = vsel %vm299, %v312, 0.0
      %317 = vadd.xlane.f32.xlu0 %v316
      %v318 = vpop.xlane.xlu0 %317
      %v319 = vmul.f32 %v315, %v306
      %v320 = vmul.f32 %v318, %v306
      %v321 = vadd.f32 %v319, 1e-05
      %v322 = vadd.f32 %v320, 1e-05
      %v323 = vrsqrt.pop %v321
      %v324 = vrsqrt.pop %v322
      %v325 = vmul.f32 %v309, %v323
      %v326 = vmul.f32 %v310, %v324
      %v327 = vld [vmem:[%s1] sm:$0x1]
      %v329 = vlaneseq
      %v330 = vshrl.u32 %v329, 7
      %v331 = vsub.s32 0, %v330
      %v332 = vrot.slane %v327, %v331
      %v334 = vmul.f32 %v325, %v332
      %v335 = vmul.f32 %v326, %v332
      %v336 = vld [vmem:[%s2] sm:$0x1]
      %v338 = vlaneseq
      %v339 = vshrl.u32 %v338, 7
      %v340 = vsub.s32 0, %v339
      %v341 = vrot.slane %v336, %v340
      %v343 = vadd.f32 %v334, %v341
      %v344 = vadd.f32 %v335, %v341
      %v345 = vpack.c.bf16 %v344, %v343
      %v346 = vld [vmem:[%s275] sm:$0xff]
      %v347 = vld [vmem:[%s275 + $0x8] sm:$0xff]
      %v348 = vld [vmem:[%s275 + $0x10] sm:$0xff]
      %v349 = vld [vmem:[%s275 + $0x18] sm:$0xff]
      %v350 = vld [vmem:[%s275 + $0x20] sm:$0xff]
      %v351 = vld [vmem:[%s275 + $0x28] sm:$0xff]
      %v352 = vld [vmem:[%s275 + $0x30] sm:$0xff]
      %v353 = vld [vmem:[%s275 + $0x38] sm:$0xff]
      %v354 = vld [vmem:[%s280] sm:$0x3]
      %v356 = vlaneseq
      %v357 = vshrl.u32 %v356, 7
      %v358 = vsub.s32 0, %v357
      %v359 = vrot.slane %v354, %v358
      %v360 = vlaneseq
      %v361 = vshrl.u32 %v360, 7
      %v362 = vsub.s32 1, %v361
      %v363 = vrot.slane %v354, %v362
      %v374 = vunpack.c.l.b16 %v346
      %v375 = vunpack.c.h.b16 %v346
      %v376 = vunpack.c.l.b16 %v347
      %v377 = vunpack.c.h.b16 %v347
      %v378 = vunpack.c.l.b16 %v348
      %v379 = vunpack.c.h.b16 %v348
      %v380 = vunpack.c.l.b16 %v349
      %v381 = vunpack.c.h.b16 %v349
      %v382 = vunpack.c.l.b16 %v350
      %v383 = vunpack.c.h.b16 %v350
      %v384 = vunpack.c.l.b16 %v351
      %v385 = vunpack.c.h.b16 %v351
      %v386 = vunpack.c.l.b16 %v352
      %v387 = vunpack.c.h.b16 %v352
      %v388 = vunpack.c.l.b16 %v353
      %v389 = vunpack.c.h.b16 %v353
      %v390 = vpack.c.b16 %v376, %v374
      %v391 = vpack.c.b16 %v377, %v375
      %v392 = vpack.c.b16 %v380, %v378
      %v393 = vpack.c.b16 %v381, %v379
      %v394 = vpack.c.b16 %v384, %v382
      %v395 = vpack.c.b16 %v385, %v383
      %v396 = vpack.c.b16 %v388, %v386
      %v397 = vpack.c.b16 %v389, %v387
      %v407 = vsel %vm299, %v345, 0
      %409 = vmatprep.subr.bf16.mxu0 0
      %410 = vmatpush1.bf16.msra.mxu0 0
      %411 = vmatprep.subr.bf16.mxu0 0
      %412 = vmatpush1.bf16.msra.mxu0 0
      %413 = vmatprep.subr.bf16.mxu0 0
      %414 = vmatpush1.bf16.msra.mxu0 0
      %415 = vmatprep.subr.bf16.mxu0 0
      %416 = vmatpush1.bf16.msra.mxu0 0
      %417 = vmatprep.subr.bf16.mxu0 %v397
      %418 = vmatpush1.bf16.msra.mxu0 %v396
      %419 = vmatprep.subr.bf16.mxu0 %v395
      %420 = vmatpush1.bf16.msra.mxu0 %v394
      %421 = vmatprep.subr.bf16.mxu0 %v393
      %422 = vmatpush1.bf16.msra.mxu0 %v392
      %423 = vmatprep.subr.bf16.mxu0 %v391
      %424 = vmatpush1.bf16.msra.mxu0 %v390
      %425 = vmatprep.subr.bf16.mxu0 0
      %426 = vmatpush2.bf16.msra.mxu0 0
      %427 = vmatprep.subr.bf16.mxu0 0
      %428 = vmatpush2.bf16.msra.mxu0 0
      %429 = vmatprep.subr.bf16.mxu0 0
      %430 = vmatpush2.bf16.msra.mxu0 0
      %431 = vmatprep.subr.bf16.mxu0 0
      %432 = vmatpush2.bf16.msra.mxu0 0
      %433 = vmatprep.subr.bf16.mxu0 0
      %434 = vmatpush2.bf16.msra.mxu0 0
      %435 = vmatprep.subr.bf16.mxu0 0
      %436 = vmatpush2.bf16.msra.mxu0 0
      %437 = vmatprep.subr.bf16.mxu0 0
      %438 = vmatpush2.bf16.msra.mxu0 0
      %439 = vmatprep.subr.bf16.mxu0 0
      %440 = vmatpush2.bf16.msra.mxu0 0
      %441 = vmatprep.mubr.bf16.mxu0 0
      %442 = vmatmul.mubr.bf16.gmra.mxu0 %v407
      %v443 = vpop.f32.mrf.mxu0
      %v444 = vadd.f32 %v359, %v443
      %v445 = vpop.f32.mrf.mxu0
      %v446 = vadd.f32 %v363, %v445
      %v447 = vpop.f32.mrf.mxu0
      %v448 = vadd.f32 %v359, %v447
      %v449 = vpop.f32.mrf.mxu0
      %v450 = vadd.f32 %v363, %v449
      %451 = vdwg.mxu0
      %v452 = vpack.c.bf16 %v448, %v444
      %v453 = vpack.c.bf16 %v450, %v446
      %v456 = vunpack.c.l.b16 %v452
      %v457 = vunpack.c.l.b16 %v453
      %v458 = vunpack.c.h.b16 %v452
      %v459 = vunpack.c.h.b16 %v453
      %v460 = vpack.c.b16 %v457, %v456
      %v461 = vpack.c.b16 %v459, %v458
      %vm464 = vcmask 1043456
      %vm465 = vcmask 523268
      %vm466 = vmor %vm465, %vm464
      %467 = vst.msk [vmem:[%s291] sm:$0xff] %vm466, %v460
      %468 = vst.msk [vmem:[%s291 + $0x8] sm:$0xff] %vm466, %v461
      %s469 = smul.u32 2, %s20
      %s470 = smul.u32 2, %s21
      %p471 = scmp.lt.s32.totalorder %s469, 3
      %s472 = scalar_select %p471, %s469, 3
      %p473 = scmp.lt.s32.totalorder %s470, 1
      %s474 = scalar_select %p473, %s470, 1
      %s475 = smul.addr %s472, 2
      %s476 = sadd.s32 %s474, %s475
      %s477 = smul.addr %s476, 4
      %s478 = scalar_lea.vmem %s5, %s477
      // Predicated region
      $region41: #{_lambda_.37} parent=39 // pred_check
        %p479 = pneg %p168
      $region42: #{_lambda_.37} parent=39 // pred_check_branch
        %481 = sbr.rel (%p479) target = $region44
      $region43: #{_lambda_.37} parent=39 // pred_region
        %s482 = smul.u32 2, %s20
        %s483 = smul.u32 2, %s21
      $region44: #{_lambda_.37} parent=39 // pred_fallthru
        _
    $region40: #{_lambda_.37} parent=5 // pred_fallthru
      _
    %p484 = scmp.le.s32.totalorder 2, %s11
    // Predicated region
    $region45: #{_lambda_.37} parent=5 // pred_check
      %p485 = pneg %p484
    $region46: #{_lambda_.37} parent=5 // pred_check_branch
      %487 = sbr.rel (%p485) target = $region48
    $region47: #{_lambda_.37} parent=5 // pred_region
      %s488 = ssub.s32 %s11, 2
      // Predicated region
      $region49: #{_lambda_.37} parent=47 // pred_check
        %p489 = pneg %p174
      $region50: #{_lambda_.37} parent=47 // pred_check_branch
        %491 = sbr.rel (%p489) target = $region52
      $region51: #{_lambda_.37} parent=47 // pred_region
        %s492 = smul.u32 2, %s22
        %s493 = smul.u32 2, %s23
        %p494 = scmp.lt.s32.totalorder %s492, 3
        %s495 = scalar_select %p494, %s492, 3
        %p496 = scmp.lt.s32.totalorder %s493, 1
        %s497 = scalar_select %p496, %s493, 1
        %s498 = smul.addr %s495, 2
        %s499 = sadd.s32 %s497, %s498
        %s500 = smul.addr %s499, 4
        %s501 = scalar_lea.vmem %s5, %s500
      $region52: #{_lambda_.37} parent=47 // pred_fallthru
        _
    $region48: #{_lambda_.37} parent=5 // pred_fallthru
      _
  $region6: #{_lambda_.37} parent=0 // loop_footer
    %s15 = sadd.s32 1, %s11
  $region7: #{_lambda_.37} parent=0 // loop_footer_branch
    %10 = sbr.rel target = $region3
  $region8: #{_lambda_.37} parent=0 // loop_exit
    _

// kernel: _lambda_.36
$region0: #{_lambda_.36}
  #allocation0 [shape = 'u32[]', space=smem, size = 0x4, offset = 0x4, fixed_abs, tag = 'smem constant byte address 0x4 - core index']
  #allocation1 [shape = 'u32[144,128]{1,0:T(1,128)}', space=vmem, size = 0x12000, scoped, tag = 'internal scratch']
  %s0 = inlined_call_operand.vmem [shape: bf16[32,128], index: 0, kind: input, shape index: {}]
  %s1 = inlined_call_operand.vmem [shape: f32[1,128], index: 1, kind: input, shape index: {}]
  %s2 = inlined_call_operand.vmem [shape: f32[1,128], index: 2, kind: input, shape index: {}]
  %s3 = inlined_call_operand.vmem [shape: bf16[128,64], index: 3, kind: input, shape index: {}]
  %s4 = inlined_call_operand.vmem [shape: f32[1,64], index: 4, kind: input, shape index: {}]
  %s5 = inlined_call_operand.vmem [shape: bf16[32,64], index: 5, kind: output, shape index: {}]
  %s6 = sld [smem:[#allocation0]]
  $region53: #{_lambda_.36} parent=0
    _
  %s8 = ssub.s32 1, %s6
  %s9 = scalar_select 0, %s8, %s6
  loop: start=0, step=1, limit=4
  $region2: #{_lambda_.36} parent=0 // loop_pre_header
    _
  $region3: #{_lambda_.36} parent=0 // loop_header
    %s11 = sphi 0, %s15
    %p12 = scmp.ge.s32.totalorder %s11, 4
    %s18 = sphi 0, %s30
    %s19 = sphi 0, %s26
    %s20 = sphi 0, %s18
    %s21 = sphi 0, %s19
    %s22 = sphi 0, %s20
    %s23 = sphi 0, %s21
    %s33 = sphi 0, %s35
    %s36 = sphi 0, %s33
    %s37 = sphi 0, %s36
    %s53 = sphi 0, %s37
    %s57 = sphi 0, %s57
    %s59 = sphi 0, %s57
    %s60 = sphi 0, %s59
    %s74 = sphi 0, %s60
    %s78 = sphi 0, %s78
    %s80 = sphi 0, %s78
    %s81 = sphi 0, %s80
    %s95 = sphi 0, %s81
    %s101 = sphi 0, %s103
    %s104 = sphi 0, %s101
    %s105 = sphi 0, %s104
    %s121 = sphi 0, %s105
    %s127 = sphi 0, %s129
    %s130 = sphi 0, %s127
    %s131 = sphi 0, %s130
    %s147 = sphi 0, %s131
    %s155 = sphi 0, %s157
    %s158 = sphi 0, %s155
    %s159 = sphi 0, %s158
    %s175 = sphi 0, %s159
  $region4: #{_lambda_.36} parent=0 // loop_header_branch
    %14 = sbr.rel (%p12) target = $region8
  $region5: #{_lambda_.36} parent=0 // loop_body
    %s16 = ssub.s32 %s11, 1
    %s17 = ssub.s32 %s11, 2
    %s24 = sadd.s32 1, %s19
    %p25 = scmp.ge.s32.totalorder %s24, 1
    %s26 = scalar_select %p25, 0, %s24
    %s27 = sadd.s32 1, %s18
    %s28 = scalar_select %p25, %s27, %s18
    %p29 = scmp.ge.s32.totalorder %s28, 2
    %s30 = scalar_select %p29, 0, %s28
    %s31 = ssub.s32 %s18, %s30
    %p32 = scmp.eq.s32.totalorder %s31, 0
    %s34 = sadd.s32 %s33, 1
    %s35 = scalar_select %p32, %s33, %s34
    %p38 = pneg %p32
    %p39 = scmp.eq.s32.totalorder %s11, 1
    %p40 = por %p38, %p39
    %p41 = scmp.ne.s32.totalorder %s33, %s36
    %p42 = scmp.eq.s32.totalorder %s11, 0
    %p43 = por %p41, %p42
    %p44 = scmp.ne.s32.totalorder %s33, %s36
    %p45 = scmp.eq.s32.totalorder %s16, 1
    %p46 = por %p44, %p45
    %p47 = scmp.ne.s32.totalorder %s36, %s37
    %p48 = scmp.eq.s32.totalorder %s16, 0
    %p49 = por %p47, %p48
    %p50 = scmp.ne.s32.totalorder %s36, %s37
    %p51 = scmp.eq.s32.totalorder %s17, 1
    %p52 = por %p50, %p51
    %p54 = scmp.ne.s32.totalorder %s37, %s53
    %p55 = scmp.eq.s32.totalorder %s17, 0
    %p56 = por %p54, %p55
    %s58 = sadd.s32 %s57, 1
    %p61 = scmp.eq.s32.totalorder %s11, 1
    %p62 = scmp.ne.s32.totalorder %s57, %s59
    %p63 = scmp.eq.s32.totalorder %s11, 0
    %p64 = por %p62, %p63
    %p65 = scmp.ne.s32.totalorder %s57, %s59
    %p66 = scmp.eq.s32.totalorder %s16, 1
    %p67 = por %p65, %p66
    %p68 = scmp.ne.s32.totalorder %s59, %s60
    %p69 = scmp.eq.s32.totalorder %s16, 0
    %p70 = por %p68, %p69
    %p71 = scmp.ne.s32.totalorder %s59, %s60
    %p72 = scmp.eq.s32.totalorder %s17, 1
    %p73 = por %p71, %p72
    %p75 = scmp.ne.s32.totalorder %s60, %s74
    %p76 = scmp.eq.s32.totalorder %s17, 0
    %p77 = por %p75, %p76
    %s79 = sadd.s32 %s78, 1
    %p82 = scmp.eq.s32.totalorder %s11, 1
    %p83 = scmp.ne.s32.totalorder %s78, %s80
    %p84 = scmp.eq.s32.totalorder %s11, 0
    %p85 = por %p83, %p84
    %p86 = scmp.ne.s32.totalorder %s78, %s80
    %p87 = scmp.eq.s32.totalorder %s16, 1
    %p88 = por %p86, %p87
    %p89 = scmp.ne.s32.totalorder %s80, %s81
    %p90 = scmp.eq.s32.totalorder %s16, 0
    %p91 = por %p89, %p90
    %p92 = scmp.ne.s32.totalorder %s80, %s81
    %p93 = scmp.eq.s32.totalorder %s17, 1
    %p94 = por %p92, %p93
    %p96 = scmp.ne.s32.totalorder %s81, %s95
    %p97 = scmp.eq.s32.totalorder %s17, 0
    %p98 = por %p96, %p97
    %s99 = ssub.s32 %s19, %s26
    %p100 = scmp.eq.s32.totalorder %s99, 0
    %s102 = sadd.s32 %s101, 1
    %s103 = scalar_select %p100, %s101, %s102
    %p106 = pneg %p100
    %p107 = scmp.eq.s32.totalorder %s11, 1
    %p108 = por %p106, %p107
    %p109 = scmp.ne.s32.totalorder %s101, %s104
    %p110 = scmp.eq.s32.totalorder %s11, 0
    %p111 = por %p109, %p110
    %p112 = scmp.ne.s32.totalorder %s101, %s104
    %p113 = scmp.eq.s32.totalorder %s16, 1
    %p114 = por %p112, %p113
    %p115 = scmp.ne.s32.totalorder %s104, %s105
    %p116 = scmp.eq.s32.totalorder %s16, 0
    %p117 = por %p115, %p116
    %p118 = scmp.ne.s32.totalorder %s104, %s105
    %p119 = scmp.eq.s32.totalorder %s17, 1
    %p120 = por %p118, %p119
    %p122 = scmp.ne.s32.totalorder %s105, %s121
    %p123 = scmp.eq.s32.totalorder %s17, 0
    %p124 = por %p122, %p123
    %s125 = ssub.s32 %s19, %s26
    %p126 = scmp.eq.s32.totalorder %s125, 0
    %s128 = sadd.s32 %s127, 1
    %s129 = scalar_select %p126, %s127, %s128
    %p132 = pneg %p126
    %p133 = scmp.eq.s32.totalorder %s11, 1
    %p134 = por %p132, %p133
    %p135 = scmp.ne.s32.totalorder %s127, %s130
    %p136 = scmp.eq.s32.totalorder %s11, 0
    %p137 = por %p135, %p136
    %p138 = scmp.ne.s32.totalorder %s127, %s130
    %p139 = scmp.eq.s32.totalorder %s16, 1
    %p140 = por %p138, %p139
    %p141 = scmp.ne.s32.totalorder %s130, %s131
    %p142 = scmp.eq.s32.totalorder %s16, 0
    %p143 = por %p141, %p142
    %p144 = scmp.ne.s32.totalorder %s130, %s131
    %p145 = scmp.eq.s32.totalorder %s17, 1
    %p146 = por %p144, %p145
    %p148 = scmp.ne.s32.totalorder %s131, %s147
    %p149 = scmp.eq.s32.totalorder %s17, 0
    %p150 = por %p148, %p149
    %s151 = ssub.s32 %s18, %s30
    %s152 = ssub.s32 %s19, %s26
    %s153 = sor.u32 %s151, %s152
    %p154 = scmp.eq.s32.totalorder %s153, 0
    %s156 = sadd.s32 %s155, 1
    %s157 = scalar_select %p154, %s155, %s156
    %p160 = pneg %p154
    %p161 = scmp.eq.s32.totalorder %s11, 1
    %p162 = por %p160, %p161
    %p163 = scmp.ne.s32.totalorder %s155, %s158
    %p164 = scmp.eq.s32.totalorder %s11, 0
    %p165 = por %p163, %p164
    %p166 = scmp.ne.s32.totalorder %s155, %s158
    %p167 = scmp.eq.s32.totalorder %s16, 1
    %p168 = por %p166, %p167
    %p169 = scmp.ne.s32.totalorder %s158, %s159
    %p170 = scmp.eq.s32.totalorder %s16, 0
    %p171 = por %p169, %p170
    %p172 = scmp.ne.s32.totalorder %s158, %s159
    %p173 = scmp.eq.s32.totalorder %s17, 1
    %p174 = por %p172, %p173
    %p176 = scmp.ne.s32.totalorder %s159, %s175
    %p177 = scmp.eq.s32.totalorder %s17, 0
    %p178 = por %p176, %p177
    %p179 = scmp.le.s32.totalorder 1, %s11
    %p180 = scmp.lt.s32.totalorder %s11, 3
    %p181 = pnand %p179, %p180
    %p182 = pneg %p181
    // Predicated region
    $region9: #{_lambda_.36} parent=5 // pred_check
      _
    $region10: #{_lambda_.36} parent=5 // pred_check_branch
      %184 = sbr.rel (%p181) target = $region12
    $region11: #{_lambda_.36} parent=5 // pred_region
      %s185 = ssub.s32 %s11, 1
      // Predicated region
      $region13: #{_lambda_.36} parent=11 // pred_check
        %p186 = pneg %p70
      $region14: #{_lambda_.36} parent=11 // pred_check_branch
        %188 = sbr.rel (%p186) target = $region16
      $region15: #{_lambda_.36} parent=11 // pred_region
        _
      $region16: #{_lambda_.36} parent=11 // pred_fallthru
        _
      // Predicated region
      $region17: #{_lambda_.36} parent=11 // pred_check
        %p189 = pneg %p91
      $region18: #{_lambda_.36} parent=11 // pred_check_branch
        %191 = sbr.rel (%p189) target = $region20
      $region19: #{_lambda_.36} parent=11 // pred_region
        _
      $region20: #{_lambda_.36} parent=11 // pred_fallthru
        _
      // Predicated region
      $region21: #{_lambda_.36} parent=11 // pred_check
        %p192 = pneg %p117
      $region22: #{_lambda_.36} parent=11 // pred_check_branch
        %194 = sbr.rel (%p192) target = $region24
      $region23: #{_lambda_.36} parent=11 // pred_region
        %p195 = scmp.lt.s32.totalorder %s21, 0
        %s196 = scalar_select %p195, %s21, 0
        %s197 = smul.addr %s196, 4
        %s198 = scalar_lea.vmem %s3, %s197
      $region24: #{_lambda_.36} parent=11 // pred_fallthru
        _
      // Predicated region
      $region25: #{_lambda_.36} parent=11 // pred_check
        %p199 = pneg %p143
      $region26: #{_lambda_.36} parent=11 // pred_check_branch
        %201 = sbr.rel (%p199) target = $region28
      $region27: #{_lambda_.36} parent=11 // pred_region
        %p202 = scmp.lt.s32.totalorder %s21, 0
        %s203 = scalar_select %p202, %s21, 0
        %s204 = scalar_lea.vmem %s4, %s203
      $region28: #{_lambda_.36} parent=11 // pred_fallthru
        _
    $region12: #{_lambda_.36} parent=5 // pred_fallthru
      _
    %p205 = scmp.lt.s32.totalorder %s11, 2
    // Predicated region
    $region29: #{_lambda_.36} parent=5 // pred_check
      %p206 = pneg %p205
    $region30: #{_lambda_.36} parent=5 // pred_check_branch
      %208 = sbr.rel (%p206) target = $region32
    $region31: #{_lambda_.36} parent=5 // pred_region
      // Predicated region
      $region33: #{_lambda_.36} parent=31 // pred_check
        %p209 = pneg %p43
      $region34: #{_lambda_.36} parent=31 // pred_check_branch
        %211 = sbr.rel (%p209) target = $region36
      $region35: #{_lambda_.36} parent=31 // pred_region
        %s212 = smul.u32 2, %s18
        %p213 = scmp.lt.s32.totalorder %s212, 3
        %s214 = scalar_select %p213, %s212, 3
        %s215 = smul.addr %s214, 4
        %s216 = scalar_lea.vmem %s0, %s215
        %s217 = smul.u32 2, %s18
      $region36: #{_lambda_.36} parent=31 // pred_fallthru
        _
    $region32: #{_lambda_.36} parent=5 // pred_fallthru
      _
    %p218 = scmp.le.s32.totalorder 1, %s11
    %p219 = scmp.lt.s32.totalorder %s11, 3
    %p220 = pnand %p218, %p219
    %p221 = pneg %p220
    // Predicated region
    $region37: #{_lambda_.36} parent=5 // pred_check
      _
    $region38: #{_lambda_.36} parent=5 // pred_check_branch
      %223 = sbr.rel (%p220) target = $region40
    $region39: #{_lambda_.36} parent=5 // pred_region
      %s224 = ssub.s32 %s11, 1
      %s225 = smul.u32 2, %s20
      %p226 = scmp.lt.s32.totalorder %s225, 3
      %s227 = scalar_select %p226, %s225, 3
      %s228 = smul.addr %s227, 4
      %s229 = scalar_lea.vmem %s0, %s228
      %p230 = pneg %p49
      %p231 = pneg %p46
      %p232 = pneg %p70
      %p233 = pneg %p67
      %p234 = pneg %p91
      %p235 = pneg %p88
      %p236 = scmp.lt.s32.totalorder %s21, 0
      %s237 = scalar_select %p236, %s21, 0
      %s238 = smul.addr %s237, 4
      %s239 = scalar_lea.vmem %s3, %s238
      %p240 = pneg %p117
      %p241 = pneg %p114
      %p242 = scmp.lt.s32.totalorder %s21, 0
      %s243 = scalar_select %p242, %s21, 0
      %s244 = scalar_lea.vmem %s4, %s243
      %p245 = pneg %p143
      %p246 = pneg %p140
      %p247 = pneg %p171
      %p248 = pneg %p168
      %s249 = smul.u32 2, %s20
      %p250 = scmp.lt.s32.totalorder %s249, 3
      %s251 = scalar_select %p250, %s249, 3
      %p252 = scmp.lt.s32.totalorder %s21, 0
      %s253 = scalar_select %p252, %s21, 0
      %s254 = sadd.s32 %s253, %s251
      %s255 = smul.addr %s254, 4
      %s256 = scalar_lea.vmem %s5, %s255
      %s257 = smul.u32 2, %s20
      %p258 = scmp.lt.s32.totalorder %s257, 3
      %s259 = scalar_select %p258, %s257, 3
      %s260 = smul.addr %s259, 4
      %s261 = scalar_lea.vmem %s0, %s260
      %s262 = smul.u32 2, %s20
      %p263 = scmp.lt.s32.totalorder %s21, 0
      %s264 = scalar_select %p263, %s21, 0
      %s265 = smul.addr %s264, 4
      %s266 = scalar_lea.vmem %s3, %s265
      %p267 = scmp.lt.s32.totalorder %s21, 0
      %s268 = scalar_select %p267, %s21, 0
      %s269 = scalar_lea.vmem %s4, %s268
      %s270 = smul.u32 2, %s20
      %p271 = scmp.lt.s32.totalorder %s270, 3
      %s272 = scalar_select %p271, %s270, 3
      %p273 = scmp.lt.s32.totalorder %s21, 0
      %s274 = scalar_select %p273, %s21, 0
      %s275 = sadd.s32 %s274, %s272
      %s276 = smul.addr %s275, 4
      %s277 = scalar_lea.vmem %s5, %s276
      %s278 = smul.u32 2, %s20
      %v280 = vld [vmem:[%s261] sm:$0xf]
      %v281 = vld [vmem:[%s261 + $0x4] sm:$0xf]
      %v282 = vunpack.c.l.bf16 %v280
      %v283 = vunpack.c.l.bf16 %v281
      %284 = vadd.xlane.f32.xlu0 %v282
      %v285 = vpop.xlane.xlu0 %284
      %286 = vadd.xlane.f32.xlu0 %v283
      %v287 = vpop.xlane.xlu0 %286
      %v288 = vrcp.pop 128.0
      %v289 = vmul.f32 %v285, %v288
      %v290 = vmul.f32 %v287, %v288
      %v291 = vsub.f32 %v282, %v289
      %v292 = vsub.f32 %v283, %v290
      %v293 = vmul.f32 %v291, %v291
      %v294 = vmul.f32 %v292, %v292
      %295 = vadd.xlane.f32.xlu0 %v293
      %v296 = vpop.xlane.xlu0 %295
      %297 = vadd.xlane.f32.xlu0 %v294
      %v298 = vpop.xlane.xlu0 %297
      %v299 = vmul.f32 %v296, %v288
      %v300 = vmul.f32 %v298, %v288
      %v301 = vadd.f32 %v299, 1e-05
      %v302 = vadd.f32 %v300, 1e-05
      %v303 = vrsqrt.pop %v301
      %v304 = vrsqrt.pop %v302
      %v305 = vmul.f32 %v291, %v303
      %v306 = vmul.f32 %v292, %v304
      %v307 = vld [vmem:[%s1] sm:$0x1]
      %v309 = vlaneseq
      %v310 = vshrl.u32 %v309, 7
      %v311 = vsub.s32 0, %v310
      %v312 = vrot.slane %v307, %v311
      %v314 = vmul.f32 %v305, %v312
      %v315 = vmul.f32 %v306, %v312
      %v316 = vld [vmem:[%s2] sm:$0x1]
      %v318 = vlaneseq
      %v319 = vshrl.u32 %v318, 7
      %v320 = vsub.s32 0, %v319
      %v321 = vrot.slane %v316, %v320
      %v323 = vadd.f32 %v314, %v321
      %v324 = vadd.f32 %v315, %v321
      %v325 = vpack.c.bf16 %v324, %v323
      %v326 = vld [vmem:[%s266] sm:$0xf]
      %v327 = vld [vmem:[%s266 + $0x4] sm:$0xf]
      %v328 = vld [vmem:[%s266 + $0x8] sm:$0xf]
      %v329 = vld [vmem:[%s266 + $0xc] sm:$0xf]
      %v330 = vld [vmem:[%s266 + $0x10] sm:$0xf]
      %v331 = vld [vmem:[%s266 + $0x14] sm:$0xf]
      %v332 = vld [vmem:[%s266 + $0x18] sm:$0xf]
      %v333 = vld [vmem:[%s266 + $0x1c] sm:$0xf]
      %v334 = vld [vmem:[%s266 + $0x20] sm:$0xf]
      %v335 = vld [vmem:[%s266 + $0x24] sm:$0xf]
      %v336 = vld [vmem:[%s266 + $0x28] sm:$0xf]
      %v337 = vld [vmem:[%s266 + $0x2c] sm:$0xf]
      %v338 = vld [vmem:[%s266 + $0x30] sm:$0xf]
      %v339 = vld [vmem:[%s266 + $0x34] sm:$0xf]
      %v340 = vld [vmem:[%s266 + $0x38] sm:$0xf]
      %v341 = vld [vmem:[%s266 + $0x3c] sm:$0xf]
      %v342 = vld [vmem:[%s269] sm:$0x1]
      %v344 = vlaneseq
      %v345 = vshrl.u32 %v344, 7
      %v346 = vsub.s32 0, %v345
      %v347 = vrot.slane %v342, %v346
      %v365 = vunpack.c.l.b16 %v326
      %v366 = vunpack.c.l.b16 %v327
      %v367 = vunpack.c.l.b16 %v328
      %v368 = vunpack.c.l.b16 %v329
      %v369 = vunpack.c.l.b16 %v330
      %v370 = vunpack.c.l.b16 %v331
      %v371 = vunpack.c.l.b16 %v332
      %v372 = vunpack.c.l.b16 %v333
      %v373 = vunpack.c.l.b16 %v334
      %v374 = vunpack.c.l.b16 %v335
      %v375 = vunpack.c.l.b16 %v336
      %v376 = vunpack.c.l.b16 %v337
      %v377 = vunpack.c.l.b16 %v338
      %v378 = vunpack.c.l.b16 %v339
      %v379 = vunpack.c.l.b16 %v340
      %v380 = vunpack.c.l.b16 %v341
      %v381 = vpack.c.b16 %v366, %v365
      %v382 = vpack.c.b16 %v368, %v367
      %v383 = vpack.c.b16 %v370, %v369
      %v384 = vpack.c.b16 %v372, %v371
      %v385 = vpack.c.b16 %v374, %v373
      %v386 = vpack.c.b16 %v376, %v375
      %v387 = vpack.c.b16 %v378, %v377
      %v388 = vpack.c.b16 %v380, %v379
      %397 = vmatprep.subr.bf16.mxu0 0
      %398 = vmatpush1.bf16.msra.mxu0 %v388
      %399 = vmatprep.subr.bf16.mxu0 0
      %400 = vmatpush1.bf16.msra.mxu0 %v387
      %401 = vmatprep.subr.bf16.mxu0 0
      %402 = vmatpush1.bf16.msra.mxu0 %v386
      %403 = vmatprep.subr.bf16.mxu0 0
      %404 = vmatpush1.bf16.msra.mxu0 %v385
      %405 = vmatprep.subr.bf16.mxu0 0
      %406 = vmatpush1.bf16.msra.mxu0 %v384
      %407 = vmatprep.subr.bf16.mxu0 0
      %408 = vmatpush1.bf16.msra.mxu0 %v383
      %409 = vmatprep.subr.bf16.mxu0 0
      %410 = vmatpush1.bf16.msra.mxu0 %v382
      %411 = vmatprep.subr.bf16.mxu0 0
      %412 = vmatpush1.bf16.msra.mxu0 %v381
      %413 = vmatprep.subr.bf16.mxu0 0
      %414 = vmatpush2.bf16.msra.mxu0 0
      %415 = vmatprep.subr.bf16.mxu0 0
      %416 = vmatpush2.bf16.msra.mxu0 0
      %417 = vmatprep.subr.bf16.mxu0 0
      %418 = vmatpush2.bf16.msra.mxu0 0
      %419 = vmatprep.subr.bf16.mxu0 0
      %420 = vmatpush2.bf16.msra.mxu0 0
      %421 = vmatprep.subr.bf16.mxu0 0
      %422 = vmatpush2.bf16.msra.mxu0 0
      %423 = vmatprep.subr.bf16.mxu0 0
      %424 = vmatpush2.bf16.msra.mxu0 0
      %425 = vmatprep.subr.bf16.mxu0 0
      %426 = vmatpush2.bf16.msra.mxu0 0
      %427 = vmatprep.subr.bf16.mxu0 0
      %428 = vmatpush2.bf16.msra.mxu0 0
      %429 = vmatprep.mubr.bf16.mxu0 0
      %430 = vmatmul.mubr.bf16.gmra.mxu0 %v325
      %v431 = vpop.f32.mrf.mxu0
      %v432 = vadd.f32 %v347, %v431
      %v433 = vpop.f32.mrf.mxu0
      %v434 = vpop.f32.mrf.mxu0
      %v435 = vadd.f32 %v347, %v434
      %v436 = vpop.f32.mrf.mxu0
      %437 = vdwg.mxu0
      %v438 = vpack.c.bf16 %v435, %v432
      %v440 = vunpack.c.l.b16 %v438
      %v441 = vunpack.c.h.b16 %v438
      %v442 = vpack.c.b16 %v440, %v440
      %v443 = vpack.c.b16 %v441, %v441
      %vm446 = vcmask 519168
      %447 = vst.msk [vmem:[%s277] sm:$0xf] %vm446, %v442
      %448 = vst.msk [vmem:[%s277 + $0x4] sm:$0xf] %vm446, %v443
      %s449 = smul.u32 2, %s20
      %p450 = scmp.lt.s32.totalorder %s449, 3
      %s451 = scalar_select %p450, %s449, 3
      %p452 = scmp.lt.s32.totalorder %s21, 0
      %s453 = scalar_select %p452, %s21, 0
      %s454 = sadd.s32 %s453, %s451
      %s455 = smul.addr %s454, 4
      %s456 = scalar_lea.vmem %s5, %s455
      // Predicated region
      $region41: #{_lambda_.36} parent=39 // pred_check
        %p457 = pneg %p168
      $region42: #{_lambda_.36} parent=39 // pred_check_branch
        %459 = sbr.rel (%p457) target = $region44
      $region43: #{_lambda_.36} parent=39 // pred_region
        %s460 = smul.u32 2, %s20
      $region44: #{_lambda_.36} parent=39 // pred_fallthru
        _
    $region40: #{_lambda_.36} parent=5 // pred_fallthru
      _
    %p461 = scmp.le.s32.totalorder 2, %s11
    // Predicated region
    $region45: #{_lambda_.36} parent=5 // pred_check
      %p462 = pneg %p461
    $region46: #{_lambda_.36} parent=5 // pred_check_branch
      %464 = sbr.rel (%p462) target = $region48
    $region47: #{_lambda_.36} parent=5 // pred_region
      %s465 = ssub.s32 %s11, 2
      // Predicated region
      $region49: #{_lambda_.36} parent=47 // pred_check
        %p466 = pneg %p174
      $region50: #{_lambda_.36} parent=47 // pred_check_branch
        %468 = sbr.rel (%p466) target = $region52
      $region51: #{_lambda_.36} parent=47 // pred_region
        %s469 = smul.u32 2, %s22
        %p470 = scmp.lt.s32.totalorder %s469, 3
        %s471 = scalar_select %p470, %s469, 3
        %p472 = scmp.lt.s32.totalorder %s23, 0
        %s473 = scalar_select %p472, %s23, 0
        %s474 = sadd.s32 %s473, %s471
        %s475 = smul.addr %s474, 4
        %s476 = scalar_lea.vmem %s5, %s475
      $region52: #{_lambda_.36} parent=47 // pred_fallthru
        _
    $region48: #{_lambda_.36} parent=5 // pred_fallthru
      _
  $region6: #{_lambda_.36} parent=0 // loop_footer
    %s15 = sadd.s32 1, %s11
  $region7: #{_lambda_.36} parent=0 // loop_footer_branch
    %10 = sbr.rel target = $region3
  $region8: #{_lambda_.36} parent=0 // loop_exit
    _

// kernel: _lambda_.38
$region0: #{_lambda_.38}
  #allocation0 [shape = 'u32[]', space=smem, size = 0x4, offset = 0x4, fixed_abs, tag = 'smem constant byte address 0x4 - core index']
  #allocation1 [shape = 'u32[144,128]{1,0:T(1,128)}', space=vmem, size = 0x12000, scoped, tag = 'internal scratch']
  %s0 = inlined_call_operand.vmem [shape: bf16[2,16,192], index: 0, kind: input, shape index: {}]
  %s1 = inlined_call_operand.vmem [shape: f32[4,16,16], index: 1, kind: input, shape index: {}]
  %s2 = inlined_call_operand.vmem [shape: bf16[2,16,64], index: 2, kind: output, shape index: {}]
  %s3 = sld [smem:[#allocation0]]
  $region41: #{_lambda_.38} parent=0
    _
  %s5 = ssub.s32 1, %s3
  %s6 = scalar_select 0, %s5, %s3
  loop: start=0, step=1, limit=4
  $region2: #{_lambda_.38} parent=0 // loop_pre_header
    _
  $region3: #{_lambda_.38} parent=0 // loop_header
    %s8 = sphi 0, %s12
    %p9 = scmp.ge.s32.totalorder %s8, 4
    %s18 = sphi 0, %s20
    %s21 = sphi 0, %s18
    %s22 = sphi 0, %s21
    %s38 = sphi 0, %s22
    %s42 = sphi 0, %s42
    %s44 = sphi 0, %s42
    %s45 = sphi 0, %s44
    %s59 = sphi 0, %s45
    %s65 = sphi 0, %s67
    %s68 = sphi 0, %s65
    %s69 = sphi 0, %s68
    %s85 = sphi 0, %s69
  $region4: #{_lambda_.38} parent=0 // loop_header_branch
    %11 = sbr.rel (%p9) target = $region8
  $region5: #{_lambda_.38} parent=0 // loop_body
    %s13 = ssub.s32 %s8, 1
    %s14 = ssub.s32 %s8, 2
    %s15 = sadd.s32 %s8, 1
    %s16 = ssub.s32 %s8, %s15
    %p17 = scmp.eq.s32.totalorder %s16, 0
    %s19 = sadd.s32 %s18, 1
    %s20 = scalar_select %p17, %s18, %s19
    %p23 = pneg %p17
    %p24 = scmp.eq.s32.totalorder %s8, 1
    %p25 = por %p23, %p24
    %p26 = scmp.ne.s32.totalorder %s18, %s21
    %p27 = scmp.eq.s32.totalorder %s8, 0
    %p28 = por %p26, %p27
    %p29 = scmp.ne.s32.totalorder %s18, %s21
    %p30 = scmp.eq.s32.totalorder %s13, 1
    %p31 = por %p29, %p30
    %p32 = scmp.ne.s32.totalorder %s21, %s22
    %p33 = scmp.eq.s32.totalorder %s13, 0
    %p34 = por %p32, %p33
    %p35 = scmp.ne.s32.totalorder %s21, %s22
    %p36 = scmp.eq.s32.totalorder %s14, 1
    %p37 = por %p35, %p36
    %p39 = scmp.ne.s32.totalorder %s22, %s38
    %p40 = scmp.eq.s32.totalorder %s14, 0
    %p41 = por %p39, %p40
    %s43 = sadd.s32 %s42, 1
    %p46 = scmp.eq.s32.totalorder %s8, 1
    %p47 = scmp.ne.s32.totalorder %s42, %s44
    %p48 = scmp.eq.s32.totalorder %s8, 0
    %p49 = por %p47, %p48
    %p50 = scmp.ne.s32.totalorder %s42, %s44
    %p51 = scmp.eq.s32.totalorder %s13, 1
    %p52 = por %p50, %p51
    %p53 = scmp.ne.s32.totalorder %s44, %s45
    %p54 = scmp.eq.s32.totalorder %s13, 0
    %p55 = por %p53, %p54
    %p56 = scmp.ne.s32.totalorder %s44, %s45
    %p57 = scmp.eq.s32.totalorder %s14, 1
    %p58 = por %p56, %p57
    %p60 = scmp.ne.s32.totalorder %s45, %s59
    %p61 = scmp.eq.s32.totalorder %s14, 0
    %p62 = por %p60, %p61
    %s63 = ssub.s32 %s8, %s15
    %p64 = scmp.eq.s32.totalorder %s63, 0
    %s66 = sadd.s32 %s65, 1
    %s67 = scalar_select %p64, %s65, %s66
    %p70 = pneg %p64
    %p71 = scmp.eq.s32.totalorder %s8, 1
    %p72 = por %p70, %p71
    %p73 = scmp.ne.s32.totalorder %s65, %s68
    %p74 = scmp.eq.s32.totalorder %s8, 0
    %p75 = por %p73, %p74
    %p76 = scmp.ne.s32.totalorder %s65, %s68
    %p77 = scmp.eq.s32.totalorder %s13, 1
    %p78 = por %p76, %p77
    %p79 = scmp.ne.s32.totalorder %s68, %s69
    %p80 = scmp.eq.s32.totalorder %s13, 0
    %p81 = por %p79, %p80
    %p82 = scmp.ne.s32.totalorder %s68, %s69
    %p83 = scmp.eq.s32.totalorder %s14, 1
    %p84 = por %p82, %p83
    %p86 = scmp.ne.s32.totalorder %s69, %s85
    %p87 = scmp.eq.s32.totalorder %s14, 0
    %p88 = por %p86, %p87
    %p89 = scmp.le.s32.totalorder 1, %s8
    %p90 = scmp.lt.s32.totalorder %s8, 3
    %p91 = pnand %p89, %p90
    %p92 = pneg %p91
    // Predicated region
    $region9: #{_lambda_.38} parent=5 // pred_check
      _
    $region10: #{_lambda_.38} parent=5 // pred_check_branch
      %94 = sbr.rel (%p91) target = $region12
    $region11: #{_lambda_.38} parent=5 // pred_region
      %s95 = ssub.s32 %s8, 1
      // Predicated region
      $region13: #{_lambda_.38} parent=11 // pred_check
        %p96 = pneg %p55
      $region14: #{_lambda_.38} parent=11 // pred_check_branch
        %98 = sbr.rel (%p96) target = $region16
      $region15: #{_lambda_.38} parent=11 // pred_region
        _
      $region16: #{_lambda_.38} parent=11 // pred_fallthru
        _
    $region12: #{_lambda_.38} parent=5 // pred_fallthru
      _
    %p99 = scmp.lt.s32.totalorder %s8, 2
    // Predicated region
    $region17: #{_lambda_.38} parent=5 // pred_check
      %p100 = pneg %p99
    $region18: #{_lambda_.38} parent=5 // pred_check_branch
      %102 = sbr.rel (%p100) target = $region20
    $region19: #{_lambda_.38} parent=5 // pred_region
      // Predicated region
      $region21: #{_lambda_.38} parent=19 // pred_check
        %p103 = pneg %p28
      $region22: #{_lambda_.38} parent=19 // pred_check_branch
        %105 = sbr.rel (%p103) target = $region24
      $region23: #{_lambda_.38} parent=19 // pred_region
        %p106 = scmp.lt.s32.totalorder %s8, 1
        %s107 = scalar_select %p106, %s8, 1
        %s108 = smul.addr %s107, 4
        %s109 = smul.addr %s108, 4
        %s110 = scalar_lea.vmem %s0, %s109
      $region24: #{_lambda_.38} parent=19 // pred_fallthru
        _
    $region20: #{_lambda_.38} parent=5 // pred_fallthru
      _
    %p111 = scmp.le.s32.totalorder 1, %s8
    %p112 = scmp.lt.s32.totalorder %s8, 3
    %p113 = pnand %p111, %p112
    %p114 = pneg %p113
    // Predicated region
    $region25: #{_lambda_.38} parent=5 // pred_check
      _
    $region26: #{_lambda_.38} parent=5 // pred_check_branch
      %116 = sbr.rel (%p113) target = $region28
    $region27: #{_lambda_.38} parent=5 // pred_region
      %s117 = ssub.s32 %s8, 1
      %p118 = scmp.lt.s32.totalorder %s13, 1
      %s119 = scalar_select %p118, %s13, 1
      %s120 = smul.addr %s119, 4
      %s121 = smul.addr %s120, 4
      %s122 = scalar_lea.vmem %s0, %s121
      %p123 = pneg %p34
      %p124 = pneg %p31
      %p125 = pneg %p55
      %p126 = pneg %p52
      %p127 = pneg %p81
      %p128 = pneg %p78
      %p129 = scmp.lt.s32.totalorder %s13, 1
      %s130 = scalar_select %p129, %s13, 1
      %s131 = smul.addr %s130, 2
      %s132 = smul.addr %s131, 4
      %s133 = scalar_lea.vmem %s2, %s132
      %p134 = scmp.lt.s32.totalorder %s13, 1
      %s135 = scalar_select %p134, %s13, 1
      %s136 = smul.addr %s135, 4
      %s137 = smul.addr %s136, 4
      %s138 = scalar_lea.vmem %s0, %s137
      %p139 = scmp.lt.s32.totalorder %s13, 1
      %s140 = scalar_select %p139, %s13, 1
      %s141 = smul.addr %s140, 2
      %s142 = smul.addr %s141, 4
      %s143 = scalar_lea.vmem %s2, %s142
      %v145 = vld [vmem:[%s138] sm:$0xf]
      %v146 = vld [vmem:[%s138 + $0x8] sm:$0xf]
      %v147 = vld [vmem:[%s138 + $0x4] sm:$0xf]
      %v148 = vld [vmem:[%s138 + $0xc] sm:$0xf]
      %v151 = vunpack.c.l.b16 %v145
      %v152 = vunpack.c.l.b16 %v146
      %v153 = vpack.c.b16 %v152, %v151
      %154 = vrot.lane.b32.xlu0 %v153, 64
      %v155 = vpop.permute.xlu0 %154
      %vm156 = vcmask 130048
      %v158 = vsel %vm156, %v153, 0
      %v161 = vsel %vm156, %v155, 0
      %163 = vmatprep.subr.bf16.mxu0 0
      %164 = vmatpush1.bf16.xpose.msra.mxu0 0
      %165 = vmatprep.subr.bf16.mxu0 0
      %166 = vmatpush1.bf16.xpose.msra.mxu0 0
      %167 = vmatprep.subr.bf16.mxu0 0
      %168 = vmatpush1.bf16.xpose.msra.mxu0 0
      %169 = vmatprep.subr.bf16.mxu0 0
      %170 = vmatpush1.bf16.xpose.msra.mxu0 0
      %171 = vmatprep.subr.bf16.mxu0 0
      %172 = vmatpush1.bf16.xpose.msra.mxu0 0
      %173 = vmatprep.subr.bf16.mxu0 0
      %174 = vmatpush1.bf16.xpose.msra.mxu0 0
      %175 = vmatprep.subr.bf16.mxu0 0
      %176 = vmatpush1.bf16.xpose.msra.mxu0 0
      %177 = vmatprep.subr.bf16.mxu0 0
      %178 = vmatpush1.bf16.xpose.msra.mxu0 %v161
      %179 = vmatprep.subr.bf16.mxu0 0
      %180 = vmatpush2.bf16.xpose.msra.mxu0 0
      %181 = vmatprep.subr.bf16.mxu0 0
      %182 = vmatpush2.bf16.xpose.msra.mxu0 0
      %183 = vmatprep.subr.bf16.mxu0 0
      %184 = vmatpush2.bf16.xpose.msra.mxu0 0
      %185 = vmatprep.subr.bf16.mxu0 0
      %186 = vmatpush2.bf16.xpose.msra.mxu0 0
      %187 = vmatprep.subr.bf16.mxu0 0
      %188 = vmatpush2.bf16.xpose.msra.mxu0 0
      %189 = vmatprep.subr.bf16.mxu0 0
      %190 = vmatpush2.bf16.xpose.msra.mxu0 0
      %191 = vmatprep.subr.bf16.mxu0 0
      %192 = vmatpush2.bf16.xpose.msra.mxu0 0
      %193 = vmatprep.subr.bf16.mxu0 0
      %194 = vmatpush2.bf16.xpose.msra.mxu0 0
      %195 = vmatprep.mubr.bf16.mxu0 0
      %196 = vmatmul.mubr.bf16.gmra.mxu0 %v158
      %v197 = vpop.f32.mrf.mxu0
      %v198 = vadd.f32 0.0, %v197
      %v199 = vpop.f32.mrf.mxu0
      %v200 = vpop.f32.mrf.mxu0
      %v201 = vadd.f32 0.0, %v200
      %v202 = vpop.f32.mrf.mxu0
      %203 = vdwg.mxu0
      %v204 = vmul.f32 %v198, 0.25
      %v205 = vmul.f32 %v201, 0.25
      %v206 = vld [vmem:[%s1] sm:$0xff]
      %v207 = vld [vmem:[%s1 + $0x8] sm:$0xff]
      %v208 = vadd.f32 %v204, %v206
      %v209 = vadd.f32 %v205, %v207
      %v210 = vsel %vm156, %v208, -inf
      %211 = vmax.xlane.f32.xlu0 %v210
      %v212 = vpop.xlane.xlu0 %211
      %v213 = vsel %vm156, %v209, -inf
      %214 = vmax.xlane.f32.xlu0 %v213
      %v215 = vpop.xlane.xlu0 %214
      %v216 = vsub.f32 %v208, %v212
      %v217 = vsub.f32 %v209, %v215
      %v218 = vmul.f32 %v216, 1.442695
      %v219 = vpow.pop %v218
      %v220 = vmul.f32 %v217, 1.442695
      %v221 = vpow.pop %v220
      %v222 = vsel %vm156, %v219, 0.0
      %223 = vadd.xlane.f32.xlu0 %v222
      %v224 = vpop.xlane.xlu0 %223
      %v225 = vsel %vm156, %v221, 0.0
      %226 = vadd.xlane.f32.xlu0 %v225
      %v227 = vpop.xlane.xlu0 %226
      %v228 = vrcp.pop %v224
      %v229 = vrcp.pop %v227
      %v230 = vmul.f32 %v219, %v228
      %v231 = vmul.f32 %v221, %v229
      %v232 = vpack.c.bf16 %v231, %v230
      %v235 = vunpack.c.l.b16 %v147
      %v236 = vunpack.c.l.b16 %v148
      %v237 = vpack.c.b16 %v236, %v235
      %v240 = vsel %vm156, %v232, 0
      %242 = vmatprep.subr.bf16.mxu0 0
      %243 = vmatpush1.bf16.msra.mxu0 0
      %244 = vmatprep.subr.bf16.mxu0 0
      %245 = vmatpush1.bf16.msra.mxu0 0
      %246 = vmatprep.subr.bf16.mxu0 0
      %247 = vmatpush1.bf16.msra.mxu0 0
      %248 = vmatprep.subr.bf16.mxu0 0
      %249 = vmatpush1.bf16.msra.mxu0 0
      %250 = vmatprep.subr.bf16.mxu0 0
      %251 = vmatpush1.bf16.msra.mxu0 0
      %252 = vmatprep.subr.bf16.mxu0 0
      %253 = vmatpush1.bf16.msra.mxu0 0
      %254 = vmatprep.subr.bf16.mxu0 0
      %255 = vmatpush1.bf16.msra.mxu0 0
      %256 = vmatprep.subr.bf16.mxu0 0
      %257 = vmatpush1.bf16.msra.mxu0 %v237
      %258 = vmatprep.subr.bf16.mxu0 0
      %259 = vmatpush2.bf16.msra.mxu0 0
      %260 = vmatprep.subr.bf16.mxu0 0
      %261 = vmatpush2.bf16.msra.mxu0 0
      %262 = vmatprep.subr.bf16.mxu0 0
      %263 = vmatpush2.bf16.msra.mxu0 0
      %264 = vmatprep.subr.bf16.mxu0 0
      %265 = vmatpush2.bf16.msra.mxu0 0
      %266 = vmatprep.subr.bf16.mxu0 0
      %267 = vmatpush2.bf16.msra.mxu0 0
      %268 = vmatprep.subr.bf16.mxu0 0
      %269 = vmatpush2.bf16.msra.mxu0 0
      %270 = vmatprep.subr.bf16.mxu0 0
      %271 = vmatpush2.bf16.msra.mxu0 0
      %272 = vmatprep.subr.bf16.mxu0 0
      %273 = vmatpush2.bf16.msra.mxu0 0
      %274 = vmatprep.mubr.bf16.mxu0 0
      %275 = vmatmul.mubr.bf16.gmra.mxu0 %v240
      %v276 = vpop.f32.mrf.mxu0
      %v277 = vadd.f32 0.0, %v276
      %v278 = vpop.f32.mrf.mxu0
      %v279 = vpop.f32.mrf.mxu0
      %v280 = vadd.f32 0.0, %v279
      %v281 = vpop.f32.mrf.mxu0
      %282 = vdwg.mxu0
      %v283 = vpack.c.bf16 %v280, %v277
      %v285 = vunpack.c.l.b16 %v283
      %v286 = vunpack.c.h.b16 %v283
      %v287 = vpack.c.b16 %v285, %v285
      %v288 = vpack.c.b16 %v286, %v286
      %vm291 = vcmask 125952
      %292 = vst.msk [vmem:[%s143] sm:$0xf] %vm291, %v287
      %293 = vst.msk [vmem:[%s143 + $0x4] sm:$0xf] %vm291, %v288
      %v294 = vld [vmem:[%s138] sm:$0xf]
      %v295 = vld [vmem:[%s138 + $0x8] sm:$0xf]
      %v296 = vld [vmem:[%s138 + $0x4] sm:$0xf]
      %v297 = vld [vmem:[%s138 + $0xc] sm:$0xf]
      %v300 = vunpack.c.l.b16 %v294
      %v301 = vunpack.c.l.b16 %v295
      %v302 = vpack.c.b16 %v301, %v300
      %303 = vrot.lane.b32.xlu0 %v302, 112
      %v304 = vpop.permute.xlu0 %303
      %305 = vrot.lane.b32.xlu0 %v302, 48
      %v306 = vpop.permute.xlu0 %305
      %v308 = vsel %vm156, %v304, 0
      %v311 = vsel %vm156, %v306, 0
      %313 = vmatprep.subr.bf16.mxu0 0
      %314 = vmatpush1.bf16.xpose.msra.mxu0 0
      %315 = vmatprep.subr.bf16.mxu0 0
      %316 = vmatpush1.bf16.xpose.msra.mxu0 0
      %317 = vmatprep.subr.bf16.mxu0 0
      %318 = vmatpush1.bf16.xpose.msra.mxu0 0
      %319 = vmatprep.subr.bf16.mxu0 0
      %320 = vmatpush1.bf16.xpose.msra.mxu0 0
      %321 = vmatprep.subr.bf16.mxu0 0
      %322 = vmatpush1.bf16.xpose.msra.mxu0 0
      %323 = vmatprep.subr.bf16.mxu0 0
      %324 = vmatpush1.bf16.xpose.msra.mxu0 0
      %325 = vmatprep.subr.bf16.mxu0 0
      %326 = vmatpush1.bf16.xpose.msra.mxu0 0
      %327 = vmatprep.subr.bf16.mxu0 0
      %328 = vmatpush1.bf16.xpose.msra.mxu0 %v311
      %329 = vmatprep.subr.bf16.mxu0 0
      %330 = vmatpush2.bf16.xpose.msra.mxu0 0
      %331 = vmatprep.subr.bf16.mxu0 0
      %332 = vmatpush2.bf16.xpose.msra.mxu0 0
      %333 = vmatprep.subr.bf16.mxu0 0
      %334 = vmatpush2.bf16.xpose.msra.mxu0 0
      %335 = vmatprep.subr.bf16.mxu0 0
      %336 = vmatpush2.bf16.xpose.msra.mxu0 0
      %337 = vmatprep.subr.bf16.mxu0 0
      %338 = vmatpush2.bf16.xpose.msra.mxu0 0
      %339 = vmatprep.subr.bf16.mxu0 0
      %340 = vmatpush2.bf16.xpose.msra.mxu0 0
      %341 = vmatprep.subr.bf16.mxu0 0
      %342 = vmatpush2.bf16.xpose.msra.mxu0 0
      %343 = vmatprep.subr.bf16.mxu0 0
      %344 = vmatpush2.bf16.xpose.msra.mxu0 0
      %345 = vmatprep.mubr.bf16.mxu0 0
      %346 = vmatmul.mubr.bf16.gmra.mxu0 %v308
      %v347 = vpop.f32.mrf.mxu0
      %v348 = vadd.f32 0.0, %v347
      %v349 = vpop.f32.mrf.mxu0
      %v350 = vpop.f32.mrf.mxu0
      %v351 = vadd.f32 0.0, %v350
      %v352 = vpop.f32.mrf.mxu0
      %353 = vdwg.mxu0
      %v354 = vmul.f32 %v348, 0.25
      %v355 = vmul.f32 %v351, 0.25
      %s356 = scalar_lea.vmem %s1, 16
      %v357 = vld [vmem:[%s356] sm:$0xff]
      %v358 = vld [vmem:[%s356 + $0x8] sm:$0xff]
      %v359 = vadd.f32 %v354, %v357
      %v360 = vadd.f32 %v355, %v358
      %v361 = vsel %vm156, %v359, -inf
      %362 = vmax.xlane.f32.xlu0 %v361
      %v363 = vpop.xlane.xlu0 %362
      %v364 = vsel %vm156, %v360, -inf
      %365 = vmax.xlane.f32.xlu0 %v364
      %v366 = vpop.xlane.xlu0 %365
      %v367 = vsub.f32 %v359, %v363
      %v368 = vsub.f32 %v360, %v366
      %v369 = vmul.f32 %v367, 1.442695
      %v370 = vpow.pop %v369
      %v371 = vmul.f32 %v368, 1.442695
      %v372 = vpow.pop %v371
      %v373 = vsel %vm156, %v370, 0.0
      %374 = vadd.xlane.f32.xlu0 %v373
      %v375 = vpop.xlane.xlu0 %374
      %v376 = vsel %vm156, %v372, 0.0
      %377 = vadd.xlane.f32.xlu0 %v376
      %v378 = vpop.xlane.xlu0 %377
      %v379 = vrcp.pop %v375
      %v380 = vrcp.pop %v378
      %v381 = vmul.f32 %v370, %v379
      %v382 = vmul.f32 %v372, %v380
      %v383 = vpack.c.bf16 %v382, %v381
      %v386 = vunpack.c.l.b16 %v296
      %v387 = vunpack.c.l.b16 %v297
      %v388 = vpack.c.b16 %v387, %v386
      %389 = vrot.lane.b32.xlu0 %v388, 112
      %v390 = vpop.permute.xlu0 %389
      %v393 = vsel %vm156, %v383, 0
      %395 = vmatprep.subr.bf16.mxu0 0
      %396 = vmatpush1.bf16.msra.mxu0 0
      %397 = vmatprep.subr.bf16.mxu0 0
      %398 = vmatpush1.bf16.msra.mxu0 0
      %399 = vmatprep.subr.bf16.mxu0 0
      %400 = vmatpush1.bf16.msra.mxu0 0
      %401 = vmatprep.subr.bf16.mxu0 0
      %402 = vmatpush1.bf16.msra.mxu0 0
      %403 = vmatprep.subr.bf16.mxu0 0
      %404 = vmatpush1.bf16.msra.mxu0 0
      %405 = vmatprep.subr.bf16.mxu0 0
      %406 = vmatpush1.bf16.msra.mxu0 0
      %407 = vmatprep.subr.bf16.mxu0 0
      %408 = vmatpush1.bf16.msra.mxu0 0
      %409 = vmatprep.subr.bf16.mxu0 0
      %410 = vmatpush1.bf16.msra.mxu0 %v390
      %411 = vmatprep.subr.bf16.mxu0 0
      %412 = vmatpush2.bf16.msra.mxu0 0
      %413 = vmatprep.subr.bf16.mxu0 0
      %414 = vmatpush2.bf16.msra.mxu0 0
      %415 = vmatprep.subr.bf16.mxu0 0
      %416 = vmatpush2.bf16.msra.mxu0 0
      %417 = vmatprep.subr.bf16.mxu0 0
      %418 = vmatpush2.bf16.msra.mxu0 0
      %419 = vmatprep.subr.bf16.mxu0 0
      %420 = vmatpush2.bf16.msra.mxu0 0
      %421 = vmatprep.subr.bf16.mxu0 0
      %422 = vmatpush2.bf16.msra.mxu0 0
      %423 = vmatprep.subr.bf16.mxu0 0
      %424 = vmatpush2.bf16.msra.mxu0 0
      %425 = vmatprep.subr.bf16.mxu0 0
      %426 = vmatpush2.bf16.msra.mxu0 0
      %427 = vmatprep.mubr.bf16.mxu0 0
      %428 = vmatmul.mubr.bf16.gmra.mxu0 %v393
      %v429 = vpop.f32.mrf.mxu0
      %v430 = vadd.f32 0.0, %v429
      %v431 = vpop.f32.mrf.mxu0
      %v432 = vpop.f32.mrf.mxu0
      %v433 = vadd.f32 0.0, %v432
      %v434 = vpop.f32.mrf.mxu0
      %435 = vdwg.mxu0
      %v436 = vpack.c.bf16 %v433, %v430
      %v438 = vunpack.c.l.b16 %v436
      %v439 = vunpack.c.h.b16 %v436
      %v440 = vpack.c.b16 %v438, %v438
      %v441 = vpack.c.b16 %v439, %v439
      %442 = vrot.lane.b32.xlu0 %v440, 16
      %v443 = vpop.permute.xlu0 %442
      %444 = vrot.lane.b32.xlu0 %v441, 16
      %v445 = vpop.permute.xlu0 %444
      %vm448 = vcmask 257152
      %449 = vst.msk [vmem:[%s143] sm:$0xf] %vm448, %v443
      %450 = vst.msk [vmem:[%s143 + $0x4] sm:$0xf] %vm448, %v445
      %v451 = vld [vmem:[%s138] sm:$0xf]
      %v452 = vld [vmem:[%s138 + $0x8] sm:$0xf]
      %v453 = vld [vmem:[%s138 + $0x4] sm:$0xf]
      %v454 = vld [vmem:[%s138 + $0xc] sm:$0xf]
      %v457 = vunpack.c.l.b16 %v451
      %v458 = vunpack.c.l.b16 %v452
      %v459 = vpack.c.b16 %v458, %v457
      %460 = vrot.lane.b32.xlu0 %v459, 96
      %v461 = vpop.permute.xlu0 %460
      %462 = vrot.lane.b32.xlu0 %v459, 32
      %v463 = vpop.permute.xlu0 %462
      %v465 = vsel %vm156, %v461, 0
      %v468 = vsel %vm156, %v463, 0
      %470 = vmatprep.subr.bf16.mxu0 0
      %471 = vmatpush1.bf16.xpose.msra.mxu0 0
      %472 = vmatprep.subr.bf16.mxu0 0
      %473 = vmatpush1.bf16.xpose.msra.mxu0 0
      %474 = vmatprep.subr.bf16.mxu0 0
      %475 = vmatpush1.bf16.xpose.msra.mxu0 0
      %476 = vmatprep.subr.bf16.mxu0 0
      %477 = vmatpush1.bf16.xpose.msra.mxu0 0
      %478 = vmatprep.subr.bf16.mxu0 0
      %479 = vmatpush1.bf16.xpose.msra.mxu0 0
      %480 = vmatprep.subr.bf16.mxu0 0
      %481 = vmatpush1.bf16.xpose.msra.mxu0 0
      %482 = vmatprep.subr.bf16.mxu0 0
      %483 = vmatpush1.bf16.xpose.msra.mxu0 0
      %484 = vmatprep.subr.bf16.mxu0 0
      %485 = vmatpush1.bf16.xpose.msra.mxu0 %v468
      %486 = vmatprep.subr.bf16.mxu0 0
      %487 = vmatpush2.bf16.xpose.msra.mxu0 0
      %488 = vmatprep.subr.bf16.mxu0 0
      %489 = vmatpush2.bf16.xpose.msra.mxu0 0
      %490 = vmatprep.subr.bf16.mxu0 0
      %491 = vmatpush2.bf16.xpose.msra.mxu0 0
      %492 = vmatprep.subr.bf16.mxu0 0
      %493 = vmatpush2.bf16.xpose.msra.mxu0 0
      %494 = vmatprep.subr.bf16.mxu0 0
      %495 = vmatpush2.bf16.xpose.msra.mxu0 0
      %496 = vmatprep.subr.bf16.mxu0 0
      %497 = vmatpush2.bf16.xpose.msra.mxu0 0
      %498 = vmatprep.subr.bf16.mxu0 0
      %499 = vmatpush2.bf16.xpose.msra.mxu0 0
      %500 = vmatprep.subr.bf16.mxu0 0
      %501 = vmatpush2.bf16.xpose.msra.mxu0 0
      %502 = vmatprep.mubr.bf16.mxu0 0
      %503 = vmatmul.mubr.bf16.gmra.mxu0 %v465
      %v504 = vpop.f32.mrf.mxu0
      %v505 = vadd.f32 0.0, %v504
      %v506 = vpop.f32.mrf.mxu0
      %v507 = vpop.f32.mrf.mxu0
      %v508 = vadd.f32 0.0, %v507
      %v509 = vpop.f32.mrf.mxu0
      %510 = vdwg.mxu0
      %v511 = vmul.f32 %v505, 0.25
      %v512 = vmul.f32 %v508, 0.25
      %s513 = scalar_lea.vmem %s1, 32
      %v514 = vld [vmem:[%s513] sm:$0xff]
      %v515 = vld [vmem:[%s513 + $0x8] sm:$0xff]
      %v516 = vadd.f32 %v511, %v514
      %v517 = vadd.f32 %v512, %v515
      %v518 = vsel %vm156, %v516, -inf
      %519 = vmax.xlane.f32.xlu0 %v518
      %v520 = vpop.xlane.xlu0 %519
      %v521 = vsel %vm156, %v517, -inf
      %522 = vmax.xlane.f32.xlu0 %v521
      %v523 = vpop.xlane.xlu0 %522
      %v524 = vsub.f32 %v516, %v520
      %v525 = vsub.f32 %v517, %v523
      %v526 = vmul.f32 %v524, 1.442695
      %v527 = vpow.pop %v526
      %v528 = vmul.f32 %v525, 1.442695
      %v529 = vpow.pop %v528
      %v530 = vsel %vm156, %v527, 0.0
      %531 = vadd.xlane.f32.xlu0 %v530
      %v532 = vpop.xlane.xlu0 %531
      %v533 = vsel %vm156, %v529, 0.0
      %534 = vadd.xlane.f32.xlu0 %v533
      %v535 = vpop.xlane.xlu0 %534
      %v536 = vrcp.pop %v532
      %v537 = vrcp.pop %v535
      %v538 = vmul.f32 %v527, %v536
      %v539 = vmul.f32 %v529, %v537
      %v540 = vpack.c.bf16 %v539, %v538
      %v543 = vunpack.c.l.b16 %v453
      %v544 = vunpack.c.l.b16 %v454
      %v545 = vpack.c.b16 %v544, %v543
      %546 = vrot.lane.b32.xlu0 %v545, 96
      %v547 = vpop.permute.xlu0 %546
      %v550 = vsel %vm156, %v540, 0
      %552 = vmatprep.subr.bf16.mxu0 0
      %553 = vmatpush1.bf16.msra.mxu0 0
      %554 = vmatprep.subr.bf16.mxu0 0
      %555 = vmatpush1.bf16.msra.mxu0 0
      %556 = vmatprep.subr.bf16.mxu0 0
      %557 = vmatpush1.bf16.msra.mxu0 0
      %558 = vmatprep.subr.bf16.mxu0 0
      %559 = vmatpush1.bf16.msra.mxu0 0
      %560 = vmatprep.subr.bf16.mxu0 0
      %561 = vmatpush1.bf16.msra.mxu0 0
      %562 = vmatprep.subr.bf16.mxu0 0
      %563 = vmatpush1.bf16.msra.mxu0 0
      %564 = vmatprep.subr.bf16.mxu0 0
      %565 = vmatpush1.bf16.msra.mxu0 0
      %566 = vmatprep.subr.bf16.mxu0 0
      %567 = vmatpush1.bf16.msra.mxu0 %v547
      %568 = vmatprep.subr.bf16.mxu0 0
      %569 = vmatpush2.bf16.msra.mxu0 0
      %570 = vmatprep.subr.bf16.mxu0 0
      %571 = vmatpush2.bf16.msra.mxu0 0
      %572 = vmatprep.subr.bf16.mxu0 0
      %573 = vmatpush2.bf16.msra.mxu0 0
      %574 = vmatprep.subr.bf16.mxu0 0
      %575 = vmatpush2.bf16.msra.mxu0 0
      %576 = vmatprep.subr.bf16.mxu0 0
      %577 = vmatpush2.bf16.msra.mxu0 0
      %578 = vmatprep.subr.bf16.mxu0 0
      %579 = vmatpush2.bf16.msra.mxu0 0
      %580 = vmatprep.subr.bf16.mxu0 0
      %581 = vmatpush2.bf16.msra.mxu0 0
      %582 = vmatprep.subr.bf16.mxu0 0
      %583 = vmatpush2.bf16.msra.mxu0 0
      %584 = vmatprep.mubr.bf16.mxu0 0
      %585 = vmatmul.mubr.bf16.gmra.mxu0 %v550
      %v586 = vpop.f32.mrf.mxu0
      %v587 = vadd.f32 0.0, %v586
      %v588 = vpop.f32.mrf.mxu0
      %v589 = vpop.f32.mrf.mxu0
      %v590 = vadd.f32 0.0, %v589
      %v591 = vpop.f32.mrf.mxu0
      %592 = vdwg.mxu0
      %v593 = vpack.c.bf16 %v590, %v587
      %v595 = vunpack.c.l.b16 %v593
      %v596 = vunpack.c.h.b16 %v593
      %v597 = vpack.c.b16 %v595, %v595
      %v598 = vpack.c.b16 %v596, %v596
      %599 = vrot.lane.b32.xlu0 %v597, 32
      %v600 = vpop.permute.xlu0 %599
      %601 = vrot.lane.b32.xlu0 %v598, 32
      %v602 = vpop.permute.xlu0 %601
      %vm605 = vcmask 388352
      %606 = vst.msk [vmem:[%s143] sm:$0xf] %vm605, %v600
      %607 = vst.msk [vmem:[%s143 + $0x4] sm:$0xf] %vm605, %v602
      %v608 = vld [vmem:[%s138] sm:$0xf]
      %v609 = vld [vmem:[%s138 + $0x8] sm:$0xf]
      %v610 = vld [vmem:[%s138 + $0x4] sm:$0xf]
      %v611 = vld [vmem:[%s138 + $0xc] sm:$0xf]
      %v614 = vunpack.c.l.b16 %v608
      %v615 = vunpack.c.l.b16 %v609
      %v616 = vpack.c.b16 %v615, %v614
      %617 = vrot.lane.b32.xlu0 %v616, 80
      %v618 = vpop.permute.xlu0 %617
      %619 = vrot.lane.b32.xlu0 %v616, 16
      %v620 = vpop.permute.xlu0 %619
      %v622 = vsel %vm156, %v618, 0
      %v625 = vsel %vm156, %v620, 0
      %627 = vmatprep.subr.bf16.mxu0 0
      %628 = vmatpush1.bf16.xpose.msra.mxu0 0
      %629 = vmatprep.subr.bf16.mxu0 0
      %630 = vmatpush1.bf16.xpose.msra.mxu0 0
      %631 = vmatprep.subr.bf16.mxu0 0
      %632 = vmatpush1.bf16.xpose.msra.mxu0 0
      %633 = vmatprep.subr.bf16.mxu0 0
      %634 = vmatpush1.bf16.xpose.msra.mxu0 0
      %635 = vmatprep.subr.bf16.mxu0 0
      %636 = vmatpush1.bf16.xpose.msra.mxu0 0
      %637 = vmatprep.subr.bf16.mxu0 0
      %638 = vmatpush1.bf16.xpose.msra.mxu0 0
      %639 = vmatprep.subr.bf16.mxu0 0
      %640 = vmatpush1.bf16.xpose.msra.mxu0 0
      %641 = vmatprep.subr.bf16.mxu0 0
      %642 = vmatpush1.bf16.xpose.msra.mxu0 %v625
      %643 = vmatprep.subr.bf16.mxu0 0
      %644 = vmatpush2.bf16.xpose.msra.mxu0 0
      %645 = vmatprep.subr.bf16.mxu0 0
      %646 = vmatpush2.bf16.xpose.msra.mxu0 0
      %647 = vmatprep.subr.bf16.mxu0 0
      %648 = vmatpush2.bf16.xpose.msra.mxu0 0
      %649 = vmatprep.subr.bf16.mxu0 0
      %650 = vmatpush2.bf16.xpose.msra.mxu0 0
      %651 = vmatprep.subr.bf16.mxu0 0
      %652 = vmatpush2.bf16.xpose.msra.mxu0 0
      %653 = vmatprep.subr.bf16.mxu0 0
      %654 = vmatpush2.bf16.xpose.msra.mxu0 0
      %655 = vmatprep.subr.bf16.mxu0 0
      %656 = vmatpush2.bf16.xpose.msra.mxu0 0
      %657 = vmatprep.subr.bf16.mxu0 0
      %658 = vmatpush2.bf16.xpose.msra.mxu0 0
      %659 = vmatprep.mubr.bf16.mxu0 0
      %660 = vmatmul.mubr.bf16.gmra.mxu0 %v622
      %v661 = vpop.f32.mrf.mxu0
      %v662 = vadd.f32 0.0, %v661
      %v663 = vpop.f32.mrf.mxu0
      %v664 = vpop.f32.mrf.mxu0
      %v665 = vadd.f32 0.0, %v664
      %v666 = vpop.f32.mrf.mxu0
      %667 = vdwg.mxu0
      %v668 = vmul.f32 %v662, 0.25
      %v669 = vmul.f32 %v665, 0.25
      %s670 = scalar_lea.vmem %s1, 48
      %v671 = vld [vmem:[%s670] sm:$0xff]
      %v672 = vld [vmem:[%s670 + $0x8] sm:$0xff]
      %v673 = vadd.f32 %v668, %v671
      %v674 = vadd.f32 %v669, %v672
      %v675 = vsel %vm156, %v673, -inf
      %676 = vmax.xlane.f32.xlu0 %v675
      %v677 = vpop.xlane.xlu0 %676
      %v678 = vsel %vm156, %v674, -inf
      %679 = vmax.xlane.f32.xlu0 %v678
      %v680 = vpop.xlane.xlu0 %679
      %v681 = vsub.f32 %v673, %v677
      %v682 = vsub.f32 %v674, %v680
      %v683 = vmul.f32 %v681, 1.442695
      %v684 = vpow.pop %v683
      %v685 = vmul.f32 %v682, 1.442695
      %v686 = vpow.pop %v685
      %v687 = vsel %vm156, %v684, 0.0
      %688 = vadd.xlane.f32.xlu0 %v687
      %v689 = vpop.xlane.xlu0 %688
      %v690 = vsel %vm156, %v686, 0.0
      %691 = vadd.xlane.f32.xlu0 %v690
      %v692 = vpop.xlane.xlu0 %691
      %v693 = vrcp.pop %v689
      %v694 = vrcp.pop %v692
      %v695 = vmul.f32 %v684, %v693
      %v696 = vmul.f32 %v686, %v694
      %v697 = vpack.c.bf16 %v696, %v695
      %v700 = vunpack.c.l.b16 %v610
      %v701 = vunpack.c.l.b16 %v611
      %v702 = vpack.c.b16 %v701, %v700
      %703 = vrot.lane.b32.xlu0 %v702, 80
      %v704 = vpop.permute.xlu0 %703
      %v707 = vsel %vm156, %v697, 0
      %709 = vmatprep.subr.bf16.mxu0 0
      %710 = vmatpush1.bf16.msra.mxu0 0
      %711 = vmatprep.subr.bf16.mxu0 0
      %712 = vmatpush1.bf16.msra.mxu0 0
      %713 = vmatprep.subr.bf16.mxu0 0
      %714 = vmatpush1.bf16.msra.mxu0 0
      %715 = vmatprep.subr.bf16.mxu0 0
      %716 = vmatpush1.bf16.msra.mxu0 0
      %717 = vmatprep.subr.bf16.mxu0 0
      %718 = vmatpush1.bf16.msra.mxu0 0
      %719 = vmatprep.subr.bf16.mxu0 0
      %720 = vmatpush1.bf16.msra.mxu0 0
      %721 = vmatprep.subr.bf16.mxu0 0
      %722 = vmatpush1.bf16.msra.mxu0 0
      %723 = vmatprep.subr.bf16.mxu0 0
      %724 = vmatpush1.bf16.msra.mxu0 %v704
      %725 = vmatprep.subr.bf16.mxu0 0
      %726 = vmatpush2.bf16.msra.mxu0 0
      %727 = vmatprep.subr.bf16.mxu0 0
      %728 = vmatpush2.bf16.msra.mxu0 0
      %729 = vmatprep.subr.bf16.mxu0 0
      %730 = vmatpush2.bf16.msra.mxu0 0
      %731 = vmatprep.subr.bf16.mxu0 0
      %732 = vmatpush2.bf16.msra.mxu0 0
      %733 = vmatprep.subr.bf16.mxu0 0
      %734 = vmatpush2.bf16.msra.mxu0 0
      %735 = vmatprep.subr.bf16.mxu0 0
      %736 = vmatpush2.bf16.msra.mxu0 0
      %737 = vmatprep.subr.bf16.mxu0 0
      %738 = vmatpush2.bf16.msra.mxu0 0
      %739 = vmatprep.subr.bf16.mxu0 0
      %740 = vmatpush2.bf16.msra.mxu0 0
      %741 = vmatprep.mubr.bf16.mxu0 0
      %742 = vmatmul.mubr.bf16.gmra.mxu0 %v707
      %v743 = vpop.f32.mrf.mxu0
      %v744 = vadd.f32 0.0, %v743
      %v745 = vpop.f32.mrf.mxu0
      %v746 = vpop.f32.mrf.mxu0
      %v747 = vadd.f32 0.0, %v746
      %v748 = vpop.f32.mrf.mxu0
      %749 = vdwg.mxu0
      %v750 = vpack.c.bf16 %v747, %v744
      %v752 = vunpack.c.l.b16 %v750
      %v753 = vunpack.c.h.b16 %v750
      %v754 = vpack.c.b16 %v752, %v752
      %v755 = vpack.c.b16 %v753, %v753
      %756 = vrot.lane.b32.xlu0 %v754, 48
      %v757 = vpop.permute.xlu0 %756
      %758 = vrot.lane.b32.xlu0 %v755, 48
      %v759 = vpop.permute.xlu0 %758
      %vm762 = vcmask 519552
      %763 = vst.msk [vmem:[%s143] sm:$0xf] %vm762, %v757
      %764 = vst.msk [vmem:[%s143 + $0x4] sm:$0xf] %vm762, %v759
      %p765 = scmp.lt.s32.totalorder %s13, 1
      %s766 = scalar_select %p765, %s13, 1
      %s767 = smul.addr %s766, 2
      %s768 = smul.addr %s767, 4
      %s769 = scalar_lea.vmem %s2, %s768
      // Predicated region
      $region29: #{_lambda_.38} parent=27 // pred_check
        %p770 = pneg %p78
      $region30: #{_lambda_.38} parent=27 // pred_check_branch
        %772 = sbr.rel (%p770) target = $region32
      $region31: #{_lambda_.38} parent=27 // pred_region
        _
      $region32: #{_lambda_.38} parent=27 // pred_fallthru
        _
    $region28: #{_lambda_.38} parent=5 // pred_fallthru
      _
    %p773 = scmp.le.s32.totalorder 2, %s8
    // Predicated region
    $region33: #{_lambda_.38} parent=5 // pred_check
      %p774 = pneg %p773
    $region34: #{_lambda_.38} parent=5 // pred_check_branch
      %776 = sbr.rel (%p774) target = $region36
    $region35: #{_lambda_.38} parent=5 // pred_region
      %s777 = ssub.s32 %s8, 2
      // Predicated region
      $region37: #{_lambda_.38} parent=35 // pred_check
        %p778 = pneg %p84
      $region38: #{_lambda_.38} parent=35 // pred_check_branch
        %780 = sbr.rel (%p778) target = $region40
      $region39: #{_lambda_.38} parent=35 // pred_region
        %p781 = scmp.lt.s32.totalorder %s14, 1
        %s782 = scalar_select %p781, %s14, 1
        %s783 = smul.addr %s782, 2
        %s784 = smul.addr %s783, 4
        %s785 = scalar_lea.vmem %s2, %s784
      $region40: #{_lambda_.38} parent=35 // pred_fallthru
        _
    $region36: #{_lambda_.38} parent=5 // pred_fallthru
      _
  $region6: #{_lambda_.38} parent=0 // loop_footer
    %s12 = sadd.s32 1, %s8
  $region7: #{_lambda_.38} parent=0 // loop_footer_branch
    %7 = sbr.rel target = $region3
  $region8: #{_lambda_.38} parent=0 // loop_exit
    _

// kernel: _lambda_.39
$region0: #{_lambda_.39}
  #allocation0 [shape = 'u32[]', space=smem, size = 0x4, offset = 0x4, fixed_abs, tag = 'smem constant byte address 0x4 - core index']
  #allocation1 [shape = 'u32[144,128]{1,0:T(1,128)}', space=vmem, size = 0x12000, scoped, tag = 'internal scratch']
  %s0 = inlined_call_operand.vmem [shape: bf16[32,64], index: 0, kind: input, shape index: {}]
  %s1 = inlined_call_operand.vmem [shape: bf16[64,64], index: 1, kind: input, shape index: {}]
  %s2 = inlined_call_operand.vmem [shape: f32[1,64], index: 2, kind: input, shape index: {}]
  %s3 = inlined_call_operand.vmem [shape: bf16[32,64], index: 3, kind: input, shape index: {}]
  %s4 = inlined_call_operand.vmem [shape: bf16[32,64], index: 4, kind: output, shape index: {}]
  %s5 = sld [smem:[#allocation0]]
  $region49: #{_lambda_.39} parent=0
    _
  %s7 = ssub.s32 1, %s5
  %s8 = scalar_select 0, %s7, %s5
  loop: start=0, step=1, limit=4
  $region2: #{_lambda_.39} parent=0 // loop_pre_header
    _
  $region3: #{_lambda_.39} parent=0 // loop_header
    %s10 = sphi 0, %s14
    %p11 = scmp.ge.s32.totalorder %s10, 4
    %s17 = sphi 0, %s29
    %s18 = sphi 0, %s25
    %s19 = sphi 0, %s17
    %s20 = sphi 0, %s18
    %s21 = sphi 0, %s19
    %s22 = sphi 0, %s20
    %s32 = sphi 0, %s34
    %s35 = sphi 0, %s32
    %s36 = sphi 0, %s35
    %s52 = sphi 0, %s36
    %s58 = sphi 0, %s60
    %s61 = sphi 0, %s58
    %s62 = sphi 0, %s61
    %s78 = sphi 0, %s62
    %s84 = sphi 0, %s86
    %s87 = sphi 0, %s84
    %s88 = sphi 0, %s87
    %s104 = sphi 0, %s88
    %s112 = sphi 0, %s114
    %s115 = sphi 0, %s112
    %s116 = sphi 0, %s115
    %s132 = sphi 0, %s116
    %s140 = sphi 0, %s142
    %s143 = sphi 0, %s140
    %s144 = sphi 0, %s143
    %s160 = sphi 0, %s144
  $region4: #{_lambda_.39} parent=0 // loop_header_branch
    %13 = sbr.rel (%p11) target = $region8
  $region5: #{_lambda_.39} parent=0 // loop_body
    %s15 = ssub.s32 %s10, 1
    %s16 = ssub.s32 %s10, 2
    %s23 = sadd.s32 1, %s18
    %p24 = scmp.ge.s32.totalorder %s23, 1
    %s25 = scalar_select %p24, 0, %s23
    %s26 = sadd.s32 1, %s17
    %s27 = scalar_select %p24, %s26, %s17
    %p28 = scmp.ge.s32.totalorder %s27, 2
    %s29 = scalar_select %p28, 0, %s27
    %s30 = ssub.s32 %s17, %s29
    %p31 = scmp.eq.s32.totalorder %s30, 0
    %s33 = sadd.s32 %s32, 1
    %s34 = scalar_select %p31, %s32, %s33
    %p37 = pneg %p31
    %p38 = scmp.eq.s32.totalorder %s10, 1
    %p39 = por %p37, %p38
    %p40 = scmp.ne.s32.totalorder %s32, %s35
    %p41 = scmp.eq.s32.totalorder %s10, 0
    %p42 = por %p40, %p41
    %p43 = scmp.ne.s32.totalorder %s32, %s35
    %p44 = scmp.eq.s32.totalorder %s15, 1
    %p45 = por %p43, %p44
    %p46 = scmp.ne.s32.totalorder %s35, %s36
    %p47 = scmp.eq.s32.totalorder %s15, 0
    %p48 = por %p46, %p47
    %p49 = scmp.ne.s32.totalorder %s35, %s36
    %p50 = scmp.eq.s32.totalorder %s16, 1
    %p51 = por %p49, %p50
    %p53 = scmp.ne.s32.totalorder %s36, %s52
    %p54 = scmp.eq.s32.totalorder %s16, 0
    %p55 = por %p53, %p54
    %s56 = ssub.s32 %s18, %s25
    %p57 = scmp.eq.s32.totalorder %s56, 0
    %s59 = sadd.s32 %s58, 1
    %s60 = scalar_select %p57, %s58, %s59
    %p63 = pneg %p57
    %p64 = scmp.eq.s32.totalorder %s10, 1
    %p65 = por %p63, %p64
    %p66 = scmp.ne.s32.totalorder %s58, %s61
    %p67 = scmp.eq.s32.totalorder %s10, 0
    %p68 = por %p66, %p67
    %p69 = scmp.ne.s32.totalorder %s58, %s61
    %p70 = scmp.eq.s32.totalorder %s15, 1
    %p71 = por %p69, %p70
    %p72 = scmp.ne.s32.totalorder %s61, %s62
    %p73 = scmp.eq.s32.totalorder %s15, 0
    %p74 = por %p72, %p73
    %p75 = scmp.ne.s32.totalorder %s61, %s62
    %p76 = scmp.eq.s32.totalorder %s16, 1
    %p77 = por %p75, %p76
    %p79 = scmp.ne.s32.totalorder %s62, %s78
    %p80 = scmp.eq.s32.totalorder %s16, 0
    %p81 = por %p79, %p80
    %s82 = ssub.s32 %s18, %s25
    %p83 = scmp.eq.s32.totalorder %s82, 0
    %s85 = sadd.s32 %s84, 1
    %s86 = scalar_select %p83, %s84, %s85
    %p89 = pneg %p83
    %p90 = scmp.eq.s32.totalorder %s10, 1
    %p91 = por %p89, %p90
    %p92 = scmp.ne.s32.totalorder %s84, %s87
    %p93 = scmp.eq.s32.totalorder %s10, 0
    %p94 = por %p92, %p93
    %p95 = scmp.ne.s32.totalorder %s84, %s87
    %p96 = scmp.eq.s32.totalorder %s15, 1
    %p97 = por %p95, %p96
    %p98 = scmp.ne.s32.totalorder %s87, %s88
    %p99 = scmp.eq.s32.totalorder %s15, 0
    %p100 = por %p98, %p99
    %p101 = scmp.ne.s32.totalorder %s87, %s88
    %p102 = scmp.eq.s32.totalorder %s16, 1
    %p103 = por %p101, %p102
    %p105 = scmp.ne.s32.totalorder %s88, %s104
    %p106 = scmp.eq.s32.totalorder %s16, 0
    %p107 = por %p105, %p106
    %s108 = ssub.s32 %s17, %s29
    %s109 = ssub.s32 %s18, %s25
    %s110 = sor.u32 %s108, %s109
    %p111 = scmp.eq.s32.totalorder %s110, 0
    %s113 = sadd.s32 %s112, 1
    %s114 = scalar_select %p111, %s112, %s113
    %p117 = pneg %p111
    %p118 = scmp.eq.s32.totalorder %s10, 1
    %p119 = por %p117, %p118
    %p120 = scmp.ne.s32.totalorder %s112, %s115
    %p121 = scmp.eq.s32.totalorder %s10, 0
    %p122 = por %p120, %p121
    %p123 = scmp.ne.s32.totalorder %s112, %s115
    %p124 = scmp.eq.s32.totalorder %s15, 1
    %p125 = por %p123, %p124
    %p126 = scmp.ne.s32.totalorder %s115, %s116
    %p127 = scmp.eq.s32.totalorder %s15, 0
    %p128 = por %p126, %p127
    %p129 = scmp.ne.s32.totalorder %s115, %s116
    %p130 = scmp.eq.s32.totalorder %s16, 1
    %p131 = por %p129, %p130
    %p133 = scmp.ne.s32.totalorder %s116, %s132
    %p134 = scmp.eq.s32.totalorder %s16, 0
    %p135 = por %p133, %p134
    %s136 = ssub.s32 %s17, %s29
    %s137 = ssub.s32 %s18, %s25
    %s138 = sor.u32 %s136, %s137
    %p139 = scmp.eq.s32.totalorder %s138, 0
    %s141 = sadd.s32 %s140, 1
    %s142 = scalar_select %p139, %s140, %s141
    %p145 = pneg %p139
    %p146 = scmp.eq.s32.totalorder %s10, 1
    %p147 = por %p145, %p146
    %p148 = scmp.ne.s32.totalorder %s140, %s143
    %p149 = scmp.eq.s32.totalorder %s10, 0
    %p150 = por %p148, %p149
    %p151 = scmp.ne.s32.totalorder %s140, %s143
    %p152 = scmp.eq.s32.totalorder %s15, 1
    %p153 = por %p151, %p152
    %p154 = scmp.ne.s32.totalorder %s143, %s144
    %p155 = scmp.eq.s32.totalorder %s15, 0
    %p156 = por %p154, %p155
    %p157 = scmp.ne.s32.totalorder %s143, %s144
    %p158 = scmp.eq.s32.totalorder %s16, 1
    %p159 = por %p157, %p158
    %p161 = scmp.ne.s32.totalorder %s144, %s160
    %p162 = scmp.eq.s32.totalorder %s16, 0
    %p163 = por %p161, %p162
    %p164 = scmp.le.s32.totalorder 1, %s10
    %p165 = scmp.lt.s32.totalorder %s10, 3
    %p166 = pnand %p164, %p165
    %p167 = pneg %p166
    // Predicated region
    $region9: #{_lambda_.39} parent=5 // pred_check
      _
    $region10: #{_lambda_.39} parent=5 // pred_check_branch
      %169 = sbr.rel (%p166) target = $region12
    $region11: #{_lambda_.39} parent=5 // pred_region
      %s170 = ssub.s32 %s10, 1
      // Predicated region
      $region13: #{_lambda_.39} parent=11 // pred_check
        %p171 = pneg %p74
      $region14: #{_lambda_.39} parent=11 // pred_check_branch
        %173 = sbr.rel (%p171) target = $region16
      $region15: #{_lambda_.39} parent=11 // pred_region
        %p174 = scmp.lt.s32.totalorder %s20, 0
        %s175 = scalar_select %p174, %s20, 0
        %s176 = smul.addr %s175, 4
        %s177 = scalar_lea.vmem %s1, %s176
      $region16: #{_lambda_.39} parent=11 // pred_fallthru
        _
      // Predicated region
      $region17: #{_lambda_.39} parent=11 // pred_check
        %p178 = pneg %p100
      $region18: #{_lambda_.39} parent=11 // pred_check_branch
        %180 = sbr.rel (%p178) target = $region20
      $region19: #{_lambda_.39} parent=11 // pred_region
        %p181 = scmp.lt.s32.totalorder %s20, 0
        %s182 = scalar_select %p181, %s20, 0
        %s183 = scalar_lea.vmem %s2, %s182
      $region20: #{_lambda_.39} parent=11 // pred_fallthru
        _
    $region12: #{_lambda_.39} parent=5 // pred_fallthru
      _
    %p184 = scmp.lt.s32.totalorder %s10, 2
    // Predicated region
    $region21: #{_lambda_.39} parent=5 // pred_check
      %p185 = pneg %p184
    $region22: #{_lambda_.39} parent=5 // pred_check_branch
      %187 = sbr.rel (%p185) target = $region24
    $region23: #{_lambda_.39} parent=5 // pred_region
      // Predicated region
      $region25: #{_lambda_.39} parent=23 // pred_check
        %p188 = pneg %p42
      $region26: #{_lambda_.39} parent=23 // pred_check_branch
        %190 = sbr.rel (%p188) target = $region28
      $region27: #{_lambda_.39} parent=23 // pred_region
        %s191 = smul.u32 2, %s17
        %p192 = scmp.lt.s32.totalorder %s191, 3
        %s193 = scalar_select %p192, %s191, 3
        %s194 = smul.addr %s193, 4
        %s195 = scalar_lea.vmem %s0, %s194
        %s196 = smul.u32 2, %s17
      $region28: #{_lambda_.39} parent=23 // pred_fallthru
        _
      // Predicated region
      $region29: #{_lambda_.39} parent=23 // pred_check
        %p197 = pneg %p122
      $region30: #{_lambda_.39} parent=23 // pred_check_branch
        %199 = sbr.rel (%p197) target = $region32
      $region31: #{_lambda_.39} parent=23 // pred_region
        %s200 = smul.u32 2, %s17
        %p201 = scmp.lt.s32.totalorder %s200, 3
        %s202 = scalar_select %p201, %s200, 3
        %p203 = scmp.lt.s32.totalorder %s18, 0
        %s204 = scalar_select %p203, %s18, 0
        %s205 = sadd.s32 %s204, %s202
        %s206 = smul.addr %s205, 4
        %s207 = scalar_lea.vmem %s3, %s206
        %s208 = smul.u32 2, %s17
      $region32: #{_lambda_.39} parent=23 // pred_fallthru
        _
    $region24: #{_lambda_.39} parent=5 // pred_fallthru
      _
    %p209 = scmp.le.s32.totalorder 1, %s10
    %p210 = scmp.lt.s32.totalorder %s10, 3
    %p211 = pnand %p209, %p210
    %p212 = pneg %p211
    // Predicated region
    $region33: #{_lambda_.39} parent=5 // pred_check
      _
    $region34: #{_lambda_.39} parent=5 // pred_check_branch
      %214 = sbr.rel (%p211) target = $region36
    $region35: #{_lambda_.39} parent=5 // pred_region
      %s215 = ssub.s32 %s10, 1
      %s216 = smul.u32 2, %s19
      %p217 = scmp.lt.s32.totalorder %s216, 3
      %s218 = scalar_select %p217, %s216, 3
      %s219 = smul.addr %s218, 4
      %s220 = scalar_lea.vmem %s0, %s219
      %p221 = pneg %p48
      %p222 = pneg %p45
      %p223 = scmp.lt.s32.totalorder %s20, 0
      %s224 = scalar_select %p223, %s20, 0
      %s225 = smul.addr %s224, 4
      %s226 = scalar_lea.vmem %s1, %s225
      %p227 = pneg %p74
      %p228 = pneg %p71
      %p229 = scmp.lt.s32.totalorder %s20, 0
      %s230 = scalar_select %p229, %s20, 0
      %s231 = scalar_lea.vmem %s2, %s230
      %p232 = pneg %p100
      %p233 = pneg %p97
      %s234 = smul.u32 2, %s19
      %p235 = scmp.lt.s32.totalorder %s234, 3
      %s236 = scalar_select %p235, %s234, 3
      %p237 = scmp.lt.s32.totalorder %s20, 0
      %s238 = scalar_select %p237, %s20, 0
      %s239 = sadd.s32 %s238, %s236
      %s240 = smul.addr %s239, 4
      %s241 = scalar_lea.vmem %s3, %s240
      %p242 = pneg %p128
      %p243 = pneg %p125
      %p244 = pneg %p156
      %p245 = pneg %p153
      %s246 = smul.u32 2, %s19
      %p247 = scmp.lt.s32.totalorder %s246, 3
      %s248 = scalar_select %p247, %s246, 3
      %p249 = scmp.lt.s32.totalorder %s20, 0
      %s250 = scalar_select %p249, %s20, 0
      %s251 = sadd.s32 %s250, %s248
      %s252 = smul.addr %s251, 4
      %s253 = scalar_lea.vmem %s4, %s252
      %s254 = smul.u32 2, %s19
      %p255 = scmp.lt.s32.totalorder %s254, 3
      %s256 = scalar_select %p255, %s254, 3
      %s257 = smul.addr %s256, 4
      %s258 = scalar_lea.vmem %s0, %s257
      %s259 = smul.u32 2, %s19
      %p260 = scmp.lt.s32.totalorder %s20, 0
      %s261 = scalar_select %p260, %s20, 0
      %s262 = smul.addr %s261, 4
      %s263 = scalar_lea.vmem %s1, %s262
      %p264 = scmp.lt.s32.totalorder %s20, 0
      %s265 = scalar_select %p264, %s20, 0
      %s266 = scalar_lea.vmem %s2, %s265
      %s267 = smul.u32 2, %s19
      %p268 = scmp.lt.s32.totalorder %s267, 3
      %s269 = scalar_select %p268, %s267, 3
      %p270 = scmp.lt.s32.totalorder %s20, 0
      %s271 = scalar_select %p270, %s20, 0
      %s272 = sadd.s32 %s271, %s269
      %s273 = smul.addr %s272, 4
      %s274 = scalar_lea.vmem %s3, %s273
      %s275 = smul.u32 2, %s19
      %s276 = smul.u32 2, %s19
      %p277 = scmp.lt.s32.totalorder %s276, 3
      %s278 = scalar_select %p277, %s276, 3
      %p279 = scmp.lt.s32.totalorder %s20, 0
      %s280 = scalar_select %p279, %s20, 0
      %s281 = sadd.s32 %s280, %s278
      %s282 = smul.addr %s281, 4
      %s283 = scalar_lea.vmem %s4, %s282
      %s284 = smul.u32 2, %s19
      %v286 = vld [vmem:[%s258] sm:$0xf]
      %v287 = vld [vmem:[%s258 + $0x4] sm:$0xf]
      %v288 = vld [vmem:[%s263] sm:$0xf]
      %v289 = vld [vmem:[%s263 + $0x4] sm:$0xf]
      %v290 = vld [vmem:[%s263 + $0x8] sm:$0xf]
      %v291 = vld [vmem:[%s263 + $0xc] sm:$0xf]
      %v292 = vld [vmem:[%s263 + $0x10] sm:$0xf]
      %v293 = vld [vmem:[%s263 + $0x14] sm:$0xf]
      %v294 = vld [vmem:[%s263 + $0x18] sm:$0xf]
      %v295 = vld [vmem:[%s263 + $0x1c] sm:$0xf]
      %v296 = vld [vmem:[%s266] sm:$0x1]
      %v298 = vlaneseq
      %v299 = vshrl.u32 %v298, 7
      %v300 = vsub.s32 0, %v299
      %v301 = vrot.slane %v296, %v300
      %v305 = vunpack.c.l.b16 %v286
      %v306 = vunpack.c.l.b16 %v287
      %v307 = vpack.c.b16 %v306, %v305
      %v316 = vunpack.c.l.b16 %v288
      %v317 = vunpack.c.l.b16 %v289
      %v318 = vunpack.c.l.b16 %v290
      %v319 = vunpack.c.l.b16 %v291
      %v320 = vunpack.c.l.b16 %v292
      %v321 = vunpack.c.l.b16 %v293
      %v322 = vunpack.c.l.b16 %v294
      %v323 = vunpack.c.l.b16 %v295
      %v324 = vpack.c.b16 %v317, %v316
      %v325 = vpack.c.b16 %v319, %v318
      %v326 = vpack.c.b16 %v321, %v320
      %v327 = vpack.c.b16 %v323, %v322
      %vm332 = vcmask 523264
      %v334 = vsel %vm332, %v307, 0
      %336 = vmatprep.subr.bf16.mxu0 0
      %337 = vmatpush1.bf16.msra.mxu0 0
      %338 = vmatprep.subr.bf16.mxu0 0
      %339 = vmatpush1.bf16.msra.mxu0 0
      %340 = vmatprep.subr.bf16.mxu0 0
      %341 = vmatpush1.bf16.msra.mxu0 0
      %342 = vmatprep.subr.bf16.mxu0 0
      %343 = vmatpush1.bf16.msra.mxu0 0
      %344 = vmatprep.subr.bf16.mxu0 0
      %345 = vmatpush1.bf16.msra.mxu0 %v327
      %346 = vmatprep.subr.bf16.mxu0 0
      %347 = vmatpush1.bf16.msra.mxu0 %v326
      %348 = vmatprep.subr.bf16.mxu0 0
      %349 = vmatpush1.bf16.msra.mxu0 %v325
      %350 = vmatprep.subr.bf16.mxu0 0
      %351 = vmatpush1.bf16.msra.mxu0 %v324
      %352 = vmatprep.subr.bf16.mxu0 0
      %353 = vmatpush2.bf16.msra.mxu0 0
      %354 = vmatprep.subr.bf16.mxu0 0
      %355 = vmatpush2.bf16.msra.mxu0 0
      %356 = vmatprep.subr.bf16.mxu0 0
      %357 = vmatpush2.bf16.msra.mxu0 0
      %358 = vmatprep.subr.bf16.mxu0 0
      %359 = vmatpush2.bf16.msra.mxu0 0
      %360 = vmatprep.subr.bf16.mxu0 0
      %361 = vmatpush2.bf16.msra.mxu0 0
      %362 = vmatprep.subr.bf16.mxu0 0
      %363 = vmatpush2.bf16.msra.mxu0 0
      %364 = vmatprep.subr.bf16.mxu0 0
      %365 = vmatpush2.bf16.msra.mxu0 0
      %366 = vmatprep.subr.bf16.mxu0 0
      %367 = vmatpush2.bf16.msra.mxu0 0
      %368 = vmatprep.mubr.bf16.mxu0 0
      %369 = vmatmul.mubr.bf16.gmra.mxu0 %v334
      %v370 = vpop.f32.mrf.mxu0
      %v371 = vadd.f32 %v301, %v370
      %v372 = vpop.f32.mrf.mxu0
      %v373 = vpop.f32.mrf.mxu0
      %v374 = vadd.f32 %v301, %v373
      %v375 = vpop.f32.mrf.mxu0
      %376 = vdwg.mxu0
      %v377 = vld [vmem:[%s274] sm:$0xf]
      %v378 = vld [vmem:[%s274 + $0x4] sm:$0xf]
      %v379 = vunpack.c.l.bf16 %v377
      %v380 = vunpack.c.l.bf16 %v378
      %v381 = vadd.f32 %v371, %v379
      %v382 = vadd.f32 %v374, %v380
      %v383 = vpack.c.bf16 %v382, %v381
      %v385 = vunpack.c.l.b16 %v383
      %v386 = vunpack.c.h.b16 %v383
      %v387 = vpack.c.b16 %v385, %v385
      %v388 = vpack.c.b16 %v386, %v386
      %vm391 = vcmask 519168
      %392 = vst.msk [vmem:[%s283] sm:$0xf] %vm391, %v387
      %393 = vst.msk [vmem:[%s283 + $0x4] sm:$0xf] %vm391, %v388
      %s394 = smul.u32 2, %s19
      %p395 = scmp.lt.s32.totalorder %s394, 3
      %s396 = scalar_select %p395, %s394, 3
      %p397 = scmp.lt.s32.totalorder %s20, 0
      %s398 = scalar_select %p397, %s20, 0
      %s399 = sadd.s32 %s398, %s396
      %s400 = smul.addr %s399, 4
      %s401 = scalar_lea.vmem %s4, %s400
      // Predicated region
      $region37: #{_lambda_.39} parent=35 // pred_check
        %p402 = pneg %p153
      $region38: #{_lambda_.39} parent=35 // pred_check_branch
        %404 = sbr.rel (%p402) target = $region40
      $region39: #{_lambda_.39} parent=35 // pred_region
        %s405 = smul.u32 2, %s19
      $region40: #{_lambda_.39} parent=35 // pred_fallthru
        _
    $region36: #{_lambda_.39} parent=5 // pred_fallthru
      _
    %p406 = scmp.le.s32.totalorder 2, %s10
    // Predicated region
    $region41: #{_lambda_.39} parent=5 // pred_check
      %p407 = pneg %p406
    $region42: #{_lambda_.39} parent=5 // pred_check_branch
      %409 = sbr.rel (%p407) target = $region44
    $region43: #{_lambda_.39} parent=5 // pred_region
      %s410 = ssub.s32 %s10, 2
      // Predicated region
      $region45: #{_lambda_.39} parent=43 // pred_check
        %p411 = pneg %p159
      $region46: #{_lambda_.39} parent=43 // pred_check_branch
        %413 = sbr.rel (%p411) target = $region48
      $region47: #{_lambda_.39} parent=43 // pred_region
        %s414 = smul.u32 2, %s21
        %p415 = scmp.lt.s32.totalorder %s414, 3
        %s416 = scalar_select %p415, %s414, 3
        %p417 = scmp.lt.s32.totalorder %s22, 0
        %s418 = scalar_select %p417, %s22, 0
        %s419 = sadd.s32 %s418, %s416
        %s420 = smul.addr %s419, 4
        %s421 = scalar_lea.vmem %s4, %s420
      $region48: #{_lambda_.39} parent=43 // pred_fallthru
        _
    $region44: #{_lambda_.39} parent=5 // pred_fallthru
      _
  $region6: #{_lambda_.39} parent=0 // loop_footer
    %s14 = sadd.s32 1, %s10
  $region7: #{_lambda_.39} parent=0 // loop_footer_branch
    %9 = sbr.rel target = $region3
  $region8: #{_lambda_.39} parent=0 // loop_exit
    _

// kernel: _lambda_.40
$region0: #{_lambda_.40}
  #allocation0 [shape = 'u32[]', space=smem, size = 0x4, offset = 0x4, fixed_abs, tag = 'smem constant byte address 0x4 - core index']
  #allocation1 [shape = 'u32[144,128]{1,0:T(1,128)}', space=vmem, size = 0x12000, scoped, tag = 'internal scratch']
  %s0 = inlined_call_operand.vmem [shape: bf16[32,64], index: 0, kind: input, shape index: {}]
  %s1 = inlined_call_operand.vmem [shape: f32[1,64], index: 1, kind: input, shape index: {}]
  %s2 = inlined_call_operand.vmem [shape: f32[1,64], index: 2, kind: input, shape index: {}]
  %s3 = inlined_call_operand.vmem [shape: bf16[64,256], index: 3, kind: input, shape index: {}]
  %s4 = inlined_call_operand.vmem [shape: f32[1,256], index: 4, kind: input, shape index: {}]
  %s5 = inlined_call_operand.vmem [shape: bf16[32,256], index: 5, kind: output, shape index: {}]
  %s6 = sld [smem:[#allocation0]]
  $region53: #{_lambda_.40} parent=0
    _
  %s8 = ssub.s32 1, %s6
  %s9 = scalar_select 0, %s8, %s6
  loop: start=0, step=1, limit=4
  $region2: #{_lambda_.40} parent=0 // loop_pre_header
    _
  $region3: #{_lambda_.40} parent=0 // loop_header
    %s11 = sphi 0, %s15
    %p12 = scmp.ge.s32.totalorder %s11, 4
    %s18 = sphi 0, %s30
    %s19 = sphi 0, %s26
    %s20 = sphi 0, %s18
    %s21 = sphi 0, %s19
    %s22 = sphi 0, %s20
    %s23 = sphi 0, %s21
    %s33 = sphi 0, %s35
    %s36 = sphi 0, %s33
    %s37 = sphi 0, %s36
    %s53 = sphi 0, %s37
    %s57 = sphi 0, %s57
    %s59 = sphi 0, %s57
    %s60 = sphi 0, %s59
    %s74 = sphi 0, %s60
    %s78 = sphi 0, %s78
    %s80 = sphi 0, %s78
    %s81 = sphi 0, %s80
    %s95 = sphi 0, %s81
    %s101 = sphi 0, %s103
    %s104 = sphi 0, %s101
    %s105 = sphi 0, %s104
    %s121 = sphi 0, %s105
    %s127 = sphi 0, %s129
    %s130 = sphi 0, %s127
    %s131 = sphi 0, %s130
    %s147 = sphi 0, %s131
    %s155 = sphi 0, %s157
    %s158 = sphi 0, %s155
    %s159 = sphi 0, %s158
    %s175 = sphi 0, %s159
  $region4: #{_lambda_.40} parent=0 // loop_header_branch
    %14 = sbr.rel (%p12) target = $region8
  $region5: #{_lambda_.40} parent=0 // loop_body
    %s16 = ssub.s32 %s11, 1
    %s17 = ssub.s32 %s11, 2
    %s24 = sadd.s32 1, %s19
    %p25 = scmp.ge.s32.totalorder %s24, 1
    %s26 = scalar_select %p25, 0, %s24
    %s27 = sadd.s32 1, %s18
    %s28 = scalar_select %p25, %s27, %s18
    %p29 = scmp.ge.s32.totalorder %s28, 2
    %s30 = scalar_select %p29, 0, %s28
    %s31 = ssub.s32 %s18, %s30
    %p32 = scmp.eq.s32.totalorder %s31, 0
    %s34 = sadd.s32 %s33, 1
    %s35 = scalar_select %p32, %s33, %s34
    %p38 = pneg %p32
    %p39 = scmp.eq.s32.totalorder %s11, 1
    %p40 = por %p38, %p39
    %p41 = scmp.ne.s32.totalorder %s33, %s36
    %p42 = scmp.eq.s32.totalorder %s11, 0
    %p43 = por %p41, %p42
    %p44 = scmp.ne.s32.totalorder %s33, %s36
    %p45 = scmp.eq.s32.totalorder %s16, 1
    %p46 = por %p44, %p45
    %p47 = scmp.ne.s32.totalorder %s36, %s37
    %p48 = scmp.eq.s32.totalorder %s16, 0
    %p49 = por %p47, %p48
    %p50 = scmp.ne.s32.totalorder %s36, %s37
    %p51 = scmp.eq.s32.totalorder %s17, 1
    %p52 = por %p50, %p51
    %p54 = scmp.ne.s32.totalorder %s37, %s53
    %p55 = scmp.eq.s32.totalorder %s17, 0
    %p56 = por %p54, %p55
    %s58 = sadd.s32 %s57, 1
    %p61 = scmp.eq.s32.totalorder %s11, 1
    %p62 = scmp.ne.s32.totalorder %s57, %s59
    %p63 = scmp.eq.s32.totalorder %s11, 0
    %p64 = por %p62, %p63
    %p65 = scmp.ne.s32.totalorder %s57, %s59
    %p66 = scmp.eq.s32.totalorder %s16, 1
    %p67 = por %p65, %p66
    %p68 = scmp.ne.s32.totalorder %s59, %s60
    %p69 = scmp.eq.s32.totalorder %s16, 0
    %p70 = por %p68, %p69
    %p71 = scmp.ne.s32.totalorder %s59, %s60
    %p72 = scmp.eq.s32.totalorder %s17, 1
    %p73 = por %p71, %p72
    %p75 = scmp.ne.s32.totalorder %s60, %s74
    %p76 = scmp.eq.s32.totalorder %s17, 0
    %p77 = por %p75, %p76
    %s79 = sadd.s32 %s78, 1
    %p82 = scmp.eq.s32.totalorder %s11, 1
    %p83 = scmp.ne.s32.totalorder %s78, %s80
    %p84 = scmp.eq.s32.totalorder %s11, 0
    %p85 = por %p83, %p84
    %p86 = scmp.ne.s32.totalorder %s78, %s80
    %p87 = scmp.eq.s32.totalorder %s16, 1
    %p88 = por %p86, %p87
    %p89 = scmp.ne.s32.totalorder %s80, %s81
    %p90 = scmp.eq.s32.totalorder %s16, 0
    %p91 = por %p89, %p90
    %p92 = scmp.ne.s32.totalorder %s80, %s81
    %p93 = scmp.eq.s32.totalorder %s17, 1
    %p94 = por %p92, %p93
    %p96 = scmp.ne.s32.totalorder %s81, %s95
    %p97 = scmp.eq.s32.totalorder %s17, 0
    %p98 = por %p96, %p97
    %s99 = ssub.s32 %s19, %s26
    %p100 = scmp.eq.s32.totalorder %s99, 0
    %s102 = sadd.s32 %s101, 1
    %s103 = scalar_select %p100, %s101, %s102
    %p106 = pneg %p100
    %p107 = scmp.eq.s32.totalorder %s11, 1
    %p108 = por %p106, %p107
    %p109 = scmp.ne.s32.totalorder %s101, %s104
    %p110 = scmp.eq.s32.totalorder %s11, 0
    %p111 = por %p109, %p110
    %p112 = scmp.ne.s32.totalorder %s101, %s104
    %p113 = scmp.eq.s32.totalorder %s16, 1
    %p114 = por %p112, %p113
    %p115 = scmp.ne.s32.totalorder %s104, %s105
    %p116 = scmp.eq.s32.totalorder %s16, 0
    %p117 = por %p115, %p116
    %p118 = scmp.ne.s32.totalorder %s104, %s105
    %p119 = scmp.eq.s32.totalorder %s17, 1
    %p120 = por %p118, %p119
    %p122 = scmp.ne.s32.totalorder %s105, %s121
    %p123 = scmp.eq.s32.totalorder %s17, 0
    %p124 = por %p122, %p123
    %s125 = ssub.s32 %s19, %s26
    %p126 = scmp.eq.s32.totalorder %s125, 0
    %s128 = sadd.s32 %s127, 1
    %s129 = scalar_select %p126, %s127, %s128
    %p132 = pneg %p126
    %p133 = scmp.eq.s32.totalorder %s11, 1
    %p134 = por %p132, %p133
    %p135 = scmp.ne.s32.totalorder %s127, %s130
    %p136 = scmp.eq.s32.totalorder %s11, 0
    %p137 = por %p135, %p136
    %p138 = scmp.ne.s32.totalorder %s127, %s130
    %p139 = scmp.eq.s32.totalorder %s16, 1
    %p140 = por %p138, %p139
    %p141 = scmp.ne.s32.totalorder %s130, %s131
    %p142 = scmp.eq.s32.totalorder %s16, 0
    %p143 = por %p141, %p142
    %p144 = scmp.ne.s32.totalorder %s130, %s131
    %p145 = scmp.eq.s32.totalorder %s17, 1
    %p146 = por %p144, %p145
    %p148 = scmp.ne.s32.totalorder %s131, %s147
    %p149 = scmp.eq.s32.totalorder %s17, 0
    %p150 = por %p148, %p149
    %s151 = ssub.s32 %s18, %s30
    %s152 = ssub.s32 %s19, %s26
    %s153 = sor.u32 %s151, %s152
    %p154 = scmp.eq.s32.totalorder %s153, 0
    %s156 = sadd.s32 %s155, 1
    %s157 = scalar_select %p154, %s155, %s156
    %p160 = pneg %p154
    %p161 = scmp.eq.s32.totalorder %s11, 1
    %p162 = por %p160, %p161
    %p163 = scmp.ne.s32.totalorder %s155, %s158
    %p164 = scmp.eq.s32.totalorder %s11, 0
    %p165 = por %p163, %p164
    %p166 = scmp.ne.s32.totalorder %s155, %s158
    %p167 = scmp.eq.s32.totalorder %s16, 1
    %p168 = por %p166, %p167
    %p169 = scmp.ne.s32.totalorder %s158, %s159
    %p170 = scmp.eq.s32.totalorder %s16, 0
    %p171 = por %p169, %p170
    %p172 = scmp.ne.s32.totalorder %s158, %s159
    %p173 = scmp.eq.s32.totalorder %s17, 1
    %p174 = por %p172, %p173
    %p176 = scmp.ne.s32.totalorder %s159, %s175
    %p177 = scmp.eq.s32.totalorder %s17, 0
    %p178 = por %p176, %p177
    %p179 = scmp.le.s32.totalorder 1, %s11
    %p180 = scmp.lt.s32.totalorder %s11, 3
    %p181 = pnand %p179, %p180
    %p182 = pneg %p181
    // Predicated region
    $region9: #{_lambda_.40} parent=5 // pred_check
      _
    $region10: #{_lambda_.40} parent=5 // pred_check_branch
      %184 = sbr.rel (%p181) target = $region12
    $region11: #{_lambda_.40} parent=5 // pred_region
      %s185 = ssub.s32 %s11, 1
      // Predicated region
      $region13: #{_lambda_.40} parent=11 // pred_check
        %p186 = pneg %p70
      $region14: #{_lambda_.40} parent=11 // pred_check_branch
        %188 = sbr.rel (%p186) target = $region16
      $region15: #{_lambda_.40} parent=11 // pred_region
        _
      $region16: #{_lambda_.40} parent=11 // pred_fallthru
        _
      // Predicated region
      $region17: #{_lambda_.40} parent=11 // pred_check
        %p189 = pneg %p91
      $region18: #{_lambda_.40} parent=11 // pred_check_branch
        %191 = sbr.rel (%p189) target = $region20
      $region19: #{_lambda_.40} parent=11 // pred_region
        _
      $region20: #{_lambda_.40} parent=11 // pred_fallthru
        _
      // Predicated region
      $region21: #{_lambda_.40} parent=11 // pred_check
        %p192 = pneg %p117
      $region22: #{_lambda_.40} parent=11 // pred_check_branch
        %194 = sbr.rel (%p192) target = $region24
      $region23: #{_lambda_.40} parent=11 // pred_region
        %s195 = smul.u32 2, %s21
        %p196 = scmp.lt.s32.totalorder %s195, 1
        %s197 = scalar_select %p196, %s195, 1
        %s198 = smul.addr %s197, 4
        %s199 = scalar_lea.vmem %s3, %s198
        %s200 = smul.u32 2, %s21
      $region24: #{_lambda_.40} parent=11 // pred_fallthru
        _
      // Predicated region
      $region25: #{_lambda_.40} parent=11 // pred_check
        %p201 = pneg %p143
      $region26: #{_lambda_.40} parent=11 // pred_check_branch
        %203 = sbr.rel (%p201) target = $region28
      $region27: #{_lambda_.40} parent=11 // pred_region
        %s204 = smul.u32 2, %s21
        %p205 = scmp.lt.s32.totalorder %s204, 1
        %s206 = scalar_select %p205, %s204, 1
        %s207 = scalar_lea.vmem %s4, %s206
        %s208 = smul.u32 2, %s21
      $region28: #{_lambda_.40} parent=11 // pred_fallthru
        _
    $region12: #{_lambda_.40} parent=5 // pred_fallthru
      _
    %p209 = scmp.lt.s32.totalorder %s11, 2
    // Predicated region
    $region29: #{_lambda_.40} parent=5 // pred_check
      %p210 = pneg %p209
    $region30: #{_lambda_.40} parent=5 // pred_check_branch
      %212 = sbr.rel (%p210) target = $region32
    $region31: #{_lambda_.40} parent=5 // pred_region
      // Predicated region
      $region33: #{_lambda_.40} parent=31 // pred_check
        %p213 = pneg %p43
      $region34: #{_lambda_.40} parent=31 // pred_check_branch
        %215 = sbr.rel (%p213) target = $region36
      $region35: #{_lambda_.40} parent=31 // pred_region
        %s216 = smul.u32 2, %s18
        %p217 = scmp.lt.s32.totalorder %s216, 3
        %s218 = scalar_select %p217, %s216, 3
        %s219 = smul.addr %s218, 4
        %s220 = scalar_lea.vmem %s0, %s219
        %s221 = smul.u32 2, %s18
      $region36: #{_lambda_.40} parent=31 // pred_fallthru
        _
    $region32: #{_lambda_.40} parent=5 // pred_fallthru
      _
    %p222 = scmp.le.s32.totalorder 1, %s11
    %p223 = scmp.lt.s32.totalorder %s11, 3
    %p224 = pnand %p222, %p223
    %p225 = pneg %p224
    // Predicated region
    $region37: #{_lambda_.40} parent=5 // pred_check
      _
    $region38: #{_lambda_.40} parent=5 // pred_check_branch
      %227 = sbr.rel (%p224) target = $region40
    $region39: #{_lambda_.40} parent=5 // pred_region
      %s228 = ssub.s32 %s11, 1
      %s229 = smul.u32 2, %s20
      %p230 = scmp.lt.s32.totalorder %s229, 3
      %s231 = scalar_select %p230, %s229, 3
      %s232 = smul.addr %s231, 4
      %s233 = scalar_lea.vmem %s0, %s232
      %p234 = pneg %p49
      %p235 = pneg %p46
      %p236 = pneg %p70
      %p237 = pneg %p67
      %p238 = pneg %p91
      %p239 = pneg %p88
      %s240 = smul.u32 2, %s21
      %p241 = scmp.lt.s32.totalorder %s240, 1
      %s242 = scalar_select %p241, %s240, 1
      %s243 = smul.addr %s242, 4
      %s244 = scalar_lea.vmem %s3, %s243
      %p245 = pneg %p117
      %p246 = pneg %p114
      %s247 = smul.u32 2, %s21
      %p248 = scmp.lt.s32.totalorder %s247, 1
      %s249 = scalar_select %p248, %s247, 1
      %s250 = scalar_lea.vmem %s4, %s249
      %p251 = pneg %p143
      %p252 = pneg %p140
      %p253 = pneg %p171
      %p254 = pneg %p168
      %s255 = smul.u32 2, %s20
      %s256 = smul.u32 2, %s21
      %p257 = scmp.lt.s32.totalorder %s255, 3
      %s258 = scalar_select %p257, %s255, 3
      %p259 = scmp.lt.s32.totalorder %s256, 1
      %s260 = scalar_select %p259, %s256, 1
      %s261 = smul.addr %s258, 2
      %s262 = sadd.s32 %s260, %s261
      %s263 = smul.addr %s262, 4
      %s264 = scalar_lea.vmem %s5, %s263
      %s265 = smul.u32 2, %s20
      %p266 = scmp.lt.s32.totalorder %s265, 3
      %s267 = scalar_select %p266, %s265, 3
      %s268 = smul.addr %s267, 4
      %s269 = scalar_lea.vmem %s0, %s268
      %s270 = smul.u32 2, %s20
      %s271 = smul.u32 2, %s21
      %p272 = scmp.lt.s32.totalorder %s271, 1
      %s273 = scalar_select %p272, %s271, 1
      %s274 = smul.addr %s273, 4
      %s275 = scalar_lea.vmem %s3, %s274
      %s276 = smul.u32 2, %s21
      %s277 = smul.u32 2, %s21
      %p278 = scmp.lt.s32.totalorder %s277, 1
      %s279 = scalar_select %p278, %s277, 1
      %s280 = scalar_lea.vmem %s4, %s279
      %s281 = smul.u32 2, %s21
      %s282 = smul.u32 2, %s20
      %s283 = smul.u32 2, %s21
      %p284 = scmp.lt.s32.totalorder %s282, 3
      %s285 = scalar_select %p284, %s282, 3
      %p286 = scmp.lt.s32.totalorder %s283, 1
      %s287 = scalar_select %p286, %s283, 1
      %s288 = smul.addr %s285, 2
      %s289 = sadd.s32 %s287, %s288
      %s290 = smul.addr %s289, 4
      %s291 = scalar_lea.vmem %s5, %s290
      %s292 = smul.u32 2, %s20
      %s293 = smul.u32 2, %s21
      %v295 = vld [vmem:[%s269] sm:$0xf]
      %v296 = vld [vmem:[%s269 + $0x4] sm:$0xf]
      %v297 = vunpack.c.l.bf16 %v295
      %v298 = vunpack.c.l.bf16 %v296
      %vm299 = vcmask 523264
      %v300 = vsel %vm299, %v297, 0.0
      %301 = vadd.xlane.f32.xlu0 %v300
      %v302 = vpop.xlane.xlu0 %301
      %v303 = vsel %vm299, %v298, 0.0
      %304 = vadd.xlane.f32.xlu0 %v303
      %v305 = vpop.xlane.xlu0 %304
      %v306 = vrcp.pop 64.0
      %v307 = vmul.f32 %v302, %v306
      %v308 = vmul.f32 %v305, %v306
      %v309 = vsub.f32 %v297, %v307
      %v310 = vsub.f32 %v298, %v308
      %v311 = vmul.f32 %v309, %v309
      %v312 = vmul.f32 %v310, %v310
      %v313 = vsel %vm299, %v311, 0.0
      %314 = vadd.xlane.f32.xlu0 %v313
      %v315 = vpop.xlane.xlu0 %314
      %v316 = vsel %vm299, %v312, 0.0
      %317 = vadd.xlane.f32.xlu0 %v316
      %v318 = vpop.xlane.xlu0 %317
      %v319 = vmul.f32 %v315, %v306
      %v320 = vmul.f32 %v318, %v306
      %v321 = vadd.f32 %v319, 1e-05
      %v322 = vadd.f32 %v320, 1e-05
      %v323 = vrsqrt.pop %v321
      %v324 = vrsqrt.pop %v322
      %v325 = vmul.f32 %v309, %v323
      %v326 = vmul.f32 %v310, %v324
      %v327 = vld [vmem:[%s1] sm:$0x1]
      %v329 = vlaneseq
      %v330 = vshrl.u32 %v329, 7
      %v331 = vsub.s32 0, %v330
      %v332 = vrot.slane %v327, %v331
      %v334 = vmul.f32 %v325, %v332
      %v335 = vmul.f32 %v326, %v332
      %v336 = vld [vmem:[%s2] sm:$0x1]
      %v338 = vlaneseq
      %v339 = vshrl.u32 %v338, 7
      %v340 = vsub.s32 0, %v339
      %v341 = vrot.slane %v336, %v340
      %v343 = vadd.f32 %v334, %v341
      %v344 = vadd.f32 %v335, %v341
      %v345 = vpack.c.bf16 %v344, %v343
      %v346 = vld [vmem:[%s275] sm:$0xff]
      %v347 = vld [vmem:[%s275 + $0x8] sm:$0xff]
      %v348 = vld [vmem:[%s275 + $0x10] sm:$0xff]
      %v349 = vld [vmem:[%s275 + $0x18] sm:$0xff]
      %v350 = vld [vmem:[%s275 + $0x20] sm:$0xff]
      %v351 = vld [vmem:[%s275 + $0x28] sm:$0xff]
      %v352 = vld [vmem:[%s275 + $0x30] sm:$0xff]
      %v353 = vld [vmem:[%s275 + $0x38] sm:$0xff]
      %v354 = vld [vmem:[%s280] sm:$0x3]
      %v356 = vlaneseq
      %v357 = vshrl.u32 %v356, 7
      %v358 = vsub.s32 0, %v357
      %v359 = vrot.slane %v354, %v358
      %v360 = vlaneseq
      %v361 = vshrl.u32 %v360, 7
      %v362 = vsub.s32 1, %v361
      %v363 = vrot.slane %v354, %v362
      %v374 = vunpack.c.l.b16 %v346
      %v375 = vunpack.c.h.b16 %v346
      %v376 = vunpack.c.l.b16 %v347
      %v377 = vunpack.c.h.b16 %v347
      %v378 = vunpack.c.l.b16 %v348
      %v379 = vunpack.c.h.b16 %v348
      %v380 = vunpack.c.l.b16 %v349
      %v381 = vunpack.c.h.b16 %v349
      %v382 = vunpack.c.l.b16 %v350
      %v383 = vunpack.c.h.b16 %v350
      %v384 = vunpack.c.l.b16 %v351
      %v385 = vunpack.c.h.b16 %v351
      %v386 = vunpack.c.l.b16 %v352
      %v387 = vunpack.c.h.b16 %v352
      %v388 = vunpack.c.l.b16 %v353
      %v389 = vunpack.c.h.b16 %v353
      %v390 = vpack.c.b16 %v376, %v374
      %v391 = vpack.c.b16 %v377, %v375
      %v392 = vpack.c.b16 %v380, %v378
      %v393 = vpack.c.b16 %v381, %v379
      %v394 = vpack.c.b16 %v384, %v382
      %v395 = vpack.c.b16 %v385, %v383
      %v396 = vpack.c.b16 %v388, %v386
      %v397 = vpack.c.b16 %v389, %v387
      %v407 = vsel %vm299, %v345, 0
      %409 = vmatprep.subr.bf16.mxu0 0
      %410 = vmatpush1.bf16.msra.mxu0 0
      %411 = vmatprep.subr.bf16.mxu0 0
      %412 = vmatpush1.bf16.msra.mxu0 0
      %413 = vmatprep.subr.bf16.mxu0 0
      %414 = vmatpush1.bf16.msra.mxu0 0
      %415 = vmatprep.subr.bf16.mxu0 0
      %416 = vmatpush1.bf16.msra.mxu0 0
      %417 = vmatprep.subr.bf16.mxu0 %v397
      %418 = vmatpush1.bf16.msra.mxu0 %v396
      %419 = vmatprep.subr.bf16.mxu0 %v395
      %420 = vmatpush1.bf16.msra.mxu0 %v394
      %421 = vmatprep.subr.bf16.mxu0 %v393
      %422 = vmatpush1.bf16.msra.mxu0 %v392
      %423 = vmatprep.subr.bf16.mxu0 %v391
      %424 = vmatpush1.bf16.msra.mxu0 %v390
      %425 = vmatprep.subr.bf16.mxu0 0
      %426 = vmatpush2.bf16.msra.mxu0 0
      %427 = vmatprep.subr.bf16.mxu0 0
      %428 = vmatpush2.bf16.msra.mxu0 0
      %429 = vmatprep.subr.bf16.mxu0 0
      %430 = vmatpush2.bf16.msra.mxu0 0
      %431 = vmatprep.subr.bf16.mxu0 0
      %432 = vmatpush2.bf16.msra.mxu0 0
      %433 = vmatprep.subr.bf16.mxu0 0
      %434 = vmatpush2.bf16.msra.mxu0 0
      %435 = vmatprep.subr.bf16.mxu0 0
      %436 = vmatpush2.bf16.msra.mxu0 0
      %437 = vmatprep.subr.bf16.mxu0 0
      %438 = vmatpush2.bf16.msra.mxu0 0
      %439 = vmatprep.subr.bf16.mxu0 0
      %440 = vmatpush2.bf16.msra.mxu0 0
      %441 = vmatprep.mubr.bf16.mxu0 0
      %442 = vmatmul.mubr.bf16.gmra.mxu0 %v407
      %v443 = vpop.f32.mrf.mxu0
      %v444 = vadd.f32 %v359, %v443
      %v445 = vpop.f32.mrf.mxu0
      %v446 = vadd.f32 %v363, %v445
      %v447 = vpop.f32.mrf.mxu0
      %v448 = vadd.f32 %v359, %v447
      %v449 = vpop.f32.mrf.mxu0
      %v450 = vadd.f32 %v363, %v449
      %451 = vdwg.mxu0
      %v452 = vmul.f32 %v444, 0.5
      %v453 = vmul.f32 %v446, 0.5
      %v454 = vmul.f32 %v448, 0.5
      %v455 = vmul.f32 %v450, 0.5
      %v456 = vmul.f32 %v444, 0.044715
      %v457 = vmul.f32 %v446, 0.044715
      %v458 = vmul.f32 %v448, 0.044715
      %v459 = vmul.f32 %v450, 0.044715
      %v460 = vmul.f32 %v456, %v444
      %v461 = vmul.f32 %v457, %v446
      %v462 = vmul.f32 %v458, %v448
      %v463 = vmul.f32 %v459, %v450
      %v464 = vmul.f32 %v460, %v444
      %v465 = vmul.f32 %v461, %v446
      %v466 = vmul.f32 %v462, %v448
      %v467 = vmul.f32 %v463, %v450
      %v468 = vadd.f32 %v444, %v464
      %v469 = vadd.f32 %v446, %v465
      %v470 = vadd.f32 %v448, %v466
      %v471 = vadd.f32 %v450, %v467
      %v472 = vmul.f32 %v468, 0.7978846
      %v473 = vmul.f32 %v469, 0.7978846
      %v474 = vmul.f32 %v470, 0.7978846
      %v475 = vmul.f32 %v471, 0.7978846
      %v476 = vtanh.pop %v472
      %v477 = vtanh.pop %v473
      %v478 = vtanh.pop %v474
      %v479 = vtanh.pop %v475
      %v480 = vadd.f32 %v476, 1.0
      %v481 = vadd.f32 %v477, 1.0
      %v482 = vadd.f32 %v478, 1.0
      %v483 = vadd.f32 %v479, 1.0
      %v484 = vmul.f32 %v452, %v480
      %v485 = vmul.f32 %v453, %v481
      %v486 = vmul.f32 %v454, %v482
      %v487 = vmul.f32 %v455, %v483
      %v488 = vpack.c.bf16 %v486, %v484
      %v489 = vpack.c.bf16 %v487, %v485
      %v492 = vunpack.c.l.b16 %v488
      %v493 = vunpack.c.l.b16 %v489
      %v494 = vunpack.c.h.b16 %v488
      %v495 = vunpack.c.h.b16 %v489
      %v496 = vpack.c.b16 %v493, %v492
      %v497 = vpack.c.b16 %v495, %v494
      %500 = vst [vmem:[%s291] sm:$0xff] %v496
      %501 = vst [vmem:[%s291 + $0x8] sm:$0xff] %v497
      %s502 = smul.u32 2, %s20
      %s503 = smul.u32 2, %s21
      %p504 = scmp.lt.s32.totalorder %s502, 3
      %s505 = scalar_select %p504, %s502, 3
      %p506 = scmp.lt.s32.totalorder %s503, 1
      %s507 = scalar_select %p506, %s503, 1
      %s508 = smul.addr %s505, 2
      %s509 = sadd.s32 %s507, %s508
      %s510 = smul.addr %s509, 4
      %s511 = scalar_lea.vmem %s5, %s510
      // Predicated region
      $region41: #{_lambda_.40} parent=39 // pred_check
        %p512 = pneg %p168
      $region42: #{_lambda_.40} parent=39 // pred_check_branch
        %514 = sbr.rel (%p512) target = $region44
      $region43: #{_lambda_.40} parent=39 // pred_region
        %s515 = smul.u32 2, %s20
        %s516 = smul.u32 2, %s21
      $region44: #{_lambda_.40} parent=39 // pred_fallthru
        _
    $region40: #{_lambda_.40} parent=5 // pred_fallthru
      _
    %p517 = scmp.le.s32.totalorder 2, %s11
    // Predicated region
    $region45: #{_lambda_.40} parent=5 // pred_check
      %p518 = pneg %p517
    $region46: #{_lambda_.40} parent=5 // pred_check_branch
      %520 = sbr.rel (%p518) target = $region48
    $region47: #{_lambda_.40} parent=5 // pred_region
      %s521 = ssub.s32 %s11, 2
      // Predicated region
      $region49: #{_lambda_.40} parent=47 // pred_check
        %p522 = pneg %p174
      $region50: #{_lambda_.40} parent=47 // pred_check_branch
        %524 = sbr.rel (%p522) target = $region52
      $region51: #{_lambda_.40} parent=47 // pred_region
        %s525 = smul.u32 2, %s22
        %s526 = smul.u32 2, %s23
        %p527 = scmp.lt.s32.totalorder %s525, 3
        %s528 = scalar_select %p527, %s525, 3
        %p529 = scmp.lt.s32.totalorder %s526, 1
        %s530 = scalar_select %p529, %s526, 1
        %s531 = smul.addr %s528, 2
        %s532 = sadd.s32 %s530, %s531
        %s533 = smul.addr %s532, 4
        %s534 = scalar_lea.vmem %s5, %s533
      $region52: #{_lambda_.40} parent=47 // pred_fallthru
        _
    $region48: #{_lambda_.40} parent=5 // pred_fallthru
      _
  $region6: #{_lambda_.40} parent=0 // loop_footer
    %s15 = sadd.s32 1, %s11
  $region7: #{_lambda_.40} parent=0 // loop_footer_branch
    %10 = sbr.rel target = $region3
  $region8: #{_lambda_.40} parent=0 // loop_exit
    _

// kernel: _lambda_.41
$region0: #{_lambda_.41}
  #allocation0 [shape = 'u32[]', space=smem, size = 0x4, offset = 0x4, fixed_abs, tag = 'smem constant byte address 0x4 - core index']
  #allocation1 [shape = 'u32[144,128]{1,0:T(1,128)}', space=vmem, size = 0x12000, scoped, tag = 'internal scratch']
  %s0 = inlined_call_operand.vmem [shape: bf16[32,256], index: 0, kind: input, shape index: {}]
  %s1 = inlined_call_operand.vmem [shape: bf16[256,64], index: 1, kind: input, shape index: {}]
  %s2 = inlined_call_operand.vmem [shape: f32[1,64], index: 2, kind: input, shape index: {}]
  %s3 = inlined_call_operand.vmem [shape: bf16[32,64], index: 3, kind: input, shape index: {}]
  %s4 = inlined_call_operand.vmem [shape: bf16[32,64], index: 4, kind: output, shape index: {}]
  %s5 = sld [smem:[#allocation0]]
  $region49: #{_lambda_.41} parent=0
    _
  %s7 = ssub.s32 1, %s5
  %s8 = scalar_select 0, %s7, %s5
  loop: start=0, step=1, limit=4
  $region2: #{_lambda_.41} parent=0 // loop_pre_header
    _
  $region3: #{_lambda_.41} parent=0 // loop_header
    %s10 = sphi 0, %s14
    %p11 = scmp.ge.s32.totalorder %s10, 4
    %s17 = sphi 0, %s29
    %s18 = sphi 0, %s25
    %s19 = sphi 0, %s17
    %s20 = sphi 0, %s18
    %s21 = sphi 0, %s19
    %s22 = sphi 0, %s20
    %s32 = sphi 0, %s34
    %s35 = sphi 0, %s32
    %s36 = sphi 0, %s35
    %s52 = sphi 0, %s36
    %s58 = sphi 0, %s60
    %s61 = sphi 0, %s58
    %s62 = sphi 0, %s61
    %s78 = sphi 0, %s62
    %s84 = sphi 0, %s86
    %s87 = sphi 0, %s84
    %s88 = sphi 0, %s87
    %s104 = sphi 0, %s88
    %s112 = sphi 0, %s114
    %s115 = sphi 0, %s112
    %s116 = sphi 0, %s115
    %s132 = sphi 0, %s116
    %s140 = sphi 0, %s142
    %s143 = sphi 0, %s140
    %s144 = sphi 0, %s143
    %s160 = sphi 0, %s144
  $region4: #{_lambda_.41} parent=0 // loop_header_branch
    %13 = sbr.rel (%p11) target = $region8
  $region5: #{_lambda_.41} parent=0 // loop_body
    %s15 = ssub.s32 %s10, 1
    %s16 = ssub.s32 %s10, 2
    %s23 = sadd.s32 1, %s18
    %p24 = scmp.ge.s32.totalorder %s23, 1
    %s25 = scalar_select %p24, 0, %s23
    %s26 = sadd.s32 1, %s17
    %s27 = scalar_select %p24, %s26, %s17
    %p28 = scmp.ge.s32.totalorder %s27, 2
    %s29 = scalar_select %p28, 0, %s27
    %s30 = ssub.s32 %s17, %s29
    %p31 = scmp.eq.s32.totalorder %s30, 0
    %s33 = sadd.s32 %s32, 1
    %s34 = scalar_select %p31, %s32, %s33
    %p37 = pneg %p31
    %p38 = scmp.eq.s32.totalorder %s10, 1
    %p39 = por %p37, %p38
    %p40 = scmp.ne.s32.totalorder %s32, %s35
    %p41 = scmp.eq.s32.totalorder %s10, 0
    %p42 = por %p40, %p41
    %p43 = scmp.ne.s32.totalorder %s32, %s35
    %p44 = scmp.eq.s32.totalorder %s15, 1
    %p45 = por %p43, %p44
    %p46 = scmp.ne.s32.totalorder %s35, %s36
    %p47 = scmp.eq.s32.totalorder %s15, 0
    %p48 = por %p46, %p47
    %p49 = scmp.ne.s32.totalorder %s35, %s36
    %p50 = scmp.eq.s32.totalorder %s16, 1
    %p51 = por %p49, %p50
    %p53 = scmp.ne.s32.totalorder %s36, %s52
    %p54 = scmp.eq.s32.totalorder %s16, 0
    %p55 = por %p53, %p54
    %s56 = ssub.s32 %s18, %s25
    %p57 = scmp.eq.s32.totalorder %s56, 0
    %s59 = sadd.s32 %s58, 1
    %s60 = scalar_select %p57, %s58, %s59
    %p63 = pneg %p57
    %p64 = scmp.eq.s32.totalorder %s10, 1
    %p65 = por %p63, %p64
    %p66 = scmp.ne.s32.totalorder %s58, %s61
    %p67 = scmp.eq.s32.totalorder %s10, 0
    %p68 = por %p66, %p67
    %p69 = scmp.ne.s32.totalorder %s58, %s61
    %p70 = scmp.eq.s32.totalorder %s15, 1
    %p71 = por %p69, %p70
    %p72 = scmp.ne.s32.totalorder %s61, %s62
    %p73 = scmp.eq.s32.totalorder %s15, 0
    %p74 = por %p72, %p73
    %p75 = scmp.ne.s32.totalorder %s61, %s62
    %p76 = scmp.eq.s32.totalorder %s16, 1
    %p77 = por %p75, %p76
    %p79 = scmp.ne.s32.totalorder %s62, %s78
    %p80 = scmp.eq.s32.totalorder %s16, 0
    %p81 = por %p79, %p80
    %s82 = ssub.s32 %s18, %s25
    %p83 = scmp.eq.s32.totalorder %s82, 0
    %s85 = sadd.s32 %s84, 1
    %s86 = scalar_select %p83, %s84, %s85
    %p89 = pneg %p83
    %p90 = scmp.eq.s32.totalorder %s10, 1
    %p91 = por %p89, %p90
    %p92 = scmp.ne.s32.totalorder %s84, %s87
    %p93 = scmp.eq.s32.totalorder %s10, 0
    %p94 = por %p92, %p93
    %p95 = scmp.ne.s32.totalorder %s84, %s87
    %p96 = scmp.eq.s32.totalorder %s15, 1
    %p97 = por %p95, %p96
    %p98 = scmp.ne.s32.totalorder %s87, %s88
    %p99 = scmp.eq.s32.totalorder %s15, 0
    %p100 = por %p98, %p99
    %p101 = scmp.ne.s32.totalorder %s87, %s88
    %p102 = scmp.eq.s32.totalorder %s16, 1
    %p103 = por %p101, %p102
    %p105 = scmp.ne.s32.totalorder %s88, %s104
    %p106 = scmp.eq.s32.totalorder %s16, 0
    %p107 = por %p105, %p106
    %s108 = ssub.s32 %s17, %s29
    %s109 = ssub.s32 %s18, %s25
    %s110 = sor.u32 %s108, %s109
    %p111 = scmp.eq.s32.totalorder %s110, 0
    %s113 = sadd.s32 %s112, 1
    %s114 = scalar_select %p111, %s112, %s113
    %p117 = pneg %p111
    %p118 = scmp.eq.s32.totalorder %s10, 1
    %p119 = por %p117, %p118
    %p120 = scmp.ne.s32.totalorder %s112, %s115
    %p121 = scmp.eq.s32.totalorder %s10, 0
    %p122 = por %p120, %p121
    %p123 = scmp.ne.s32.totalorder %s112, %s115
    %p124 = scmp.eq.s32.totalorder %s15, 1
    %p125 = por %p123, %p124
    %p126 = scmp.ne.s32.totalorder %s115, %s116
    %p127 = scmp.eq.s32.totalorder %s15, 0
    %p128 = por %p126, %p127
    %p129 = scmp.ne.s32.totalorder %s115, %s116
    %p130 = scmp.eq.s32.totalorder %s16, 1
    %p131 = por %p129, %p130
    %p133 = scmp.ne.s32.totalorder %s116, %s132
    %p134 = scmp.eq.s32.totalorder %s16, 0
    %p135 = por %p133, %p134
    %s136 = ssub.s32 %s17, %s29
    %s137 = ssub.s32 %s18, %s25
    %s138 = sor.u32 %s136, %s137
    %p139 = scmp.eq.s32.totalorder %s138, 0
    %s141 = sadd.s32 %s140, 1
    %s142 = scalar_select %p139, %s140, %s141
    %p145 = pneg %p139
    %p146 = scmp.eq.s32.totalorder %s10, 1
    %p147 = por %p145, %p146
    %p148 = scmp.ne.s32.totalorder %s140, %s143
    %p149 = scmp.eq.s32.totalorder %s10, 0
    %p150 = por %p148, %p149
    %p151 = scmp.ne.s32.totalorder %s140, %s143
    %p152 = scmp.eq.s32.totalorder %s15, 1
    %p153 = por %p151, %p152
    %p154 = scmp.ne.s32.totalorder %s143, %s144
    %p155 = scmp.eq.s32.totalorder %s15, 0
    %p156 = por %p154, %p155
    %p157 = scmp.ne.s32.totalorder %s143, %s144
    %p158 = scmp.eq.s32.totalorder %s16, 1
    %p159 = por %p157, %p158
    %p161 = scmp.ne.s32.totalorder %s144, %s160
    %p162 = scmp.eq.s32.totalorder %s16, 0
    %p163 = por %p161, %p162
    %p164 = scmp.le.s32.totalorder 1, %s10
    %p165 = scmp.lt.s32.totalorder %s10, 3
    %p166 = pnand %p164, %p165
    %p167 = pneg %p166
    // Predicated region
    $region9: #{_lambda_.41} parent=5 // pred_check
      _
    $region10: #{_lambda_.41} parent=5 // pred_check_branch
      %169 = sbr.rel (%p166) target = $region12
    $region11: #{_lambda_.41} parent=5 // pred_region
      %s170 = ssub.s32 %s10, 1
      // Predicated region
      $region13: #{_lambda_.41} parent=11 // pred_check
        %p171 = pneg %p74
      $region14: #{_lambda_.41} parent=11 // pred_check_branch
        %173 = sbr.rel (%p171) target = $region16
      $region15: #{_lambda_.41} parent=11 // pred_region
        %p174 = scmp.lt.s32.totalorder %s20, 0
        %s175 = scalar_select %p174, %s20, 0
        %s176 = smul.addr %s175, 4
        %s177 = scalar_lea.vmem %s1, %s176
      $region16: #{_lambda_.41} parent=11 // pred_fallthru
        _
      // Predicated region
      $region17: #{_lambda_.41} parent=11 // pred_check
        %p178 = pneg %p100
      $region18: #{_lambda_.41} parent=11 // pred_check_branch
        %180 = sbr.rel (%p178) target = $region20
      $region19: #{_lambda_.41} parent=11 // pred_region
        %p181 = scmp.lt.s32.totalorder %s20, 0
        %s182 = scalar_select %p181, %s20, 0
        %s183 = scalar_lea.vmem %s2, %s182
      $region20: #{_lambda_.41} parent=11 // pred_fallthru
        _
    $region12: #{_lambda_.41} parent=5 // pred_fallthru
      _
    %p184 = scmp.lt.s32.totalorder %s10, 2
    // Predicated region
    $region21: #{_lambda_.41} parent=5 // pred_check
      %p185 = pneg %p184
    $region22: #{_lambda_.41} parent=5 // pred_check_branch
      %187 = sbr.rel (%p185) target = $region24
    $region23: #{_lambda_.41} parent=5 // pred_region
      // Predicated region
      $region25: #{_lambda_.41} parent=23 // pred_check
        %p188 = pneg %p42
      $region26: #{_lambda_.41} parent=23 // pred_check_branch
        %190 = sbr.rel (%p188) target = $region28
      $region27: #{_lambda_.41} parent=23 // pred_region
        %s191 = smul.u32 2, %s17
        %p192 = scmp.lt.s32.totalorder %s191, 3
        %s193 = scalar_select %p192, %s191, 3
        %s194 = smul.addr %s193, 2
        %s195 = smul.addr %s194, 4
        %s196 = scalar_lea.vmem %s0, %s195
        %s197 = smul.u32 2, %s17
      $region28: #{_lambda_.41} parent=23 // pred_fallthru
        _
      // Predicated region
      $region29: #{_lambda_.41} parent=23 // pred_check
        %p198 = pneg %p122
      $region30: #{_lambda_.41} parent=23 // pred_check_branch
        %200 = sbr.rel (%p198) target = $region32
      $region31: #{_lambda_.41} parent=23 // pred_region
        %s201 = smul.u32 2, %s17
        %p202 = scmp.lt.s32.totalorder %s201, 3
        %s203 = scalar_select %p202, %s201, 3
        %p204 = scmp.lt.s32.totalorder %s18, 0
        %s205 = scalar_select %p204, %s18, 0
        %s206 = sadd.s32 %s205, %s203
        %s207 = smul.addr %s206, 4
        %s208 = scalar_lea.vmem %s3, %s207
        %s209 = smul.u32 2, %s17
      $region32: #{_lambda_.41} parent=23 // pred_fallthru
        _
    $region24: #{_lambda_.41} parent=5 // pred_fallthru
      _
    %p210 = scmp.le.s32.totalorder 1, %s10
    %p211 = scmp.lt.s32.totalorder %s10, 3
    %p212 = pnand %p210, %p211
    %p213 = pneg %p212
    // Predicated region
    $region33: #{_lambda_.41} parent=5 // pred_check
      _
    $region34: #{_lambda_.41} parent=5 // pred_check_branch
      %215 = sbr.rel (%p212) target = $region36
    $region35: #{_lambda_.41} parent=5 // pred_region
      %s216 = ssub.s32 %s10, 1
      %s217 = smul.u32 2, %s19
      %p218 = scmp.lt.s32.totalorder %s217, 3
      %s219 = scalar_select %p218, %s217, 3
      %s220 = smul.addr %s219, 2
      %s221 = smul.addr %s220, 4
      %s222 = scalar_lea.vmem %s0, %s221
      %p223 = pneg %p48
      %p224 = pneg %p45
      %p225 = scmp.lt.s32.totalorder %s20, 0
      %s226 = scalar_select %p225, %s20, 0
      %s227 = smul.addr %s226, 4
      %s228 = scalar_lea.vmem %s1, %s227
      %p229 = pneg %p74
      %p230 = pneg %p71
      %p231 = scmp.lt.s32.totalorder %s20, 0
      %s232 = scalar_select %p231, %s20, 0
      %s233 = scalar_lea.vmem %s2, %s232
      %p234 = pneg %p100
      %p235 = pneg %p97
      %s236 = smul.u32 2, %s19
      %p237 = scmp.lt.s32.totalorder %s236, 3
      %s238 = scalar_select %p237, %s236, 3
      %p239 = scmp.lt.s32.totalorder %s20, 0
      %s240 = scalar_select %p239, %s20, 0
      %s241 = sadd.s32 %s240, %s238
      %s242 = smul.addr %s241, 4
      %s243 = scalar_lea.vmem %s3, %s242
      %p244 = pneg %p128
      %p245 = pneg %p125
      %p246 = pneg %p156
      %p247 = pneg %p153
      %s248 = smul.u32 2, %s19
      %p249 = scmp.lt.s32.totalorder %s248, 3
      %s250 = scalar_select %p249, %s248, 3
      %p251 = scmp.lt.s32.totalorder %s20, 0
      %s252 = scalar_select %p251, %s20, 0
      %s253 = sadd.s32 %s252, %s250
      %s254 = smul.addr %s253, 4
      %s255 = scalar_lea.vmem %s4, %s254
      %s256 = smul.u32 2, %s19
      %p257 = scmp.lt.s32.totalorder %s256, 3
      %s258 = scalar_select %p257, %s256, 3
      %s259 = smul.addr %s258, 2
      %s260 = smul.addr %s259, 4
      %s261 = scalar_lea.vmem %s0, %s260
      %s262 = smul.u32 2, %s19
      %p263 = scmp.lt.s32.totalorder %s20, 0
      %s264 = scalar_select %p263, %s20, 0
      %s265 = smul.addr %s264, 4
      %s266 = scalar_lea.vmem %s1, %s265
      %p267 = scmp.lt.s32.totalorder %s20, 0
      %s268 = scalar_select %p267, %s20, 0
      %s269 = scalar_lea.vmem %s2, %s268
      %s270 = smul.u32 2, %s19
      %p271 = scmp.lt.s32.totalorder %s270, 3
      %s272 = scalar_select %p271, %s270, 3
      %p273 = scmp.lt.s32.totalorder %s20, 0
      %s274 = scalar_select %p273, %s20, 0
      %s275 = sadd.s32 %s274, %s272
      %s276 = smul.addr %s275, 4
      %s277 = scalar_lea.vmem %s3, %s276
      %s278 = smul.u32 2, %s19
      %s279 = smul.u32 2, %s19
      %p280 = scmp.lt.s32.totalorder %s279, 3
      %s281 = scalar_select %p280, %s279, 3
      %p282 = scmp.lt.s32.totalorder %s20, 0
      %s283 = scalar_select %p282, %s20, 0
      %s284 = sadd.s32 %s283, %s281
      %s285 = smul.addr %s284, 4
      %s286 = scalar_lea.vmem %s4, %s285
      %s287 = smul.u32 2, %s19
      %v289 = vld [vmem:[%s261] sm:$0xff]
      %v290 = vld [vmem:[%s261 + $0x8] sm:$0xff]
      %v291 = vld [vmem:[%s266] sm:$0xf]
      %v292 = vld [vmem:[%s266 + $0x4] sm:$0xf]
      %v293 = vld [vmem:[%s266 + $0x8] sm:$0xf]
      %v294 = vld [vmem:[%s266 + $0xc] sm:$0xf]
      %v295 = vld [vmem:[%s266 + $0x10] sm:$0xf]
      %v296 = vld [vmem:[%s266 + $0x14] sm:$0xf]
      %v297 = vld [vmem:[%s266 + $0x18] sm:$0xf]
      %v298 = vld [vmem:[%s266 + $0x1c] sm:$0xf]
      %v299 = vld [vmem:[%s266 + $0x20] sm:$0xf]
      %v300 = vld [vmem:[%s266 + $0x24] sm:$0xf]
      %v301 = vld [vmem:[%s266 + $0x28] sm:$0xf]
      %v302 = vld [vmem:[%s266 + $0x2c] sm:$0xf]
      %v303 = vld [vmem:[%s266 + $0x30] sm:$0xf]
      %v304 = vld [vmem:[%s266 + $0x34] sm:$0xf]
      %v305 = vld [vmem:[%s266 + $0x38] sm:$0xf]
      %v306 = vld [vmem:[%s266 + $0x3c] sm:$0xf]
      %v307 = vld [vmem:[%s266 + $0x40] sm:$0xf]
      %v308 = vld [vmem:[%s266 + $0x44] sm:$0xf]
      %v309 = vld [vmem:[%s266 + $0x48] sm:$0xf]
      %v310 = vld [vmem:[%s266 + $0x4c] sm:$0xf]
      %v311 = vld [vmem:[%s266 + $0x50] sm:$0xf]
      %v312 = vld [vmem:[%s266 + $0x54] sm:$0xf]
      %v313 = vld [vmem:[%s266 + $0x58] sm:$0xf]
      %v314 = vld [vmem:[%s266 + $0x5c] sm:$0xf]
      %v315 = vld [vmem:[%s266 + $0x60] sm:$0xf]
      %v316 = vld [vmem:[%s266 + $0x64] sm:$0xf]
      %v317 = vld [vmem:[%s266 + $0x68] sm:$0xf]
      %v318 = vld [vmem:[%s266 + $0x6c] sm:$0xf]
      %v319 = vld [vmem:[%s266 + $0x70] sm:$0xf]
      %v320 = vld [vmem:[%s266 + $0x74] sm:$0xf]
      %v321 = vld [vmem:[%s266 + $0x78] sm:$0xf]
      %v322 = vld [vmem:[%s266 + $0x7c] sm:$0xf]
      %v323 = vld [vmem:[%s269] sm:$0x1]
      %v325 = vlaneseq
      %v326 = vshrl.u32 %v325, 7
      %v327 = vsub.s32 0, %v326
      %v328 = vrot.slane %v323, %v327
      %v332 = vunpack.c.l.b16 %v289
      %v333 = vunpack.c.h.b16 %v289
      %v334 = vunpack.c.l.b16 %v290
      %v335 = vunpack.c.h.b16 %v290
      %v336 = vpack.c.b16 %v334, %v332
      %v337 = vpack.c.b16 %v335, %v333
      %v372 = vunpack.c.l.b16 %v291
      %v373 = vunpack.c.l.b16 %v292
      %v374 = vunpack.c.l.b16 %v293
      %v375 = vunpack.c.l.b16 %v294
      %v376 = vunpack.c.l.b16 %v295
      %v377 = vunpack.c.l.b16 %v296
      %v378 = vunpack.c.l.b16 %v297
      %v379 = vunpack.c.l.b16 %v298
      %v380 = vunpack.c.l.b16 %v299
      %v381 = vunpack.c.l.b16 %v300
      %v382 = vunpack.c.l.b16 %v301
      %v383 = vunpack.c.l.b16 %v302
      %v384 = vunpack.c.l.b16 %v303
      %v385 = vunpack.c.l.b16 %v304
      %v386 = vunpack.c.l.b16 %v305
      %v387 = vunpack.c.l.b16 %v306
      %v388 = vunpack.c.l.b16 %v307
      %v389 = vunpack.c.l.b16 %v308
      %v390 = vunpack.c.l.b16 %v309
      %v391 = vunpack.c.l.b16 %v310
      %v392 = vunpack.c.l.b16 %v311
      %v393 = vunpack.c.l.b16 %v312
      %v394 = vunpack.c.l.b16 %v313
      %v395 = vunpack.c.l.b16 %v314
      %v396 = vunpack.c.l.b16 %v315
      %v397 = vunpack.c.l.b16 %v316
      %v398 = vunpack.c.l.b16 %v317
      %v399 = vunpack.c.l.b16 %v318
      %v400 = vunpack.c.l.b16 %v319
      %v401 = vunpack.c.l.b16 %v320
      %v402 = vunpack.c.l.b16 %v321
      %v403 = vunpack.c.l.b16 %v322
      %v404 = vpack.c.b16 %v373, %v372
      %v405 = vpack.c.b16 %v375, %v374
      %v406 = vpack.c.b16 %v377, %v376
      %v407 = vpack.c.b16 %v379, %v378
      %v408 = vpack.c.b16 %v381, %v380
      %v409 = vpack.c.b16 %v383, %v382
      %v410 = vpack.c.b16 %v385, %v384
      %v411 = vpack.c.b16 %v387, %v386
      %v412 = vpack.c.b16 %v389, %v388
      %v413 = vpack.c.b16 %v391, %v390
      %v414 = vpack.c.b16 %v393, %v392
      %v415 = vpack.c.b16 %v395, %v394
      %v416 = vpack.c.b16 %v397, %v396
      %v417 = vpack.c.b16 %v399, %v398
      %v418 = vpack.c.b16 %v401, %v400
      %v419 = vpack.c.b16 %v403, %v402
      %436 = vmatprep.subr.bf16.mxu0 0
      %437 = vmatpush1.bf16.msra.mxu0 %v411
      %438 = vmatprep.subr.bf16.mxu0 0
      %439 = vmatpush1.bf16.msra.mxu0 %v410
      %440 = vmatprep.subr.bf16.mxu0 0
      %441 = vmatpush1.bf16.msra.mxu0 %v409
      %442 = vmatprep.subr.bf16.mxu0 0
      %443 = vmatpush1.bf16.msra.mxu0 %v408
      %444 = vmatprep.subr.bf16.mxu0 0
      %445 = vmatpush1.bf16.msra.mxu0 %v407
      %446 = vmatprep.subr.bf16.mxu0 0
      %447 = vmatpush1.bf16.msra.mxu0 %v406
      %448 = vmatprep.subr.bf16.mxu0 0
      %449 = vmatpush1.bf16.msra.mxu0 %v405
      %450 = vmatprep.subr.bf16.mxu0 0
      %451 = vmatpush1.bf16.msra.mxu0 %v404
      %452 = vmatprep.subr.bf16.mxu0 0
      %453 = vmatpush2.bf16.msra.mxu0 %v419
      %454 = vmatprep.subr.bf16.mxu0 0
      %455 = vmatpush2.bf16.msra.mxu0 %v418
      %456 = vmatprep.subr.bf16.mxu0 0
      %457 = vmatpush2.bf16.msra.mxu0 %v417
      %458 = vmatprep.subr.bf16.mxu0 0
      %459 = vmatpush2.bf16.msra.mxu0 %v416
      %460 = vmatprep.subr.bf16.mxu0 0
      %461 = vmatpush2.bf16.msra.mxu0 %v415
      %462 = vmatprep.subr.bf16.mxu0 0
      %463 = vmatpush2.bf16.msra.mxu0 %v414
      %464 = vmatprep.subr.bf16.mxu0 0
      %465 = vmatpush2.bf16.msra.mxu0 %v413
      %466 = vmatprep.subr.bf16.mxu0 0
      %467 = vmatpush2.bf16.msra.mxu0 %v412
      %468 = vmatprep.mubr.bf16.mxu0 %v337
      %469 = vmatmul.mubr.bf16.gmra.mxu0 %v336
      %v470 = vpop.f32.mrf.mxu0
      %v471 = vadd.f32 %v328, %v470
      %v472 = vpop.f32.mrf.mxu0
      %v473 = vpop.f32.mrf.mxu0
      %v474 = vadd.f32 %v328, %v473
      %v475 = vpop.f32.mrf.mxu0
      %476 = vdwg.mxu0
      %v477 = vld [vmem:[%s277] sm:$0xf]
      %v478 = vld [vmem:[%s277 + $0x4] sm:$0xf]
      %v479 = vunpack.c.l.bf16 %v477
      %v480 = vunpack.c.l.bf16 %v478
      %v481 = vadd.f32 %v471, %v479
      %v482 = vadd.f32 %v474, %v480
      %v483 = vpack.c.bf16 %v482, %v481
      %v485 = vunpack.c.l.b16 %v483
      %v486 = vunpack.c.h.b16 %v483
      %v487 = vpack.c.b16 %v485, %v485
      %v488 = vpack.c.b16 %v486, %v486
      %vm491 = vcmask 519168
      %492 = vst.msk [vmem:[%s286] sm:$0xf] %vm491, %v487
      %493 = vst.msk [vmem:[%s286 + $0x4] sm:$0xf] %vm491, %v488
      %s494 = smul.u32 2, %s19
      %p495 = scmp.lt.s32.totalorder %s494, 3
      %s496 = scalar_select %p495, %s494, 3
      %p497 = scmp.lt.s32.totalorder %s20, 0
      %s498 = scalar_select %p497, %s20, 0
      %s499 = sadd.s32 %s498, %s496
      %s500 = smul.addr %s499, 4
      %s501 = scalar_lea.vmem %s4, %s500
      // Predicated region
      $region37: #{_lambda_.41} parent=35 // pred_check
        %p502 = pneg %p153
      $region38: #{_lambda_.41} parent=35 // pred_check_branch
        %504 = sbr.rel (%p502) target = $region40
      $region39: #{_lambda_.41} parent=35 // pred_region
        %s505 = smul.u32 2, %s19
      $region40: #{_lambda_.41} parent=35 // pred_fallthru
        _
    $region36: #{_lambda_.41} parent=5 // pred_fallthru
      _
    %p506 = scmp.le.s32.totalorder 2, %s10
    // Predicated region
    $region41: #{_lambda_.41} parent=5 // pred_check
      %p507 = pneg %p506
    $region42: #{_lambda_.41} parent=5 // pred_check_branch
      %509 = sbr.rel (%p507) target = $region44
    $region43: #{_lambda_.41} parent=5 // pred_region
      %s510 = ssub.s32 %s10, 2
      // Predicated region
      $region45: #{_lambda_.41} parent=43 // pred_check
        %p511 = pneg %p159
      $region46: #{_lambda_.41} parent=43 // pred_check_branch
        %513 = sbr.rel (%p511) target = $region48
      $region47: #{_lambda_.41} parent=43 // pred_region
        %s514 = smul.u32 2, %s21
        %p515 = scmp.lt.s32.totalorder %s514, 3
        %s516 = scalar_select %p515, %s514, 3
        %p517 = scmp.lt.s32.totalorder %s22, 0
        %s518 = scalar_select %p517, %s22, 0
        %s519 = sadd.s32 %s518, %s516
        %s520 = smul.addr %s519, 4
        %s521 = scalar_lea.vmem %s4, %s520
      $region48: #{_lambda_.41} parent=43 // pred_fallthru
        _
    $region44: #{_lambda_.41} parent=5 // pred_fallthru
      _
  $region6: #{_lambda_.41} parent=0 // loop_footer
    %s14 = sadd.s32 1, %s10
  $region7: #{_lambda_.41} parent=0 // loop_footer_branch
    %9 = sbr.rel target = $region3
  $region8: #{_lambda_.41} parent=0 // loop_exit
    _

// kernel: _lambda_.47
$region0: #{_lambda_.47}
  #allocation0 [shape = 'u32[]', space=smem, size = 0x4, offset = 0x4, fixed_abs, tag = 'smem constant byte address 0x4 - core index']
  #allocation1 [shape = 'u32[144,128]{1,0:T(1,128)}', space=vmem, size = 0x12000, scoped, tag = 'internal scratch']
  %s0 = inlined_call_operand.vmem [shape: bf16[32,64], index: 0, kind: input, shape index: {}]
  %s1 = inlined_call_operand.vmem [shape: f32[1,64], index: 1, kind: input, shape index: {}]
  %s2 = inlined_call_operand.vmem [shape: f32[1,64], index: 2, kind: input, shape index: {}]
  %s3 = inlined_call_operand.vmem [shape: f32[32,64], index: 3, kind: output, shape index: {}]
  %s4 = sld [smem:[#allocation0]]
  $region45: #{_lambda_.47} parent=0
    _
  %s6 = ssub.s32 1, %s4
  %s7 = scalar_select 0, %s6, %s4
  loop: start=0, step=1, limit=4
  $region2: #{_lambda_.47} parent=0 // loop_pre_header
    _
  $region3: #{_lambda_.47} parent=0 // loop_header
    %s9 = sphi 0, %s13
    %p10 = scmp.ge.s32.totalorder %s9, 4
    %s19 = sphi 0, %s21
    %s22 = sphi 0, %s19
    %s23 = sphi 0, %s22
    %s39 = sphi 0, %s23
    %s43 = sphi 0, %s43
    %s45 = sphi 0, %s43
    %s46 = sphi 0, %s45
    %s60 = sphi 0, %s46
    %s64 = sphi 0, %s64
    %s66 = sphi 0, %s64
    %s67 = sphi 0, %s66
    %s81 = sphi 0, %s67
    %s87 = sphi 0, %s89
    %s90 = sphi 0, %s87
    %s91 = sphi 0, %s90
    %s107 = sphi 0, %s91
  $region4: #{_lambda_.47} parent=0 // loop_header_branch
    %12 = sbr.rel (%p10) target = $region8
  $region5: #{_lambda_.47} parent=0 // loop_body
    %s14 = ssub.s32 %s9, 1
    %s15 = ssub.s32 %s9, 2
    %s16 = sadd.s32 %s9, 1
    %s17 = ssub.s32 %s9, %s16
    %p18 = scmp.eq.s32.totalorder %s17, 0
    %s20 = sadd.s32 %s19, 1
    %s21 = scalar_select %p18, %s19, %s20
    %p24 = pneg %p18
    %p25 = scmp.eq.s32.totalorder %s9, 1
    %p26 = por %p24, %p25
    %p27 = scmp.ne.s32.totalorder %s19, %s22
    %p28 = scmp.eq.s32.totalorder %s9, 0
    %p29 = por %p27, %p28
    %p30 = scmp.ne.s32.totalorder %s19, %s22
    %p31 = scmp.eq.s32.totalorder %s14, 1
    %p32 = por %p30, %p31
    %p33 = scmp.ne.s32.totalorder %s22, %s23
    %p34 = scmp.eq.s32.totalorder %s14, 0
    %p35 = por %p33, %p34
    %p36 = scmp.ne.s32.totalorder %s22, %s23
    %p37 = scmp.eq.s32.totalorder %s15, 1
    %p38 = por %p36, %p37
    %p40 = scmp.ne.s32.totalorder %s23, %s39
    %p41 = scmp.eq.s32.totalorder %s15, 0
    %p42 = por %p40, %p41
    %s44 = sadd.s32 %s43, 1
    %p47 = scmp.eq.s32.totalorder %s9, 1
    %p48 = scmp.ne.s32.totalorder %s43, %s45
    %p49 = scmp.eq.s32.totalorder %s9, 0
    %p50 = por %p48, %p49
    %p51 = scmp.ne.s32.totalorder %s43, %s45
    %p52 = scmp.eq.s32.totalorder %s14, 1
    %p53 = por %p51, %p52
    %p54 = scmp.ne.s32.totalorder %s45, %s46
    %p55 = scmp.eq.s32.totalorder %s14, 0
    %p56 = por %p54, %p55
    %p57 = scmp.ne.s32.totalorder %s45, %s46
    %p58 = scmp.eq.s32.totalorder %s15, 1
    %p59 = por %p57, %p58
    %p61 = scmp.ne.s32.totalorder %s46, %s60
    %p62 = scmp.eq.s32.totalorder %s15, 0
    %p63 = por %p61, %p62
    %s65 = sadd.s32 %s64, 1
    %p68 = scmp.eq.s32.totalorder %s9, 1
    %p69 = scmp.ne.s32.totalorder %s64, %s66
    %p70 = scmp.eq.s32.totalorder %s9, 0
    %p71 = por %p69, %p70
    %p72 = scmp.ne.s32.totalorder %s64, %s66
    %p73 = scmp.eq.s32.totalorder %s14, 1
    %p74 = por %p72, %p73
    %p75 = scmp.ne.s32.totalorder %s66, %s67
    %p76 = scmp.eq.s32.totalorder %s14, 0
    %p77 = por %p75, %p76
    %p78 = scmp.ne.s32.totalorder %s66, %s67
    %p79 = scmp.eq.s32.totalorder %s15, 1
    %p80 = por %p78, %p79
    %p82 = scmp.ne.s32.totalorder %s67, %s81
    %p83 = scmp.eq.s32.totalorder %s15, 0
    %p84 = por %p82, %p83
    %s85 = ssub.s32 %s9, %s16
    %p86 = scmp.eq.s32.totalorder %s85, 0
    %s88 = sadd.s32 %s87, 1
    %s89 = scalar_select %p86, %s87, %s88
    %p92 = pneg %p86
    %p93 = scmp.eq.s32.totalorder %s9, 1
    %p94 = por %p92, %p93
    %p95 = scmp.ne.s32.totalorder %s87, %s90
    %p96 = scmp.eq.s32.totalorder %s9, 0
    %p97 = por %p95, %p96
    %p98 = scmp.ne.s32.totalorder %s87, %s90
    %p99 = scmp.eq.s32.totalorder %s14, 1
    %p100 = por %p98, %p99
    %p101 = scmp.ne.s32.totalorder %s90, %s91
    %p102 = scmp.eq.s32.totalorder %s14, 0
    %p103 = por %p101, %p102
    %p104 = scmp.ne.s32.totalorder %s90, %s91
    %p105 = scmp.eq.s32.totalorder %s15, 1
    %p106 = por %p104, %p105
    %p108 = scmp.ne.s32.totalorder %s91, %s107
    %p109 = scmp.eq.s32.totalorder %s15, 0
    %p110 = por %p108, %p109
    %p111 = scmp.le.s32.totalorder 1, %s9
    %p112 = scmp.lt.s32.totalorder %s9, 3
    %p113 = pnand %p111, %p112
    %p114 = pneg %p113
    // Predicated region
    $region9: #{_lambda_.47} parent=5 // pred_check
      _
    $region10: #{_lambda_.47} parent=5 // pred_check_branch
      %116 = sbr.rel (%p113) target = $region12
    $region11: #{_lambda_.47} parent=5 // pred_region
      %s117 = ssub.s32 %s9, 1
      // Predicated region
      $region13: #{_lambda_.47} parent=11 // pred_check
        %p118 = pneg %p56
      $region14: #{_lambda_.47} parent=11 // pred_check_branch
        %120 = sbr.rel (%p118) target = $region16
      $region15: #{_lambda_.47} parent=11 // pred_region
        _
      $region16: #{_lambda_.47} parent=11 // pred_fallthru
        _
      // Predicated region
      $region17: #{_lambda_.47} parent=11 // pred_check
        %p121 = pneg %p77
      $region18: #{_lambda_.47} parent=11 // pred_check_branch
        %123 = sbr.rel (%p121) target = $region20
      $region19: #{_lambda_.47} parent=11 // pred_region
        _
      $region20: #{_lambda_.47} parent=11 // pred_fallthru
        _
    $region12: #{_lambda_.47} parent=5 // pred_fallthru
      _
    %p124 = scmp.lt.s32.totalorder %s9, 2
    // Predicated region
    $region21: #{_lambda_.47} parent=5 // pred_check
      %p125 = pneg %p124
    $region22: #{_lambda_.47} parent=5 // pred_check_branch
      %127 = sbr.rel (%p125) target = $region24
    $region23: #{_lambda_.47} parent=5 // pred_region
      // Predicated region
      $region25: #{_lambda_.47} parent=23 // pred_check
        %p128 = pneg %p29
      $region26: #{_lambda_.47} parent=23 // pred_check_branch
        %130 = sbr.rel (%p128) target = $region28
      $region27: #{_lambda_.47} parent=23 // pred_region
        %s131 = smul.u32 2, %s9
        %p132 = scmp.lt.s32.totalorder %s131, 3
        %s133 = scalar_select %p132, %s131, 3
        %s134 = smul.addr %s133, 4
        %s135 = scalar_lea.vmem %s0, %s134
        %s136 = smul.u32 2, %s9
      $region28: #{_lambda_.47} parent=23 // pred_fallthru
        _
    $region24: #{_lambda_.47} parent=5 // pred_fallthru
      _
    %p137 = scmp.le.s32.totalorder 1, %s9
    %p138 = scmp.lt.s32.totalorder %s9, 3
    %p139 = pnand %p137, %p138
    %p140 = pneg %p139
    // Predicated region
    $region29: #{_lambda_.47} parent=5 // pred_check
      _
    $region30: #{_lambda_.47} parent=5 // pred_check_branch
      %142 = sbr.rel (%p139) target = $region32
    $region31: #{_lambda_.47} parent=5 // pred_region
      %s143 = ssub.s32 %s9, 1
      %s144 = smul.u32 2, %s14
      %p145 = scmp.lt.s32.totalorder %s144, 3
      %s146 = scalar_select %p145, %s144, 3
      %s147 = smul.addr %s146, 4
      %s148 = scalar_lea.vmem %s0, %s147
      %p149 = pneg %p35
      %p150 = pneg %p32
      %p151 = pneg %p56
      %p152 = pneg %p53
      %p153 = pneg %p77
      %p154 = pneg %p74
      %p155 = pneg %p103
      %p156 = pneg %p100
      %s157 = smul.u32 2, %s14
      %p158 = scmp.lt.s32.totalorder %s157, 3
      %s159 = scalar_select %p158, %s157, 3
      %s160 = smul.addr %s159, 8
      %s161 = scalar_lea.vmem %s3, %s160
      %s162 = smul.u32 2, %s14
      %p163 = scmp.lt.s32.totalorder %s162, 3
      %s164 = scalar_select %p163, %s162, 3
      %s165 = smul.addr %s164, 4
      %s166 = scalar_lea.vmem %s0, %s165
      %s167 = smul.u32 2, %s14
      %s168 = smul.u32 2, %s14
      %p169 = scmp.lt.s32.totalorder %s168, 3
      %s170 = scalar_select %p169, %s168, 3
      %s171 = smul.addr %s170, 8
      %s172 = scalar_lea.vmem %s3, %s171
      %s173 = smul.u32 2, %s14
      %v174 = vld [vmem:[%s166] sm:$0xf]
      %v175 = vld [vmem:[%s166 + $0x4] sm:$0xf]
      %v176 = vunpack.c.l.bf16 %v174
      %v177 = vunpack.c.l.bf16 %v175
      %vm178 = vcmask 523264
      %v179 = vsel %vm178, %v176, 0.0
      %180 = vadd.xlane.f32.xlu0 %v179
      %v181 = vpop.xlane.xlu0 %180
      %v182 = vsel %vm178, %v177, 0.0
      %183 = vadd.xlane.f32.xlu0 %v182
      %v184 = vpop.xlane.xlu0 %183
      %v185 = vrcp.pop 64.0
      %v186 = vmul.f32 %v181, %v185
      %v187 = vmul.f32 %v184, %v185
      %v188 = vsub.f32 %v176, %v186
      %v189 = vsub.f32 %v177, %v187
      %v190 = vmul.f32 %v188, %v188
      %v191 = vmul.f32 %v189, %v189
      %v192 = vsel %vm178, %v190, 0.0
      %193 = vadd.xlane.f32.xlu0 %v192
      %v194 = vpop.xlane.xlu0 %193
      %v195 = vsel %vm178, %v191, 0.0
      %196 = vadd.xlane.f32.xlu0 %v195
      %v197 = vpop.xlane.xlu0 %196
      %v198 = vmul.f32 %v194, %v185
      %v199 = vmul.f32 %v197, %v185
      %v200 = vadd.f32 %v198, 1e-05
      %v201 = vadd.f32 %v199, 1e-05
      %v202 = vrsqrt.pop %v200
      %v203 = vrsqrt.pop %v201
      %v204 = vmul.f32 %v188, %v202
      %v205 = vmul.f32 %v189, %v203
      %v206 = vld [vmem:[%s1] sm:$0x1]
      %v208 = vlaneseq
      %v209 = vshrl.u32 %v208, 7
      %v210 = vsub.s32 0, %v209
      %v211 = vrot.slane %v206, %v210
      %v213 = vmul.f32 %v204, %v211
      %v214 = vmul.f32 %v205, %v211
      %v215 = vld [vmem:[%s2] sm:$0x1]
      %v217 = vlaneseq
      %v218 = vshrl.u32 %v217, 7
      %v219 = vsub.s32 0, %v218
      %v220 = vrot.slane %v215, %v219
      %v222 = vadd.f32 %v213, %v220
      %v223 = vadd.f32 %v214, %v220
      %224 = vst.msk [vmem:[%s172] sm:$0xff] %vm178, %v222
      %225 = vst.msk [vmem:[%s172 + $0x8] sm:$0xff] %vm178, %v223
      %s226 = smul.u32 2, %s14
      %p227 = scmp.lt.s32.totalorder %s226, 3
      %s228 = scalar_select %p227, %s226, 3
      %s229 = smul.addr %s228, 8
      %s230 = scalar_lea.vmem %s3, %s229
      // Predicated region
      $region33: #{_lambda_.47} parent=31 // pred_check
        %p231 = pneg %p100
      $region34: #{_lambda_.47} parent=31 // pred_check_branch
        %233 = sbr.rel (%p231) target = $region36
      $region35: #{_lambda_.47} parent=31 // pred_region
        %s234 = smul.u32 2, %s14
      $region36: #{_lambda_.47} parent=31 // pred_fallthru
        _
    $region32: #{_lambda_.47} parent=5 // pred_fallthru
      _
    %p235 = scmp.le.s32.totalorder 2, %s9
    // Predicated region
    $region37: #{_lambda_.47} parent=5 // pred_check
      %p236 = pneg %p235
    $region38: #{_lambda_.47} parent=5 // pred_check_branch
      %238 = sbr.rel (%p236) target = $region40
    $region39: #{_lambda_.47} parent=5 // pred_region
      %s239 = ssub.s32 %s9, 2
      // Predicated region
      $region41: #{_lambda_.47} parent=39 // pred_check
        %p240 = pneg %p106
      $region42: #{_lambda_.47} parent=39 // pred_check_branch
        %242 = sbr.rel (%p240) target = $region44
      $region43: #{_lambda_.47} parent=39 // pred_region
        %s243 = smul.u32 2, %s15
        %p244 = scmp.lt.s32.totalorder %s243, 3
        %s245 = scalar_select %p244, %s243, 3
        %s246 = smul.addr %s245, 8
        %s247 = scalar_lea.vmem %s3, %s246
      $region44: #{_lambda_.47} parent=39 // pred_fallthru
        _
    $region40: #{_lambda_.47} parent=5 // pred_fallthru
      _
  $region6: #{_lambda_.47} parent=0 // loop_footer
    %s13 = sadd.s32 1, %s9
  $region7: #{_lambda_.47} parent=0 // loop_footer_branch
    %8 = sbr.rel target = $region3
  $region8: #{_lambda_.47} parent=0 // loop_exit
    _

</llo_original>
